<compile_context>
chip_gen: v5e
topology: v5e:2x2
jax: 0.10.0
libtpu: 0.0.40
codegen_flags: <defaults>
</compile_context>

<pallas_src>
import math
import functools

import jax
import jax.numpy as jnp
from jax import lax
from jax.experimental import pallas as pl
from jax.experimental.pallas import tpu as pltpu


# ---------------------------------------------------------------------------
# In-kernel helpers (f32)
# ---------------------------------------------------------------------------
def _layernorm_stats(x, eps=1e-5):
    """Pure normalization; the affine (gamma/beta) is folded into the next
    matmul's weight/bias on the wrapper side."""
    mu = jnp.mean(x, axis=-1, keepdims=True)
    xc = x - mu
    var = jnp.mean(xc * xc, axis=-1, keepdims=True)
    return xc * lax.rsqrt(var + eps)


def _new_gelu(x):
    c = math.sqrt(2.0 / math.pi)
    return 0.5 * x * (1.0 + jnp.tanh(c * (x + 0.044715 * x * x * x)))


# ---------------------------------------------------------------------------
# Pallas kernel: `batch_block` batch elements per grid step, folded into M
# ---------------------------------------------------------------------------
def block_kernel(x_ref,
                 wqkv_ref, bqkv_ref,
                 wo_ref, bo_ref,
                 wfc_ref, bfc_ref,
                 wpr_ref, bpr_ref,
                 o_ref,
                 *, n_head, head_dim, batch_block, seq_len):
    T = seq_len
    D = head_dim
    C = n_head * D

    x = x_ref[...]                                      # (M, C) f32, M = BB*T

    # --- ln_1 (f32 statistics; affine folded into wqkv/bqkv) ---
    x1 = _layernorm_stats(x)

    # --- fused QKV: one lane-dense (M, C) @ (C, 3C) bf16 matmul ---
    qkv = jnp.dot(x1.astype(jnp.bfloat16), wqkv_ref[...],
                  preferred_element_type=jnp.float32) + bqkv_ref[...]
    # (ln_1 gamma/beta and 1/sqrt(D) are already folded into wqkv/bqkv.)

    # Split once on 128-lane-aligned boundaries, cast to bf16 once.
    q_all = qkv[:, :C].astype(jnp.bfloat16)             # (M, C)
    k_all = qkv[:, C:2 * C].astype(jnp.bfloat16)        # (M, C)
    v_all = qkv[:, 2 * C:3 * C].astype(jnp.bfloat16)    # (M, C)

    # --- causal additive bias, built once ---
    row = lax.broadcasted_iota(jnp.int32, (T, T), 0)
    col = lax.broadcasted_iota(jnp.int32, (T, T), 1)
    mask_bias = jnp.where(col <= row, 0.0, -1e30).astype(jnp.float32)

    # --- attention: tiny per-(batch, head) score / softmax / PV blocks ---
    y_rows = []
    for b in range(batch_block):                        # static, unrolled
        r0 = b * T
        head_outs = []
        for h in range(n_head):                         # static, unrolled
            c0 = h * D
            q = q_all[r0:r0 + T, c0:c0 + D]
            k = k_all[r0:r0 + T, c0:c0 + D]
            v = v_all[r0:r0 + T, c0:c0 + D]
            s = lax.dot_general(q, k, (((1,), (1,)), ((), ())),
                                preferred_element_type=jnp.float32)
            s = s + mask_bias
            s = s - jnp.max(s, axis=-1, keepdims=True)
            p = jnp.exp(s)                              # f32 softmax
            p = p * pl.reciprocal(jnp.sum(p, axis=-1, keepdims=True),
                                  approx=True)
            head_outs.append(jnp.dot(p.astype(jnp.bfloat16), v,
                                     preferred_element_type=jnp.float32))
        y_rows.append(jnp.concatenate(head_outs, axis=-1))     # (T, C)
    y = jnp.concatenate(y_rows, axis=0) if batch_block > 1 else y_rows[0]

    # --- fused output projection: one (M, C) @ (C, C) bf16 matmul ---
    attn_out = jnp.dot(y.astype(jnp.bfloat16), wo_ref[...],
                       preferred_element_type=jnp.float32) + bo_ref[...]

    # --- residual 1 ---
    x2 = x + attn_out

    # --- ln_2 (affine folded into wfc/bfc) + MLP (two bf16 matmuls) ---
    x2n = _layernorm_stats(x2)
    h1 = _new_gelu(jnp.dot(x2n.astype(jnp.bfloat16), wfc_ref[...],
                           preferred_element_type=jnp.float32) + bfc_ref[...])
    mlp_out = jnp.dot(h1.astype(jnp.bfloat16), wpr_ref[...],
                      preferred_element_type=jnp.float32) + bpr_ref[...]

    o_ref[...] = x2 + mlp_out


# ---------------------------------------------------------------------------
# Wrapper
# ---------------------------------------------------------------------------
def gpt_block(x, params, *, n_head, batch_block=None):
    B, T, C = x.shape
    D = C // n_head
    F4 = 4 * C
    if batch_block is None:
        # Fold the whole batch into M (grid=(1,)) — best on single-TC
        # v5e/v6e.  On v7x pass batch_block=1 to shard batches over 2 TCs.
        batch_block = B
    assert B % batch_block == 0
    n_steps = B // batch_block
    M = batch_block * T

    f32 = jnp.float32

    # Fold 1/sqrt(D) into the Q columns of the fused QKV projection, and the
    # ln_1 affine (gamma/beta) into wqkv/bqkv:
    #   (xn*g + b) @ (W*s) + bias*s  ==  xn @ (g^T * W * s) + (b @ (W*s) + bias*s)
    qkv_scale = jnp.concatenate(
        [jnp.full((C,), 1.0 / math.sqrt(D), f32),
         jnp.ones((2 * C,), f32)])[None, :]                       # (1, 3C)
    w_qkv_s = params["wqkv"] * qkv_scale                          # (C, 3C) f32
    b_qkv_s = params["bqkv"] * qkv_scale                          # (1, 3C) f32
    wqkv = (params["ln1_g"].reshape(C, 1) * w_qkv_s).astype(jnp.bfloat16)
    bqkv = (params["ln1_b"] @ w_qkv_s + b_qkv_s).astype(f32)

    wo = params["wo"].astype(jnp.bfloat16)
    bo = params["bo"].astype(f32)

    # Fold the ln_2 affine into the MLP c_fc projection.
    wfc = (params["ln2_g"].reshape(C, 1) * params["wfc"]).astype(jnp.bfloat16)
    bfc = (params["ln2_b"] @ params["wfc"] + params["bfc"]).astype(f32)

    wpr = params["wpr"].astype(jnp.bfloat16)
    bpr = params["bpr"].astype(f32)

    x2d = x.reshape(B * T, C)        # lane/sublane-dense 2-D slab

    full = lambda shape: pl.BlockSpec(shape, lambda g: (0,) * len(shape))

    kernel = functools.partial(block_kernel, n_head=n_head, head_dim=D,
                               batch_block=batch_block, seq_len=T)

    out2d = pl.pallas_call(
        kernel,
        out_shape=jax.ShapeDtypeStruct((B * T, C), jnp.float32),
        grid_spec=pltpu.PrefetchScalarGridSpec(
            num_scalar_prefetch=0,
            grid=(n_steps,),
            in_specs=[
                pl.BlockSpec((M, C), lambda g: (g, 0)),         # x
                full((C, 3 * C)), full((1, 3 * C)),             # wqkv, bqkv
                full((C, C)), full((1, C)),                     # wo, bo
                full((C, F4)), full((1, F4)),                   # wfc, bfc
                full((F4, C)), full((1, C)),                    # wpr, bpr
            ],
            out_specs=pl.BlockSpec((M, C), lambda g: (g, 0)),
        ),
        compiler_params=pltpu.CompilerParams(
            dimension_semantics=("parallel",)),
    )(x2d, wqkv, bqkv, wo, bo, wfc, bfc, wpr, bpr)

    return out2d.reshape(B, T, C)


# ---------------------------------------------------------------------------
# Pure-JAX f32 reference (matches the PyTorch module)
# ---------------------------------------------------------------------------
def gpt_block_ref(x, p, *, n_head):
    B, T, C = x.shape
    D = C // n_head

    def ln(v, g, b):
        mu = v.mean(-1, keepdims=True)
        var = ((v - mu) ** 2).mean(-1, keepdims=True)
        return (v - mu) / jnp.sqrt(var + 1e-5) * g + b

    x1 = ln(x, p["ln1_g"], p["ln1_b"])
    qkv = x1 @ p["wqkv"] + p["bqkv"]
    q, k, v = jnp.split(qkv, 3, axis=-1)
    q = q.reshape(B, T, n_head, D).transpose(0, 2, 1, 3)
    k = k.reshape(B, T, n_head, D).transpose(0, 2, 1, 3)
    v = v.reshape(B, T, n_head, D).transpose(0, 2, 1, 3)
    s = jnp.einsum('bhtd,bhsd->bhts', q, k) / math.sqrt(D)
    mask = jnp.tril(jnp.ones((T, T), bool))
    s = jnp.where(mask, s, -1e30)
    att = jax.nn.softmax(s, axis=-1)
    y = jnp.einsum('bhts,bhsd->bhtd', att, v)
    y = y.transpose(0, 2, 1, 3).reshape(B, T, C)
    attn_out = y @ p["wo"] + p["bo"]
    x2 = x + attn_out
    x2n = ln(x2, p["ln2_g"], p["ln2_b"])
    h1 = x2n @ p["wfc"] + p["bfc"]
    c = math.sqrt(2.0 / math.pi)
    h1 = 0.5 * h1 * (1.0 + jnp.tanh(c * (h1 + 0.044715 * h1 ** 3)))
    return x2 + h1 @ p["wpr"] + p["bpr"]


# ---------------------------------------------------------------------------
def make_params(key, C, n_head):
    F4 = 4 * C
    ks = jax.random.split(key, 10)
    std = 0.02
    return {
        "ln1_g": 1.0 + 0.1 * jax.random.normal(ks[0], (1, C), jnp.float32),
        "ln1_b": 0.1 * jax.random.normal(ks[1], (1, C), jnp.float32),
        "wqkv": std * jax.random.normal(ks[2], (C, 3 * C), jnp.float32),
        "bqkv": std * jax.random.normal(ks[3], (1, 3 * C), jnp.float32),
        "wo": std * jax.random.normal(ks[4], (C, C), jnp.float32),
        "bo": jnp.zeros((1, C), jnp.float32),
        "ln2_g": 1.0 + 0.1 * jax.random.normal(ks[5], (1, C), jnp.float32),
        "ln2_b": 0.1 * jax.random.normal(ks[6], (1, C), jnp.float32),
        "wfc": std * jax.random.normal(ks[7], (C, F4), jnp.float32),
        "bfc": std * jax.random.normal(ks[8], (1, F4), jnp.float32),
        "wpr": std * jax.random.normal(ks[9], (F4, C), jnp.float32),
        "bpr": jnp.zeros((1, C), jnp.float32),
    }


if __name__ == "__main__":
    # CustomConfig: n_embd=256, n_head=8, block_size=64; small batch B=2.
    B, T, C, H = 2, 64, 256, 8

    key = jax.random.PRNGKey(0)
    kx, kp = jax.random.split(key)
    x = jax.random.normal(kx, (B, T, C), jnp.float32)
    params = make_params(kp, C, H)

    out = jax.block_until_ready(gpt_block(x, params, n_head=H))
    ref = jax.block_until_ready(gpt_block_ref(x, params, n_head=H))

    assert out.shape == (B, T, C)
    assert bool(jnp.all(jnp.isfinite(out)))
    err = float(jnp.max(jnp.abs(out - ref)))
    assert bool(jnp.allclose(out, ref, atol=2e-2, rtol=2e-2)), err

    print("KERNEL_OK")
</pallas_src>

<mosaic_0001>
module attributes {stable_mosaic.version = 11 : i64} {
  func.func @block_kernel(%arg0: i32, %arg1: memref<128x256xf32, #tpu.memory_space<vmem>>, %arg2: memref<256x768xbf16, #tpu.memory_space<vmem>>, %arg3: memref<1x768xf32, #tpu.memory_space<vmem>>, %arg4: memref<256x256xbf16, #tpu.memory_space<vmem>>, %arg5: memref<1x256xf32, #tpu.memory_space<vmem>>, %arg6: memref<256x1024xbf16, #tpu.memory_space<vmem>>, %arg7: memref<1x1024xf32, #tpu.memory_space<vmem>>, %arg8: memref<1024x256xbf16, #tpu.memory_space<vmem>>, %arg9: memref<1x256xf32, #tpu.memory_space<vmem>>, %arg10: memref<128x256xf32, #tpu.memory_space<vmem>>) attributes {dimension_semantics = [#tpu.dimension_semantics<parallel>], iteration_bounds = array<i64: 1>, scalar_prefetch = 0 : i64, scratch_operands = 0 : i64, tpu.core_type = #tpu.core_type<tc>, window_params = [{transform_indices = @transform_0, window_bounds = array<i64: 128, 256>}, {pipeline_mode = #tpu.pipeline_mode<synchronous>, transform_indices = @transform_1, window_bounds = array<i64: 256, 768>}, {pipeline_mode = #tpu.pipeline_mode<synchronous>, transform_indices = @transform_2, window_bounds = array<i64: 1, 768>}, {pipeline_mode = #tpu.pipeline_mode<synchronous>, transform_indices = @transform_3, window_bounds = array<i64: 256, 256>}, {pipeline_mode = #tpu.pipeline_mode<synchronous>, transform_indices = @transform_4, window_bounds = array<i64: 1, 256>}, {pipeline_mode = #tpu.pipeline_mode<synchronous>, transform_indices = @transform_5, window_bounds = array<i64: 256, 1024>}, {pipeline_mode = #tpu.pipeline_mode<synchronous>, transform_indices = @transform_6, window_bounds = array<i64: 1, 1024>}, {pipeline_mode = #tpu.pipeline_mode<synchronous>, transform_indices = @transform_7, window_bounds = array<i64: 1024, 256>}, {pipeline_mode = #tpu.pipeline_mode<synchronous>, transform_indices = @transform_8, window_bounds = array<i64: 1, 256>}, {transform_indices = @transform_9, window_bounds = array<i64: 128, 256>}]} {
    %c0 = arith.constant 0 : index
    %c0_0 = arith.constant 0 : index
    %0 = vector.load %arg1[%c0, %c0_0] : memref<128x256xf32, #tpu.memory_space<vmem>>, vector<128x256xf32>
    %cst = arith.constant dense<0.000000e+00> : vector<128xf32>
    %1 = vector.multi_reduction <add>, %0, %cst [1] : vector<128x256xf32> to vector<128xf32>
    %2 = vector.shape_cast %1 : vector<128xf32> to vector<128x1xf32>
    %cst_1 = arith.constant 2.560000e+02 : f32
    %3 = vector.broadcast %cst_1 : f32 to vector<128x1xf32>
    %4 = arith.divf %2, %3 : vector<128x1xf32>
    %5 = vector.broadcast %4 : vector<128x1xf32> to vector<128x256xf32>
    %6 = arith.subf %0, %5 : vector<128x256xf32>
    %7 = arith.mulf %6, %6 : vector<128x256xf32>
    %cst_2 = arith.constant dense<0.000000e+00> : vector<128xf32>
    %8 = vector.multi_reduction <add>, %7, %cst_2 [1] : vector<128x256xf32> to vector<128xf32>
    %9 = vector.shape_cast %8 : vector<128xf32> to vector<128x1xf32>
    %cst_3 = arith.constant 2.560000e+02 : f32
    %10 = vector.broadcast %cst_3 : f32 to vector<128x1xf32>
    %11 = arith.divf %9, %10 : vector<128x1xf32>
    %cst_4 = arith.constant 9.99999974E-6 : f32
    %12 = vector.broadcast %cst_4 : f32 to vector<128x1xf32>
    %13 = arith.addf %11, %12 : vector<128x1xf32>
    %14 = math.rsqrt %13 : vector<128x1xf32>
    %15 = vector.broadcast %14 : vector<128x1xf32> to vector<128x256xf32>
    %16 = arith.mulf %6, %15 : vector<128x256xf32>
    %17 = arith.truncf %16 : vector<128x256xf32> to vector<128x256xbf16>
    %c0_5 = arith.constant 0 : index
    %c0_6 = arith.constant 0 : index
    %18 = vector.load %arg2[%c0_5, %c0_6] : memref<256x768xbf16, #tpu.memory_space<vmem>>, vector<256x768xbf16>
    %cst_7 = arith.constant dense<0.000000e+00> : vector<128x768xf32>
    %19 = tpu.matmul %17, %18, %cst_7 {dimension_numbers = #tpu.dot_dimension_numbers<[1], [0], [0], [1], [0, 0, 1, 1], [], []>} : vector<128x256xbf16>, vector<256x768xbf16>, vector<128x768xf32> -> vector<128x768xf32>
    %c0_8 = arith.constant 0 : index
    %c0_9 = arith.constant 0 : index
    %20 = vector.load %arg3[%c0_8, %c0_9] : memref<1x768xf32, #tpu.memory_space<vmem>>, vector<1x768xf32>
    %21 = vector.broadcast %20 : vector<1x768xf32> to vector<128x768xf32>
    %22 = arith.addf %19, %21 : vector<128x768xf32>
    %23 = vector.extract_strided_slice %22 {offsets = [0, 0], sizes = [128, 256], strides = [1, 1]} : vector<128x768xf32> to vector<128x256xf32>
    %24 = arith.truncf %23 : vector<128x256xf32> to vector<128x256xbf16>
    %25 = vector.extract_strided_slice %22 {offsets = [0, 256], sizes = [128, 256], strides = [1, 1]} : vector<128x768xf32> to vector<128x256xf32>
    %26 = arith.truncf %25 : vector<128x256xf32> to vector<128x256xbf16>
    %27 = vector.extract_strided_slice %22 {offsets = [0, 512], sizes = [128, 256], strides = [1, 1]} : vector<128x768xf32> to vector<128x256xf32>
    %28 = arith.truncf %27 : vector<128x256xf32> to vector<128x256xbf16>
    %29 = tpu.iota {dimensions = array<i32: 0>} : vector<64x64xi32>
    %30 = tpu.iota {dimensions = array<i32: 1>} : vector<64x64xi32>
    %31 = arith.cmpi sle, %30, %29 : vector<64x64xi32>
    %cst_10 = arith.constant 0.000000e+00 : f32
    %cst_11 = arith.constant -1.000000e+30 : f32
    %32 = vector.broadcast %cst_10 : f32 to vector<64x64xf32>
    %33 = vector.broadcast %cst_11 : f32 to vector<64x64xf32>
    %34 = arith.select %31, %32, %33 : vector<64x64xi1>, vector<64x64xf32>
    %35 = vector.extract_strided_slice %24 {offsets = [0, 0], sizes = [64, 32], strides = [1, 1]} : vector<128x256xbf16> to vector<64x32xbf16>
    %36 = vector.extract_strided_slice %26 {offsets = [0, 0], sizes = [64, 32], strides = [1, 1]} : vector<128x256xbf16> to vector<64x32xbf16>
    %37 = vector.extract_strided_slice %28 {offsets = [0, 0], sizes = [64, 32], strides = [1, 1]} : vector<128x256xbf16> to vector<64x32xbf16>
    %cst_12 = arith.constant dense<0.000000e+00> : vector<64x64xf32>
    %38 = tpu.matmul %35, %36, %cst_12 {dimension_numbers = #tpu.dot_dimension_numbers<[1], [1], [0], [0], [0, 0, 1, 0], [], []>} : vector<64x32xbf16>, vector<64x32xbf16>, vector<64x64xf32> -> vector<64x64xf32>
    %39 = arith.addf %38, %34 : vector<64x64xf32>
    %cst_13 = arith.constant dense<0xFF800000> : vector<64xf32>
    %40 = vector.multi_reduction <maximumf>, %39, %cst_13 [1] : vector<64x64xf32> to vector<64xf32>
    %41 = vector.shape_cast %40 : vector<64xf32> to vector<64x1xf32>
    %42 = vector.broadcast %41 : vector<64x1xf32> to vector<64x64xf32>
    %43 = arith.subf %39, %42 : vector<64x64xf32>
    %44 = math.exp %43 : vector<64x64xf32>
    %cst_14 = arith.constant dense<0.000000e+00> : vector<64xf32>
    %45 = vector.multi_reduction <add>, %44, %cst_14 [1] : vector<64x64xf32> to vector<64xf32>
    %46 = vector.shape_cast %45 : vector<64xf32> to vector<64x1xf32>
    %47 = tpu.reciprocal %46 {approx = true} : vector<64x1xf32> -> vector<64x1xf32>
    %48 = vector.broadcast %47 : vector<64x1xf32> to vector<64x64xf32>
    %49 = arith.mulf %44, %48 : vector<64x64xf32>
    %50 = arith.truncf %49 : vector<64x64xf32> to vector<64x64xbf16>
    %cst_15 = arith.constant dense<0.000000e+00> : vector<64x32xf32>
    %51 = tpu.matmul %50, %37, %cst_15 {dimension_numbers = #tpu.dot_dimension_numbers<[1], [0], [0], [1], [0, 0, 1, 1], [], []>} : vector<64x64xbf16>, vector<64x32xbf16>, vector<64x32xf32> -> vector<64x32xf32>
    %52 = vector.extract_strided_slice %24 {offsets = [0, 32], sizes = [64, 32], strides = [1, 1]} : vector<128x256xbf16> to vector<64x32xbf16>
    %53 = vector.extract_strided_slice %26 {offsets = [0, 32], sizes = [64, 32], strides = [1, 1]} : vector<128x256xbf16> to vector<64x32xbf16>
    %54 = vector.extract_strided_slice %28 {offsets = [0, 32], sizes = [64, 32], strides = [1, 1]} : vector<128x256xbf16> to vector<64x32xbf16>
    %cst_16 = arith.constant dense<0.000000e+00> : vector<64x64xf32>
    %55 = tpu.matmul %52, %53, %cst_16 {dimension_numbers = #tpu.dot_dimension_numbers<[1], [1], [0], [0], [0, 0, 1, 0], [], []>} : vector<64x32xbf16>, vector<64x32xbf16>, vector<64x64xf32> -> vector<64x64xf32>
    %56 = arith.addf %55, %34 : vector<64x64xf32>
    %cst_17 = arith.constant dense<0xFF800000> : vector<64xf32>
    %57 = vector.multi_reduction <maximumf>, %56, %cst_17 [1] : vector<64x64xf32> to vector<64xf32>
    %58 = vector.shape_cast %57 : vector<64xf32> to vector<64x1xf32>
    %59 = vector.broadcast %58 : vector<64x1xf32> to vector<64x64xf32>
    %60 = arith.subf %56, %59 : vector<64x64xf32>
    %61 = math.exp %60 : vector<64x64xf32>
    %cst_18 = arith.constant dense<0.000000e+00> : vector<64xf32>
    %62 = vector.multi_reduction <add>, %61, %cst_18 [1] : vector<64x64xf32> to vector<64xf32>
    %63 = vector.shape_cast %62 : vector<64xf32> to vector<64x1xf32>
    %64 = tpu.reciprocal %63 {approx = true} : vector<64x1xf32> -> vector<64x1xf32>
    %65 = vector.broadcast %64 : vector<64x1xf32> to vector<64x64xf32>
    %66 = arith.mulf %61, %65 : vector<64x64xf32>
    %67 = arith.truncf %66 : vector<64x64xf32> to vector<64x64xbf16>
    %cst_19 = arith.constant dense<0.000000e+00> : vector<64x32xf32>
    %68 = tpu.matmul %67, %54, %cst_19 {dimension_numbers = #tpu.dot_dimension_numbers<[1], [0], [0], [1], [0, 0, 1, 1], [], []>} : vector<64x64xbf16>, vector<64x32xbf16>, vector<64x32xf32> -> vector<64x32xf32>
    %69 = vector.extract_strided_slice %24 {offsets = [0, 64], sizes = [64, 32], strides = [1, 1]} : vector<128x256xbf16> to vector<64x32xbf16>
    %70 = vector.extract_strided_slice %26 {offsets = [0, 64], sizes = [64, 32], strides = [1, 1]} : vector<128x256xbf16> to vector<64x32xbf16>
    %71 = vector.extract_strided_slice %28 {offsets = [0, 64], sizes = [64, 32], strides = [1, 1]} : vector<128x256xbf16> to vector<64x32xbf16>
    %cst_20 = arith.constant dense<0.000000e+00> : vector<64x64xf32>
    %72 = tpu.matmul %69, %70, %cst_20 {dimension_numbers = #tpu.dot_dimension_numbers<[1], [1], [0], [0], [0, 0, 1, 0], [], []>} : vector<64x32xbf16>, vector<64x32xbf16>, vector<64x64xf32> -> vector<64x64xf32>
    %73 = arith.addf %72, %34 : vector<64x64xf32>
    %cst_21 = arith.constant dense<0xFF800000> : vector<64xf32>
    %74 = vector.multi_reduction <maximumf>, %73, %cst_21 [1] : vector<64x64xf32> to vector<64xf32>
    %75 = vector.shape_cast %74 : vector<64xf32> to vector<64x1xf32>
    %76 = vector.broadcast %75 : vector<64x1xf32> to vector<64x64xf32>
    %77 = arith.subf %73, %76 : vector<64x64xf32>
    %78 = math.exp %77 : vector<64x64xf32>
    %cst_22 = arith.constant dense<0.000000e+00> : vector<64xf32>
    %79 = vector.multi_reduction <add>, %78, %cst_22 [1] : vector<64x64xf32> to vector<64xf32>
    %80 = vector.shape_cast %79 : vector<64xf32> to vector<64x1xf32>
    %81 = tpu.reciprocal %80 {approx = true} : vector<64x1xf32> -> vector<64x1xf32>
    %82 = vector.broadcast %81 : vector<64x1xf32> to vector<64x64xf32>
    %83 = arith.mulf %78, %82 : vector<64x64xf32>
    %84 = arith.truncf %83 : vector<64x64xf32> to vector<64x64xbf16>
    %cst_23 = arith.constant dense<0.000000e+00> : vector<64x32xf32>
    %85 = tpu.matmul %84, %71, %cst_23 {dimension_numbers = #tpu.dot_dimension_numbers<[1], [0], [0], [1], [0, 0, 1, 1], [], []>} : vector<64x64xbf16>, vector<64x32xbf16>, vector<64x32xf32> -> vector<64x32xf32>
    %86 = vector.extract_strided_slice %24 {offsets = [0, 96], sizes = [64, 32], strides = [1, 1]} : vector<128x256xbf16> to vector<64x32xbf16>
    %87 = vector.extract_strided_slice %26 {offsets = [0, 96], sizes = [64, 32], strides = [1, 1]} : vector<128x256xbf16> to vector<64x32xbf16>
    %88 = vector.extract_strided_slice %28 {offsets = [0, 96], sizes = [64, 32], strides = [1, 1]} : vector<128x256xbf16> to vector<64x32xbf16>
    %cst_24 = arith.constant dense<0.000000e+00> : vector<64x64xf32>
    %89 = tpu.matmul %86, %87, %cst_24 {dimension_numbers = #tpu.dot_dimension_numbers<[1], [1], [0], [0], [0, 0, 1, 0], [], []>} : vector<64x32xbf16>, vector<64x32xbf16>, vector<64x64xf32> -> vector<64x64xf32>
    %90 = arith.addf %89, %34 : vector<64x64xf32>
    %cst_25 = arith.constant dense<0xFF800000> : vector<64xf32>
    %91 = vector.multi_reduction <maximumf>, %90, %cst_25 [1] : vector<64x64xf32> to vector<64xf32>
    %92 = vector.shape_cast %91 : vector<64xf32> to vector<64x1xf32>
    %93 = vector.broadcast %92 : vector<64x1xf32> to vector<64x64xf32>
    %94 = arith.subf %90, %93 : vector<64x64xf32>
    %95 = math.exp %94 : vector<64x64xf32>
    %cst_26 = arith.constant dense<0.000000e+00> : vector<64xf32>
    %96 = vector.multi_reduction <add>, %95, %cst_26 [1] : vector<64x64xf32> to vector<64xf32>
    %97 = vector.shape_cast %96 : vector<64xf32> to vector<64x1xf32>
    %98 = tpu.reciprocal %97 {approx = true} : vector<64x1xf32> -> vector<64x1xf32>
    %99 = vector.broadcast %98 : vector<64x1xf32> to vector<64x64xf32>
    %100 = arith.mulf %95, %99 : vector<64x64xf32>
    %101 = arith.truncf %100 : vector<64x64xf32> to vector<64x64xbf16>
    %cst_27 = arith.constant dense<0.000000e+00> : vector<64x32xf32>
    %102 = tpu.matmul %101, %88, %cst_27 {dimension_numbers = #tpu.dot_dimension_numbers<[1], [0], [0], [1], [0, 0, 1, 1], [], []>} : vector<64x64xbf16>, vector<64x32xbf16>, vector<64x32xf32> -> vector<64x32xf32>
    %103 = vector.extract_strided_slice %24 {offsets = [0, 128], sizes = [64, 32], strides = [1, 1]} : vector<128x256xbf16> to vector<64x32xbf16>
    %104 = vector.extract_strided_slice %26 {offsets = [0, 128], sizes = [64, 32], strides = [1, 1]} : vector<128x256xbf16> to vector<64x32xbf16>
    %105 = vector.extract_strided_slice %28 {offsets = [0, 128], sizes = [64, 32], strides = [1, 1]} : vector<128x256xbf16> to vector<64x32xbf16>
    %cst_28 = arith.constant dense<0.000000e+00> : vector<64x64xf32>
    %106 = tpu.matmul %103, %104, %cst_28 {dimension_numbers = #tpu.dot_dimension_numbers<[1], [1], [0], [0], [0, 0, 1, 0], [], []>} : vector<64x32xbf16>, vector<64x32xbf16>, vector<64x64xf32> -> vector<64x64xf32>
    %107 = arith.addf %106, %34 : vector<64x64xf32>
    %cst_29 = arith.constant dense<0xFF800000> : vector<64xf32>
    %108 = vector.multi_reduction <maximumf>, %107, %cst_29 [1] : vector<64x64xf32> to vector<64xf32>
    %109 = vector.shape_cast %108 : vector<64xf32> to vector<64x1xf32>
    %110 = vector.broadcast %109 : vector<64x1xf32> to vector<64x64xf32>
    %111 = arith.subf %107, %110 : vector<64x64xf32>
    %112 = math.exp %111 : vector<64x64xf32>
    %cst_30 = arith.constant dense<0.000000e+00> : vector<64xf32>
    %113 = vector.multi_reduction <add>, %112, %cst_30 [1] : vector<64x64xf32> to vector<64xf32>
    %114 = vector.shape_cast %113 : vector<64xf32> to vector<64x1xf32>
    %115 = tpu.reciprocal %114 {approx = true} : vector<64x1xf32> -> vector<64x1xf32>
    %116 = vector.broadcast %115 : vector<64x1xf32> to vector<64x64xf32>
    %117 = arith.mulf %112, %116 : vector<64x64xf32>
    %118 = arith.truncf %117 : vector<64x64xf32> to vector<64x64xbf16>
    %cst_31 = arith.constant dense<0.000000e+00> : vector<64x32xf32>
    %119 = tpu.matmul %118, %105, %cst_31 {dimension_numbers = #tpu.dot_dimension_numbers<[1], [0], [0], [1], [0, 0, 1, 1], [], []>} : vector<64x64xbf16>, vector<64x32xbf16>, vector<64x32xf32> -> vector<64x32xf32>
    %120 = vector.extract_strided_slice %24 {offsets = [0, 160], sizes = [64, 32], strides = [1, 1]} : vector<128x256xbf16> to vector<64x32xbf16>
    %121 = vector.extract_strided_slice %26 {offsets = [0, 160], sizes = [64, 32], strides = [1, 1]} : vector<128x256xbf16> to vector<64x32xbf16>
    %122 = vector.extract_strided_slice %28 {offsets = [0, 160], sizes = [64, 32], strides = [1, 1]} : vector<128x256xbf16> to vector<64x32xbf16>
    %cst_32 = arith.constant dense<0.000000e+00> : vector<64x64xf32>
    %123 = tpu.matmul %120, %121, %cst_32 {dimension_numbers = #tpu.dot_dimension_numbers<[1], [1], [0], [0], [0, 0, 1, 0], [], []>} : vector<64x32xbf16>, vector<64x32xbf16>, vector<64x64xf32> -> vector<64x64xf32>
    %124 = arith.addf %123, %34 : vector<64x64xf32>
    %cst_33 = arith.constant dense<0xFF800000> : vector<64xf32>
    %125 = vector.multi_reduction <maximumf>, %124, %cst_33 [1] : vector<64x64xf32> to vector<64xf32>
    %126 = vector.shape_cast %125 : vector<64xf32> to vector<64x1xf32>
    %127 = vector.broadcast %126 : vector<64x1xf32> to vector<64x64xf32>
    %128 = arith.subf %124, %127 : vector<64x64xf32>
    %129 = math.exp %128 : vector<64x64xf32>
    %cst_34 = arith.constant dense<0.000000e+00> : vector<64xf32>
    %130 = vector.multi_reduction <add>, %129, %cst_34 [1] : vector<64x64xf32> to vector<64xf32>
    %131 = vector.shape_cast %130 : vector<64xf32> to vector<64x1xf32>
    %132 = tpu.reciprocal %131 {approx = true} : vector<64x1xf32> -> vector<64x1xf32>
    %133 = vector.broadcast %132 : vector<64x1xf32> to vector<64x64xf32>
    %134 = arith.mulf %129, %133 : vector<64x64xf32>
    %135 = arith.truncf %134 : vector<64x64xf32> to vector<64x64xbf16>
    %cst_35 = arith.constant dense<0.000000e+00> : vector<64x32xf32>
    %136 = tpu.matmul %135, %122, %cst_35 {dimension_numbers = #tpu.dot_dimension_numbers<[1], [0], [0], [1], [0, 0, 1, 1], [], []>} : vector<64x64xbf16>, vector<64x32xbf16>, vector<64x32xf32> -> vector<64x32xf32>
    %137 = vector.extract_strided_slice %24 {offsets = [0, 192], sizes = [64, 32], strides = [1, 1]} : vector<128x256xbf16> to vector<64x32xbf16>
    %138 = vector.extract_strided_slice %26 {offsets = [0, 192], sizes = [64, 32], strides = [1, 1]} : vector<128x256xbf16> to vector<64x32xbf16>
    %139 = vector.extract_strided_slice %28 {offsets = [0, 192], sizes = [64, 32], strides = [1, 1]} : vector<128x256xbf16> to vector<64x32xbf16>
    %cst_36 = arith.constant dense<0.000000e+00> : vector<64x64xf32>
    %140 = tpu.matmul %137, %138, %cst_36 {dimension_numbers = #tpu.dot_dimension_numbers<[1], [1], [0], [0], [0, 0, 1, 0], [], []>} : vector<64x32xbf16>, vector<64x32xbf16>, vector<64x64xf32> -> vector<64x64xf32>
    %141 = arith.addf %140, %34 : vector<64x64xf32>
    %cst_37 = arith.constant dense<0xFF800000> : vector<64xf32>
    %142 = vector.multi_reduction <maximumf>, %141, %cst_37 [1] : vector<64x64xf32> to vector<64xf32>
    %143 = vector.shape_cast %142 : vector<64xf32> to vector<64x1xf32>
    %144 = vector.broadcast %143 : vector<64x1xf32> to vector<64x64xf32>
    %145 = arith.subf %141, %144 : vector<64x64xf32>
    %146 = math.exp %145 : vector<64x64xf32>
    %cst_38 = arith.constant dense<0.000000e+00> : vector<64xf32>
    %147 = vector.multi_reduction <add>, %146, %cst_38 [1] : vector<64x64xf32> to vector<64xf32>
    %148 = vector.shape_cast %147 : vector<64xf32> to vector<64x1xf32>
    %149 = tpu.reciprocal %148 {approx = true} : vector<64x1xf32> -> vector<64x1xf32>
    %150 = vector.broadcast %149 : vector<64x1xf32> to vector<64x64xf32>
    %151 = arith.mulf %146, %150 : vector<64x64xf32>
    %152 = arith.truncf %151 : vector<64x64xf32> to vector<64x64xbf16>
    %cst_39 = arith.constant dense<0.000000e+00> : vector<64x32xf32>
    %153 = tpu.matmul %152, %139, %cst_39 {dimension_numbers = #tpu.dot_dimension_numbers<[1], [0], [0], [1], [0, 0, 1, 1], [], []>} : vector<64x64xbf16>, vector<64x32xbf16>, vector<64x32xf32> -> vector<64x32xf32>
    %154 = vector.extract_strided_slice %24 {offsets = [0, 224], sizes = [64, 32], strides = [1, 1]} : vector<128x256xbf16> to vector<64x32xbf16>
    %155 = vector.extract_strided_slice %26 {offsets = [0, 224], sizes = [64, 32], strides = [1, 1]} : vector<128x256xbf16> to vector<64x32xbf16>
    %156 = vector.extract_strided_slice %28 {offsets = [0, 224], sizes = [64, 32], strides = [1, 1]} : vector<128x256xbf16> to vector<64x32xbf16>
    %cst_40 = arith.constant dense<0.000000e+00> : vector<64x64xf32>
    %157 = tpu.matmul %154, %155, %cst_40 {dimension_numbers = #tpu.dot_dimension_numbers<[1], [1], [0], [0], [0, 0, 1, 0], [], []>} : vector<64x32xbf16>, vector<64x32xbf16>, vector<64x64xf32> -> vector<64x64xf32>
    %158 = arith.addf %157, %34 : vector<64x64xf32>
    %cst_41 = arith.constant dense<0xFF800000> : vector<64xf32>
    %159 = vector.multi_reduction <maximumf>, %158, %cst_41 [1] : vector<64x64xf32> to vector<64xf32>
    %160 = vector.shape_cast %159 : vector<64xf32> to vector<64x1xf32>
    %161 = vector.broadcast %160 : vector<64x1xf32> to vector<64x64xf32>
    %162 = arith.subf %158, %161 : vector<64x64xf32>
    %163 = math.exp %162 : vector<64x64xf32>
    %cst_42 = arith.constant dense<0.000000e+00> : vector<64xf32>
    %164 = vector.multi_reduction <add>, %163, %cst_42 [1] : vector<64x64xf32> to vector<64xf32>
    %165 = vector.shape_cast %164 : vector<64xf32> to vector<64x1xf32>
    %166 = tpu.reciprocal %165 {approx = true} : vector<64x1xf32> -> vector<64x1xf32>
    %167 = vector.broadcast %166 : vector<64x1xf32> to vector<64x64xf32>
    %168 = arith.mulf %163, %167 : vector<64x64xf32>
    %169 = arith.truncf %168 : vector<64x64xf32> to vector<64x64xbf16>
    %cst_43 = arith.constant dense<0.000000e+00> : vector<64x32xf32>
    %170 = tpu.matmul %169, %156, %cst_43 {dimension_numbers = #tpu.dot_dimension_numbers<[1], [0], [0], [1], [0, 0, 1, 1], [], []>} : vector<64x64xbf16>, vector<64x32xbf16>, vector<64x32xf32> -> vector<64x32xf32>
    %171 = tpu.concatenate %51, %68, %85, %102, %119, %136, %153, %170 in 1 : vector<64x32xf32>, vector<64x32xf32>, vector<64x32xf32>, vector<64x32xf32>, vector<64x32xf32>, vector<64x32xf32>, vector<64x32xf32>, vector<64x32xf32> -> vector<64x256xf32>
    %172 = vector.extract_strided_slice %24 {offsets = [64, 0], sizes = [64, 32], strides = [1, 1]} : vector<128x256xbf16> to vector<64x32xbf16>
    %173 = vector.extract_strided_slice %26 {offsets = [64, 0], sizes = [64, 32], strides = [1, 1]} : vector<128x256xbf16> to vector<64x32xbf16>
    %174 = vector.extract_strided_slice %28 {offsets = [64, 0], sizes = [64, 32], strides = [1, 1]} : vector<128x256xbf16> to vector<64x32xbf16>
    %cst_44 = arith.constant dense<0.000000e+00> : vector<64x64xf32>
    %175 = tpu.matmul %172, %173, %cst_44 {dimension_numbers = #tpu.dot_dimension_numbers<[1], [1], [0], [0], [0, 0, 1, 0], [], []>} : vector<64x32xbf16>, vector<64x32xbf16>, vector<64x64xf32> -> vector<64x64xf32>
    %176 = arith.addf %175, %34 : vector<64x64xf32>
    %cst_45 = arith.constant dense<0xFF800000> : vector<64xf32>
    %177 = vector.multi_reduction <maximumf>, %176, %cst_45 [1] : vector<64x64xf32> to vector<64xf32>
    %178 = vector.shape_cast %177 : vector<64xf32> to vector<64x1xf32>
    %179 = vector.broadcast %178 : vector<64x1xf32> to vector<64x64xf32>
    %180 = arith.subf %176, %179 : vector<64x64xf32>
    %181 = math.exp %180 : vector<64x64xf32>
    %cst_46 = arith.constant dense<0.000000e+00> : vector<64xf32>
    %182 = vector.multi_reduction <add>, %181, %cst_46 [1] : vector<64x64xf32> to vector<64xf32>
    %183 = vector.shape_cast %182 : vector<64xf32> to vector<64x1xf32>
    %184 = tpu.reciprocal %183 {approx = true} : vector<64x1xf32> -> vector<64x1xf32>
    %185 = vector.broadcast %184 : vector<64x1xf32> to vector<64x64xf32>
    %186 = arith.mulf %181, %185 : vector<64x64xf32>
    %187 = arith.truncf %186 : vector<64x64xf32> to vector<64x64xbf16>
    %cst_47 = arith.constant dense<0.000000e+00> : vector<64x32xf32>
    %188 = tpu.matmul %187, %174, %cst_47 {dimension_numbers = #tpu.dot_dimension_numbers<[1], [0], [0], [1], [0, 0, 1, 1], [], []>} : vector<64x64xbf16>, vector<64x32xbf16>, vector<64x32xf32> -> vector<64x32xf32>
    %189 = vector.extract_strided_slice %24 {offsets = [64, 32], sizes = [64, 32], strides = [1, 1]} : vector<128x256xbf16> to vector<64x32xbf16>
    %190 = vector.extract_strided_slice %26 {offsets = [64, 32], sizes = [64, 32], strides = [1, 1]} : vector<128x256xbf16> to vector<64x32xbf16>
    %191 = vector.extract_strided_slice %28 {offsets = [64, 32], sizes = [64, 32], strides = [1, 1]} : vector<128x256xbf16> to vector<64x32xbf16>
    %cst_48 = arith.constant dense<0.000000e+00> : vector<64x64xf32>
    %192 = tpu.matmul %189, %190, %cst_48 {dimension_numbers = #tpu.dot_dimension_numbers<[1], [1], [0], [0], [0, 0, 1, 0], [], []>} : vector<64x32xbf16>, vector<64x32xbf16>, vector<64x64xf32> -> vector<64x64xf32>
    %193 = arith.addf %192, %34 : vector<64x64xf32>
    %cst_49 = arith.constant dense<0xFF800000> : vector<64xf32>
    %194 = vector.multi_reduction <maximumf>, %193, %cst_49 [1] : vector<64x64xf32> to vector<64xf32>
    %195 = vector.shape_cast %194 : vector<64xf32> to vector<64x1xf32>
    %196 = vector.broadcast %195 : vector<64x1xf32> to vector<64x64xf32>
    %197 = arith.subf %193, %196 : vector<64x64xf32>
    %198 = math.exp %197 : vector<64x64xf32>
    %cst_50 = arith.constant dense<0.000000e+00> : vector<64xf32>
    %199 = vector.multi_reduction <add>, %198, %cst_50 [1] : vector<64x64xf32> to vector<64xf32>
    %200 = vector.shape_cast %199 : vector<64xf32> to vector<64x1xf32>
    %201 = tpu.reciprocal %200 {approx = true} : vector<64x1xf32> -> vector<64x1xf32>
    %202 = vector.broadcast %201 : vector<64x1xf32> to vector<64x64xf32>
    %203 = arith.mulf %198, %202 : vector<64x64xf32>
    %204 = arith.truncf %203 : vector<64x64xf32> to vector<64x64xbf16>
    %cst_51 = arith.constant dense<0.000000e+00> : vector<64x32xf32>
    %205 = tpu.matmul %204, %191, %cst_51 {dimension_numbers = #tpu.dot_dimension_numbers<[1], [0], [0], [1], [0, 0, 1, 1], [], []>} : vector<64x64xbf16>, vector<64x32xbf16>, vector<64x32xf32> -> vector<64x32xf32>
    %206 = vector.extract_strided_slice %24 {offsets = [64, 64], sizes = [64, 32], strides = [1, 1]} : vector<128x256xbf16> to vector<64x32xbf16>
    %207 = vector.extract_strided_slice %26 {offsets = [64, 64], sizes = [64, 32], strides = [1, 1]} : vector<128x256xbf16> to vector<64x32xbf16>
    %208 = vector.extract_strided_slice %28 {offsets = [64, 64], sizes = [64, 32], strides = [1, 1]} : vector<128x256xbf16> to vector<64x32xbf16>
    %cst_52 = arith.constant dense<0.000000e+00> : vector<64x64xf32>
    %209 = tpu.matmul %206, %207, %cst_52 {dimension_numbers = #tpu.dot_dimension_numbers<[1], [1], [0], [0], [0, 0, 1, 0], [], []>} : vector<64x32xbf16>, vector<64x32xbf16>, vector<64x64xf32> -> vector<64x64xf32>
    %210 = arith.addf %209, %34 : vector<64x64xf32>
    %cst_53 = arith.constant dense<0xFF800000> : vector<64xf32>
    %211 = vector.multi_reduction <maximumf>, %210, %cst_53 [1] : vector<64x64xf32> to vector<64xf32>
    %212 = vector.shape_cast %211 : vector<64xf32> to vector<64x1xf32>
    %213 = vector.broadcast %212 : vector<64x1xf32> to vector<64x64xf32>
    %214 = arith.subf %210, %213 : vector<64x64xf32>
    %215 = math.exp %214 : vector<64x64xf32>
    %cst_54 = arith.constant dense<0.000000e+00> : vector<64xf32>
    %216 = vector.multi_reduction <add>, %215, %cst_54 [1] : vector<64x64xf32> to vector<64xf32>
    %217 = vector.shape_cast %216 : vector<64xf32> to vector<64x1xf32>
    %218 = tpu.reciprocal %217 {approx = true} : vector<64x1xf32> -> vector<64x1xf32>
    %219 = vector.broadcast %218 : vector<64x1xf32> to vector<64x64xf32>
    %220 = arith.mulf %215, %219 : vector<64x64xf32>
    %221 = arith.truncf %220 : vector<64x64xf32> to vector<64x64xbf16>
    %cst_55 = arith.constant dense<0.000000e+00> : vector<64x32xf32>
    %222 = tpu.matmul %221, %208, %cst_55 {dimension_numbers = #tpu.dot_dimension_numbers<[1], [0], [0], [1], [0, 0, 1, 1], [], []>} : vector<64x64xbf16>, vector<64x32xbf16>, vector<64x32xf32> -> vector<64x32xf32>
    %223 = vector.extract_strided_slice %24 {offsets = [64, 96], sizes = [64, 32], strides = [1, 1]} : vector<128x256xbf16> to vector<64x32xbf16>
    %224 = vector.extract_strided_slice %26 {offsets = [64, 96], sizes = [64, 32], strides = [1, 1]} : vector<128x256xbf16> to vector<64x32xbf16>
    %225 = vector.extract_strided_slice %28 {offsets = [64, 96], sizes = [64, 32], strides = [1, 1]} : vector<128x256xbf16> to vector<64x32xbf16>
    %cst_56 = arith.constant dense<0.000000e+00> : vector<64x64xf32>
    %226 = tpu.matmul %223, %224, %cst_56 {dimension_numbers = #tpu.dot_dimension_numbers<[1], [1], [0], [0], [0, 0, 1, 0], [], []>} : vector<64x32xbf16>, vector<64x32xbf16>, vector<64x64xf32> -> vector<64x64xf32>
    %227 = arith.addf %226, %34 : vector<64x64xf32>
    %cst_57 = arith.constant dense<0xFF800000> : vector<64xf32>
    %228 = vector.multi_reduction <maximumf>, %227, %cst_57 [1] : vector<64x64xf32> to vector<64xf32>
    %229 = vector.shape_cast %228 : vector<64xf32> to vector<64x1xf32>
    %230 = vector.broadcast %229 : vector<64x1xf32> to vector<64x64xf32>
    %231 = arith.subf %227, %230 : vector<64x64xf32>
    %232 = math.exp %231 : vector<64x64xf32>
    %cst_58 = arith.constant dense<0.000000e+00> : vector<64xf32>
    %233 = vector.multi_reduction <add>, %232, %cst_58 [1] : vector<64x64xf32> to vector<64xf32>
    %234 = vector.shape_cast %233 : vector<64xf32> to vector<64x1xf32>
    %235 = tpu.reciprocal %234 {approx = true} : vector<64x1xf32> -> vector<64x1xf32>
    %236 = vector.broadcast %235 : vector<64x1xf32> to vector<64x64xf32>
    %237 = arith.mulf %232, %236 : vector<64x64xf32>
    %238 = arith.truncf %237 : vector<64x64xf32> to vector<64x64xbf16>
    %cst_59 = arith.constant dense<0.000000e+00> : vector<64x32xf32>
    %239 = tpu.matmul %238, %225, %cst_59 {dimension_numbers = #tpu.dot_dimension_numbers<[1], [0], [0], [1], [0, 0, 1, 1], [], []>} : vector<64x64xbf16>, vector<64x32xbf16>, vector<64x32xf32> -> vector<64x32xf32>
    %240 = vector.extract_strided_slice %24 {offsets = [64, 128], sizes = [64, 32], strides = [1, 1]} : vector<128x256xbf16> to vector<64x32xbf16>
    %241 = vector.extract_strided_slice %26 {offsets = [64, 128], sizes = [64, 32], strides = [1, 1]} : vector<128x256xbf16> to vector<64x32xbf16>
    %242 = vector.extract_strided_slice %28 {offsets = [64, 128], sizes = [64, 32], strides = [1, 1]} : vector<128x256xbf16> to vector<64x32xbf16>
    %cst_60 = arith.constant dense<0.000000e+00> : vector<64x64xf32>
    %243 = tpu.matmul %240, %241, %cst_60 {dimension_numbers = #tpu.dot_dimension_numbers<[1], [1], [0], [0], [0, 0, 1, 0], [], []>} : vector<64x32xbf16>, vector<64x32xbf16>, vector<64x64xf32> -> vector<64x64xf32>
    %244 = arith.addf %243, %34 : vector<64x64xf32>
    %cst_61 = arith.constant dense<0xFF800000> : vector<64xf32>
    %245 = vector.multi_reduction <maximumf>, %244, %cst_61 [1] : vector<64x64xf32> to vector<64xf32>
    %246 = vector.shape_cast %245 : vector<64xf32> to vector<64x1xf32>
    %247 = vector.broadcast %246 : vector<64x1xf32> to vector<64x64xf32>
    %248 = arith.subf %244, %247 : vector<64x64xf32>
    %249 = math.exp %248 : vector<64x64xf32>
    %cst_62 = arith.constant dense<0.000000e+00> : vector<64xf32>
    %250 = vector.multi_reduction <add>, %249, %cst_62 [1] : vector<64x64xf32> to vector<64xf32>
    %251 = vector.shape_cast %250 : vector<64xf32> to vector<64x1xf32>
    %252 = tpu.reciprocal %251 {approx = true} : vector<64x1xf32> -> vector<64x1xf32>
    %253 = vector.broadcast %252 : vector<64x1xf32> to vector<64x64xf32>
    %254 = arith.mulf %249, %253 : vector<64x64xf32>
    %255 = arith.truncf %254 : vector<64x64xf32> to vector<64x64xbf16>
    %cst_63 = arith.constant dense<0.000000e+00> : vector<64x32xf32>
    %256 = tpu.matmul %255, %242, %cst_63 {dimension_numbers = #tpu.dot_dimension_numbers<[1], [0], [0], [1], [0, 0, 1, 1], [], []>} : vector<64x64xbf16>, vector<64x32xbf16>, vector<64x32xf32> -> vector<64x32xf32>
    %257 = vector.extract_strided_slice %24 {offsets = [64, 160], sizes = [64, 32], strides = [1, 1]} : vector<128x256xbf16> to vector<64x32xbf16>
    %258 = vector.extract_strided_slice %26 {offsets = [64, 160], sizes = [64, 32], strides = [1, 1]} : vector<128x256xbf16> to vector<64x32xbf16>
    %259 = vector.extract_strided_slice %28 {offsets = [64, 160], sizes = [64, 32], strides = [1, 1]} : vector<128x256xbf16> to vector<64x32xbf16>
    %cst_64 = arith.constant dense<0.000000e+00> : vector<64x64xf32>
    %260 = tpu.matmul %257, %258, %cst_64 {dimension_numbers = #tpu.dot_dimension_numbers<[1], [1], [0], [0], [0, 0, 1, 0], [], []>} : vector<64x32xbf16>, vector<64x32xbf16>, vector<64x64xf32> -> vector<64x64xf32>
    %261 = arith.addf %260, %34 : vector<64x64xf32>
    %cst_65 = arith.constant dense<0xFF800000> : vector<64xf32>
    %262 = vector.multi_reduction <maximumf>, %261, %cst_65 [1] : vector<64x64xf32> to vector<64xf32>
    %263 = vector.shape_cast %262 : vector<64xf32> to vector<64x1xf32>
    %264 = vector.broadcast %263 : vector<64x1xf32> to vector<64x64xf32>
    %265 = arith.subf %261, %264 : vector<64x64xf32>
    %266 = math.exp %265 : vector<64x64xf32>
    %cst_66 = arith.constant dense<0.000000e+00> : vector<64xf32>
    %267 = vector.multi_reduction <add>, %266, %cst_66 [1] : vector<64x64xf32> to vector<64xf32>
    %268 = vector.shape_cast %267 : vector<64xf32> to vector<64x1xf32>
    %269 = tpu.reciprocal %268 {approx = true} : vector<64x1xf32> -> vector<64x1xf32>
    %270 = vector.broadcast %269 : vector<64x1xf32> to vector<64x64xf32>
    %271 = arith.mulf %266, %270 : vector<64x64xf32>
    %272 = arith.truncf %271 : vector<64x64xf32> to vector<64x64xbf16>
    %cst_67 = arith.constant dense<0.000000e+00> : vector<64x32xf32>
    %273 = tpu.matmul %272, %259, %cst_67 {dimension_numbers = #tpu.dot_dimension_numbers<[1], [0], [0], [1], [0, 0, 1, 1], [], []>} : vector<64x64xbf16>, vector<64x32xbf16>, vector<64x32xf32> -> vector<64x32xf32>
    %274 = vector.extract_strided_slice %24 {offsets = [64, 192], sizes = [64, 32], strides = [1, 1]} : vector<128x256xbf16> to vector<64x32xbf16>
    %275 = vector.extract_strided_slice %26 {offsets = [64, 192], sizes = [64, 32], strides = [1, 1]} : vector<128x256xbf16> to vector<64x32xbf16>
    %276 = vector.extract_strided_slice %28 {offsets = [64, 192], sizes = [64, 32], strides = [1, 1]} : vector<128x256xbf16> to vector<64x32xbf16>
    %cst_68 = arith.constant dense<0.000000e+00> : vector<64x64xf32>
    %277 = tpu.matmul %274, %275, %cst_68 {dimension_numbers = #tpu.dot_dimension_numbers<[1], [1], [0], [0], [0, 0, 1, 0], [], []>} : vector<64x32xbf16>, vector<64x32xbf16>, vector<64x64xf32> -> vector<64x64xf32>
    %278 = arith.addf %277, %34 : vector<64x64xf32>
    %cst_69 = arith.constant dense<0xFF800000> : vector<64xf32>
    %279 = vector.multi_reduction <maximumf>, %278, %cst_69 [1] : vector<64x64xf32> to vector<64xf32>
    %280 = vector.shape_cast %279 : vector<64xf32> to vector<64x1xf32>
    %281 = vector.broadcast %280 : vector<64x1xf32> to vector<64x64xf32>
    %282 = arith.subf %278, %281 : vector<64x64xf32>
    %283 = math.exp %282 : vector<64x64xf32>
    %cst_70 = arith.constant dense<0.000000e+00> : vector<64xf32>
    %284 = vector.multi_reduction <add>, %283, %cst_70 [1] : vector<64x64xf32> to vector<64xf32>
    %285 = vector.shape_cast %284 : vector<64xf32> to vector<64x1xf32>
    %286 = tpu.reciprocal %285 {approx = true} : vector<64x1xf32> -> vector<64x1xf32>
    %287 = vector.broadcast %286 : vector<64x1xf32> to vector<64x64xf32>
    %288 = arith.mulf %283, %287 : vector<64x64xf32>
    %289 = arith.truncf %288 : vector<64x64xf32> to vector<64x64xbf16>
    %cst_71 = arith.constant dense<0.000000e+00> : vector<64x32xf32>
    %290 = tpu.matmul %289, %276, %cst_71 {dimension_numbers = #tpu.dot_dimension_numbers<[1], [0], [0], [1], [0, 0, 1, 1], [], []>} : vector<64x64xbf16>, vector<64x32xbf16>, vector<64x32xf32> -> vector<64x32xf32>
    %291 = vector.extract_strided_slice %24 {offsets = [64, 224], sizes = [64, 32], strides = [1, 1]} : vector<128x256xbf16> to vector<64x32xbf16>
    %292 = vector.extract_strided_slice %26 {offsets = [64, 224], sizes = [64, 32], strides = [1, 1]} : vector<128x256xbf16> to vector<64x32xbf16>
    %293 = vector.extract_strided_slice %28 {offsets = [64, 224], sizes = [64, 32], strides = [1, 1]} : vector<128x256xbf16> to vector<64x32xbf16>
    %cst_72 = arith.constant dense<0.000000e+00> : vector<64x64xf32>
    %294 = tpu.matmul %291, %292, %cst_72 {dimension_numbers = #tpu.dot_dimension_numbers<[1], [1], [0], [0], [0, 0, 1, 0], [], []>} : vector<64x32xbf16>, vector<64x32xbf16>, vector<64x64xf32> -> vector<64x64xf32>
    %295 = arith.addf %294, %34 : vector<64x64xf32>
    %cst_73 = arith.constant dense<0xFF800000> : vector<64xf32>
    %296 = vector.multi_reduction <maximumf>, %295, %cst_73 [1] : vector<64x64xf32> to vector<64xf32>
    %297 = vector.shape_cast %296 : vector<64xf32> to vector<64x1xf32>
    %298 = vector.broadcast %297 : vector<64x1xf32> to vector<64x64xf32>
    %299 = arith.subf %295, %298 : vector<64x64xf32>
    %300 = math.exp %299 : vector<64x64xf32>
    %cst_74 = arith.constant dense<0.000000e+00> : vector<64xf32>
    %301 = vector.multi_reduction <add>, %300, %cst_74 [1] : vector<64x64xf32> to vector<64xf32>
    %302 = vector.shape_cast %301 : vector<64xf32> to vector<64x1xf32>
    %303 = tpu.reciprocal %302 {approx = true} : vector<64x1xf32> -> vector<64x1xf32>
    %304 = vector.broadcast %303 : vector<64x1xf32> to vector<64x64xf32>
    %305 = arith.mulf %300, %304 : vector<64x64xf32>
    %306 = arith.truncf %305 : vector<64x64xf32> to vector<64x64xbf16>
    %cst_75 = arith.constant dense<0.000000e+00> : vector<64x32xf32>
    %307 = tpu.matmul %306, %293, %cst_75 {dimension_numbers = #tpu.dot_dimension_numbers<[1], [0], [0], [1], [0, 0, 1, 1], [], []>} : vector<64x64xbf16>, vector<64x32xbf16>, vector<64x32xf32> -> vector<64x32xf32>
    %308 = tpu.concatenate %188, %205, %222, %239, %256, %273, %290, %307 in 1 : vector<64x32xf32>, vector<64x32xf32>, vector<64x32xf32>, vector<64x32xf32>, vector<64x32xf32>, vector<64x32xf32>, vector<64x32xf32>, vector<64x32xf32> -> vector<64x256xf32>
    %309 = tpu.concatenate %171, %308 in 0 : vector<64x256xf32>, vector<64x256xf32> -> vector<128x256xf32>
    %310 = arith.truncf %309 : vector<128x256xf32> to vector<128x256xbf16>
    %c0_76 = arith.constant 0 : index
    %c0_77 = arith.constant 0 : index
    %311 = vector.load %arg4[%c0_76, %c0_77] : memref<256x256xbf16, #tpu.memory_space<vmem>>, vector<256x256xbf16>
    %cst_78 = arith.constant dense<0.000000e+00> : vector<128x256xf32>
    %312 = tpu.matmul %310, %311, %cst_78 {dimension_numbers = #tpu.dot_dimension_numbers<[1], [0], [0], [1], [0, 0, 1, 1], [], []>} : vector<128x256xbf16>, vector<256x256xbf16>, vector<128x256xf32> -> vector<128x256xf32>
    %c0_79 = arith.constant 0 : index
    %c0_80 = arith.constant 0 : index
    %313 = vector.load %arg5[%c0_79, %c0_80] : memref<1x256xf32, #tpu.memory_space<vmem>>, vector<1x256xf32>
    %314 = vector.broadcast %313 : vector<1x256xf32> to vector<128x256xf32>
    %315 = arith.addf %312, %314 : vector<128x256xf32>
    %316 = arith.addf %0, %315 : vector<128x256xf32>
    %cst_81 = arith.constant dense<0.000000e+00> : vector<128xf32>
    %317 = vector.multi_reduction <add>, %316, %cst_81 [1] : vector<128x256xf32> to vector<128xf32>
    %318 = vector.shape_cast %317 : vector<128xf32> to vector<128x1xf32>
    %cst_82 = arith.constant 2.560000e+02 : f32
    %319 = vector.broadcast %cst_82 : f32 to vector<128x1xf32>
    %320 = arith.divf %318, %319 : vector<128x1xf32>
    %321 = vector.broadcast %320 : vector<128x1xf32> to vector<128x256xf32>
    %322 = arith.subf %316, %321 : vector<128x256xf32>
    %323 = arith.mulf %322, %322 : vector<128x256xf32>
    %cst_83 = arith.constant dense<0.000000e+00> : vector<128xf32>
    %324 = vector.multi_reduction <add>, %323, %cst_83 [1] : vector<128x256xf32> to vector<128xf32>
    %325 = vector.shape_cast %324 : vector<128xf32> to vector<128x1xf32>
    %cst_84 = arith.constant 2.560000e+02 : f32
    %326 = vector.broadcast %cst_84 : f32 to vector<128x1xf32>
    %327 = arith.divf %325, %326 : vector<128x1xf32>
    %cst_85 = arith.constant 9.99999974E-6 : f32
    %328 = vector.broadcast %cst_85 : f32 to vector<128x1xf32>
    %329 = arith.addf %327, %328 : vector<128x1xf32>
    %330 = math.rsqrt %329 : vector<128x1xf32>
    %331 = vector.broadcast %330 : vector<128x1xf32> to vector<128x256xf32>
    %332 = arith.mulf %322, %331 : vector<128x256xf32>
    %333 = arith.truncf %332 : vector<128x256xf32> to vector<128x256xbf16>
    %c0_86 = arith.constant 0 : index
    %c0_87 = arith.constant 0 : index
    %334 = vector.load %arg6[%c0_86, %c0_87] : memref<256x1024xbf16, #tpu.memory_space<vmem>>, vector<256x1024xbf16>
    %cst_88 = arith.constant dense<0.000000e+00> : vector<128x1024xf32>
    %335 = tpu.matmul %333, %334, %cst_88 {dimension_numbers = #tpu.dot_dimension_numbers<[1], [0], [0], [1], [0, 0, 1, 1], [], []>} : vector<128x256xbf16>, vector<256x1024xbf16>, vector<128x1024xf32> -> vector<128x1024xf32>
    %c0_89 = arith.constant 0 : index
    %c0_90 = arith.constant 0 : index
    %336 = vector.load %arg7[%c0_89, %c0_90] : memref<1x1024xf32, #tpu.memory_space<vmem>>, vector<1x1024xf32>
    %337 = vector.broadcast %336 : vector<1x1024xf32> to vector<128x1024xf32>
    %338 = arith.addf %335, %337 : vector<128x1024xf32>
    %cst_91 = arith.constant 5.000000e-01 : f32
    %339 = vector.broadcast %cst_91 : f32 to vector<128x1024xf32>
    %340 = arith.mulf %339, %338 : vector<128x1024xf32>
    %cst_92 = arith.constant 4.471500e-02 : f32
    %341 = vector.broadcast %cst_92 : f32 to vector<128x1024xf32>
    %342 = arith.mulf %341, %338 : vector<128x1024xf32>
    %343 = arith.mulf %342, %338 : vector<128x1024xf32>
    %344 = arith.mulf %343, %338 : vector<128x1024xf32>
    %345 = arith.addf %338, %344 : vector<128x1024xf32>
    %cst_93 = arith.constant 0.797884583 : f32
    %346 = vector.broadcast %cst_93 : f32 to vector<128x1024xf32>
    %347 = arith.mulf %346, %345 : vector<128x1024xf32>
    %348 = math.tanh %347 : vector<128x1024xf32>
    %cst_94 = arith.constant 1.000000e+00 : f32
    %349 = vector.broadcast %cst_94 : f32 to vector<128x1024xf32>
    %350 = arith.addf %349, %348 : vector<128x1024xf32>
    %351 = arith.mulf %340, %350 : vector<128x1024xf32>
    %352 = arith.truncf %351 : vector<128x1024xf32> to vector<128x1024xbf16>
    %c0_95 = arith.constant 0 : index
    %c0_96 = arith.constant 0 : index
    %353 = vector.load %arg8[%c0_95, %c0_96] : memref<1024x256xbf16, #tpu.memory_space<vmem>>, vector<1024x256xbf16>
    %cst_97 = arith.constant dense<0.000000e+00> : vector<128x256xf32>
    %354 = tpu.matmul %352, %353, %cst_97 {dimension_numbers = #tpu.dot_dimension_numbers<[1], [0], [0], [1], [0, 0, 1, 1], [], []>} : vector<128x1024xbf16>, vector<1024x256xbf16>, vector<128x256xf32> -> vector<128x256xf32>
    %c0_98 = arith.constant 0 : index
    %c0_99 = arith.constant 0 : index
    %355 = vector.load %arg9[%c0_98, %c0_99] : memref<1x256xf32, #tpu.memory_space<vmem>>, vector<1x256xf32>
    %356 = vector.broadcast %355 : vector<1x256xf32> to vector<128x256xf32>
    %357 = arith.addf %354, %356 : vector<128x256xf32>
    %358 = arith.addf %316, %357 : vector<128x256xf32>
    %c0_100 = arith.constant 0 : index
    %c0_101 = arith.constant 0 : index
    %359 = vector.load %arg10[%c0_100, %c0_101] : memref<128x256xf32, #tpu.memory_space<vmem>>, vector<128x256xf32>
    tpu.vector_store %arg10[%c0_100, %c0_101], %358 {strides = array<i32>} : memref<128x256xf32, #tpu.memory_space<vmem>>, vector<128x256xf32>,
    return
  }
  func.func @transform_0(%arg0: i32) -> (i32, i32) {
    %c0_i32 = arith.constant 0 : i32
    %c0_i32_0 = arith.constant 0 : i32
    return %arg0, %c0_i32 : i32, i32
  }
  func.func @transform_1(%arg0: i32) -> (i32, i32) {
    %c0_i32 = arith.constant 0 : i32
    %c0_i32_0 = arith.constant 0 : i32
    %c0_i32_1 = arith.constant 0 : i32
    return %c0_i32, %c0_i32_0 : i32, i32
  }
  func.func @transform_2(%arg0: i32) -> (i32, i32) {
    %c0_i32 = arith.constant 0 : i32
    %c0_i32_0 = arith.constant 0 : i32
    %c0_i32_1 = arith.constant 0 : i32
    return %c0_i32, %c0_i32_0 : i32, i32
  }
  func.func @transform_3(%arg0: i32) -> (i32, i32) {
    %c0_i32 = arith.constant 0 : i32
    %c0_i32_0 = arith.constant 0 : i32
    %c0_i32_1 = arith.constant 0 : i32
    return %c0_i32, %c0_i32_0 : i32, i32
  }
  func.func @transform_4(%arg0: i32) -> (i32, i32) {
    %c0_i32 = arith.constant 0 : i32
    %c0_i32_0 = arith.constant 0 : i32
    %c0_i32_1 = arith.constant 0 : i32
    return %c0_i32, %c0_i32_0 : i32, i32
  }
  func.func @transform_5(%arg0: i32) -> (i32, i32) {
    %c0_i32 = arith.constant 0 : i32
    %c0_i32_0 = arith.constant 0 : i32
    %c0_i32_1 = arith.constant 0 : i32
    return %c0_i32, %c0_i32_0 : i32, i32
  }
  func.func @transform_6(%arg0: i32) -> (i32, i32) {
    %c0_i32 = arith.constant 0 : i32
    %c0_i32_0 = arith.constant 0 : i32
    %c0_i32_1 = arith.constant 0 : i32
    return %c0_i32, %c0_i32_0 : i32, i32
  }
  func.func @transform_7(%arg0: i32) -> (i32, i32) {
    %c0_i32 = arith.constant 0 : i32
    %c0_i32_0 = arith.constant 0 : i32
    %c0_i32_1 = arith.constant 0 : i32
    return %c0_i32, %c0_i32_0 : i32, i32
  }
  func.func @transform_8(%arg0: i32) -> (i32, i32) {
    %c0_i32 = arith.constant 0 : i32
    %c0_i32_0 = arith.constant 0 : i32
    %c0_i32_1 = arith.constant 0 : i32
    return %c0_i32, %c0_i32_0 : i32, i32
  }
  func.func @transform_9(%arg0: i32) -> (i32, i32) {
    %c0_i32 = arith.constant 0 : i32
    %c0_i32_0 = arith.constant 0 : i32
    return %arg0, %c0_i32 : i32, i32
  }
}

</mosaic_0001>

<llo_original>
// kernel: tpu_custom_call.1
$region0: #{tpu_custom_call.1}
  #allocation0 [shape = 'u32[]', space=smem, size = 0x4, offset = 0x4, fixed_abs, tag = 'smem constant byte address 0x4 - core index']
  #allocation1 [shape = 'u32[72,128]{1,0:T(1,128)}', space=vmem, size = 0x9000, scoped, tag = 'internal scratch']
  %s0 = inlined_call_operand.hbm [shape: f32[128,256], index: 0, kind: input, shape index: {}]
  %s1 = inlined_call_operand.hbm [shape: bf16[256,768], index: 1, kind: input, shape index: {}]
  %s2 = inlined_call_operand.hbm [shape: f32[1,768], index: 2, kind: input, shape index: {}]
  %s3 = inlined_call_operand.hbm [shape: bf16[256,256], index: 3, kind: input, shape index: {}]
  %s4 = inlined_call_operand.vmem [shape: f32[1,256], index: 4, kind: input, shape index: {}]
  %s5 = inlined_call_operand.hbm [shape: bf16[256,1024], index: 5, kind: input, shape index: {}]
  %s6 = inlined_call_operand.hbm [shape: f32[1,1024], index: 6, kind: input, shape index: {}]
  %s7 = inlined_call_operand.hbm [shape: bf16[1024,256], index: 7, kind: input, shape index: {}]
  %s8 = inlined_call_operand.vmem [shape: f32[1,256], index: 8, kind: input, shape index: {}]
  %s9 = inlined_call_operand.hbm [shape: f32[128,256], index: 9, kind: output, shape index: {}]
  %s10 = sld [smem:[#allocation0]]
  $region74: #{tpu_custom_call.1} parent=0
    _
  %s12 = ssub.s32 1, %s10
  %s13 = scalar_select 0, %s12, %s10
  $region1: #{tpu_custom_call.1} parent=0
    #allocation2 [shape = 'u8[131072]{0}', space=vmem, size = 0x20000, scoped, tag = 'input window, operand 0, single buffered']
    #allocation3 [shape = 's32[1]{0}', space=sflag, size = 0x4, scoped, tag = 'scoped memory for tpu_custom_call.1']
    #allocation4 [shape = 's32[1]{0}', space=sflag, size = 0x4, scoped, tag = 'scoped memory for tpu_custom_call.1']
    #allocation5 [shape = 'u8[393216]{0}', space=vmem, size = 0x60000, scoped, tag = 'input window, operand 1, single buffered']
    #allocation6 [shape = 's32[1]{0}', space=sflag, size = 0x4, scoped, tag = 'scoped memory for tpu_custom_call.1']
    #allocation7 [shape = 'u8[3072]{0}', space=vmem, size = 0xc00, scoped, tag = 'input window, operand 2, single buffered']
    #allocation8 [shape = 'u8[131072]{0}', space=vmem, size = 0x20000, scoped, tag = 'input window, operand 3, single buffered']
    #allocation9 [shape = 's32[1]{0}', space=sflag, size = 0x4, scoped, tag = 'scoped memory for tpu_custom_call.1']
    #allocation10 [shape = 'u8[524288]{0}', space=vmem, size = 0x80000, scoped, tag = 'input window, operand 5, single buffered']
    #allocation11 [shape = 'u8[4096]{0}', space=vmem, size = 0x1000, scoped, tag = 'input window, operand 6, single buffered']
    #allocation12 [shape = 's32[1]{0}', space=sflag, size = 0x4, scoped, tag = 'scoped memory for tpu_custom_call.1']
    #allocation13 [shape = 'u8[524288]{0}', space=vmem, size = 0x80000, scoped, tag = 'input window, operand 7, single buffered']
    #allocation14 [shape = 'u8[131072]{0}', space=vmem, size = 0x20000, scoped, tag = 'output window, operand 0, single buffered']
    %14 = vsyncpa [#allocation3], 0
    %15 = vsyncpa [#allocation6], 0
    %16 = vsyncpa [#allocation9], 0
    %17 = vsyncpa [#allocation12], 0
    %18 = vsyncpa [#allocation4], 0
    // Predicated region
    $region2: #{tpu_custom_call.1} parent=1 // pred_check
      _
    $region3: #{tpu_custom_call.1} parent=1 // pred_check_branch
      %20 = sbr.rel (0) target = $region5
    $region4: #{tpu_custom_call.1} parent=1 // pred_region
      %22 = vsyncadd [#allocation3], 0
      %s23 = sshll.u32 %s0, 4
      %s24 = int_to_ptr.hbm [resolvable:$true] %s23
      %s25 = sshll.u32 [#allocation2], 4
      %s26 = int_to_ptr.vmem [resolvable:$true] %s25
      %31 = dma.hbm_to_vmem [thread:$0]  %s24, 4096, %s26, [#allocation3], 256, 256, 16
    $region5: #{tpu_custom_call.1} parent=1 // pred_fallthru
      _
    // Predicated region
    $region6: #{tpu_custom_call.1} parent=1 // pred_check
      _
    $region7: #{tpu_custom_call.1} parent=1 // pred_check_branch
      %33 = sbr.rel (0) target = $region9
    $region8: #{tpu_custom_call.1} parent=1 // pred_region
      %35 = vsyncadd [#allocation6], 0
      %s36 = sshll.u32 %s1, 4
      %s37 = int_to_ptr.hbm [resolvable:$true] %s36
      %s38 = sshll.u32 [#allocation5], 4
      %s39 = int_to_ptr.vmem [resolvable:$true] %s38
      %44 = dma.hbm_to_vmem [thread:$0]  %s37, 12288, %s39, [#allocation6], 384, 384, 24
    $region9: #{tpu_custom_call.1} parent=1 // pred_fallthru
      _
    // Predicated region
    $region10: #{tpu_custom_call.1} parent=1 // pred_check
      _
    $region11: #{tpu_custom_call.1} parent=1 // pred_check_branch
      %46 = sbr.rel (0) target = $region13
    $region12: #{tpu_custom_call.1} parent=1 // pred_region
      %48 = vsyncadd [#allocation6], 0
      %s50 = sshll.u32 %s2, 4
      %s51 = int_to_ptr.hbm [resolvable:$true] %s50
      %s52 = sshll.u32 [#allocation7], 4
      %s53 = int_to_ptr.vmem [resolvable:$true] %s52
      %55 = dma.hbm_to_vmem [thread:$0]  %s51, 96, %s53, [#allocation6]
    $region13: #{tpu_custom_call.1} parent=1 // pred_fallthru
      _
    // Predicated region
    $region14: #{tpu_custom_call.1} parent=1 // pred_check
      _
    $region15: #{tpu_custom_call.1} parent=1 // pred_check_branch
      %57 = sbr.rel (0) target = $region17
    $region16: #{tpu_custom_call.1} parent=1 // pred_region
      %59 = vsyncadd [#allocation9], 0
      %s60 = sshll.u32 %s3, 4
      %s61 = int_to_ptr.hbm [resolvable:$true] %s60
      %s62 = sshll.u32 [#allocation8], 4
      %s63 = int_to_ptr.vmem [resolvable:$true] %s62
      %68 = dma.hbm_to_vmem [thread:$0]  %s61, 4096, %s63, [#allocation9], 128, 128, 8
    $region17: #{tpu_custom_call.1} parent=1 // pred_fallthru
      _
    // Predicated region
    $region18: #{tpu_custom_call.1} parent=1 // pred_check
      _
    $region19: #{tpu_custom_call.1} parent=1 // pred_check_branch
      %70 = sbr.rel (0) target = $region21
    $region20: #{tpu_custom_call.1} parent=1 // pred_region
      _
    $region21: #{tpu_custom_call.1} parent=1 // pred_fallthru
      _
    // Predicated region
    $region22: #{tpu_custom_call.1} parent=1 // pred_check
      _
    $region23: #{tpu_custom_call.1} parent=1 // pred_check_branch
      %72 = sbr.rel (0) target = $region25
    $region24: #{tpu_custom_call.1} parent=1 // pred_region
      %74 = vsyncadd [#allocation9], 0
      %s75 = sshll.u32 %s5, 4
      %s76 = int_to_ptr.hbm [resolvable:$true] %s75
      %s77 = sshll.u32 [#allocation10], 4
      %s78 = int_to_ptr.vmem [resolvable:$true] %s77
      %83 = dma.hbm_to_vmem [thread:$0]  %s76, 16384, %s78, [#allocation9], 512, 512, 32
    $region25: #{tpu_custom_call.1} parent=1 // pred_fallthru
      _
    // Predicated region
    $region26: #{tpu_custom_call.1} parent=1 // pred_check
      _
    $region27: #{tpu_custom_call.1} parent=1 // pred_check_branch
      %85 = sbr.rel (0) target = $region29
    $region28: #{tpu_custom_call.1} parent=1 // pred_region
      %87 = vsyncadd [#allocation12], 0
      %s89 = sshll.u32 %s6, 4
      %s90 = int_to_ptr.hbm [resolvable:$true] %s89
      %s91 = sshll.u32 [#allocation11], 4
      %s92 = int_to_ptr.vmem [resolvable:$true] %s91
      %94 = dma.hbm_to_vmem [thread:$0]  %s90, 128, %s92, [#allocation12]
    $region29: #{tpu_custom_call.1} parent=1 // pred_fallthru
      _
    // Predicated region
    $region30: #{tpu_custom_call.1} parent=1 // pred_check
      _
    $region31: #{tpu_custom_call.1} parent=1 // pred_check_branch
      %96 = sbr.rel (0) target = $region33
    $region32: #{tpu_custom_call.1} parent=1 // pred_region
      %98 = vsyncadd [#allocation12], 0
      %s99 = sshll.u32 %s7, 4
      %s100 = int_to_ptr.hbm [resolvable:$true] %s99
      %s101 = sshll.u32 [#allocation13], 4
      %s102 = int_to_ptr.vmem [resolvable:$true] %s101
      %107 = dma.hbm_to_vmem [thread:$0]  %s100, 16384, %s102, [#allocation12], 128, 128, 8
    $region33: #{tpu_custom_call.1} parent=1 // pred_fallthru
      _
    // Predicated region
    $region34: #{tpu_custom_call.1} parent=1 // pred_check
      _
    $region35: #{tpu_custom_call.1} parent=1 // pred_check_branch
      %109 = sbr.rel (0) target = $region37
    $region36: #{tpu_custom_call.1} parent=1 // pred_region
      _
    $region37: #{tpu_custom_call.1} parent=1 // pred_fallthru
      _
    // Predicated region
    $region38: #{tpu_custom_call.1} parent=1 // pred_check
      _
    $region39: #{tpu_custom_call.1} parent=1 // pred_check_branch
      %111 = sbr.rel (0) target = $region41
    $region40: #{tpu_custom_call.1} parent=1 // pred_region
      %113 = dma.done [#allocation3], 4096
    $region41: #{tpu_custom_call.1} parent=1 // pred_fallthru
      _
    // Predicated region
    $region42: #{tpu_custom_call.1} parent=1 // pred_check
      _
    $region43: #{tpu_custom_call.1} parent=1 // pred_check_branch
      %115 = sbr.rel (0) target = $region45
    $region44: #{tpu_custom_call.1} parent=1 // pred_region
      %117 = dma.done [#allocation6], 12288
    $region45: #{tpu_custom_call.1} parent=1 // pred_fallthru
      _
    // Predicated region
    $region46: #{tpu_custom_call.1} parent=1 // pred_check
      _
    $region47: #{tpu_custom_call.1} parent=1 // pred_check_branch
      %119 = sbr.rel (0) target = $region49
    $region48: #{tpu_custom_call.1} parent=1 // pred_region
      %121 = dma.done [#allocation6], 96
    $region49: #{tpu_custom_call.1} parent=1 // pred_fallthru
      _
    // Predicated region
    $region50: #{tpu_custom_call.1} parent=1 // pred_check
      _
    $region51: #{tpu_custom_call.1} parent=1 // pred_check_branch
      %123 = sbr.rel (0) target = $region53
    $region52: #{tpu_custom_call.1} parent=1 // pred_region
      %125 = dma.done [#allocation9], 4096
    $region53: #{tpu_custom_call.1} parent=1 // pred_fallthru
      _
    // Predicated region
    $region54: #{tpu_custom_call.1} parent=1 // pred_check
      _
    $region55: #{tpu_custom_call.1} parent=1 // pred_check_branch
      %127 = sbr.rel (0) target = $region57
    $region56: #{tpu_custom_call.1} parent=1 // pred_region
      %129 = dma.done [#allocation9], 16384
    $region57: #{tpu_custom_call.1} parent=1 // pred_fallthru
      _
    // Predicated region
    $region58: #{tpu_custom_call.1} parent=1 // pred_check
      _
    $region59: #{tpu_custom_call.1} parent=1 // pred_check_branch
      %131 = sbr.rel (0) target = $region61
    $region60: #{tpu_custom_call.1} parent=1 // pred_region
      %133 = dma.done [#allocation12], 128
    $region61: #{tpu_custom_call.1} parent=1 // pred_fallthru
      _
    // Predicated region
    $region62: #{tpu_custom_call.1} parent=1 // pred_check
      _
    $region63: #{tpu_custom_call.1} parent=1 // pred_check_branch
      %135 = sbr.rel (0) target = $region65
    $region64: #{tpu_custom_call.1} parent=1 // pred_region
      %137 = dma.done [#allocation12], 16384
    $region65: #{tpu_custom_call.1} parent=1 // pred_fallthru
      _
    %v139 = vld [vmem:[#allocation2] sm:$0xff]
    %v140 = vld [vmem:[#allocation2 + $0x8] sm:$0xff]
    %v141 = vld [vmem:[#allocation2 + $0x10] sm:$0xff]
    %v142 = vld [vmem:[#allocation2 + $0x18] sm:$0xff]
    %v143 = vld [vmem:[#allocation2 + $0x20] sm:$0xff]
    %v144 = vld [vmem:[#allocation2 + $0x28] sm:$0xff]
    %v145 = vld [vmem:[#allocation2 + $0x30] sm:$0xff]
    %v146 = vld [vmem:[#allocation2 + $0x38] sm:$0xff]
    %v147 = vld [vmem:[#allocation2 + $0x40] sm:$0xff]
    %v148 = vld [vmem:[#allocation2 + $0x48] sm:$0xff]
    %v149 = vld [vmem:[#allocation2 + $0x50] sm:$0xff]
    %v150 = vld [vmem:[#allocation2 + $0x58] sm:$0xff]
    %v151 = vld [vmem:[#allocation2 + $0x60] sm:$0xff]
    %v152 = vld [vmem:[#allocation2 + $0x68] sm:$0xff]
    %v153 = vld [vmem:[#allocation2 + $0x70] sm:$0xff]
    %v154 = vld [vmem:[#allocation2 + $0x78] sm:$0xff]
    %v155 = vld [vmem:[#allocation2 + $0x80] sm:$0xff]
    %v156 = vld [vmem:[#allocation2 + $0x88] sm:$0xff]
    %v157 = vld [vmem:[#allocation2 + $0x90] sm:$0xff]
    %v158 = vld [vmem:[#allocation2 + $0x98] sm:$0xff]
    %v159 = vld [vmem:[#allocation2 + $0xa0] sm:$0xff]
    %v160 = vld [vmem:[#allocation2 + $0xa8] sm:$0xff]
    %v161 = vld [vmem:[#allocation2 + $0xb0] sm:$0xff]
    %v162 = vld [vmem:[#allocation2 + $0xb8] sm:$0xff]
    %v163 = vld [vmem:[#allocation2 + $0xc0] sm:$0xff]
    %v164 = vld [vmem:[#allocation2 + $0xc8] sm:$0xff]
    %v165 = vld [vmem:[#allocation2 + $0xd0] sm:$0xff]
    %v166 = vld [vmem:[#allocation2 + $0xd8] sm:$0xff]
    %v167 = vld [vmem:[#allocation2 + $0xe0] sm:$0xff]
    %v168 = vld [vmem:[#allocation2 + $0xe8] sm:$0xff]
    %v169 = vld [vmem:[#allocation2 + $0xf0] sm:$0xff]
    %v170 = vld [vmem:[#allocation2 + $0xf8] sm:$0xff]
    %v171 = vadd.f32 %v139, %v140
    %172 = vadd.xlane.f32.xlu0 %v171
    %v173 = vpop.xlane.xlu0 %172
    %v174 = vadd.f32 %v141, %v142
    %175 = vadd.xlane.f32.xlu0 %v174
    %v176 = vpop.xlane.xlu0 %175
    %v177 = vadd.f32 %v143, %v144
    %178 = vadd.xlane.f32.xlu0 %v177
    %v179 = vpop.xlane.xlu0 %178
    %v180 = vadd.f32 %v145, %v146
    %181 = vadd.xlane.f32.xlu0 %v180
    %v182 = vpop.xlane.xlu0 %181
    %v183 = vadd.f32 %v147, %v148
    %184 = vadd.xlane.f32.xlu0 %v183
    %v185 = vpop.xlane.xlu0 %184
    %v186 = vadd.f32 %v149, %v150
    %187 = vadd.xlane.f32.xlu0 %v186
    %v188 = vpop.xlane.xlu0 %187
    %v189 = vadd.f32 %v151, %v152
    %190 = vadd.xlane.f32.xlu0 %v189
    %v191 = vpop.xlane.xlu0 %190
    %v192 = vadd.f32 %v153, %v154
    %193 = vadd.xlane.f32.xlu0 %v192
    %v194 = vpop.xlane.xlu0 %193
    %v195 = vadd.f32 %v155, %v156
    %196 = vadd.xlane.f32.xlu0 %v195
    %v197 = vpop.xlane.xlu0 %196
    %v198 = vadd.f32 %v157, %v158
    %199 = vadd.xlane.f32.xlu0 %v198
    %v200 = vpop.xlane.xlu0 %199
    %v201 = vadd.f32 %v159, %v160
    %202 = vadd.xlane.f32.xlu0 %v201
    %v203 = vpop.xlane.xlu0 %202
    %v204 = vadd.f32 %v161, %v162
    %205 = vadd.xlane.f32.xlu0 %v204
    %v206 = vpop.xlane.xlu0 %205
    %v207 = vadd.f32 %v163, %v164
    %208 = vadd.xlane.f32.xlu0 %v207
    %v209 = vpop.xlane.xlu0 %208
    %v210 = vadd.f32 %v165, %v166
    %211 = vadd.xlane.f32.xlu0 %v210
    %v212 = vpop.xlane.xlu0 %211
    %v213 = vadd.f32 %v167, %v168
    %214 = vadd.xlane.f32.xlu0 %v213
    %v215 = vpop.xlane.xlu0 %214
    %v216 = vadd.f32 %v169, %v170
    %217 = vadd.xlane.f32.xlu0 %v216
    %v218 = vpop.xlane.xlu0 %217
    %v219 = vrcp.pop 256.0
    %v220 = vmul.f32 256.0, %v219
    %v221 = vsub.f32 1.0, %v220
    %v222 = vmul.f32 %v219, %v221
    %v223 = vadd.f32 %v219, %v222
    %vm224 = vweird.f32 %v219
    %v225 = vsel %vm224, %v219, %v223
    %v226 = vmul.f32 %v173, %v225
    %v227 = vmul.f32 %v176, %v225
    %v228 = vmul.f32 %v179, %v225
    %v229 = vmul.f32 %v182, %v225
    %v230 = vmul.f32 %v185, %v225
    %v231 = vmul.f32 %v188, %v225
    %v232 = vmul.f32 %v191, %v225
    %v233 = vmul.f32 %v194, %v225
    %v234 = vmul.f32 %v197, %v225
    %v235 = vmul.f32 %v200, %v225
    %v236 = vmul.f32 %v203, %v225
    %v237 = vmul.f32 %v206, %v225
    %v238 = vmul.f32 %v209, %v225
    %v239 = vmul.f32 %v212, %v225
    %v240 = vmul.f32 %v215, %v225
    %v241 = vmul.f32 %v218, %v225
    %v242 = vsub.f32 %v139, %v226
    %v243 = vsub.f32 %v140, %v226
    %v244 = vsub.f32 %v141, %v227
    %v245 = vsub.f32 %v142, %v227
    %v246 = vsub.f32 %v143, %v228
    %v247 = vsub.f32 %v144, %v228
    %v248 = vsub.f32 %v145, %v229
    %v249 = vsub.f32 %v146, %v229
    %v250 = vsub.f32 %v147, %v230
    %v251 = vsub.f32 %v148, %v230
    %v252 = vsub.f32 %v149, %v231
    %v253 = vsub.f32 %v150, %v231
    %v254 = vsub.f32 %v151, %v232
    %v255 = vsub.f32 %v152, %v232
    %v256 = vsub.f32 %v153, %v233
    %v257 = vsub.f32 %v154, %v233
    %v258 = vsub.f32 %v155, %v234
    %v259 = vsub.f32 %v156, %v234
    %v260 = vsub.f32 %v157, %v235
    %v261 = vsub.f32 %v158, %v235
    %v262 = vsub.f32 %v159, %v236
    %v263 = vsub.f32 %v160, %v236
    %v264 = vsub.f32 %v161, %v237
    %v265 = vsub.f32 %v162, %v237
    %v266 = vsub.f32 %v163, %v238
    %v267 = vsub.f32 %v164, %v238
    %v268 = vsub.f32 %v165, %v239
    %v269 = vsub.f32 %v166, %v239
    %v270 = vsub.f32 %v167, %v240
    %v271 = vsub.f32 %v168, %v240
    %v272 = vsub.f32 %v169, %v241
    %v273 = vsub.f32 %v170, %v241
    %v274 = vmul.f32 %v242, %v242
    %v275 = vmul.f32 %v243, %v243
    %v276 = vmul.f32 %v244, %v244
    %v277 = vmul.f32 %v245, %v245
    %v278 = vmul.f32 %v246, %v246
    %v279 = vmul.f32 %v247, %v247
    %v280 = vmul.f32 %v248, %v248
    %v281 = vmul.f32 %v249, %v249
    %v282 = vmul.f32 %v250, %v250
    %v283 = vmul.f32 %v251, %v251
    %v284 = vmul.f32 %v252, %v252
    %v285 = vmul.f32 %v253, %v253
    %v286 = vmul.f32 %v254, %v254
    %v287 = vmul.f32 %v255, %v255
    %v288 = vmul.f32 %v256, %v256
    %v289 = vmul.f32 %v257, %v257
    %v290 = vmul.f32 %v258, %v258
    %v291 = vmul.f32 %v259, %v259
    %v292 = vmul.f32 %v260, %v260
    %v293 = vmul.f32 %v261, %v261
    %v294 = vmul.f32 %v262, %v262
    %v295 = vmul.f32 %v263, %v263
    %v296 = vmul.f32 %v264, %v264
    %v297 = vmul.f32 %v265, %v265
    %v298 = vmul.f32 %v266, %v266
    %v299 = vmul.f32 %v267, %v267
    %v300 = vmul.f32 %v268, %v268
    %v301 = vmul.f32 %v269, %v269
    %v302 = vmul.f32 %v270, %v270
    %v303 = vmul.f32 %v271, %v271
    %v304 = vmul.f32 %v272, %v272
    %v305 = vmul.f32 %v273, %v273
    %v306 = vadd.f32 %v274, %v275
    %307 = vadd.xlane.f32.xlu0 %v306
    %v308 = vpop.xlane.xlu0 %307
    %v309 = vadd.f32 %v276, %v277
    %310 = vadd.xlane.f32.xlu0 %v309
    %v311 = vpop.xlane.xlu0 %310
    %v312 = vadd.f32 %v278, %v279
    %313 = vadd.xlane.f32.xlu0 %v312
    %v314 = vpop.xlane.xlu0 %313
    %v315 = vadd.f32 %v280, %v281
    %316 = vadd.xlane.f32.xlu0 %v315
    %v317 = vpop.xlane.xlu0 %316
    %v318 = vadd.f32 %v282, %v283
    %319 = vadd.xlane.f32.xlu0 %v318
    %v320 = vpop.xlane.xlu0 %319
    %v321 = vadd.f32 %v284, %v285
    %322 = vadd.xlane.f32.xlu0 %v321
    %v323 = vpop.xlane.xlu0 %322
    %v324 = vadd.f32 %v286, %v287
    %325 = vadd.xlane.f32.xlu0 %v324
    %v326 = vpop.xlane.xlu0 %325
    %v327 = vadd.f32 %v288, %v289
    %328 = vadd.xlane.f32.xlu0 %v327
    %v329 = vpop.xlane.xlu0 %328
    %v330 = vadd.f32 %v290, %v291
    %331 = vadd.xlane.f32.xlu0 %v330
    %v332 = vpop.xlane.xlu0 %331
    %v333 = vadd.f32 %v292, %v293
    %334 = vadd.xlane.f32.xlu0 %v333
    %v335 = vpop.xlane.xlu0 %334
    %v336 = vadd.f32 %v294, %v295
    %337 = vadd.xlane.f32.xlu0 %v336
    %v338 = vpop.xlane.xlu0 %337
    %v339 = vadd.f32 %v296, %v297
    %340 = vadd.xlane.f32.xlu0 %v339
    %v341 = vpop.xlane.xlu0 %340
    %v342 = vadd.f32 %v298, %v299
    %343 = vadd.xlane.f32.xlu0 %v342
    %v344 = vpop.xlane.xlu0 %343
    %v345 = vadd.f32 %v300, %v301
    %346 = vadd.xlane.f32.xlu0 %v345
    %v347 = vpop.xlane.xlu0 %346
    %v348 = vadd.f32 %v302, %v303
    %349 = vadd.xlane.f32.xlu0 %v348
    %v350 = vpop.xlane.xlu0 %349
    %v351 = vadd.f32 %v304, %v305
    %352 = vadd.xlane.f32.xlu0 %v351
    %v353 = vpop.xlane.xlu0 %352
    %v354 = vmul.f32 %v308, %v225
    %v355 = vmul.f32 %v311, %v225
    %v356 = vmul.f32 %v314, %v225
    %v357 = vmul.f32 %v317, %v225
    %v358 = vmul.f32 %v320, %v225
    %v359 = vmul.f32 %v323, %v225
    %v360 = vmul.f32 %v326, %v225
    %v361 = vmul.f32 %v329, %v225
    %v362 = vmul.f32 %v332, %v225
    %v363 = vmul.f32 %v335, %v225
    %v364 = vmul.f32 %v338, %v225
    %v365 = vmul.f32 %v341, %v225
    %v366 = vmul.f32 %v344, %v225
    %v367 = vmul.f32 %v347, %v225
    %v368 = vmul.f32 %v350, %v225
    %v369 = vmul.f32 %v353, %v225
    %v370 = vadd.f32 %v354, 1e-05
    %v371 = vadd.f32 %v355, 1e-05
    %v372 = vadd.f32 %v356, 1e-05
    %v373 = vadd.f32 %v357, 1e-05
    %v374 = vadd.f32 %v358, 1e-05
    %v375 = vadd.f32 %v359, 1e-05
    %v376 = vadd.f32 %v360, 1e-05
    %v377 = vadd.f32 %v361, 1e-05
    %v378 = vadd.f32 %v362, 1e-05
    %v379 = vadd.f32 %v363, 1e-05
    %v380 = vadd.f32 %v364, 1e-05
    %v381 = vadd.f32 %v365, 1e-05
    %v382 = vadd.f32 %v366, 1e-05
    %v383 = vadd.f32 %v367, 1e-05
    %v384 = vadd.f32 %v368, 1e-05
    %v385 = vadd.f32 %v369, 1e-05
    %v386 = vrsqrt.pop %v370
    %v387 = vmul.f32 %v386, %v370
    %v388 = vmul.f32 %v387, %v386
    %v389 = vmul.f32 0.5, %v388
    %v390 = vsub.f32 1.5, %v389
    %v391 = vmul.f32 %v386, %v390
    %vm392 = vweird.f32 %v370
    %vm393 = vweird.f32 %v386
    %vm394 = vmor %vm392, %vm393
    %v395 = vsel %vm394, %v386, %v391
    %v396 = vrsqrt.pop %v371
    %v397 = vmul.f32 %v396, %v371
    %v398 = vmul.f32 %v397, %v396
    %v399 = vmul.f32 0.5, %v398
    %v400 = vsub.f32 1.5, %v399
    %v401 = vmul.f32 %v396, %v400
    %vm402 = vweird.f32 %v371
    %vm403 = vweird.f32 %v396
    %vm404 = vmor %vm402, %vm403
    %v405 = vsel %vm404, %v396, %v401
    %v406 = vrsqrt.pop %v372
    %v407 = vmul.f32 %v406, %v372
    %v408 = vmul.f32 %v407, %v406
    %v409 = vmul.f32 0.5, %v408
    %v410 = vsub.f32 1.5, %v409
    %v411 = vmul.f32 %v406, %v410
    %vm412 = vweird.f32 %v372
    %vm413 = vweird.f32 %v406
    %vm414 = vmor %vm412, %vm413
    %v415 = vsel %vm414, %v406, %v411
    %v416 = vrsqrt.pop %v373
    %v417 = vmul.f32 %v416, %v373
    %v418 = vmul.f32 %v417, %v416
    %v419 = vmul.f32 0.5, %v418
    %v420 = vsub.f32 1.5, %v419
    %v421 = vmul.f32 %v416, %v420
    %vm422 = vweird.f32 %v373
    %vm423 = vweird.f32 %v416
    %vm424 = vmor %vm422, %vm423
    %v425 = vsel %vm424, %v416, %v421
    %v426 = vrsqrt.pop %v374
    %v427 = vmul.f32 %v426, %v374
    %v428 = vmul.f32 %v427, %v426
    %v429 = vmul.f32 0.5, %v428
    %v430 = vsub.f32 1.5, %v429
    %v431 = vmul.f32 %v426, %v430
    %vm432 = vweird.f32 %v374
    %vm433 = vweird.f32 %v426
    %vm434 = vmor %vm432, %vm433
    %v435 = vsel %vm434, %v426, %v431
    %v436 = vrsqrt.pop %v375
    %v437 = vmul.f32 %v436, %v375
    %v438 = vmul.f32 %v437, %v436
    %v439 = vmul.f32 0.5, %v438
    %v440 = vsub.f32 1.5, %v439
    %v441 = vmul.f32 %v436, %v440
    %vm442 = vweird.f32 %v375
    %vm443 = vweird.f32 %v436
    %vm444 = vmor %vm442, %vm443
    %v445 = vsel %vm444, %v436, %v441
    %v446 = vrsqrt.pop %v376
    %v447 = vmul.f32 %v446, %v376
    %v448 = vmul.f32 %v447, %v446
    %v449 = vmul.f32 0.5, %v448
    %v450 = vsub.f32 1.5, %v449
    %v451 = vmul.f32 %v446, %v450
    %vm452 = vweird.f32 %v376
    %vm453 = vweird.f32 %v446
    %vm454 = vmor %vm452, %vm453
    %v455 = vsel %vm454, %v446, %v451
    %v456 = vrsqrt.pop %v377
    %v457 = vmul.f32 %v456, %v377
    %v458 = vmul.f32 %v457, %v456
    %v459 = vmul.f32 0.5, %v458
    %v460 = vsub.f32 1.5, %v459
    %v461 = vmul.f32 %v456, %v460
    %vm462 = vweird.f32 %v377
    %vm463 = vweird.f32 %v456
    %vm464 = vmor %vm462, %vm463
    %v465 = vsel %vm464, %v456, %v461
    %v466 = vrsqrt.pop %v378
    %v467 = vmul.f32 %v466, %v378
    %v468 = vmul.f32 %v467, %v466
    %v469 = vmul.f32 0.5, %v468
    %v470 = vsub.f32 1.5, %v469
    %v471 = vmul.f32 %v466, %v470
    %vm472 = vweird.f32 %v378
    %vm473 = vweird.f32 %v466
    %vm474 = vmor %vm472, %vm473
    %v475 = vsel %vm474, %v466, %v471
    %v476 = vrsqrt.pop %v379
    %v477 = vmul.f32 %v476, %v379
    %v478 = vmul.f32 %v477, %v476
    %v479 = vmul.f32 0.5, %v478
    %v480 = vsub.f32 1.5, %v479
    %v481 = vmul.f32 %v476, %v480
    %vm482 = vweird.f32 %v379
    %vm483 = vweird.f32 %v476
    %vm484 = vmor %vm482, %vm483
    %v485 = vsel %vm484, %v476, %v481
    %v486 = vrsqrt.pop %v380
    %v487 = vmul.f32 %v486, %v380
    %v488 = vmul.f32 %v487, %v486
    %v489 = vmul.f32 0.5, %v488
    %v490 = vsub.f32 1.5, %v489
    %v491 = vmul.f32 %v486, %v490
    %vm492 = vweird.f32 %v380
    %vm493 = vweird.f32 %v486
    %vm494 = vmor %vm492, %vm493
    %v495 = vsel %vm494, %v486, %v491
    %v496 = vrsqrt.pop %v381
    %v497 = vmul.f32 %v496, %v381
    %v498 = vmul.f32 %v497, %v496
    %v499 = vmul.f32 0.5, %v498
    %v500 = vsub.f32 1.5, %v499
    %v501 = vmul.f32 %v496, %v500
    %vm502 = vweird.f32 %v381
    %vm503 = vweird.f32 %v496
    %vm504 = vmor %vm502, %vm503
    %v505 = vsel %vm504, %v496, %v501
    %v506 = vrsqrt.pop %v382
    %v507 = vmul.f32 %v506, %v382
    %v508 = vmul.f32 %v507, %v506
    %v509 = vmul.f32 0.5, %v508
    %v510 = vsub.f32 1.5, %v509
    %v511 = vmul.f32 %v506, %v510
    %vm512 = vweird.f32 %v382
    %vm513 = vweird.f32 %v506
    %vm514 = vmor %vm512, %vm513
    %v515 = vsel %vm514, %v506, %v511
    %v516 = vrsqrt.pop %v383
    %v517 = vmul.f32 %v516, %v383
    %v518 = vmul.f32 %v517, %v516
    %v519 = vmul.f32 0.5, %v518
    %v520 = vsub.f32 1.5, %v519
    %v521 = vmul.f32 %v516, %v520
    %vm522 = vweird.f32 %v383
    %vm523 = vweird.f32 %v516
    %vm524 = vmor %vm522, %vm523
    %v525 = vsel %vm524, %v516, %v521
    %v526 = vrsqrt.pop %v384
    %v527 = vmul.f32 %v526, %v384
    %v528 = vmul.f32 %v527, %v526
    %v529 = vmul.f32 0.5, %v528
    %v530 = vsub.f32 1.5, %v529
    %v531 = vmul.f32 %v526, %v530
    %vm532 = vweird.f32 %v384
    %vm533 = vweird.f32 %v526
    %vm534 = vmor %vm532, %vm533
    %v535 = vsel %vm534, %v526, %v531
    %v536 = vrsqrt.pop %v385
    %v537 = vmul.f32 %v536, %v385
    %v538 = vmul.f32 %v537, %v536
    %v539 = vmul.f32 0.5, %v538
    %v540 = vsub.f32 1.5, %v539
    %v541 = vmul.f32 %v536, %v540
    %vm542 = vweird.f32 %v385
    %vm543 = vweird.f32 %v536
    %vm544 = vmor %vm542, %vm543
    %v545 = vsel %vm544, %v536, %v541
    %v546 = vmul.f32 %v242, %v395
    %v547 = vmul.f32 %v243, %v395
    %v548 = vmul.f32 %v244, %v405
    %v549 = vmul.f32 %v245, %v405
    %v550 = vmul.f32 %v246, %v415
    %v551 = vmul.f32 %v247, %v415
    %v552 = vmul.f32 %v248, %v425
    %v553 = vmul.f32 %v249, %v425
    %v554 = vmul.f32 %v250, %v435
    %v555 = vmul.f32 %v251, %v435
    %v556 = vmul.f32 %v252, %v445
    %v557 = vmul.f32 %v253, %v445
    %v558 = vmul.f32 %v254, %v455
    %v559 = vmul.f32 %v255, %v455
    %v560 = vmul.f32 %v256, %v465
    %v561 = vmul.f32 %v257, %v465
    %v562 = vmul.f32 %v258, %v475
    %v563 = vmul.f32 %v259, %v475
    %v564 = vmul.f32 %v260, %v485
    %v565 = vmul.f32 %v261, %v485
    %v566 = vmul.f32 %v262, %v495
    %v567 = vmul.f32 %v263, %v495
    %v568 = vmul.f32 %v264, %v505
    %v569 = vmul.f32 %v265, %v505
    %v570 = vmul.f32 %v266, %v515
    %v571 = vmul.f32 %v267, %v515
    %v572 = vmul.f32 %v268, %v525
    %v573 = vmul.f32 %v269, %v525
    %v574 = vmul.f32 %v270, %v535
    %v575 = vmul.f32 %v271, %v535
    %v576 = vmul.f32 %v272, %v545
    %v577 = vmul.f32 %v273, %v545
    %v578 = vpack.c.bf16 %v548, %v546
    %v579 = vpack.c.bf16 %v549, %v547
    %v580 = vpack.c.bf16 %v552, %v550
    %v581 = vpack.c.bf16 %v553, %v551
    %v582 = vpack.c.bf16 %v556, %v554
    %v583 = vpack.c.bf16 %v557, %v555
    %v584 = vpack.c.bf16 %v560, %v558
    %v585 = vpack.c.bf16 %v561, %v559
    %v586 = vpack.c.bf16 %v564, %v562
    %v587 = vpack.c.bf16 %v565, %v563
    %v588 = vpack.c.bf16 %v568, %v566
    %v589 = vpack.c.bf16 %v569, %v567
    %v590 = vpack.c.bf16 %v572, %v570
    %v591 = vpack.c.bf16 %v573, %v571
    %v592 = vpack.c.bf16 %v576, %v574
    %v593 = vpack.c.bf16 %v577, %v575
    %v594 = vld [vmem:[#allocation5] sm:$0xff]
    %v595 = vld [vmem:[#allocation5 + $0x8] sm:$0xff]
    %v596 = vld [vmem:[#allocation5 + $0x10] sm:$0xff]
    %v597 = vld [vmem:[#allocation5 + $0x18] sm:$0xff]
    %v598 = vld [vmem:[#allocation5 + $0x20] sm:$0xff]
    %v599 = vld [vmem:[#allocation5 + $0x28] sm:$0xff]
    %v600 = vld [vmem:[#allocation5 + $0x30] sm:$0xff]
    %v601 = vld [vmem:[#allocation5 + $0x38] sm:$0xff]
    %v602 = vld [vmem:[#allocation5 + $0x40] sm:$0xff]
    %v603 = vld [vmem:[#allocation5 + $0x48] sm:$0xff]
    %v604 = vld [vmem:[#allocation5 + $0x50] sm:$0xff]
    %v605 = vld [vmem:[#allocation5 + $0x58] sm:$0xff]
    %v606 = vld [vmem:[#allocation5 + $0x60] sm:$0xff]
    %v607 = vld [vmem:[#allocation5 + $0x68] sm:$0xff]
    %v608 = vld [vmem:[#allocation5 + $0x70] sm:$0xff]
    %v609 = vld [vmem:[#allocation5 + $0x78] sm:$0xff]
    %v610 = vld [vmem:[#allocation5 + $0x80] sm:$0xff]
    %v611 = vld [vmem:[#allocation5 + $0x88] sm:$0xff]
    %v612 = vld [vmem:[#allocation5 + $0x90] sm:$0xff]
    %v613 = vld [vmem:[#allocation5 + $0x98] sm:$0xff]
    %v614 = vld [vmem:[#allocation5 + $0xa0] sm:$0xff]
    %v615 = vld [vmem:[#allocation5 + $0xa8] sm:$0xff]
    %v616 = vld [vmem:[#allocation5 + $0xb0] sm:$0xff]
    %v617 = vld [vmem:[#allocation5 + $0xb8] sm:$0xff]
    %v618 = vld [vmem:[#allocation5 + $0xc0] sm:$0xff]
    %v619 = vld [vmem:[#allocation5 + $0xc8] sm:$0xff]
    %v620 = vld [vmem:[#allocation5 + $0xd0] sm:$0xff]
    %v621 = vld [vmem:[#allocation5 + $0xd8] sm:$0xff]
    %v622 = vld [vmem:[#allocation5 + $0xe0] sm:$0xff]
    %v623 = vld [vmem:[#allocation5 + $0xe8] sm:$0xff]
    %v624 = vld [vmem:[#allocation5 + $0xf0] sm:$0xff]
    %v625 = vld [vmem:[#allocation5 + $0xf8] sm:$0xff]
    %v626 = vld [vmem:[#allocation5 + $0x100] sm:$0xff]
    %v627 = vld [vmem:[#allocation5 + $0x108] sm:$0xff]
    %v628 = vld [vmem:[#allocation5 + $0x110] sm:$0xff]
    %v629 = vld [vmem:[#allocation5 + $0x118] sm:$0xff]
    %v630 = vld [vmem:[#allocation5 + $0x120] sm:$0xff]
    %v631 = vld [vmem:[#allocation5 + $0x128] sm:$0xff]
    %v632 = vld [vmem:[#allocation5 + $0x130] sm:$0xff]
    %v633 = vld [vmem:[#allocation5 + $0x138] sm:$0xff]
    %v634 = vld [vmem:[#allocation5 + $0x140] sm:$0xff]
    %v635 = vld [vmem:[#allocation5 + $0x148] sm:$0xff]
    %v636 = vld [vmem:[#allocation5 + $0x150] sm:$0xff]
    %v637 = vld [vmem:[#allocation5 + $0x158] sm:$0xff]
    %v638 = vld [vmem:[#allocation5 + $0x160] sm:$0xff]
    %v639 = vld [vmem:[#allocation5 + $0x168] sm:$0xff]
    %v640 = vld [vmem:[#allocation5 + $0x170] sm:$0xff]
    %v641 = vld [vmem:[#allocation5 + $0x178] sm:$0xff]
    %v642 = vld [vmem:[#allocation5 + $0x180] sm:$0xff]
    %v643 = vld [vmem:[#allocation5 + $0x188] sm:$0xff]
    %v644 = vld [vmem:[#allocation5 + $0x190] sm:$0xff]
    %v645 = vld [vmem:[#allocation5 + $0x198] sm:$0xff]
    %v646 = vld [vmem:[#allocation5 + $0x1a0] sm:$0xff]
    %v647 = vld [vmem:[#allocation5 + $0x1a8] sm:$0xff]
    %v648 = vld [vmem:[#allocation5 + $0x1b0] sm:$0xff]
    %v649 = vld [vmem:[#allocation5 + $0x1b8] sm:$0xff]
    %v650 = vld [vmem:[#allocation5 + $0x1c0] sm:$0xff]
    %v651 = vld [vmem:[#allocation5 + $0x1c8] sm:$0xff]
    %v652 = vld [vmem:[#allocation5 + $0x1d0] sm:$0xff]
    %v653 = vld [vmem:[#allocation5 + $0x1d8] sm:$0xff]
    %v654 = vld [vmem:[#allocation5 + $0x1e0] sm:$0xff]
    %v655 = vld [vmem:[#allocation5 + $0x1e8] sm:$0xff]
    %v656 = vld [vmem:[#allocation5 + $0x1f0] sm:$0xff]
    %v657 = vld [vmem:[#allocation5 + $0x1f8] sm:$0xff]
    %v658 = vld [vmem:[#allocation5 + $0x200] sm:$0xff]
    %v659 = vld [vmem:[#allocation5 + $0x208] sm:$0xff]
    %v660 = vld [vmem:[#allocation5 + $0x210] sm:$0xff]
    %v661 = vld [vmem:[#allocation5 + $0x218] sm:$0xff]
    %v662 = vld [vmem:[#allocation5 + $0x220] sm:$0xff]
    %v663 = vld [vmem:[#allocation5 + $0x228] sm:$0xff]
    %v664 = vld [vmem:[#allocation5 + $0x230] sm:$0xff]
    %v665 = vld [vmem:[#allocation5 + $0x238] sm:$0xff]
    %v666 = vld [vmem:[#allocation5 + $0x240] sm:$0xff]
    %v667 = vld [vmem:[#allocation5 + $0x248] sm:$0xff]
    %v668 = vld [vmem:[#allocation5 + $0x250] sm:$0xff]
    %v669 = vld [vmem:[#allocation5 + $0x258] sm:$0xff]
    %v670 = vld [vmem:[#allocation5 + $0x260] sm:$0xff]
    %v671 = vld [vmem:[#allocation5 + $0x268] sm:$0xff]
    %v672 = vld [vmem:[#allocation5 + $0x270] sm:$0xff]
    %v673 = vld [vmem:[#allocation5 + $0x278] sm:$0xff]
    %v674 = vld [vmem:[#allocation5 + $0x280] sm:$0xff]
    %v675 = vld [vmem:[#allocation5 + $0x288] sm:$0xff]
    %v676 = vld [vmem:[#allocation5 + $0x290] sm:$0xff]
    %v677 = vld [vmem:[#allocation5 + $0x298] sm:$0xff]
    %v678 = vld [vmem:[#allocation5 + $0x2a0] sm:$0xff]
    %v679 = vld [vmem:[#allocation5 + $0x2a8] sm:$0xff]
    %v680 = vld [vmem:[#allocation5 + $0x2b0] sm:$0xff]
    %v681 = vld [vmem:[#allocation5 + $0x2b8] sm:$0xff]
    %v682 = vld [vmem:[#allocation5 + $0x2c0] sm:$0xff]
    %v683 = vld [vmem:[#allocation5 + $0x2c8] sm:$0xff]
    %v684 = vld [vmem:[#allocation5 + $0x2d0] sm:$0xff]
    %v685 = vld [vmem:[#allocation5 + $0x2d8] sm:$0xff]
    %v686 = vld [vmem:[#allocation5 + $0x2e0] sm:$0xff]
    %v687 = vld [vmem:[#allocation5 + $0x2e8] sm:$0xff]
    %v688 = vld [vmem:[#allocation5 + $0x2f0] sm:$0xff]
    %v689 = vld [vmem:[#allocation5 + $0x2f8] sm:$0xff]
    %v690 = vld [vmem:[#allocation7] sm:$0x3f]
    %v692 = vperm.slane %v690, 0
    %v693 = vperm.slane %v690, 1
    %v694 = vperm.slane %v690, 2
    %v695 = vperm.slane %v690, 3
    %v696 = vperm.slane %v690, 4
    %v697 = vperm.slane %v690, 5
    %v800 = vunpack.c.l.b16 %v594
    %v801 = vunpack.c.h.b16 %v594
    %v802 = vunpack.c.l.b16 %v595
    %v803 = vunpack.c.h.b16 %v595
    %v804 = vunpack.c.l.b16 %v596
    %v805 = vunpack.c.h.b16 %v596
    %v806 = vunpack.c.l.b16 %v597
    %v807 = vunpack.c.h.b16 %v597
    %v808 = vunpack.c.l.b16 %v598
    %v809 = vunpack.c.h.b16 %v598
    %v810 = vunpack.c.l.b16 %v599
    %v811 = vunpack.c.h.b16 %v599
    %v812 = vunpack.c.l.b16 %v600
    %v813 = vunpack.c.h.b16 %v600
    %v814 = vunpack.c.l.b16 %v601
    %v815 = vunpack.c.h.b16 %v601
    %v816 = vunpack.c.l.b16 %v602
    %v817 = vunpack.c.h.b16 %v602
    %v818 = vunpack.c.l.b16 %v603
    %v819 = vunpack.c.h.b16 %v603
    %v820 = vunpack.c.l.b16 %v604
    %v821 = vunpack.c.h.b16 %v604
    %v822 = vunpack.c.l.b16 %v605
    %v823 = vunpack.c.h.b16 %v605
    %v824 = vunpack.c.l.b16 %v606
    %v825 = vunpack.c.h.b16 %v606
    %v826 = vunpack.c.l.b16 %v607
    %v827 = vunpack.c.h.b16 %v607
    %v828 = vunpack.c.l.b16 %v608
    %v829 = vunpack.c.h.b16 %v608
    %v830 = vunpack.c.l.b16 %v609
    %v831 = vunpack.c.h.b16 %v609
    %v832 = vunpack.c.l.b16 %v610
    %v833 = vunpack.c.h.b16 %v610
    %v834 = vunpack.c.l.b16 %v611
    %v835 = vunpack.c.h.b16 %v611
    %v836 = vunpack.c.l.b16 %v612
    %v837 = vunpack.c.h.b16 %v612
    %v838 = vunpack.c.l.b16 %v613
    %v839 = vunpack.c.h.b16 %v613
    %v840 = vunpack.c.l.b16 %v614
    %v841 = vunpack.c.h.b16 %v614
    %v842 = vunpack.c.l.b16 %v615
    %v843 = vunpack.c.h.b16 %v615
    %v844 = vunpack.c.l.b16 %v616
    %v845 = vunpack.c.h.b16 %v616
    %v846 = vunpack.c.l.b16 %v617
    %v847 = vunpack.c.h.b16 %v617
    %v848 = vunpack.c.l.b16 %v618
    %v849 = vunpack.c.h.b16 %v618
    %v850 = vunpack.c.l.b16 %v619
    %v851 = vunpack.c.h.b16 %v619
    %v852 = vunpack.c.l.b16 %v620
    %v853 = vunpack.c.h.b16 %v620
    %v854 = vunpack.c.l.b16 %v621
    %v855 = vunpack.c.h.b16 %v621
    %v856 = vunpack.c.l.b16 %v622
    %v857 = vunpack.c.h.b16 %v622
    %v858 = vunpack.c.l.b16 %v623
    %v859 = vunpack.c.h.b16 %v623
    %v860 = vunpack.c.l.b16 %v624
    %v861 = vunpack.c.h.b16 %v624
    %v862 = vunpack.c.l.b16 %v625
    %v863 = vunpack.c.h.b16 %v625
    %v864 = vunpack.c.l.b16 %v626
    %v865 = vunpack.c.h.b16 %v626
    %v866 = vunpack.c.l.b16 %v627
    %v867 = vunpack.c.h.b16 %v627
    %v868 = vunpack.c.l.b16 %v628
    %v869 = vunpack.c.h.b16 %v628
    %v870 = vunpack.c.l.b16 %v629
    %v871 = vunpack.c.h.b16 %v629
    %v872 = vunpack.c.l.b16 %v630
    %v873 = vunpack.c.h.b16 %v630
    %v874 = vunpack.c.l.b16 %v631
    %v875 = vunpack.c.h.b16 %v631
    %v876 = vunpack.c.l.b16 %v632
    %v877 = vunpack.c.h.b16 %v632
    %v878 = vunpack.c.l.b16 %v633
    %v879 = vunpack.c.h.b16 %v633
    %v880 = vunpack.c.l.b16 %v634
    %v881 = vunpack.c.h.b16 %v634
    %v882 = vunpack.c.l.b16 %v635
    %v883 = vunpack.c.h.b16 %v635
    %v884 = vunpack.c.l.b16 %v636
    %v885 = vunpack.c.h.b16 %v636
    %v886 = vunpack.c.l.b16 %v637
    %v887 = vunpack.c.h.b16 %v637
    %v888 = vunpack.c.l.b16 %v638
    %v889 = vunpack.c.h.b16 %v638
    %v890 = vunpack.c.l.b16 %v639
    %v891 = vunpack.c.h.b16 %v639
    %v892 = vunpack.c.l.b16 %v640
    %v893 = vunpack.c.h.b16 %v640
    %v894 = vunpack.c.l.b16 %v641
    %v895 = vunpack.c.h.b16 %v641
    %v896 = vunpack.c.l.b16 %v642
    %v897 = vunpack.c.h.b16 %v642
    %v898 = vunpack.c.l.b16 %v643
    %v899 = vunpack.c.h.b16 %v643
    %v900 = vunpack.c.l.b16 %v644
    %v901 = vunpack.c.h.b16 %v644
    %v902 = vunpack.c.l.b16 %v645
    %v903 = vunpack.c.h.b16 %v645
    %v904 = vunpack.c.l.b16 %v646
    %v905 = vunpack.c.h.b16 %v646
    %v906 = vunpack.c.l.b16 %v647
    %v907 = vunpack.c.h.b16 %v647
    %v908 = vunpack.c.l.b16 %v648
    %v909 = vunpack.c.h.b16 %v648
    %v910 = vunpack.c.l.b16 %v649
    %v911 = vunpack.c.h.b16 %v649
    %v912 = vunpack.c.l.b16 %v650
    %v913 = vunpack.c.h.b16 %v650
    %v914 = vunpack.c.l.b16 %v651
    %v915 = vunpack.c.h.b16 %v651
    %v916 = vunpack.c.l.b16 %v652
    %v917 = vunpack.c.h.b16 %v652
    %v918 = vunpack.c.l.b16 %v653
    %v919 = vunpack.c.h.b16 %v653
    %v920 = vunpack.c.l.b16 %v654
    %v921 = vunpack.c.h.b16 %v654
    %v922 = vunpack.c.l.b16 %v655
    %v923 = vunpack.c.h.b16 %v655
    %v924 = vunpack.c.l.b16 %v656
    %v925 = vunpack.c.h.b16 %v656
    %v926 = vunpack.c.l.b16 %v657
    %v927 = vunpack.c.h.b16 %v657
    %v928 = vunpack.c.l.b16 %v658
    %v929 = vunpack.c.h.b16 %v658
    %v930 = vunpack.c.l.b16 %v659
    %v931 = vunpack.c.h.b16 %v659
    %v932 = vunpack.c.l.b16 %v660
    %v933 = vunpack.c.h.b16 %v660
    %v934 = vunpack.c.l.b16 %v661
    %v935 = vunpack.c.h.b16 %v661
    %v936 = vunpack.c.l.b16 %v662
    %v937 = vunpack.c.h.b16 %v662
    %v938 = vunpack.c.l.b16 %v663
    %v939 = vunpack.c.h.b16 %v663
    %v940 = vunpack.c.l.b16 %v664
    %v941 = vunpack.c.h.b16 %v664
    %v942 = vunpack.c.l.b16 %v665
    %v943 = vunpack.c.h.b16 %v665
    %v944 = vunpack.c.l.b16 %v666
    %v945 = vunpack.c.h.b16 %v666
    %v946 = vunpack.c.l.b16 %v667
    %v947 = vunpack.c.h.b16 %v667
    %v948 = vunpack.c.l.b16 %v668
    %v949 = vunpack.c.h.b16 %v668
    %v950 = vunpack.c.l.b16 %v669
    %v951 = vunpack.c.h.b16 %v669
    %v952 = vunpack.c.l.b16 %v670
    %v953 = vunpack.c.h.b16 %v670
    %v954 = vunpack.c.l.b16 %v671
    %v955 = vunpack.c.h.b16 %v671
    %v956 = vunpack.c.l.b16 %v672
    %v957 = vunpack.c.h.b16 %v672
    %v958 = vunpack.c.l.b16 %v673
    %v959 = vunpack.c.h.b16 %v673
    %v960 = vunpack.c.l.b16 %v674
    %v961 = vunpack.c.h.b16 %v674
    %v962 = vunpack.c.l.b16 %v675
    %v963 = vunpack.c.h.b16 %v675
    %v964 = vunpack.c.l.b16 %v676
    %v965 = vunpack.c.h.b16 %v676
    %v966 = vunpack.c.l.b16 %v677
    %v967 = vunpack.c.h.b16 %v677
    %v968 = vunpack.c.l.b16 %v678
    %v969 = vunpack.c.h.b16 %v678
    %v970 = vunpack.c.l.b16 %v679
    %v971 = vunpack.c.h.b16 %v679
    %v972 = vunpack.c.l.b16 %v680
    %v973 = vunpack.c.h.b16 %v680
    %v974 = vunpack.c.l.b16 %v681
    %v975 = vunpack.c.h.b16 %v681
    %v976 = vunpack.c.l.b16 %v682
    %v977 = vunpack.c.h.b16 %v682
    %v978 = vunpack.c.l.b16 %v683
    %v979 = vunpack.c.h.b16 %v683
    %v980 = vunpack.c.l.b16 %v684
    %v981 = vunpack.c.h.b16 %v684
    %v982 = vunpack.c.l.b16 %v685
    %v983 = vunpack.c.h.b16 %v685
    %v984 = vunpack.c.l.b16 %v686
    %v985 = vunpack.c.h.b16 %v686
    %v986 = vunpack.c.l.b16 %v687
    %v987 = vunpack.c.h.b16 %v687
    %v988 = vunpack.c.l.b16 %v688
    %v989 = vunpack.c.h.b16 %v688
    %v990 = vunpack.c.l.b16 %v689
    %v991 = vunpack.c.h.b16 %v689
    %v992 = vpack.c.b16 %v806, %v800
    %v993 = vpack.c.b16 %v807, %v801
    %v994 = vpack.c.b16 %v808, %v802
    %v995 = vpack.c.b16 %v809, %v803
    %v996 = vpack.c.b16 %v810, %v804
    %v997 = vpack.c.b16 %v811, %v805
    %v998 = vpack.c.b16 %v818, %v812
    %v999 = vpack.c.b16 %v819, %v813
    %v1000 = vpack.c.b16 %v820, %v814
    %v1001 = vpack.c.b16 %v821, %v815
    %v1002 = vpack.c.b16 %v822, %v816
    %v1003 = vpack.c.b16 %v823, %v817
    %v1004 = vpack.c.b16 %v830, %v824
    %v1005 = vpack.c.b16 %v831, %v825
    %v1006 = vpack.c.b16 %v832, %v826
    %v1007 = vpack.c.b16 %v833, %v827
    %v1008 = vpack.c.b16 %v834, %v828
    %v1009 = vpack.c.b16 %v835, %v829
    %v1010 = vpack.c.b16 %v842, %v836
    %v1011 = vpack.c.b16 %v843, %v837
    %v1012 = vpack.c.b16 %v844, %v838
    %v1013 = vpack.c.b16 %v845, %v839
    %v1014 = vpack.c.b16 %v846, %v840
    %v1015 = vpack.c.b16 %v847, %v841
    %v1016 = vpack.c.b16 %v854, %v848
    %v1017 = vpack.c.b16 %v855, %v849
    %v1018 = vpack.c.b16 %v856, %v850
    %v1019 = vpack.c.b16 %v857, %v851
    %v1020 = vpack.c.b16 %v858, %v852
    %v1021 = vpack.c.b16 %v859, %v853
    %v1022 = vpack.c.b16 %v866, %v860
    %v1023 = vpack.c.b16 %v867, %v861
    %v1024 = vpack.c.b16 %v868, %v862
    %v1025 = vpack.c.b16 %v869, %v863
    %v1026 = vpack.c.b16 %v870, %v864
    %v1027 = vpack.c.b16 %v871, %v865
    %v1028 = vpack.c.b16 %v878, %v872
    %v1029 = vpack.c.b16 %v879, %v873
    %v1030 = vpack.c.b16 %v880, %v874
    %v1031 = vpack.c.b16 %v881, %v875
    %v1032 = vpack.c.b16 %v882, %v876
    %v1033 = vpack.c.b16 %v883, %v877
    %v1034 = vpack.c.b16 %v890, %v884
    %v1035 = vpack.c.b16 %v891, %v885
    %v1036 = vpack.c.b16 %v892, %v886
    %v1037 = vpack.c.b16 %v893, %v887
    %v1038 = vpack.c.b16 %v894, %v888
    %v1039 = vpack.c.b16 %v895, %v889
    %v1040 = vpack.c.b16 %v902, %v896
    %v1041 = vpack.c.b16 %v903, %v897
    %v1042 = vpack.c.b16 %v904, %v898
    %v1043 = vpack.c.b16 %v905, %v899
    %v1044 = vpack.c.b16 %v906, %v900
    %v1045 = vpack.c.b16 %v907, %v901
    %v1046 = vpack.c.b16 %v914, %v908
    %v1047 = vpack.c.b16 %v915, %v909
    %v1048 = vpack.c.b16 %v916, %v910
    %v1049 = vpack.c.b16 %v917, %v911
    %v1050 = vpack.c.b16 %v918, %v912
    %v1051 = vpack.c.b16 %v919, %v913
    %v1052 = vpack.c.b16 %v926, %v920
    %v1053 = vpack.c.b16 %v927, %v921
    %v1054 = vpack.c.b16 %v928, %v922
    %v1055 = vpack.c.b16 %v929, %v923
    %v1056 = vpack.c.b16 %v930, %v924
    %v1057 = vpack.c.b16 %v931, %v925
    %v1058 = vpack.c.b16 %v938, %v932
    %v1059 = vpack.c.b16 %v939, %v933
    %v1060 = vpack.c.b16 %v940, %v934
    %v1061 = vpack.c.b16 %v941, %v935
    %v1062 = vpack.c.b16 %v942, %v936
    %v1063 = vpack.c.b16 %v943, %v937
    %v1064 = vpack.c.b16 %v950, %v944
    %v1065 = vpack.c.b16 %v951, %v945
    %v1066 = vpack.c.b16 %v952, %v946
    %v1067 = vpack.c.b16 %v953, %v947
    %v1068 = vpack.c.b16 %v954, %v948
    %v1069 = vpack.c.b16 %v955, %v949
    %v1070 = vpack.c.b16 %v962, %v956
    %v1071 = vpack.c.b16 %v963, %v957
    %v1072 = vpack.c.b16 %v964, %v958
    %v1073 = vpack.c.b16 %v965, %v959
    %v1074 = vpack.c.b16 %v966, %v960
    %v1075 = vpack.c.b16 %v967, %v961
    %v1076 = vpack.c.b16 %v974, %v968
    %v1077 = vpack.c.b16 %v975, %v969
    %v1078 = vpack.c.b16 %v976, %v970
    %v1079 = vpack.c.b16 %v977, %v971
    %v1080 = vpack.c.b16 %v978, %v972
    %v1081 = vpack.c.b16 %v979, %v973
    %v1082 = vpack.c.b16 %v986, %v980
    %v1083 = vpack.c.b16 %v987, %v981
    %v1084 = vpack.c.b16 %v988, %v982
    %v1085 = vpack.c.b16 %v989, %v983
    %v1086 = vpack.c.b16 %v990, %v984
    %v1087 = vpack.c.b16 %v991, %v985
    %1184 = vmatpush.bf16.msra.mxu0 %v1034
    %1185 = vmatpush.bf16.msra.mxu0 %v1028
    %1186 = vmatpush.bf16.msra.mxu0 %v1022
    %1187 = vmatpush.bf16.msra.mxu0 %v1016
    %1188 = vmatpush.bf16.msra.mxu0 %v1010
    %1189 = vmatpush.bf16.msra.mxu0 %v1004
    %1190 = vmatpush.bf16.msra.mxu0 %v998
    %1191 = vmatpush.bf16.msra.mxu0 %v992
    %1192 = vmatmul.bf16.gmra.mxu0 %v578
    %v1193 = vpop.f32.mrf.mxu0
    %v1194 = vadd.f32 %v692, %v1193
    %v1195 = vpop.f32.mrf.mxu0
    %v1196 = vadd.f32 %v692, %v1195
    %1197 = vmatmul.bf16.gmra.mxu0 %v580
    %v1198 = vpop.f32.mrf.mxu0
    %v1199 = vadd.f32 %v692, %v1198
    %v1200 = vpop.f32.mrf.mxu0
    %v1201 = vadd.f32 %v692, %v1200
    %1202 = vmatmul.bf16.gmra.mxu0 %v582
    %v1203 = vpop.f32.mrf.mxu0
    %v1204 = vadd.f32 %v692, %v1203
    %v1205 = vpop.f32.mrf.mxu0
    %v1206 = vadd.f32 %v692, %v1205
    %1207 = vmatmul.bf16.gmra.mxu0 %v584
    %v1208 = vpop.f32.mrf.mxu0
    %v1209 = vadd.f32 %v692, %v1208
    %v1210 = vpop.f32.mrf.mxu0
    %v1211 = vadd.f32 %v692, %v1210
    %1212 = vmatmul.bf16.gmra.mxu0 %v586
    %v1213 = vpop.f32.mrf.mxu0
    %v1214 = vadd.f32 %v692, %v1213
    %v1215 = vpop.f32.mrf.mxu0
    %v1216 = vadd.f32 %v692, %v1215
    %1217 = vmatmul.bf16.gmra.mxu0 %v588
    %v1218 = vpop.f32.mrf.mxu0
    %v1219 = vadd.f32 %v692, %v1218
    %v1220 = vpop.f32.mrf.mxu0
    %v1221 = vadd.f32 %v692, %v1220
    %1222 = vmatmul.bf16.gmra.mxu0 %v590
    %v1223 = vpop.f32.mrf.mxu0
    %v1224 = vadd.f32 %v692, %v1223
    %v1225 = vpop.f32.mrf.mxu0
    %v1226 = vadd.f32 %v692, %v1225
    %1227 = vmatmul.bf16.gmra.mxu0 %v592
    %v1228 = vpop.f32.mrf.mxu0
    %v1229 = vadd.f32 %v692, %v1228
    %v1230 = vpop.f32.mrf.mxu0
    %v1231 = vadd.f32 %v692, %v1230
    %1232 = vdwg.mxu0
    %1233 = vmatpush.bf16.msra.mxu0 %v1082
    %1234 = vmatpush.bf16.msra.mxu0 %v1076
    %1235 = vmatpush.bf16.msra.mxu0 %v1070
    %1236 = vmatpush.bf16.msra.mxu0 %v1064
    %1237 = vmatpush.bf16.msra.mxu0 %v1058
    %1238 = vmatpush.bf16.msra.mxu0 %v1052
    %1239 = vmatpush.bf16.msra.mxu0 %v1046
    %1240 = vmatpush.bf16.msra.mxu0 %v1040
    %1241 = vmatmul.bf16.gmra.mxu0 %v579
    %v1242 = vpop.f32.mrf.mxu0
    %v1243 = vadd.f32 %v1194, %v1242
    %v1244 = vpop.f32.mrf.mxu0
    %v1245 = vadd.f32 %v1196, %v1244
    %1246 = vmatmul.bf16.gmra.mxu0 %v581
    %v1247 = vpop.f32.mrf.mxu0
    %v1248 = vadd.f32 %v1199, %v1247
    %v1249 = vpop.f32.mrf.mxu0
    %v1250 = vadd.f32 %v1201, %v1249
    %1251 = vmatmul.bf16.gmra.mxu0 %v583
    %v1252 = vpop.f32.mrf.mxu0
    %v1253 = vadd.f32 %v1204, %v1252
    %v1254 = vpop.f32.mrf.mxu0
    %v1255 = vadd.f32 %v1206, %v1254
    %1256 = vmatmul.bf16.gmra.mxu0 %v585
    %v1257 = vpop.f32.mrf.mxu0
    %v1258 = vadd.f32 %v1209, %v1257
    %v1259 = vpop.f32.mrf.mxu0
    %v1260 = vadd.f32 %v1211, %v1259
    %1261 = vmatmul.bf16.gmra.mxu0 %v587
    %v1262 = vpop.f32.mrf.mxu0
    %v1263 = vadd.f32 %v1214, %v1262
    %v1264 = vpop.f32.mrf.mxu0
    %v1265 = vadd.f32 %v1216, %v1264
    %1266 = vmatmul.bf16.gmra.mxu0 %v589
    %v1267 = vpop.f32.mrf.mxu0
    %v1268 = vadd.f32 %v1219, %v1267
    %v1269 = vpop.f32.mrf.mxu0
    %v1270 = vadd.f32 %v1221, %v1269
    %1271 = vmatmul.bf16.gmra.mxu0 %v591
    %v1272 = vpop.f32.mrf.mxu0
    %v1273 = vadd.f32 %v1224, %v1272
    %v1274 = vpop.f32.mrf.mxu0
    %v1275 = vadd.f32 %v1226, %v1274
    %1276 = vmatmul.bf16.gmra.mxu0 %v593
    %v1277 = vpop.f32.mrf.mxu0
    %v1278 = vadd.f32 %v1229, %v1277
    %v1279 = vpop.f32.mrf.mxu0
    %v1280 = vadd.f32 %v1231, %v1279
    %1281 = vdwg.mxu0
    %1282 = vmatpush.bf16.msra.mxu0 %v1035
    %1283 = vmatpush.bf16.msra.mxu0 %v1029
    %1284 = vmatpush.bf16.msra.mxu0 %v1023
    %1285 = vmatpush.bf16.msra.mxu0 %v1017
    %1286 = vmatpush.bf16.msra.mxu0 %v1011
    %1287 = vmatpush.bf16.msra.mxu0 %v1005
    %1288 = vmatpush.bf16.msra.mxu0 %v999
    %1289 = vmatpush.bf16.msra.mxu0 %v993
    %1290 = vmatmul.bf16.gmra.mxu0 %v578
    %v1291 = vpop.f32.mrf.mxu0
    %v1292 = vadd.f32 %v693, %v1291
    %v1293 = vpop.f32.mrf.mxu0
    %v1294 = vadd.f32 %v693, %v1293
    %1295 = vmatmul.bf16.gmra.mxu0 %v580
    %v1296 = vpop.f32.mrf.mxu0
    %v1297 = vadd.f32 %v693, %v1296
    %v1298 = vpop.f32.mrf.mxu0
    %v1299 = vadd.f32 %v693, %v1298
    %1300 = vmatmul.bf16.gmra.mxu0 %v582
    %v1301 = vpop.f32.mrf.mxu0
    %v1302 = vadd.f32 %v693, %v1301
    %v1303 = vpop.f32.mrf.mxu0
    %v1304 = vadd.f32 %v693, %v1303
    %1305 = vmatmul.bf16.gmra.mxu0 %v584
    %v1306 = vpop.f32.mrf.mxu0
    %v1307 = vadd.f32 %v693, %v1306
    %v1308 = vpop.f32.mrf.mxu0
    %v1309 = vadd.f32 %v693, %v1308
    %1310 = vmatmul.bf16.gmra.mxu0 %v586
    %v1311 = vpop.f32.mrf.mxu0
    %v1312 = vadd.f32 %v693, %v1311
    %v1313 = vpop.f32.mrf.mxu0
    %v1314 = vadd.f32 %v693, %v1313
    %1315 = vmatmul.bf16.gmra.mxu0 %v588
    %v1316 = vpop.f32.mrf.mxu0
    %v1317 = vadd.f32 %v693, %v1316
    %v1318 = vpop.f32.mrf.mxu0
    %v1319 = vadd.f32 %v693, %v1318
    %1320 = vmatmul.bf16.gmra.mxu0 %v590
    %v1321 = vpop.f32.mrf.mxu0
    %v1322 = vadd.f32 %v693, %v1321
    %v1323 = vpop.f32.mrf.mxu0
    %v1324 = vadd.f32 %v693, %v1323
    %1325 = vmatmul.bf16.gmra.mxu0 %v592
    %v1326 = vpop.f32.mrf.mxu0
    %v1327 = vadd.f32 %v693, %v1326
    %v1328 = vpop.f32.mrf.mxu0
    %v1329 = vadd.f32 %v693, %v1328
    %1330 = vdwg.mxu0
    %1331 = vmatpush.bf16.msra.mxu0 %v1083
    %1332 = vmatpush.bf16.msra.mxu0 %v1077
    %1333 = vmatpush.bf16.msra.mxu0 %v1071
    %1334 = vmatpush.bf16.msra.mxu0 %v1065
    %1335 = vmatpush.bf16.msra.mxu0 %v1059
    %1336 = vmatpush.bf16.msra.mxu0 %v1053
    %1337 = vmatpush.bf16.msra.mxu0 %v1047
    %1338 = vmatpush.bf16.msra.mxu0 %v1041
    %1339 = vmatmul.bf16.gmra.mxu0 %v579
    %v1340 = vpop.f32.mrf.mxu0
    %v1341 = vadd.f32 %v1292, %v1340
    %v1342 = vpop.f32.mrf.mxu0
    %v1343 = vadd.f32 %v1294, %v1342
    %1344 = vmatmul.bf16.gmra.mxu0 %v581
    %v1345 = vpop.f32.mrf.mxu0
    %v1346 = vadd.f32 %v1297, %v1345
    %v1347 = vpop.f32.mrf.mxu0
    %v1348 = vadd.f32 %v1299, %v1347
    %1349 = vmatmul.bf16.gmra.mxu0 %v583
    %v1350 = vpop.f32.mrf.mxu0
    %v1351 = vadd.f32 %v1302, %v1350
    %v1352 = vpop.f32.mrf.mxu0
    %v1353 = vadd.f32 %v1304, %v1352
    %1354 = vmatmul.bf16.gmra.mxu0 %v585
    %v1355 = vpop.f32.mrf.mxu0
    %v1356 = vadd.f32 %v1307, %v1355
    %v1357 = vpop.f32.mrf.mxu0
    %v1358 = vadd.f32 %v1309, %v1357
    %1359 = vmatmul.bf16.gmra.mxu0 %v587
    %v1360 = vpop.f32.mrf.mxu0
    %v1361 = vadd.f32 %v1312, %v1360
    %v1362 = vpop.f32.mrf.mxu0
    %v1363 = vadd.f32 %v1314, %v1362
    %1364 = vmatmul.bf16.gmra.mxu0 %v589
    %v1365 = vpop.f32.mrf.mxu0
    %v1366 = vadd.f32 %v1317, %v1365
    %v1367 = vpop.f32.mrf.mxu0
    %v1368 = vadd.f32 %v1319, %v1367
    %1369 = vmatmul.bf16.gmra.mxu0 %v591
    %v1370 = vpop.f32.mrf.mxu0
    %v1371 = vadd.f32 %v1322, %v1370
    %v1372 = vpop.f32.mrf.mxu0
    %v1373 = vadd.f32 %v1324, %v1372
    %1374 = vmatmul.bf16.gmra.mxu0 %v593
    %v1375 = vpop.f32.mrf.mxu0
    %v1376 = vadd.f32 %v1327, %v1375
    %v1377 = vpop.f32.mrf.mxu0
    %v1378 = vadd.f32 %v1329, %v1377
    %1379 = vdwg.mxu0
    %1380 = vmatpush.bf16.msra.mxu0 %v1036
    %1381 = vmatpush.bf16.msra.mxu0 %v1030
    %1382 = vmatpush.bf16.msra.mxu0 %v1024
    %1383 = vmatpush.bf16.msra.mxu0 %v1018
    %1384 = vmatpush.bf16.msra.mxu0 %v1012
    %1385 = vmatpush.bf16.msra.mxu0 %v1006
    %1386 = vmatpush.bf16.msra.mxu0 %v1000
    %1387 = vmatpush.bf16.msra.mxu0 %v994
    %1388 = vmatmul.bf16.gmra.mxu0 %v578
    %v1389 = vpop.f32.mrf.mxu0
    %v1390 = vadd.f32 %v694, %v1389
    %v1391 = vpop.f32.mrf.mxu0
    %v1392 = vadd.f32 %v694, %v1391
    %1393 = vmatmul.bf16.gmra.mxu0 %v580
    %v1394 = vpop.f32.mrf.mxu0
    %v1395 = vadd.f32 %v694, %v1394
    %v1396 = vpop.f32.mrf.mxu0
    %v1397 = vadd.f32 %v694, %v1396
    %1398 = vmatmul.bf16.gmra.mxu0 %v582
    %v1399 = vpop.f32.mrf.mxu0
    %v1400 = vadd.f32 %v694, %v1399
    %v1401 = vpop.f32.mrf.mxu0
    %v1402 = vadd.f32 %v694, %v1401
    %1403 = vmatmul.bf16.gmra.mxu0 %v584
    %v1404 = vpop.f32.mrf.mxu0
    %v1405 = vadd.f32 %v694, %v1404
    %v1406 = vpop.f32.mrf.mxu0
    %v1407 = vadd.f32 %v694, %v1406
    %1408 = vmatmul.bf16.gmra.mxu0 %v586
    %v1409 = vpop.f32.mrf.mxu0
    %v1410 = vadd.f32 %v694, %v1409
    %v1411 = vpop.f32.mrf.mxu0
    %v1412 = vadd.f32 %v694, %v1411
    %1413 = vmatmul.bf16.gmra.mxu0 %v588
    %v1414 = vpop.f32.mrf.mxu0
    %v1415 = vadd.f32 %v694, %v1414
    %v1416 = vpop.f32.mrf.mxu0
    %v1417 = vadd.f32 %v694, %v1416
    %1418 = vmatmul.bf16.gmra.mxu0 %v590
    %v1419 = vpop.f32.mrf.mxu0
    %v1420 = vadd.f32 %v694, %v1419
    %v1421 = vpop.f32.mrf.mxu0
    %v1422 = vadd.f32 %v694, %v1421
    %1423 = vmatmul.bf16.gmra.mxu0 %v592
    %v1424 = vpop.f32.mrf.mxu0
    %v1425 = vadd.f32 %v694, %v1424
    %v1426 = vpop.f32.mrf.mxu0
    %v1427 = vadd.f32 %v694, %v1426
    %1428 = vdwg.mxu0
    %1429 = vmatpush.bf16.msra.mxu0 %v1084
    %1430 = vmatpush.bf16.msra.mxu0 %v1078
    %1431 = vmatpush.bf16.msra.mxu0 %v1072
    %1432 = vmatpush.bf16.msra.mxu0 %v1066
    %1433 = vmatpush.bf16.msra.mxu0 %v1060
    %1434 = vmatpush.bf16.msra.mxu0 %v1054
    %1435 = vmatpush.bf16.msra.mxu0 %v1048
    %1436 = vmatpush.bf16.msra.mxu0 %v1042
    %1437 = vmatmul.bf16.gmra.mxu0 %v579
    %v1438 = vpop.f32.mrf.mxu0
    %v1439 = vadd.f32 %v1390, %v1438
    %v1440 = vpop.f32.mrf.mxu0
    %v1441 = vadd.f32 %v1392, %v1440
    %1442 = vmatmul.bf16.gmra.mxu0 %v581
    %v1443 = vpop.f32.mrf.mxu0
    %v1444 = vadd.f32 %v1395, %v1443
    %v1445 = vpop.f32.mrf.mxu0
    %v1446 = vadd.f32 %v1397, %v1445
    %1447 = vmatmul.bf16.gmra.mxu0 %v583
    %v1448 = vpop.f32.mrf.mxu0
    %v1449 = vadd.f32 %v1400, %v1448
    %v1450 = vpop.f32.mrf.mxu0
    %v1451 = vadd.f32 %v1402, %v1450
    %1452 = vmatmul.bf16.gmra.mxu0 %v585
    %v1453 = vpop.f32.mrf.mxu0
    %v1454 = vadd.f32 %v1405, %v1453
    %v1455 = vpop.f32.mrf.mxu0
    %v1456 = vadd.f32 %v1407, %v1455
    %1457 = vmatmul.bf16.gmra.mxu0 %v587
    %v1458 = vpop.f32.mrf.mxu0
    %v1459 = vadd.f32 %v1410, %v1458
    %v1460 = vpop.f32.mrf.mxu0
    %v1461 = vadd.f32 %v1412, %v1460
    %1462 = vmatmul.bf16.gmra.mxu0 %v589
    %v1463 = vpop.f32.mrf.mxu0
    %v1464 = vadd.f32 %v1415, %v1463
    %v1465 = vpop.f32.mrf.mxu0
    %v1466 = vadd.f32 %v1417, %v1465
    %1467 = vmatmul.bf16.gmra.mxu0 %v591
    %v1468 = vpop.f32.mrf.mxu0
    %v1469 = vadd.f32 %v1420, %v1468
    %v1470 = vpop.f32.mrf.mxu0
    %v1471 = vadd.f32 %v1422, %v1470
    %1472 = vmatmul.bf16.gmra.mxu0 %v593
    %v1473 = vpop.f32.mrf.mxu0
    %v1474 = vadd.f32 %v1425, %v1473
    %v1475 = vpop.f32.mrf.mxu0
    %v1476 = vadd.f32 %v1427, %v1475
    %1477 = vdwg.mxu0
    %1478 = vmatpush.bf16.msra.mxu0 %v1037
    %1479 = vmatpush.bf16.msra.mxu0 %v1031
    %1480 = vmatpush.bf16.msra.mxu0 %v1025
    %1481 = vmatpush.bf16.msra.mxu0 %v1019
    %1482 = vmatpush.bf16.msra.mxu0 %v1013
    %1483 = vmatpush.bf16.msra.mxu0 %v1007
    %1484 = vmatpush.bf16.msra.mxu0 %v1001
    %1485 = vmatpush.bf16.msra.mxu0 %v995
    %1486 = vmatmul.bf16.gmra.mxu0 %v578
    %v1487 = vpop.f32.mrf.mxu0
    %v1488 = vadd.f32 %v695, %v1487
    %v1489 = vpop.f32.mrf.mxu0
    %v1490 = vadd.f32 %v695, %v1489
    %1491 = vmatmul.bf16.gmra.mxu0 %v580
    %v1492 = vpop.f32.mrf.mxu0
    %v1493 = vadd.f32 %v695, %v1492
    %v1494 = vpop.f32.mrf.mxu0
    %v1495 = vadd.f32 %v695, %v1494
    %1496 = vmatmul.bf16.gmra.mxu0 %v582
    %v1497 = vpop.f32.mrf.mxu0
    %v1498 = vadd.f32 %v695, %v1497
    %v1499 = vpop.f32.mrf.mxu0
    %v1500 = vadd.f32 %v695, %v1499
    %1501 = vmatmul.bf16.gmra.mxu0 %v584
    %v1502 = vpop.f32.mrf.mxu0
    %v1503 = vadd.f32 %v695, %v1502
    %v1504 = vpop.f32.mrf.mxu0
    %v1505 = vadd.f32 %v695, %v1504
    %1506 = vmatmul.bf16.gmra.mxu0 %v586
    %v1507 = vpop.f32.mrf.mxu0
    %v1508 = vadd.f32 %v695, %v1507
    %v1509 = vpop.f32.mrf.mxu0
    %v1510 = vadd.f32 %v695, %v1509
    %1511 = vmatmul.bf16.gmra.mxu0 %v588
    %v1512 = vpop.f32.mrf.mxu0
    %v1513 = vadd.f32 %v695, %v1512
    %v1514 = vpop.f32.mrf.mxu0
    %v1515 = vadd.f32 %v695, %v1514
    %1516 = vmatmul.bf16.gmra.mxu0 %v590
    %v1517 = vpop.f32.mrf.mxu0
    %v1518 = vadd.f32 %v695, %v1517
    %v1519 = vpop.f32.mrf.mxu0
    %v1520 = vadd.f32 %v695, %v1519
    %1521 = vmatmul.bf16.gmra.mxu0 %v592
    %v1522 = vpop.f32.mrf.mxu0
    %v1523 = vadd.f32 %v695, %v1522
    %v1524 = vpop.f32.mrf.mxu0
    %v1525 = vadd.f32 %v695, %v1524
    %1526 = vdwg.mxu0
    %1527 = vmatpush.bf16.msra.mxu0 %v1085
    %1528 = vmatpush.bf16.msra.mxu0 %v1079
    %1529 = vmatpush.bf16.msra.mxu0 %v1073
    %1530 = vmatpush.bf16.msra.mxu0 %v1067
    %1531 = vmatpush.bf16.msra.mxu0 %v1061
    %1532 = vmatpush.bf16.msra.mxu0 %v1055
    %1533 = vmatpush.bf16.msra.mxu0 %v1049
    %1534 = vmatpush.bf16.msra.mxu0 %v1043
    %1535 = vmatmul.bf16.gmra.mxu0 %v579
    %v1536 = vpop.f32.mrf.mxu0
    %v1537 = vadd.f32 %v1488, %v1536
    %v1538 = vpop.f32.mrf.mxu0
    %v1539 = vadd.f32 %v1490, %v1538
    %1540 = vmatmul.bf16.gmra.mxu0 %v581
    %v1541 = vpop.f32.mrf.mxu0
    %v1542 = vadd.f32 %v1493, %v1541
    %v1543 = vpop.f32.mrf.mxu0
    %v1544 = vadd.f32 %v1495, %v1543
    %1545 = vmatmul.bf16.gmra.mxu0 %v583
    %v1546 = vpop.f32.mrf.mxu0
    %v1547 = vadd.f32 %v1498, %v1546
    %v1548 = vpop.f32.mrf.mxu0
    %v1549 = vadd.f32 %v1500, %v1548
    %1550 = vmatmul.bf16.gmra.mxu0 %v585
    %v1551 = vpop.f32.mrf.mxu0
    %v1552 = vadd.f32 %v1503, %v1551
    %v1553 = vpop.f32.mrf.mxu0
    %v1554 = vadd.f32 %v1505, %v1553
    %1555 = vmatmul.bf16.gmra.mxu0 %v587
    %v1556 = vpop.f32.mrf.mxu0
    %v1557 = vadd.f32 %v1508, %v1556
    %v1558 = vpop.f32.mrf.mxu0
    %v1559 = vadd.f32 %v1510, %v1558
    %1560 = vmatmul.bf16.gmra.mxu0 %v589
    %v1561 = vpop.f32.mrf.mxu0
    %v1562 = vadd.f32 %v1513, %v1561
    %v1563 = vpop.f32.mrf.mxu0
    %v1564 = vadd.f32 %v1515, %v1563
    %1565 = vmatmul.bf16.gmra.mxu0 %v591
    %v1566 = vpop.f32.mrf.mxu0
    %v1567 = vadd.f32 %v1518, %v1566
    %v1568 = vpop.f32.mrf.mxu0
    %v1569 = vadd.f32 %v1520, %v1568
    %1570 = vmatmul.bf16.gmra.mxu0 %v593
    %v1571 = vpop.f32.mrf.mxu0
    %v1572 = vadd.f32 %v1523, %v1571
    %v1573 = vpop.f32.mrf.mxu0
    %v1574 = vadd.f32 %v1525, %v1573
    %1575 = vdwg.mxu0
    %1576 = vmatpush.bf16.msra.mxu0 %v1038
    %1577 = vmatpush.bf16.msra.mxu0 %v1032
    %1578 = vmatpush.bf16.msra.mxu0 %v1026
    %1579 = vmatpush.bf16.msra.mxu0 %v1020
    %1580 = vmatpush.bf16.msra.mxu0 %v1014
    %1581 = vmatpush.bf16.msra.mxu0 %v1008
    %1582 = vmatpush.bf16.msra.mxu0 %v1002
    %1583 = vmatpush.bf16.msra.mxu0 %v996
    %1584 = vmatmul.bf16.gmra.mxu0 %v578
    %v1585 = vpop.f32.mrf.mxu0
    %v1586 = vadd.f32 %v696, %v1585
    %v1587 = vpop.f32.mrf.mxu0
    %v1588 = vadd.f32 %v696, %v1587
    %1589 = vmatmul.bf16.gmra.mxu0 %v580
    %v1590 = vpop.f32.mrf.mxu0
    %v1591 = vadd.f32 %v696, %v1590
    %v1592 = vpop.f32.mrf.mxu0
    %v1593 = vadd.f32 %v696, %v1592
    %1594 = vmatmul.bf16.gmra.mxu0 %v582
    %v1595 = vpop.f32.mrf.mxu0
    %v1596 = vadd.f32 %v696, %v1595
    %v1597 = vpop.f32.mrf.mxu0
    %v1598 = vadd.f32 %v696, %v1597
    %1599 = vmatmul.bf16.gmra.mxu0 %v584
    %v1600 = vpop.f32.mrf.mxu0
    %v1601 = vadd.f32 %v696, %v1600
    %v1602 = vpop.f32.mrf.mxu0
    %v1603 = vadd.f32 %v696, %v1602
    %1604 = vmatmul.bf16.gmra.mxu0 %v586
    %v1605 = vpop.f32.mrf.mxu0
    %v1606 = vadd.f32 %v696, %v1605
    %v1607 = vpop.f32.mrf.mxu0
    %v1608 = vadd.f32 %v696, %v1607
    %1609 = vmatmul.bf16.gmra.mxu0 %v588
    %v1610 = vpop.f32.mrf.mxu0
    %v1611 = vadd.f32 %v696, %v1610
    %v1612 = vpop.f32.mrf.mxu0
    %v1613 = vadd.f32 %v696, %v1612
    %1614 = vmatmul.bf16.gmra.mxu0 %v590
    %v1615 = vpop.f32.mrf.mxu0
    %v1616 = vadd.f32 %v696, %v1615
    %v1617 = vpop.f32.mrf.mxu0
    %v1618 = vadd.f32 %v696, %v1617
    %1619 = vmatmul.bf16.gmra.mxu0 %v592
    %v1620 = vpop.f32.mrf.mxu0
    %v1621 = vadd.f32 %v696, %v1620
    %v1622 = vpop.f32.mrf.mxu0
    %v1623 = vadd.f32 %v696, %v1622
    %1624 = vdwg.mxu0
    %1625 = vmatpush.bf16.msra.mxu0 %v1086
    %1626 = vmatpush.bf16.msra.mxu0 %v1080
    %1627 = vmatpush.bf16.msra.mxu0 %v1074
    %1628 = vmatpush.bf16.msra.mxu0 %v1068
    %1629 = vmatpush.bf16.msra.mxu0 %v1062
    %1630 = vmatpush.bf16.msra.mxu0 %v1056
    %1631 = vmatpush.bf16.msra.mxu0 %v1050
    %1632 = vmatpush.bf16.msra.mxu0 %v1044
    %1633 = vmatmul.bf16.gmra.mxu0 %v579
    %v1634 = vpop.f32.mrf.mxu0
    %v1635 = vadd.f32 %v1586, %v1634
    %v1636 = vpop.f32.mrf.mxu0
    %v1637 = vadd.f32 %v1588, %v1636
    %1638 = vmatmul.bf16.gmra.mxu0 %v581
    %v1639 = vpop.f32.mrf.mxu0
    %v1640 = vadd.f32 %v1591, %v1639
    %v1641 = vpop.f32.mrf.mxu0
    %v1642 = vadd.f32 %v1593, %v1641
    %1643 = vmatmul.bf16.gmra.mxu0 %v583
    %v1644 = vpop.f32.mrf.mxu0
    %v1645 = vadd.f32 %v1596, %v1644
    %v1646 = vpop.f32.mrf.mxu0
    %v1647 = vadd.f32 %v1598, %v1646
    %1648 = vmatmul.bf16.gmra.mxu0 %v585
    %v1649 = vpop.f32.mrf.mxu0
    %v1650 = vadd.f32 %v1601, %v1649
    %v1651 = vpop.f32.mrf.mxu0
    %v1652 = vadd.f32 %v1603, %v1651
    %1653 = vmatmul.bf16.gmra.mxu0 %v587
    %v1654 = vpop.f32.mrf.mxu0
    %v1655 = vadd.f32 %v1606, %v1654
    %v1656 = vpop.f32.mrf.mxu0
    %v1657 = vadd.f32 %v1608, %v1656
    %1658 = vmatmul.bf16.gmra.mxu0 %v589
    %v1659 = vpop.f32.mrf.mxu0
    %v1660 = vadd.f32 %v1611, %v1659
    %v1661 = vpop.f32.mrf.mxu0
    %v1662 = vadd.f32 %v1613, %v1661
    %1663 = vmatmul.bf16.gmra.mxu0 %v591
    %v1664 = vpop.f32.mrf.mxu0
    %v1665 = vadd.f32 %v1616, %v1664
    %v1666 = vpop.f32.mrf.mxu0
    %v1667 = vadd.f32 %v1618, %v1666
    %1668 = vmatmul.bf16.gmra.mxu0 %v593
    %v1669 = vpop.f32.mrf.mxu0
    %v1670 = vadd.f32 %v1621, %v1669
    %v1671 = vpop.f32.mrf.mxu0
    %v1672 = vadd.f32 %v1623, %v1671
    %1673 = vdwg.mxu0
    %1674 = vmatpush.bf16.msra.mxu0 %v1039
    %1675 = vmatpush.bf16.msra.mxu0 %v1033
    %1676 = vmatpush.bf16.msra.mxu0 %v1027
    %1677 = vmatpush.bf16.msra.mxu0 %v1021
    %1678 = vmatpush.bf16.msra.mxu0 %v1015
    %1679 = vmatpush.bf16.msra.mxu0 %v1009
    %1680 = vmatpush.bf16.msra.mxu0 %v1003
    %1681 = vmatpush.bf16.msra.mxu0 %v997
    %1682 = vmatmul.bf16.gmra.mxu0 %v578
    %v1683 = vpop.f32.mrf.mxu0
    %v1684 = vadd.f32 %v697, %v1683
    %v1685 = vpop.f32.mrf.mxu0
    %v1686 = vadd.f32 %v697, %v1685
    %1687 = vmatmul.bf16.gmra.mxu0 %v580
    %v1688 = vpop.f32.mrf.mxu0
    %v1689 = vadd.f32 %v697, %v1688
    %v1690 = vpop.f32.mrf.mxu0
    %v1691 = vadd.f32 %v697, %v1690
    %1692 = vmatmul.bf16.gmra.mxu0 %v582
    %v1693 = vpop.f32.mrf.mxu0
    %v1694 = vadd.f32 %v697, %v1693
    %v1695 = vpop.f32.mrf.mxu0
    %v1696 = vadd.f32 %v697, %v1695
    %1697 = vmatmul.bf16.gmra.mxu0 %v584
    %v1698 = vpop.f32.mrf.mxu0
    %v1699 = vadd.f32 %v697, %v1698
    %v1700 = vpop.f32.mrf.mxu0
    %v1701 = vadd.f32 %v697, %v1700
    %1702 = vmatmul.bf16.gmra.mxu0 %v586
    %v1703 = vpop.f32.mrf.mxu0
    %v1704 = vadd.f32 %v697, %v1703
    %v1705 = vpop.f32.mrf.mxu0
    %v1706 = vadd.f32 %v697, %v1705
    %1707 = vmatmul.bf16.gmra.mxu0 %v588
    %v1708 = vpop.f32.mrf.mxu0
    %v1709 = vadd.f32 %v697, %v1708
    %v1710 = vpop.f32.mrf.mxu0
    %v1711 = vadd.f32 %v697, %v1710
    %1712 = vmatmul.bf16.gmra.mxu0 %v590
    %v1713 = vpop.f32.mrf.mxu0
    %v1714 = vadd.f32 %v697, %v1713
    %v1715 = vpop.f32.mrf.mxu0
    %v1716 = vadd.f32 %v697, %v1715
    %1717 = vmatmul.bf16.gmra.mxu0 %v592
    %v1718 = vpop.f32.mrf.mxu0
    %v1719 = vadd.f32 %v697, %v1718
    %v1720 = vpop.f32.mrf.mxu0
    %v1721 = vadd.f32 %v697, %v1720
    %1722 = vdwg.mxu0
    %1723 = vmatpush.bf16.msra.mxu0 %v1087
    %1724 = vmatpush.bf16.msra.mxu0 %v1081
    %1725 = vmatpush.bf16.msra.mxu0 %v1075
    %1726 = vmatpush.bf16.msra.mxu0 %v1069
    %1727 = vmatpush.bf16.msra.mxu0 %v1063
    %1728 = vmatpush.bf16.msra.mxu0 %v1057
    %1729 = vmatpush.bf16.msra.mxu0 %v1051
    %1730 = vmatpush.bf16.msra.mxu0 %v1045
    %1731 = vmatmul.bf16.gmra.mxu0 %v579
    %v1732 = vpop.f32.mrf.mxu0
    %v1733 = vadd.f32 %v1684, %v1732
    %v1734 = vpop.f32.mrf.mxu0
    %v1735 = vadd.f32 %v1686, %v1734
    %1736 = vmatmul.bf16.gmra.mxu0 %v581
    %v1737 = vpop.f32.mrf.mxu0
    %v1738 = vadd.f32 %v1689, %v1737
    %v1739 = vpop.f32.mrf.mxu0
    %v1740 = vadd.f32 %v1691, %v1739
    %1741 = vmatmul.bf16.gmra.mxu0 %v583
    %v1742 = vpop.f32.mrf.mxu0
    %v1743 = vadd.f32 %v1694, %v1742
    %v1744 = vpop.f32.mrf.mxu0
    %v1745 = vadd.f32 %v1696, %v1744
    %1746 = vmatmul.bf16.gmra.mxu0 %v585
    %v1747 = vpop.f32.mrf.mxu0
    %v1748 = vadd.f32 %v1699, %v1747
    %v1749 = vpop.f32.mrf.mxu0
    %v1750 = vadd.f32 %v1701, %v1749
    %1751 = vmatmul.bf16.gmra.mxu0 %v587
    %v1752 = vpop.f32.mrf.mxu0
    %v1753 = vadd.f32 %v1704, %v1752
    %v1754 = vpop.f32.mrf.mxu0
    %v1755 = vadd.f32 %v1706, %v1754
    %1756 = vmatmul.bf16.gmra.mxu0 %v589
    %v1757 = vpop.f32.mrf.mxu0
    %v1758 = vadd.f32 %v1709, %v1757
    %v1759 = vpop.f32.mrf.mxu0
    %v1760 = vadd.f32 %v1711, %v1759
    %1761 = vmatmul.bf16.gmra.mxu0 %v591
    %v1762 = vpop.f32.mrf.mxu0
    %v1763 = vadd.f32 %v1714, %v1762
    %v1764 = vpop.f32.mrf.mxu0
    %v1765 = vadd.f32 %v1716, %v1764
    %1766 = vmatmul.bf16.gmra.mxu0 %v593
    %v1767 = vpop.f32.mrf.mxu0
    %v1768 = vadd.f32 %v1719, %v1767
    %v1769 = vpop.f32.mrf.mxu0
    %v1770 = vadd.f32 %v1721, %v1769
    %1771 = vdwg.mxu0
    %v1772 = vpack.c.bf16 %v1341, %v1243
    %v1773 = vpack.c.bf16 %v1343, %v1245
    %v1774 = vpack.c.bf16 %v1346, %v1248
    %v1775 = vpack.c.bf16 %v1348, %v1250
    %v1776 = vpack.c.bf16 %v1351, %v1253
    %v1777 = vpack.c.bf16 %v1353, %v1255
    %v1778 = vpack.c.bf16 %v1356, %v1258
    %v1779 = vpack.c.bf16 %v1358, %v1260
    %v1780 = vpack.c.bf16 %v1361, %v1263
    %v1781 = vpack.c.bf16 %v1363, %v1265
    %v1782 = vpack.c.bf16 %v1366, %v1268
    %v1783 = vpack.c.bf16 %v1368, %v1270
    %v1784 = vpack.c.bf16 %v1371, %v1273
    %v1785 = vpack.c.bf16 %v1373, %v1275
    %v1786 = vpack.c.bf16 %v1376, %v1278
    %v1787 = vpack.c.bf16 %v1378, %v1280
    %v1788 = vpack.c.bf16 %v1537, %v1439
    %v1789 = vpack.c.bf16 %v1539, %v1441
    %v1790 = vpack.c.bf16 %v1542, %v1444
    %v1791 = vpack.c.bf16 %v1544, %v1446
    %v1792 = vpack.c.bf16 %v1547, %v1449
    %v1793 = vpack.c.bf16 %v1549, %v1451
    %v1794 = vpack.c.bf16 %v1552, %v1454
    %v1795 = vpack.c.bf16 %v1554, %v1456
    %v1796 = vpack.c.bf16 %v1557, %v1459
    %v1797 = vpack.c.bf16 %v1559, %v1461
    %v1798 = vpack.c.bf16 %v1562, %v1464
    %v1799 = vpack.c.bf16 %v1564, %v1466
    %v1800 = vpack.c.bf16 %v1567, %v1469
    %v1801 = vpack.c.bf16 %v1569, %v1471
    %v1802 = vpack.c.bf16 %v1572, %v1474
    %v1803 = vpack.c.bf16 %v1574, %v1476
    %v1804 = vpack.c.bf16 %v1733, %v1635
    %v1805 = vpack.c.bf16 %v1735, %v1637
    %v1806 = vpack.c.bf16 %v1738, %v1640
    %v1807 = vpack.c.bf16 %v1740, %v1642
    %v1808 = vpack.c.bf16 %v1743, %v1645
    %v1809 = vpack.c.bf16 %v1745, %v1647
    %v1810 = vpack.c.bf16 %v1748, %v1650
    %v1811 = vpack.c.bf16 %v1750, %v1652
    %v1812 = vpack.c.bf16 %v1753, %v1655
    %v1813 = vpack.c.bf16 %v1755, %v1657
    %v1814 = vpack.c.bf16 %v1758, %v1660
    %v1815 = vpack.c.bf16 %v1760, %v1662
    %v1816 = vpack.c.bf16 %v1763, %v1665
    %v1817 = vpack.c.bf16 %v1765, %v1667
    %v1818 = vpack.c.bf16 %v1768, %v1670
    %v1819 = vpack.c.bf16 %v1770, %v1672
    %v1820 = vlaneseq
    %v1821 = vshrl.u32 %v1820, 7
    %v1822 = vadd.s32 %v1821, 8
    %v1823 = vadd.s32 %v1821, 16
    %v1824 = vadd.s32 %v1821, 24
    %v1825 = vadd.s32 %v1821, 32
    %v1826 = vadd.s32 %v1821, 40
    %v1827 = vadd.s32 %v1821, 48
    %v1828 = vadd.s32 %v1821, 56
    %v1829 = vlaneseq
    %v1830 = vand.u32 %v1829, 127
    %vm1831 = vcmp.le.s32.totalorder %v1830, %v1821
    %vm1832 = vcmp.le.s32.totalorder %v1830, %v1822
    %vm1833 = vcmp.le.s32.totalorder %v1830, %v1823
    %vm1834 = vcmp.le.s32.totalorder %v1830, %v1824
    %vm1835 = vcmp.le.s32.totalorder %v1830, %v1825
    %vm1836 = vcmp.le.s32.totalorder %v1830, %v1826
    %vm1837 = vcmp.le.s32.totalorder %v1830, %v1827
    %vm1838 = vcmp.le.s32.totalorder %v1830, %v1828
    %v1839 = vsel %vm1831, 0.0, -1e+30
    %v1840 = vsel %vm1832, 0.0, -1e+30
    %v1841 = vsel %vm1833, 0.0, -1e+30
    %v1842 = vsel %vm1834, 0.0, -1e+30
    %v1843 = vsel %vm1835, 0.0, -1e+30
    %v1844 = vsel %vm1836, 0.0, -1e+30
    %v1845 = vsel %vm1837, 0.0, -1e+30
    %v1846 = vsel %vm1838, 0.0, -1e+30
    %v1855 = vunpack.c.l.b16 %v1772
    %v1856 = vunpack.c.l.b16 %v1773
    %v1857 = vunpack.c.l.b16 %v1774
    %v1858 = vunpack.c.l.b16 %v1775
    %v1859 = vunpack.c.l.b16 %v1776
    %v1860 = vunpack.c.l.b16 %v1777
    %v1861 = vunpack.c.l.b16 %v1778
    %v1862 = vunpack.c.l.b16 %v1779
    %v1863 = vpack.c.b16 %v1856, %v1855
    %v1864 = vpack.c.b16 %v1858, %v1857
    %v1865 = vpack.c.b16 %v1860, %v1859
    %v1866 = vpack.c.b16 %v1862, %v1861
    %v1875 = vunpack.c.l.b16 %v1788
    %v1876 = vunpack.c.l.b16 %v1789
    %v1877 = vunpack.c.l.b16 %v1790
    %v1878 = vunpack.c.l.b16 %v1791
    %v1879 = vunpack.c.l.b16 %v1792
    %v1880 = vunpack.c.l.b16 %v1793
    %v1881 = vunpack.c.l.b16 %v1794
    %v1882 = vunpack.c.l.b16 %v1795
    %v1883 = vpack.c.b16 %v1876, %v1875
    %v1884 = vpack.c.b16 %v1878, %v1877
    %v1885 = vpack.c.b16 %v1880, %v1879
    %v1886 = vpack.c.b16 %v1882, %v1881
    %vm1887 = vcmask 261120
    %v1889 = vsel %vm1887, %v1863, 0
    %v1892 = vsel %vm1887, %v1864, 0
    %v1895 = vsel %vm1887, %v1865, 0
    %v1898 = vsel %vm1887, %v1866, 0
    %v1901 = vsel %vm1887, %v1883, 0
    %v1904 = vsel %vm1887, %v1884, 0
    %v1907 = vsel %vm1887, %v1885, 0
    %v1910 = vsel %vm1887, %v1886, 0
    %1912 = vmatpush.bf16.xpose.msra.mxu0 0
    %1913 = vmatpush.bf16.xpose.msra.mxu0 0
    %1914 = vmatpush.bf16.xpose.msra.mxu0 0
    %1915 = vmatpush.bf16.xpose.msra.mxu0 0
    %1916 = vmatpush.bf16.xpose.msra.mxu0 %v1910
    %1917 = vmatpush.bf16.xpose.msra.mxu0 %v1907
    %1918 = vmatpush.bf16.xpose.msra.mxu0 %v1904
    %1919 = vmatpush.bf16.xpose.msra.mxu0 %v1901
    %1920 = vmatmul.bf16.gmra.mxu0 %v1889
    %v1921 = vpop.f32.mrf.mxu0
    %v1922 = vadd.f32 %v1839, %v1921
    %v1923 = vpop.f32.mrf.mxu0
    %v1924 = vadd.f32 %v1840, %v1923
    %1925 = vmatmul.bf16.gmra.mxu0 %v1892
    %v1926 = vpop.f32.mrf.mxu0
    %v1927 = vadd.f32 %v1841, %v1926
    %v1928 = vpop.f32.mrf.mxu0
    %v1929 = vadd.f32 %v1842, %v1928
    %1930 = vmatmul.bf16.gmra.mxu0 %v1895
    %v1931 = vpop.f32.mrf.mxu0
    %v1932 = vadd.f32 %v1843, %v1931
    %v1933 = vpop.f32.mrf.mxu0
    %v1934 = vadd.f32 %v1844, %v1933
    %1935 = vmatmul.bf16.gmra.mxu0 %v1898
    %v1936 = vpop.f32.mrf.mxu0
    %v1937 = vadd.f32 %v1845, %v1936
    %v1938 = vpop.f32.mrf.mxu0
    %v1939 = vadd.f32 %v1846, %v1938
    %1940 = vdwg.mxu0
    %vm1941 = vcmask 523264
    %v1942 = vsel %vm1941, %v1922, -inf
    %1943 = vmax.xlane.f32.xlu0 %v1942
    %v1944 = vpop.xlane.xlu0 %1943
    %v1945 = vsel %vm1941, %v1924, -inf
    %1946 = vmax.xlane.f32.xlu0 %v1945
    %v1947 = vpop.xlane.xlu0 %1946
    %v1948 = vsel %vm1941, %v1927, -inf
    %1949 = vmax.xlane.f32.xlu0 %v1948
    %v1950 = vpop.xlane.xlu0 %1949
    %v1951 = vsel %vm1941, %v1929, -inf
    %1952 = vmax.xlane.f32.xlu0 %v1951
    %v1953 = vpop.xlane.xlu0 %1952
    %v1954 = vsel %vm1941, %v1932, -inf
    %1955 = vmax.xlane.f32.xlu0 %v1954
    %v1956 = vpop.xlane.xlu0 %1955
    %v1957 = vsel %vm1941, %v1934, -inf
    %1958 = vmax.xlane.f32.xlu0 %v1957
    %v1959 = vpop.xlane.xlu0 %1958
    %v1960 = vsel %vm1941, %v1937, -inf
    %1961 = vmax.xlane.f32.xlu0 %v1960
    %v1962 = vpop.xlane.xlu0 %1961
    %v1963 = vsel %vm1941, %v1939, -inf
    %1964 = vmax.xlane.f32.xlu0 %v1963
    %v1965 = vpop.xlane.xlu0 %1964
    %v1966 = vsub.f32 %v1922, %v1944
    %v1967 = vsub.f32 %v1924, %v1947
    %v1968 = vsub.f32 %v1927, %v1950
    %v1969 = vsub.f32 %v1929, %v1953
    %v1970 = vsub.f32 %v1932, %v1956
    %v1971 = vsub.f32 %v1934, %v1959
    %v1972 = vsub.f32 %v1937, %v1962
    %v1973 = vsub.f32 %v1939, %v1965
    %v1974 = vmul.f32 %v1966, 1.442695
    %v1975 = vpow.pop %v1974
    %v1976 = vmul.f32 %v1967, 1.442695
    %v1977 = vpow.pop %v1976
    %v1978 = vmul.f32 %v1968, 1.442695
    %v1979 = vpow.pop %v1978
    %v1980 = vmul.f32 %v1969, 1.442695
    %v1981 = vpow.pop %v1980
    %v1982 = vmul.f32 %v1970, 1.442695
    %v1983 = vpow.pop %v1982
    %v1984 = vmul.f32 %v1971, 1.442695
    %v1985 = vpow.pop %v1984
    %v1986 = vmul.f32 %v1972, 1.442695
    %v1987 = vpow.pop %v1986
    %v1988 = vmul.f32 %v1973, 1.442695
    %v1989 = vpow.pop %v1988
    %v1990 = vsel %vm1941, %v1975, 0.0
    %1991 = vadd.xlane.f32.xlu0 %v1990
    %v1992 = vpop.xlane.xlu0 %1991
    %v1993 = vsel %vm1941, %v1977, 0.0
    %1994 = vadd.xlane.f32.xlu0 %v1993
    %v1995 = vpop.xlane.xlu0 %1994
    %v1996 = vsel %vm1941, %v1979, 0.0
    %1997 = vadd.xlane.f32.xlu0 %v1996
    %v1998 = vpop.xlane.xlu0 %1997
    %v1999 = vsel %vm1941, %v1981, 0.0
    %2000 = vadd.xlane.f32.xlu0 %v1999
    %v2001 = vpop.xlane.xlu0 %2000
    %v2002 = vsel %vm1941, %v1983, 0.0
    %2003 = vadd.xlane.f32.xlu0 %v2002
    %v2004 = vpop.xlane.xlu0 %2003
    %v2005 = vsel %vm1941, %v1985, 0.0
    %2006 = vadd.xlane.f32.xlu0 %v2005
    %v2007 = vpop.xlane.xlu0 %2006
    %v2008 = vsel %vm1941, %v1987, 0.0
    %2009 = vadd.xlane.f32.xlu0 %v2008
    %v2010 = vpop.xlane.xlu0 %2009
    %v2011 = vsel %vm1941, %v1989, 0.0
    %2012 = vadd.xlane.f32.xlu0 %v2011
    %v2013 = vpop.xlane.xlu0 %2012
    %v2014 = vrcp.pop %v1992
    %v2015 = vrcp.pop %v1995
    %v2016 = vrcp.pop %v1998
    %v2017 = vrcp.pop %v2001
    %v2018 = vrcp.pop %v2004
    %v2019 = vrcp.pop %v2007
    %v2020 = vrcp.pop %v2010
    %v2021 = vrcp.pop %v2013
    %v2022 = vmul.f32 %v1975, %v2014
    %v2023 = vmul.f32 %v1977, %v2015
    %v2024 = vmul.f32 %v1979, %v2016
    %v2025 = vmul.f32 %v1981, %v2017
    %v2026 = vmul.f32 %v1983, %v2018
    %v2027 = vmul.f32 %v1985, %v2019
    %v2028 = vmul.f32 %v1987, %v2020
    %v2029 = vmul.f32 %v1989, %v2021
    %v2030 = vpack.c.bf16 %v2023, %v2022
    %v2031 = vpack.c.bf16 %v2025, %v2024
    %v2032 = vpack.c.bf16 %v2027, %v2026
    %v2033 = vpack.c.bf16 %v2029, %v2028
    %v2042 = vunpack.c.l.b16 %v1804
    %v2043 = vunpack.c.l.b16 %v1805
    %v2044 = vunpack.c.l.b16 %v1806
    %v2045 = vunpack.c.l.b16 %v1807
    %v2046 = vunpack.c.l.b16 %v1808
    %v2047 = vunpack.c.l.b16 %v1809
    %v2048 = vunpack.c.l.b16 %v1810
    %v2049 = vunpack.c.l.b16 %v1811
    %v2050 = vpack.c.b16 %v2043, %v2042
    %v2051 = vpack.c.b16 %v2045, %v2044
    %v2052 = vpack.c.b16 %v2047, %v2046
    %v2053 = vpack.c.b16 %v2049, %v2048
    %v2059 = vsel %vm1941, %v2030, 0
    %v2062 = vsel %vm1941, %v2031, 0
    %v2065 = vsel %vm1941, %v2032, 0
    %v2068 = vsel %vm1941, %v2033, 0
    %2070 = vmatpush.bf16.msra.mxu0 0
    %2071 = vmatpush.bf16.msra.mxu0 0
    %2072 = vmatpush.bf16.msra.mxu0 0
    %2073 = vmatpush.bf16.msra.mxu0 0
    %2074 = vmatpush.bf16.msra.mxu0 %v2053
    %2075 = vmatpush.bf16.msra.mxu0 %v2052
    %2076 = vmatpush.bf16.msra.mxu0 %v2051
    %2077 = vmatpush.bf16.msra.mxu0 %v2050
    %2078 = vmatmul.bf16.gmra.mxu0 %v2059
    %v2079 = vpop.f32.mrf.mxu0
    %v2080 = vadd.f32 0.0, %v2079
    %v2081 = vpop.f32.mrf.mxu0
    %v2082 = vadd.f32 0.0, %v2081
    %2083 = vmatmul.bf16.gmra.mxu0 %v2062
    %v2084 = vpop.f32.mrf.mxu0
    %v2085 = vadd.f32 0.0, %v2084
    %v2086 = vpop.f32.mrf.mxu0
    %v2087 = vadd.f32 0.0, %v2086
    %2088 = vmatmul.bf16.gmra.mxu0 %v2065
    %v2089 = vpop.f32.mrf.mxu0
    %v2090 = vadd.f32 0.0, %v2089
    %v2091 = vpop.f32.mrf.mxu0
    %v2092 = vadd.f32 0.0, %v2091
    %2093 = vmatmul.bf16.gmra.mxu0 %v2068
    %v2094 = vpop.f32.mrf.mxu0
    %v2095 = vadd.f32 0.0, %v2094
    %v2096 = vpop.f32.mrf.mxu0
    %v2097 = vadd.f32 0.0, %v2096
    %2098 = vdwg.mxu0
    %2099 = vrot.lane.b32.xlu0 %v1863, 96
    %v2100 = vpop.permute.xlu0 %2099
    %2101 = vrot.lane.b32.xlu0 %v1864, 96
    %v2102 = vpop.permute.xlu0 %2101
    %2103 = vrot.lane.b32.xlu0 %v1865, 96
    %v2104 = vpop.permute.xlu0 %2103
    %2105 = vrot.lane.b32.xlu0 %v1866, 96
    %v2106 = vpop.permute.xlu0 %2105
    %2107 = vrot.lane.b32.xlu0 %v1883, 96
    %v2108 = vpop.permute.xlu0 %2107
    %2109 = vrot.lane.b32.xlu0 %v1884, 96
    %v2110 = vpop.permute.xlu0 %2109
    %2111 = vrot.lane.b32.xlu0 %v1885, 96
    %v2112 = vpop.permute.xlu0 %2111
    %2113 = vrot.lane.b32.xlu0 %v1886, 96
    %v2114 = vpop.permute.xlu0 %2113
    %v2116 = vsel %vm1887, %v2100, 0
    %v2119 = vsel %vm1887, %v2102, 0
    %v2122 = vsel %vm1887, %v2104, 0
    %v2125 = vsel %vm1887, %v2106, 0
    %v2128 = vsel %vm1887, %v2108, 0
    %v2131 = vsel %vm1887, %v2110, 0
    %v2134 = vsel %vm1887, %v2112, 0
    %v2137 = vsel %vm1887, %v2114, 0
    %2139 = vmatpush.bf16.xpose.msra.mxu0 0
    %2140 = vmatpush.bf16.xpose.msra.mxu0 0
    %2141 = vmatpush.bf16.xpose.msra.mxu0 0
    %2142 = vmatpush.bf16.xpose.msra.mxu0 0
    %2143 = vmatpush.bf16.xpose.msra.mxu0 %v2137
    %2144 = vmatpush.bf16.xpose.msra.mxu0 %v2134
    %2145 = vmatpush.bf16.xpose.msra.mxu0 %v2131
    %2146 = vmatpush.bf16.xpose.msra.mxu0 %v2128
    %2147 = vmatmul.bf16.gmra.mxu0 %v2116
    %v2148 = vpop.f32.mrf.mxu0
    %v2149 = vadd.f32 %v1839, %v2148
    %v2150 = vpop.f32.mrf.mxu0
    %v2151 = vadd.f32 %v1840, %v2150
    %2152 = vmatmul.bf16.gmra.mxu0 %v2119
    %v2153 = vpop.f32.mrf.mxu0
    %v2154 = vadd.f32 %v1841, %v2153
    %v2155 = vpop.f32.mrf.mxu0
    %v2156 = vadd.f32 %v1842, %v2155
    %2157 = vmatmul.bf16.gmra.mxu0 %v2122
    %v2158 = vpop.f32.mrf.mxu0
    %v2159 = vadd.f32 %v1843, %v2158
    %v2160 = vpop.f32.mrf.mxu0
    %v2161 = vadd.f32 %v1844, %v2160
    %2162 = vmatmul.bf16.gmra.mxu0 %v2125
    %v2163 = vpop.f32.mrf.mxu0
    %v2164 = vadd.f32 %v1845, %v2163
    %v2165 = vpop.f32.mrf.mxu0
    %v2166 = vadd.f32 %v1846, %v2165
    %2167 = vdwg.mxu0
    %v2168 = vsel %vm1941, %v2149, -inf
    %2169 = vmax.xlane.f32.xlu0 %v2168
    %v2170 = vpop.xlane.xlu0 %2169
    %v2171 = vsel %vm1941, %v2151, -inf
    %2172 = vmax.xlane.f32.xlu0 %v2171
    %v2173 = vpop.xlane.xlu0 %2172
    %v2174 = vsel %vm1941, %v2154, -inf
    %2175 = vmax.xlane.f32.xlu0 %v2174
    %v2176 = vpop.xlane.xlu0 %2175
    %v2177 = vsel %vm1941, %v2156, -inf
    %2178 = vmax.xlane.f32.xlu0 %v2177
    %v2179 = vpop.xlane.xlu0 %2178
    %v2180 = vsel %vm1941, %v2159, -inf
    %2181 = vmax.xlane.f32.xlu0 %v2180
    %v2182 = vpop.xlane.xlu0 %2181
    %v2183 = vsel %vm1941, %v2161, -inf
    %2184 = vmax.xlane.f32.xlu0 %v2183
    %v2185 = vpop.xlane.xlu0 %2184
    %v2186 = vsel %vm1941, %v2164, -inf
    %2187 = vmax.xlane.f32.xlu0 %v2186
    %v2188 = vpop.xlane.xlu0 %2187
    %v2189 = vsel %vm1941, %v2166, -inf
    %2190 = vmax.xlane.f32.xlu0 %v2189
    %v2191 = vpop.xlane.xlu0 %2190
    %v2192 = vsub.f32 %v2149, %v2170
    %v2193 = vsub.f32 %v2151, %v2173
    %v2194 = vsub.f32 %v2154, %v2176
    %v2195 = vsub.f32 %v2156, %v2179
    %v2196 = vsub.f32 %v2159, %v2182
    %v2197 = vsub.f32 %v2161, %v2185
    %v2198 = vsub.f32 %v2164, %v2188
    %v2199 = vsub.f32 %v2166, %v2191
    %v2200 = vmul.f32 %v2192, 1.442695
    %v2201 = vpow.pop %v2200
    %v2202 = vmul.f32 %v2193, 1.442695
    %v2203 = vpow.pop %v2202
    %v2204 = vmul.f32 %v2194, 1.442695
    %v2205 = vpow.pop %v2204
    %v2206 = vmul.f32 %v2195, 1.442695
    %v2207 = vpow.pop %v2206
    %v2208 = vmul.f32 %v2196, 1.442695
    %v2209 = vpow.pop %v2208
    %v2210 = vmul.f32 %v2197, 1.442695
    %v2211 = vpow.pop %v2210
    %v2212 = vmul.f32 %v2198, 1.442695
    %v2213 = vpow.pop %v2212
    %v2214 = vmul.f32 %v2199, 1.442695
    %v2215 = vpow.pop %v2214
    %v2216 = vsel %vm1941, %v2201, 0.0
    %2217 = vadd.xlane.f32.xlu0 %v2216
    %v2218 = vpop.xlane.xlu0 %2217
    %v2219 = vsel %vm1941, %v2203, 0.0
    %2220 = vadd.xlane.f32.xlu0 %v2219
    %v2221 = vpop.xlane.xlu0 %2220
    %v2222 = vsel %vm1941, %v2205, 0.0
    %2223 = vadd.xlane.f32.xlu0 %v2222
    %v2224 = vpop.xlane.xlu0 %2223
    %v2225 = vsel %vm1941, %v2207, 0.0
    %2226 = vadd.xlane.f32.xlu0 %v2225
    %v2227 = vpop.xlane.xlu0 %2226
    %v2228 = vsel %vm1941, %v2209, 0.0
    %2229 = vadd.xlane.f32.xlu0 %v2228
    %v2230 = vpop.xlane.xlu0 %2229
    %v2231 = vsel %vm1941, %v2211, 0.0
    %2232 = vadd.xlane.f32.xlu0 %v2231
    %v2233 = vpop.xlane.xlu0 %2232
    %v2234 = vsel %vm1941, %v2213, 0.0
    %2235 = vadd.xlane.f32.xlu0 %v2234
    %v2236 = vpop.xlane.xlu0 %2235
    %v2237 = vsel %vm1941, %v2215, 0.0
    %2238 = vadd.xlane.f32.xlu0 %v2237
    %v2239 = vpop.xlane.xlu0 %2238
    %v2240 = vrcp.pop %v2218
    %v2241 = vrcp.pop %v2221
    %v2242 = vrcp.pop %v2224
    %v2243 = vrcp.pop %v2227
    %v2244 = vrcp.pop %v2230
    %v2245 = vrcp.pop %v2233
    %v2246 = vrcp.pop %v2236
    %v2247 = vrcp.pop %v2239
    %v2248 = vmul.f32 %v2201, %v2240
    %v2249 = vmul.f32 %v2203, %v2241
    %v2250 = vmul.f32 %v2205, %v2242
    %v2251 = vmul.f32 %v2207, %v2243
    %v2252 = vmul.f32 %v2209, %v2244
    %v2253 = vmul.f32 %v2211, %v2245
    %v2254 = vmul.f32 %v2213, %v2246
    %v2255 = vmul.f32 %v2215, %v2247
    %v2256 = vpack.c.bf16 %v2249, %v2248
    %v2257 = vpack.c.bf16 %v2251, %v2250
    %v2258 = vpack.c.bf16 %v2253, %v2252
    %v2259 = vpack.c.bf16 %v2255, %v2254
    %2260 = vrot.lane.b32.xlu0 %v2050, 96
    %v2261 = vpop.permute.xlu0 %2260
    %2262 = vrot.lane.b32.xlu0 %v2051, 96
    %v2263 = vpop.permute.xlu0 %2262
    %2264 = vrot.lane.b32.xlu0 %v2052, 96
    %v2265 = vpop.permute.xlu0 %2264
    %2266 = vrot.lane.b32.xlu0 %v2053, 96
    %v2267 = vpop.permute.xlu0 %2266
    %v2273 = vsel %vm1941, %v2256, 0
    %v2276 = vsel %vm1941, %v2257, 0
    %v2279 = vsel %vm1941, %v2258, 0
    %v2282 = vsel %vm1941, %v2259, 0
    %2284 = vmatpush.bf16.msra.mxu0 0
    %2285 = vmatpush.bf16.msra.mxu0 0
    %2286 = vmatpush.bf16.msra.mxu0 0
    %2287 = vmatpush.bf16.msra.mxu0 0
    %2288 = vmatpush.bf16.msra.mxu0 %v2267
    %2289 = vmatpush.bf16.msra.mxu0 %v2265
    %2290 = vmatpush.bf16.msra.mxu0 %v2263
    %2291 = vmatpush.bf16.msra.mxu0 %v2261
    %2292 = vmatmul.bf16.gmra.mxu0 %v2273
    %v2293 = vpop.f32.mrf.mxu0
    %v2294 = vadd.f32 0.0, %v2293
    %v2295 = vpop.f32.mrf.mxu0
    %v2296 = vadd.f32 0.0, %v2295
    %2297 = vmatmul.bf16.gmra.mxu0 %v2276
    %v2298 = vpop.f32.mrf.mxu0
    %v2299 = vadd.f32 0.0, %v2298
    %v2300 = vpop.f32.mrf.mxu0
    %v2301 = vadd.f32 0.0, %v2300
    %2302 = vmatmul.bf16.gmra.mxu0 %v2279
    %v2303 = vpop.f32.mrf.mxu0
    %v2304 = vadd.f32 0.0, %v2303
    %v2305 = vpop.f32.mrf.mxu0
    %v2306 = vadd.f32 0.0, %v2305
    %2307 = vmatmul.bf16.gmra.mxu0 %v2282
    %v2308 = vpop.f32.mrf.mxu0
    %v2309 = vadd.f32 0.0, %v2308
    %v2310 = vpop.f32.mrf.mxu0
    %v2311 = vadd.f32 0.0, %v2310
    %2312 = vdwg.mxu0
    %2313 = vrot.lane.b32.xlu0 %v1863, 64
    %v2314 = vpop.permute.xlu0 %2313
    %2315 = vrot.lane.b32.xlu0 %v1864, 64
    %v2316 = vpop.permute.xlu0 %2315
    %2317 = vrot.lane.b32.xlu0 %v1865, 64
    %v2318 = vpop.permute.xlu0 %2317
    %2319 = vrot.lane.b32.xlu0 %v1866, 64
    %v2320 = vpop.permute.xlu0 %2319
    %2321 = vrot.lane.b32.xlu0 %v1883, 64
    %v2322 = vpop.permute.xlu0 %2321
    %2323 = vrot.lane.b32.xlu0 %v1884, 64
    %v2324 = vpop.permute.xlu0 %2323
    %2325 = vrot.lane.b32.xlu0 %v1885, 64
    %v2326 = vpop.permute.xlu0 %2325
    %2327 = vrot.lane.b32.xlu0 %v1886, 64
    %v2328 = vpop.permute.xlu0 %2327
    %v2330 = vsel %vm1887, %v2314, 0
    %v2333 = vsel %vm1887, %v2316, 0
    %v2336 = vsel %vm1887, %v2318, 0
    %v2339 = vsel %vm1887, %v2320, 0
    %v2342 = vsel %vm1887, %v2322, 0
    %v2345 = vsel %vm1887, %v2324, 0
    %v2348 = vsel %vm1887, %v2326, 0
    %v2351 = vsel %vm1887, %v2328, 0
    %2353 = vmatpush.bf16.xpose.msra.mxu0 0
    %2354 = vmatpush.bf16.xpose.msra.mxu0 0
    %2355 = vmatpush.bf16.xpose.msra.mxu0 0
    %2356 = vmatpush.bf16.xpose.msra.mxu0 0
    %2357 = vmatpush.bf16.xpose.msra.mxu0 %v2351
    %2358 = vmatpush.bf16.xpose.msra.mxu0 %v2348
    %2359 = vmatpush.bf16.xpose.msra.mxu0 %v2345
    %2360 = vmatpush.bf16.xpose.msra.mxu0 %v2342
    %2361 = vmatmul.bf16.gmra.mxu0 %v2330
    %v2362 = vpop.f32.mrf.mxu0
    %v2363 = vadd.f32 %v1839, %v2362
    %v2364 = vpop.f32.mrf.mxu0
    %v2365 = vadd.f32 %v1840, %v2364
    %2366 = vmatmul.bf16.gmra.mxu0 %v2333
    %v2367 = vpop.f32.mrf.mxu0
    %v2368 = vadd.f32 %v1841, %v2367
    %v2369 = vpop.f32.mrf.mxu0
    %v2370 = vadd.f32 %v1842, %v2369
    %2371 = vmatmul.bf16.gmra.mxu0 %v2336
    %v2372 = vpop.f32.mrf.mxu0
    %v2373 = vadd.f32 %v1843, %v2372
    %v2374 = vpop.f32.mrf.mxu0
    %v2375 = vadd.f32 %v1844, %v2374
    %2376 = vmatmul.bf16.gmra.mxu0 %v2339
    %v2377 = vpop.f32.mrf.mxu0
    %v2378 = vadd.f32 %v1845, %v2377
    %v2379 = vpop.f32.mrf.mxu0
    %v2380 = vadd.f32 %v1846, %v2379
    %2381 = vdwg.mxu0
    %v2382 = vsel %vm1941, %v2363, -inf
    %2383 = vmax.xlane.f32.xlu0 %v2382
    %v2384 = vpop.xlane.xlu0 %2383
    %v2385 = vsel %vm1941, %v2365, -inf
    %2386 = vmax.xlane.f32.xlu0 %v2385
    %v2387 = vpop.xlane.xlu0 %2386
    %v2388 = vsel %vm1941, %v2368, -inf
    %2389 = vmax.xlane.f32.xlu0 %v2388
    %v2390 = vpop.xlane.xlu0 %2389
    %v2391 = vsel %vm1941, %v2370, -inf
    %2392 = vmax.xlane.f32.xlu0 %v2391
    %v2393 = vpop.xlane.xlu0 %2392
    %v2394 = vsel %vm1941, %v2373, -inf
    %2395 = vmax.xlane.f32.xlu0 %v2394
    %v2396 = vpop.xlane.xlu0 %2395
    %v2397 = vsel %vm1941, %v2375, -inf
    %2398 = vmax.xlane.f32.xlu0 %v2397
    %v2399 = vpop.xlane.xlu0 %2398
    %v2400 = vsel %vm1941, %v2378, -inf
    %2401 = vmax.xlane.f32.xlu0 %v2400
    %v2402 = vpop.xlane.xlu0 %2401
    %v2403 = vsel %vm1941, %v2380, -inf
    %2404 = vmax.xlane.f32.xlu0 %v2403
    %v2405 = vpop.xlane.xlu0 %2404
    %v2406 = vsub.f32 %v2363, %v2384
    %v2407 = vsub.f32 %v2365, %v2387
    %v2408 = vsub.f32 %v2368, %v2390
    %v2409 = vsub.f32 %v2370, %v2393
    %v2410 = vsub.f32 %v2373, %v2396
    %v2411 = vsub.f32 %v2375, %v2399
    %v2412 = vsub.f32 %v2378, %v2402
    %v2413 = vsub.f32 %v2380, %v2405
    %v2414 = vmul.f32 %v2406, 1.442695
    %v2415 = vpow.pop %v2414
    %v2416 = vmul.f32 %v2407, 1.442695
    %v2417 = vpow.pop %v2416
    %v2418 = vmul.f32 %v2408, 1.442695
    %v2419 = vpow.pop %v2418
    %v2420 = vmul.f32 %v2409, 1.442695
    %v2421 = vpow.pop %v2420
    %v2422 = vmul.f32 %v2410, 1.442695
    %v2423 = vpow.pop %v2422
    %v2424 = vmul.f32 %v2411, 1.442695
    %v2425 = vpow.pop %v2424
    %v2426 = vmul.f32 %v2412, 1.442695
    %v2427 = vpow.pop %v2426
    %v2428 = vmul.f32 %v2413, 1.442695
    %v2429 = vpow.pop %v2428
    %v2430 = vsel %vm1941, %v2415, 0.0
    %2431 = vadd.xlane.f32.xlu0 %v2430
    %v2432 = vpop.xlane.xlu0 %2431
    %v2433 = vsel %vm1941, %v2417, 0.0
    %2434 = vadd.xlane.f32.xlu0 %v2433
    %v2435 = vpop.xlane.xlu0 %2434
    %v2436 = vsel %vm1941, %v2419, 0.0
    %2437 = vadd.xlane.f32.xlu0 %v2436
    %v2438 = vpop.xlane.xlu0 %2437
    %v2439 = vsel %vm1941, %v2421, 0.0
    %2440 = vadd.xlane.f32.xlu0 %v2439
    %v2441 = vpop.xlane.xlu0 %2440
    %v2442 = vsel %vm1941, %v2423, 0.0
    %2443 = vadd.xlane.f32.xlu0 %v2442
    %v2444 = vpop.xlane.xlu0 %2443
    %v2445 = vsel %vm1941, %v2425, 0.0
    %2446 = vadd.xlane.f32.xlu0 %v2445
    %v2447 = vpop.xlane.xlu0 %2446
    %v2448 = vsel %vm1941, %v2427, 0.0
    %2449 = vadd.xlane.f32.xlu0 %v2448
    %v2450 = vpop.xlane.xlu0 %2449
    %v2451 = vsel %vm1941, %v2429, 0.0
    %2452 = vadd.xlane.f32.xlu0 %v2451
    %v2453 = vpop.xlane.xlu0 %2452
    %v2454 = vrcp.pop %v2432
    %v2455 = vrcp.pop %v2435
    %v2456 = vrcp.pop %v2438
    %v2457 = vrcp.pop %v2441
    %v2458 = vrcp.pop %v2444
    %v2459 = vrcp.pop %v2447
    %v2460 = vrcp.pop %v2450
    %v2461 = vrcp.pop %v2453
    %v2462 = vmul.f32 %v2415, %v2454
    %v2463 = vmul.f32 %v2417, %v2455
    %v2464 = vmul.f32 %v2419, %v2456
    %v2465 = vmul.f32 %v2421, %v2457
    %v2466 = vmul.f32 %v2423, %v2458
    %v2467 = vmul.f32 %v2425, %v2459
    %v2468 = vmul.f32 %v2427, %v2460
    %v2469 = vmul.f32 %v2429, %v2461
    %v2470 = vpack.c.bf16 %v2463, %v2462
    %v2471 = vpack.c.bf16 %v2465, %v2464
    %v2472 = vpack.c.bf16 %v2467, %v2466
    %v2473 = vpack.c.bf16 %v2469, %v2468
    %2474 = vrot.lane.b32.xlu0 %v2050, 64
    %v2475 = vpop.permute.xlu0 %2474
    %2476 = vrot.lane.b32.xlu0 %v2051, 64
    %v2477 = vpop.permute.xlu0 %2476
    %2478 = vrot.lane.b32.xlu0 %v2052, 64
    %v2479 = vpop.permute.xlu0 %2478
    %2480 = vrot.lane.b32.xlu0 %v2053, 64
    %v2481 = vpop.permute.xlu0 %2480
    %v2487 = vsel %vm1941, %v2470, 0
    %v2490 = vsel %vm1941, %v2471, 0
    %v2493 = vsel %vm1941, %v2472, 0
    %v2496 = vsel %vm1941, %v2473, 0
    %2498 = vmatpush.bf16.msra.mxu0 0
    %2499 = vmatpush.bf16.msra.mxu0 0
    %2500 = vmatpush.bf16.msra.mxu0 0
    %2501 = vmatpush.bf16.msra.mxu0 0
    %2502 = vmatpush.bf16.msra.mxu0 %v2481
    %2503 = vmatpush.bf16.msra.mxu0 %v2479
    %2504 = vmatpush.bf16.msra.mxu0 %v2477
    %2505 = vmatpush.bf16.msra.mxu0 %v2475
    %2506 = vmatmul.bf16.gmra.mxu0 %v2487
    %v2507 = vpop.f32.mrf.mxu0
    %v2508 = vadd.f32 0.0, %v2507
    %v2509 = vpop.f32.mrf.mxu0
    %v2510 = vadd.f32 0.0, %v2509
    %2511 = vmatmul.bf16.gmra.mxu0 %v2490
    %v2512 = vpop.f32.mrf.mxu0
    %v2513 = vadd.f32 0.0, %v2512
    %v2514 = vpop.f32.mrf.mxu0
    %v2515 = vadd.f32 0.0, %v2514
    %2516 = vmatmul.bf16.gmra.mxu0 %v2493
    %v2517 = vpop.f32.mrf.mxu0
    %v2518 = vadd.f32 0.0, %v2517
    %v2519 = vpop.f32.mrf.mxu0
    %v2520 = vadd.f32 0.0, %v2519
    %2521 = vmatmul.bf16.gmra.mxu0 %v2496
    %v2522 = vpop.f32.mrf.mxu0
    %v2523 = vadd.f32 0.0, %v2522
    %v2524 = vpop.f32.mrf.mxu0
    %v2525 = vadd.f32 0.0, %v2524
    %2526 = vdwg.mxu0
    %2527 = vrot.lane.b32.xlu0 %v1863, 32
    %v2528 = vpop.permute.xlu0 %2527
    %2529 = vrot.lane.b32.xlu0 %v1864, 32
    %v2530 = vpop.permute.xlu0 %2529
    %2531 = vrot.lane.b32.xlu0 %v1865, 32
    %v2532 = vpop.permute.xlu0 %2531
    %2533 = vrot.lane.b32.xlu0 %v1866, 32
    %v2534 = vpop.permute.xlu0 %2533
    %2535 = vrot.lane.b32.xlu0 %v1883, 32
    %v2536 = vpop.permute.xlu0 %2535
    %2537 = vrot.lane.b32.xlu0 %v1884, 32
    %v2538 = vpop.permute.xlu0 %2537
    %2539 = vrot.lane.b32.xlu0 %v1885, 32
    %v2540 = vpop.permute.xlu0 %2539
    %2541 = vrot.lane.b32.xlu0 %v1886, 32
    %v2542 = vpop.permute.xlu0 %2541
    %v2544 = vsel %vm1887, %v2528, 0
    %v2547 = vsel %vm1887, %v2530, 0
    %v2550 = vsel %vm1887, %v2532, 0
    %v2553 = vsel %vm1887, %v2534, 0
    %v2556 = vsel %vm1887, %v2536, 0
    %v2559 = vsel %vm1887, %v2538, 0
    %v2562 = vsel %vm1887, %v2540, 0
    %v2565 = vsel %vm1887, %v2542, 0
    %2567 = vmatpush.bf16.xpose.msra.mxu0 0
    %2568 = vmatpush.bf16.xpose.msra.mxu0 0
    %2569 = vmatpush.bf16.xpose.msra.mxu0 0
    %2570 = vmatpush.bf16.xpose.msra.mxu0 0
    %2571 = vmatpush.bf16.xpose.msra.mxu0 %v2565
    %2572 = vmatpush.bf16.xpose.msra.mxu0 %v2562
    %2573 = vmatpush.bf16.xpose.msra.mxu0 %v2559
    %2574 = vmatpush.bf16.xpose.msra.mxu0 %v2556
    %2575 = vmatmul.bf16.gmra.mxu0 %v2544
    %v2576 = vpop.f32.mrf.mxu0
    %v2577 = vadd.f32 %v1839, %v2576
    %v2578 = vpop.f32.mrf.mxu0
    %v2579 = vadd.f32 %v1840, %v2578
    %2580 = vmatmul.bf16.gmra.mxu0 %v2547
    %v2581 = vpop.f32.mrf.mxu0
    %v2582 = vadd.f32 %v1841, %v2581
    %v2583 = vpop.f32.mrf.mxu0
    %v2584 = vadd.f32 %v1842, %v2583
    %2585 = vmatmul.bf16.gmra.mxu0 %v2550
    %v2586 = vpop.f32.mrf.mxu0
    %v2587 = vadd.f32 %v1843, %v2586
    %v2588 = vpop.f32.mrf.mxu0
    %v2589 = vadd.f32 %v1844, %v2588
    %2590 = vmatmul.bf16.gmra.mxu0 %v2553
    %v2591 = vpop.f32.mrf.mxu0
    %v2592 = vadd.f32 %v1845, %v2591
    %v2593 = vpop.f32.mrf.mxu0
    %v2594 = vadd.f32 %v1846, %v2593
    %2595 = vdwg.mxu0
    %v2596 = vsel %vm1941, %v2577, -inf
    %2597 = vmax.xlane.f32.xlu0 %v2596
    %v2598 = vpop.xlane.xlu0 %2597
    %v2599 = vsel %vm1941, %v2579, -inf
    %2600 = vmax.xlane.f32.xlu0 %v2599
    %v2601 = vpop.xlane.xlu0 %2600
    %v2602 = vsel %vm1941, %v2582, -inf
    %2603 = vmax.xlane.f32.xlu0 %v2602
    %v2604 = vpop.xlane.xlu0 %2603
    %v2605 = vsel %vm1941, %v2584, -inf
    %2606 = vmax.xlane.f32.xlu0 %v2605
    %v2607 = vpop.xlane.xlu0 %2606
    %v2608 = vsel %vm1941, %v2587, -inf
    %2609 = vmax.xlane.f32.xlu0 %v2608
    %v2610 = vpop.xlane.xlu0 %2609
    %v2611 = vsel %vm1941, %v2589, -inf
    %2612 = vmax.xlane.f32.xlu0 %v2611
    %v2613 = vpop.xlane.xlu0 %2612
    %v2614 = vsel %vm1941, %v2592, -inf
    %2615 = vmax.xlane.f32.xlu0 %v2614
    %v2616 = vpop.xlane.xlu0 %2615
    %v2617 = vsel %vm1941, %v2594, -inf
    %2618 = vmax.xlane.f32.xlu0 %v2617
    %v2619 = vpop.xlane.xlu0 %2618
    %v2620 = vsub.f32 %v2577, %v2598
    %v2621 = vsub.f32 %v2579, %v2601
    %v2622 = vsub.f32 %v2582, %v2604
    %v2623 = vsub.f32 %v2584, %v2607
    %v2624 = vsub.f32 %v2587, %v2610
    %v2625 = vsub.f32 %v2589, %v2613
    %v2626 = vsub.f32 %v2592, %v2616
    %v2627 = vsub.f32 %v2594, %v2619
    %v2628 = vmul.f32 %v2620, 1.442695
    %v2629 = vpow.pop %v2628
    %v2630 = vmul.f32 %v2621, 1.442695
    %v2631 = vpow.pop %v2630
    %v2632 = vmul.f32 %v2622, 1.442695
    %v2633 = vpow.pop %v2632
    %v2634 = vmul.f32 %v2623, 1.442695
    %v2635 = vpow.pop %v2634
    %v2636 = vmul.f32 %v2624, 1.442695
    %v2637 = vpow.pop %v2636
    %v2638 = vmul.f32 %v2625, 1.442695
    %v2639 = vpow.pop %v2638
    %v2640 = vmul.f32 %v2626, 1.442695
    %v2641 = vpow.pop %v2640
    %v2642 = vmul.f32 %v2627, 1.442695
    %v2643 = vpow.pop %v2642
    %v2644 = vsel %vm1941, %v2629, 0.0
    %2645 = vadd.xlane.f32.xlu0 %v2644
    %v2646 = vpop.xlane.xlu0 %2645
    %v2647 = vsel %vm1941, %v2631, 0.0
    %2648 = vadd.xlane.f32.xlu0 %v2647
    %v2649 = vpop.xlane.xlu0 %2648
    %v2650 = vsel %vm1941, %v2633, 0.0
    %2651 = vadd.xlane.f32.xlu0 %v2650
    %v2652 = vpop.xlane.xlu0 %2651
    %v2653 = vsel %vm1941, %v2635, 0.0
    %2654 = vadd.xlane.f32.xlu0 %v2653
    %v2655 = vpop.xlane.xlu0 %2654
    %v2656 = vsel %vm1941, %v2637, 0.0
    %2657 = vadd.xlane.f32.xlu0 %v2656
    %v2658 = vpop.xlane.xlu0 %2657
    %v2659 = vsel %vm1941, %v2639, 0.0
    %2660 = vadd.xlane.f32.xlu0 %v2659
    %v2661 = vpop.xlane.xlu0 %2660
    %v2662 = vsel %vm1941, %v2641, 0.0
    %2663 = vadd.xlane.f32.xlu0 %v2662
    %v2664 = vpop.xlane.xlu0 %2663
    %v2665 = vsel %vm1941, %v2643, 0.0
    %2666 = vadd.xlane.f32.xlu0 %v2665
    %v2667 = vpop.xlane.xlu0 %2666
    %v2668 = vrcp.pop %v2646
    %v2669 = vrcp.pop %v2649
    %v2670 = vrcp.pop %v2652
    %v2671 = vrcp.pop %v2655
    %v2672 = vrcp.pop %v2658
    %v2673 = vrcp.pop %v2661
    %v2674 = vrcp.pop %v2664
    %v2675 = vrcp.pop %v2667
    %v2676 = vmul.f32 %v2629, %v2668
    %v2677 = vmul.f32 %v2631, %v2669
    %v2678 = vmul.f32 %v2633, %v2670
    %v2679 = vmul.f32 %v2635, %v2671
    %v2680 = vmul.f32 %v2637, %v2672
    %v2681 = vmul.f32 %v2639, %v2673
    %v2682 = vmul.f32 %v2641, %v2674
    %v2683 = vmul.f32 %v2643, %v2675
    %v2684 = vpack.c.bf16 %v2677, %v2676
    %v2685 = vpack.c.bf16 %v2679, %v2678
    %v2686 = vpack.c.bf16 %v2681, %v2680
    %v2687 = vpack.c.bf16 %v2683, %v2682
    %2688 = vrot.lane.b32.xlu0 %v2050, 32
    %v2689 = vpop.permute.xlu0 %2688
    %2690 = vrot.lane.b32.xlu0 %v2051, 32
    %v2691 = vpop.permute.xlu0 %2690
    %2692 = vrot.lane.b32.xlu0 %v2052, 32
    %v2693 = vpop.permute.xlu0 %2692
    %2694 = vrot.lane.b32.xlu0 %v2053, 32
    %v2695 = vpop.permute.xlu0 %2694
    %v2701 = vsel %vm1941, %v2684, 0
    %v2704 = vsel %vm1941, %v2685, 0
    %v2707 = vsel %vm1941, %v2686, 0
    %v2710 = vsel %vm1941, %v2687, 0
    %2712 = vmatpush.bf16.msra.mxu0 0
    %2713 = vmatpush.bf16.msra.mxu0 0
    %2714 = vmatpush.bf16.msra.mxu0 0
    %2715 = vmatpush.bf16.msra.mxu0 0
    %2716 = vmatpush.bf16.msra.mxu0 %v2695
    %2717 = vmatpush.bf16.msra.mxu0 %v2693
    %2718 = vmatpush.bf16.msra.mxu0 %v2691
    %2719 = vmatpush.bf16.msra.mxu0 %v2689
    %2720 = vmatmul.bf16.gmra.mxu0 %v2701
    %v2721 = vpop.f32.mrf.mxu0
    %v2722 = vadd.f32 0.0, %v2721
    %v2723 = vpop.f32.mrf.mxu0
    %v2724 = vadd.f32 0.0, %v2723
    %2725 = vmatmul.bf16.gmra.mxu0 %v2704
    %v2726 = vpop.f32.mrf.mxu0
    %v2727 = vadd.f32 0.0, %v2726
    %v2728 = vpop.f32.mrf.mxu0
    %v2729 = vadd.f32 0.0, %v2728
    %2730 = vmatmul.bf16.gmra.mxu0 %v2707
    %v2731 = vpop.f32.mrf.mxu0
    %v2732 = vadd.f32 0.0, %v2731
    %v2733 = vpop.f32.mrf.mxu0
    %v2734 = vadd.f32 0.0, %v2733
    %2735 = vmatmul.bf16.gmra.mxu0 %v2710
    %v2736 = vpop.f32.mrf.mxu0
    %v2737 = vadd.f32 0.0, %v2736
    %v2738 = vpop.f32.mrf.mxu0
    %v2739 = vadd.f32 0.0, %v2738
    %2740 = vdwg.mxu0
    %v2741 = vunpack.c.h.b16 %v1772
    %v2742 = vunpack.c.h.b16 %v1773
    %v2743 = vunpack.c.h.b16 %v1774
    %v2744 = vunpack.c.h.b16 %v1775
    %v2745 = vunpack.c.h.b16 %v1776
    %v2746 = vunpack.c.h.b16 %v1777
    %v2747 = vunpack.c.h.b16 %v1778
    %v2748 = vunpack.c.h.b16 %v1779
    %v2749 = vpack.c.b16 %v2742, %v2741
    %v2750 = vpack.c.b16 %v2744, %v2743
    %v2751 = vpack.c.b16 %v2746, %v2745
    %v2752 = vpack.c.b16 %v2748, %v2747
    %v2753 = vunpack.c.h.b16 %v1788
    %v2754 = vunpack.c.h.b16 %v1789
    %v2755 = vunpack.c.h.b16 %v1790
    %v2756 = vunpack.c.h.b16 %v1791
    %v2757 = vunpack.c.h.b16 %v1792
    %v2758 = vunpack.c.h.b16 %v1793
    %v2759 = vunpack.c.h.b16 %v1794
    %v2760 = vunpack.c.h.b16 %v1795
    %v2761 = vpack.c.b16 %v2754, %v2753
    %v2762 = vpack.c.b16 %v2756, %v2755
    %v2763 = vpack.c.b16 %v2758, %v2757
    %v2764 = vpack.c.b16 %v2760, %v2759
    %v2766 = vsel %vm1887, %v2749, 0
    %v2769 = vsel %vm1887, %v2750, 0
    %v2772 = vsel %vm1887, %v2751, 0
    %v2775 = vsel %vm1887, %v2752, 0
    %v2778 = vsel %vm1887, %v2761, 0
    %v2781 = vsel %vm1887, %v2762, 0
    %v2784 = vsel %vm1887, %v2763, 0
    %v2787 = vsel %vm1887, %v2764, 0
    %2789 = vmatpush.bf16.xpose.msra.mxu0 0
    %2790 = vmatpush.bf16.xpose.msra.mxu0 0
    %2791 = vmatpush.bf16.xpose.msra.mxu0 0
    %2792 = vmatpush.bf16.xpose.msra.mxu0 0
    %2793 = vmatpush.bf16.xpose.msra.mxu0 %v2787
    %2794 = vmatpush.bf16.xpose.msra.mxu0 %v2784
    %2795 = vmatpush.bf16.xpose.msra.mxu0 %v2781
    %2796 = vmatpush.bf16.xpose.msra.mxu0 %v2778
    %2797 = vmatmul.bf16.gmra.mxu0 %v2766
    %v2798 = vpop.f32.mrf.mxu0
    %v2799 = vadd.f32 %v1839, %v2798
    %v2800 = vpop.f32.mrf.mxu0
    %v2801 = vadd.f32 %v1840, %v2800
    %2802 = vmatmul.bf16.gmra.mxu0 %v2769
    %v2803 = vpop.f32.mrf.mxu0
    %v2804 = vadd.f32 %v1841, %v2803
    %v2805 = vpop.f32.mrf.mxu0
    %v2806 = vadd.f32 %v1842, %v2805
    %2807 = vmatmul.bf16.gmra.mxu0 %v2772
    %v2808 = vpop.f32.mrf.mxu0
    %v2809 = vadd.f32 %v1843, %v2808
    %v2810 = vpop.f32.mrf.mxu0
    %v2811 = vadd.f32 %v1844, %v2810
    %2812 = vmatmul.bf16.gmra.mxu0 %v2775
    %v2813 = vpop.f32.mrf.mxu0
    %v2814 = vadd.f32 %v1845, %v2813
    %v2815 = vpop.f32.mrf.mxu0
    %v2816 = vadd.f32 %v1846, %v2815
    %2817 = vdwg.mxu0
    %v2818 = vsel %vm1941, %v2799, -inf
    %2819 = vmax.xlane.f32.xlu0 %v2818
    %v2820 = vpop.xlane.xlu0 %2819
    %v2821 = vsel %vm1941, %v2801, -inf
    %2822 = vmax.xlane.f32.xlu0 %v2821
    %v2823 = vpop.xlane.xlu0 %2822
    %v2824 = vsel %vm1941, %v2804, -inf
    %2825 = vmax.xlane.f32.xlu0 %v2824
    %v2826 = vpop.xlane.xlu0 %2825
    %v2827 = vsel %vm1941, %v2806, -inf
    %2828 = vmax.xlane.f32.xlu0 %v2827
    %v2829 = vpop.xlane.xlu0 %2828
    %v2830 = vsel %vm1941, %v2809, -inf
    %2831 = vmax.xlane.f32.xlu0 %v2830
    %v2832 = vpop.xlane.xlu0 %2831
    %v2833 = vsel %vm1941, %v2811, -inf
    %2834 = vmax.xlane.f32.xlu0 %v2833
    %v2835 = vpop.xlane.xlu0 %2834
    %v2836 = vsel %vm1941, %v2814, -inf
    %2837 = vmax.xlane.f32.xlu0 %v2836
    %v2838 = vpop.xlane.xlu0 %2837
    %v2839 = vsel %vm1941, %v2816, -inf
    %2840 = vmax.xlane.f32.xlu0 %v2839
    %v2841 = vpop.xlane.xlu0 %2840
    %v2842 = vsub.f32 %v2799, %v2820
    %v2843 = vsub.f32 %v2801, %v2823
    %v2844 = vsub.f32 %v2804, %v2826
    %v2845 = vsub.f32 %v2806, %v2829
    %v2846 = vsub.f32 %v2809, %v2832
    %v2847 = vsub.f32 %v2811, %v2835
    %v2848 = vsub.f32 %v2814, %v2838
    %v2849 = vsub.f32 %v2816, %v2841
    %v2850 = vmul.f32 %v2842, 1.442695
    %v2851 = vpow.pop %v2850
    %v2852 = vmul.f32 %v2843, 1.442695
    %v2853 = vpow.pop %v2852
    %v2854 = vmul.f32 %v2844, 1.442695
    %v2855 = vpow.pop %v2854
    %v2856 = vmul.f32 %v2845, 1.442695
    %v2857 = vpow.pop %v2856
    %v2858 = vmul.f32 %v2846, 1.442695
    %v2859 = vpow.pop %v2858
    %v2860 = vmul.f32 %v2847, 1.442695
    %v2861 = vpow.pop %v2860
    %v2862 = vmul.f32 %v2848, 1.442695
    %v2863 = vpow.pop %v2862
    %v2864 = vmul.f32 %v2849, 1.442695
    %v2865 = vpow.pop %v2864
    %v2866 = vsel %vm1941, %v2851, 0.0
    %2867 = vadd.xlane.f32.xlu0 %v2866
    %v2868 = vpop.xlane.xlu0 %2867
    %v2869 = vsel %vm1941, %v2853, 0.0
    %2870 = vadd.xlane.f32.xlu0 %v2869
    %v2871 = vpop.xlane.xlu0 %2870
    %v2872 = vsel %vm1941, %v2855, 0.0
    %2873 = vadd.xlane.f32.xlu0 %v2872
    %v2874 = vpop.xlane.xlu0 %2873
    %v2875 = vsel %vm1941, %v2857, 0.0
    %2876 = vadd.xlane.f32.xlu0 %v2875
    %v2877 = vpop.xlane.xlu0 %2876
    %v2878 = vsel %vm1941, %v2859, 0.0
    %2879 = vadd.xlane.f32.xlu0 %v2878
    %v2880 = vpop.xlane.xlu0 %2879
    %v2881 = vsel %vm1941, %v2861, 0.0
    %2882 = vadd.xlane.f32.xlu0 %v2881
    %v2883 = vpop.xlane.xlu0 %2882
    %v2884 = vsel %vm1941, %v2863, 0.0
    %2885 = vadd.xlane.f32.xlu0 %v2884
    %v2886 = vpop.xlane.xlu0 %2885
    %v2887 = vsel %vm1941, %v2865, 0.0
    %2888 = vadd.xlane.f32.xlu0 %v2887
    %v2889 = vpop.xlane.xlu0 %2888
    %v2890 = vrcp.pop %v2868
    %v2891 = vrcp.pop %v2871
    %v2892 = vrcp.pop %v2874
    %v2893 = vrcp.pop %v2877
    %v2894 = vrcp.pop %v2880
    %v2895 = vrcp.pop %v2883
    %v2896 = vrcp.pop %v2886
    %v2897 = vrcp.pop %v2889
    %v2898 = vmul.f32 %v2851, %v2890
    %v2899 = vmul.f32 %v2853, %v2891
    %v2900 = vmul.f32 %v2855, %v2892
    %v2901 = vmul.f32 %v2857, %v2893
    %v2902 = vmul.f32 %v2859, %v2894
    %v2903 = vmul.f32 %v2861, %v2895
    %v2904 = vmul.f32 %v2863, %v2896
    %v2905 = vmul.f32 %v2865, %v2897
    %v2906 = vpack.c.bf16 %v2899, %v2898
    %v2907 = vpack.c.bf16 %v2901, %v2900
    %v2908 = vpack.c.bf16 %v2903, %v2902
    %v2909 = vpack.c.bf16 %v2905, %v2904
    %v2910 = vunpack.c.h.b16 %v1804
    %v2911 = vunpack.c.h.b16 %v1805
    %v2912 = vunpack.c.h.b16 %v1806
    %v2913 = vunpack.c.h.b16 %v1807
    %v2914 = vunpack.c.h.b16 %v1808
    %v2915 = vunpack.c.h.b16 %v1809
    %v2916 = vunpack.c.h.b16 %v1810
    %v2917 = vunpack.c.h.b16 %v1811
    %v2918 = vpack.c.b16 %v2911, %v2910
    %v2919 = vpack.c.b16 %v2913, %v2912
    %v2920 = vpack.c.b16 %v2915, %v2914
    %v2921 = vpack.c.b16 %v2917, %v2916
    %v2927 = vsel %vm1941, %v2906, 0
    %v2930 = vsel %vm1941, %v2907, 0
    %v2933 = vsel %vm1941, %v2908, 0
    %v2936 = vsel %vm1941, %v2909, 0
    %2938 = vmatpush.bf16.msra.mxu0 0
    %2939 = vmatpush.bf16.msra.mxu0 0
    %2940 = vmatpush.bf16.msra.mxu0 0
    %2941 = vmatpush.bf16.msra.mxu0 0
    %2942 = vmatpush.bf16.msra.mxu0 %v2921
    %2943 = vmatpush.bf16.msra.mxu0 %v2920
    %2944 = vmatpush.bf16.msra.mxu0 %v2919
    %2945 = vmatpush.bf16.msra.mxu0 %v2918
    %2946 = vmatmul.bf16.gmra.mxu0 %v2927
    %v2947 = vpop.f32.mrf.mxu0
    %v2948 = vadd.f32 0.0, %v2947
    %v2949 = vpop.f32.mrf.mxu0
    %v2950 = vadd.f32 0.0, %v2949
    %2951 = vmatmul.bf16.gmra.mxu0 %v2930
    %v2952 = vpop.f32.mrf.mxu0
    %v2953 = vadd.f32 0.0, %v2952
    %v2954 = vpop.f32.mrf.mxu0
    %v2955 = vadd.f32 0.0, %v2954
    %2956 = vmatmul.bf16.gmra.mxu0 %v2933
    %v2957 = vpop.f32.mrf.mxu0
    %v2958 = vadd.f32 0.0, %v2957
    %v2959 = vpop.f32.mrf.mxu0
    %v2960 = vadd.f32 0.0, %v2959
    %2961 = vmatmul.bf16.gmra.mxu0 %v2936
    %v2962 = vpop.f32.mrf.mxu0
    %v2963 = vadd.f32 0.0, %v2962
    %v2964 = vpop.f32.mrf.mxu0
    %v2965 = vadd.f32 0.0, %v2964
    %2966 = vdwg.mxu0
    %2967 = vrot.lane.b32.xlu0 %v2749, 96
    %v2968 = vpop.permute.xlu0 %2967
    %2969 = vrot.lane.b32.xlu0 %v2750, 96
    %v2970 = vpop.permute.xlu0 %2969
    %2971 = vrot.lane.b32.xlu0 %v2751, 96
    %v2972 = vpop.permute.xlu0 %2971
    %2973 = vrot.lane.b32.xlu0 %v2752, 96
    %v2974 = vpop.permute.xlu0 %2973
    %2975 = vrot.lane.b32.xlu0 %v2761, 96
    %v2976 = vpop.permute.xlu0 %2975
    %2977 = vrot.lane.b32.xlu0 %v2762, 96
    %v2978 = vpop.permute.xlu0 %2977
    %2979 = vrot.lane.b32.xlu0 %v2763, 96
    %v2980 = vpop.permute.xlu0 %2979
    %2981 = vrot.lane.b32.xlu0 %v2764, 96
    %v2982 = vpop.permute.xlu0 %2981
    %v2984 = vsel %vm1887, %v2968, 0
    %v2987 = vsel %vm1887, %v2970, 0
    %v2990 = vsel %vm1887, %v2972, 0
    %v2993 = vsel %vm1887, %v2974, 0
    %v2996 = vsel %vm1887, %v2976, 0
    %v2999 = vsel %vm1887, %v2978, 0
    %v3002 = vsel %vm1887, %v2980, 0
    %v3005 = vsel %vm1887, %v2982, 0
    %3007 = vmatpush.bf16.xpose.msra.mxu0 0
    %3008 = vmatpush.bf16.xpose.msra.mxu0 0
    %3009 = vmatpush.bf16.xpose.msra.mxu0 0
    %3010 = vmatpush.bf16.xpose.msra.mxu0 0
    %3011 = vmatpush.bf16.xpose.msra.mxu0 %v3005
    %3012 = vmatpush.bf16.xpose.msra.mxu0 %v3002
    %3013 = vmatpush.bf16.xpose.msra.mxu0 %v2999
    %3014 = vmatpush.bf16.xpose.msra.mxu0 %v2996
    %3015 = vmatmul.bf16.gmra.mxu0 %v2984
    %v3016 = vpop.f32.mrf.mxu0
    %v3017 = vadd.f32 %v1839, %v3016
    %v3018 = vpop.f32.mrf.mxu0
    %v3019 = vadd.f32 %v1840, %v3018
    %3020 = vmatmul.bf16.gmra.mxu0 %v2987
    %v3021 = vpop.f32.mrf.mxu0
    %v3022 = vadd.f32 %v1841, %v3021
    %v3023 = vpop.f32.mrf.mxu0
    %v3024 = vadd.f32 %v1842, %v3023
    %3025 = vmatmul.bf16.gmra.mxu0 %v2990
    %v3026 = vpop.f32.mrf.mxu0
    %v3027 = vadd.f32 %v1843, %v3026
    %v3028 = vpop.f32.mrf.mxu0
    %v3029 = vadd.f32 %v1844, %v3028
    %3030 = vmatmul.bf16.gmra.mxu0 %v2993
    %v3031 = vpop.f32.mrf.mxu0
    %v3032 = vadd.f32 %v1845, %v3031
    %v3033 = vpop.f32.mrf.mxu0
    %v3034 = vadd.f32 %v1846, %v3033
    %3035 = vdwg.mxu0
    %v3036 = vsel %vm1941, %v3017, -inf
    %3037 = vmax.xlane.f32.xlu0 %v3036
    %v3038 = vpop.xlane.xlu0 %3037
    %v3039 = vsel %vm1941, %v3019, -inf
    %3040 = vmax.xlane.f32.xlu0 %v3039
    %v3041 = vpop.xlane.xlu0 %3040
    %v3042 = vsel %vm1941, %v3022, -inf
    %3043 = vmax.xlane.f32.xlu0 %v3042
    %v3044 = vpop.xlane.xlu0 %3043
    %v3045 = vsel %vm1941, %v3024, -inf
    %3046 = vmax.xlane.f32.xlu0 %v3045
    %v3047 = vpop.xlane.xlu0 %3046
    %v3048 = vsel %vm1941, %v3027, -inf
    %3049 = vmax.xlane.f32.xlu0 %v3048
    %v3050 = vpop.xlane.xlu0 %3049
    %v3051 = vsel %vm1941, %v3029, -inf
    %3052 = vmax.xlane.f32.xlu0 %v3051
    %v3053 = vpop.xlane.xlu0 %3052
    %v3054 = vsel %vm1941, %v3032, -inf
    %3055 = vmax.xlane.f32.xlu0 %v3054
    %v3056 = vpop.xlane.xlu0 %3055
    %v3057 = vsel %vm1941, %v3034, -inf
    %3058 = vmax.xlane.f32.xlu0 %v3057
    %v3059 = vpop.xlane.xlu0 %3058
    %v3060 = vsub.f32 %v3017, %v3038
    %v3061 = vsub.f32 %v3019, %v3041
    %v3062 = vsub.f32 %v3022, %v3044
    %v3063 = vsub.f32 %v3024, %v3047
    %v3064 = vsub.f32 %v3027, %v3050
    %v3065 = vsub.f32 %v3029, %v3053
    %v3066 = vsub.f32 %v3032, %v3056
    %v3067 = vsub.f32 %v3034, %v3059
    %v3068 = vmul.f32 %v3060, 1.442695
    %v3069 = vpow.pop %v3068
    %v3070 = vmul.f32 %v3061, 1.442695
    %v3071 = vpow.pop %v3070
    %v3072 = vmul.f32 %v3062, 1.442695
    %v3073 = vpow.pop %v3072
    %v3074 = vmul.f32 %v3063, 1.442695
    %v3075 = vpow.pop %v3074
    %v3076 = vmul.f32 %v3064, 1.442695
    %v3077 = vpow.pop %v3076
    %v3078 = vmul.f32 %v3065, 1.442695
    %v3079 = vpow.pop %v3078
    %v3080 = vmul.f32 %v3066, 1.442695
    %v3081 = vpow.pop %v3080
    %v3082 = vmul.f32 %v3067, 1.442695
    %v3083 = vpow.pop %v3082
    %v3084 = vsel %vm1941, %v3069, 0.0
    %3085 = vadd.xlane.f32.xlu0 %v3084
    %v3086 = vpop.xlane.xlu0 %3085
    %v3087 = vsel %vm1941, %v3071, 0.0
    %3088 = vadd.xlane.f32.xlu0 %v3087
    %v3089 = vpop.xlane.xlu0 %3088
    %v3090 = vsel %vm1941, %v3073, 0.0
    %3091 = vadd.xlane.f32.xlu0 %v3090
    %v3092 = vpop.xlane.xlu0 %3091
    %v3093 = vsel %vm1941, %v3075, 0.0
    %3094 = vadd.xlane.f32.xlu0 %v3093
    %v3095 = vpop.xlane.xlu0 %3094
    %v3096 = vsel %vm1941, %v3077, 0.0
    %3097 = vadd.xlane.f32.xlu0 %v3096
    %v3098 = vpop.xlane.xlu0 %3097
    %v3099 = vsel %vm1941, %v3079, 0.0
    %3100 = vadd.xlane.f32.xlu0 %v3099
    %v3101 = vpop.xlane.xlu0 %3100
    %v3102 = vsel %vm1941, %v3081, 0.0
    %3103 = vadd.xlane.f32.xlu0 %v3102
    %v3104 = vpop.xlane.xlu0 %3103
    %v3105 = vsel %vm1941, %v3083, 0.0
    %3106 = vadd.xlane.f32.xlu0 %v3105
    %v3107 = vpop.xlane.xlu0 %3106
    %v3108 = vrcp.pop %v3086
    %v3109 = vrcp.pop %v3089
    %v3110 = vrcp.pop %v3092
    %v3111 = vrcp.pop %v3095
    %v3112 = vrcp.pop %v3098
    %v3113 = vrcp.pop %v3101
    %v3114 = vrcp.pop %v3104
    %v3115 = vrcp.pop %v3107
    %v3116 = vmul.f32 %v3069, %v3108
    %v3117 = vmul.f32 %v3071, %v3109
    %v3118 = vmul.f32 %v3073, %v3110
    %v3119 = vmul.f32 %v3075, %v3111
    %v3120 = vmul.f32 %v3077, %v3112
    %v3121 = vmul.f32 %v3079, %v3113
    %v3122 = vmul.f32 %v3081, %v3114
    %v3123 = vmul.f32 %v3083, %v3115
    %v3124 = vpack.c.bf16 %v3117, %v3116
    %v3125 = vpack.c.bf16 %v3119, %v3118
    %v3126 = vpack.c.bf16 %v3121, %v3120
    %v3127 = vpack.c.bf16 %v3123, %v3122
    %3128 = vrot.lane.b32.xlu0 %v2918, 96
    %v3129 = vpop.permute.xlu0 %3128
    %3130 = vrot.lane.b32.xlu0 %v2919, 96
    %v3131 = vpop.permute.xlu0 %3130
    %3132 = vrot.lane.b32.xlu0 %v2920, 96
    %v3133 = vpop.permute.xlu0 %3132
    %3134 = vrot.lane.b32.xlu0 %v2921, 96
    %v3135 = vpop.permute.xlu0 %3134
    %v3141 = vsel %vm1941, %v3124, 0
    %v3144 = vsel %vm1941, %v3125, 0
    %v3147 = vsel %vm1941, %v3126, 0
    %v3150 = vsel %vm1941, %v3127, 0
    %3152 = vmatpush.bf16.msra.mxu0 0
    %3153 = vmatpush.bf16.msra.mxu0 0
    %3154 = vmatpush.bf16.msra.mxu0 0
    %3155 = vmatpush.bf16.msra.mxu0 0
    %3156 = vmatpush.bf16.msra.mxu0 %v3135
    %3157 = vmatpush.bf16.msra.mxu0 %v3133
    %3158 = vmatpush.bf16.msra.mxu0 %v3131
    %3159 = vmatpush.bf16.msra.mxu0 %v3129
    %3160 = vmatmul.bf16.gmra.mxu0 %v3141
    %v3161 = vpop.f32.mrf.mxu0
    %v3162 = vadd.f32 0.0, %v3161
    %v3163 = vpop.f32.mrf.mxu0
    %v3164 = vadd.f32 0.0, %v3163
    %3165 = vmatmul.bf16.gmra.mxu0 %v3144
    %v3166 = vpop.f32.mrf.mxu0
    %v3167 = vadd.f32 0.0, %v3166
    %v3168 = vpop.f32.mrf.mxu0
    %v3169 = vadd.f32 0.0, %v3168
    %3170 = vmatmul.bf16.gmra.mxu0 %v3147
    %v3171 = vpop.f32.mrf.mxu0
    %v3172 = vadd.f32 0.0, %v3171
    %v3173 = vpop.f32.mrf.mxu0
    %v3174 = vadd.f32 0.0, %v3173
    %3175 = vmatmul.bf16.gmra.mxu0 %v3150
    %v3176 = vpop.f32.mrf.mxu0
    %v3177 = vadd.f32 0.0, %v3176
    %v3178 = vpop.f32.mrf.mxu0
    %v3179 = vadd.f32 0.0, %v3178
    %3180 = vdwg.mxu0
    %3181 = vrot.lane.b32.xlu0 %v2749, 64
    %v3182 = vpop.permute.xlu0 %3181
    %3183 = vrot.lane.b32.xlu0 %v2750, 64
    %v3184 = vpop.permute.xlu0 %3183
    %3185 = vrot.lane.b32.xlu0 %v2751, 64
    %v3186 = vpop.permute.xlu0 %3185
    %3187 = vrot.lane.b32.xlu0 %v2752, 64
    %v3188 = vpop.permute.xlu0 %3187
    %3189 = vrot.lane.b32.xlu0 %v2761, 64
    %v3190 = vpop.permute.xlu0 %3189
    %3191 = vrot.lane.b32.xlu0 %v2762, 64
    %v3192 = vpop.permute.xlu0 %3191
    %3193 = vrot.lane.b32.xlu0 %v2763, 64
    %v3194 = vpop.permute.xlu0 %3193
    %3195 = vrot.lane.b32.xlu0 %v2764, 64
    %v3196 = vpop.permute.xlu0 %3195
    %v3198 = vsel %vm1887, %v3182, 0
    %v3201 = vsel %vm1887, %v3184, 0
    %v3204 = vsel %vm1887, %v3186, 0
    %v3207 = vsel %vm1887, %v3188, 0
    %v3210 = vsel %vm1887, %v3190, 0
    %v3213 = vsel %vm1887, %v3192, 0
    %v3216 = vsel %vm1887, %v3194, 0
    %v3219 = vsel %vm1887, %v3196, 0
    %3221 = vmatpush.bf16.xpose.msra.mxu0 0
    %3222 = vmatpush.bf16.xpose.msra.mxu0 0
    %3223 = vmatpush.bf16.xpose.msra.mxu0 0
    %3224 = vmatpush.bf16.xpose.msra.mxu0 0
    %3225 = vmatpush.bf16.xpose.msra.mxu0 %v3219
    %3226 = vmatpush.bf16.xpose.msra.mxu0 %v3216
    %3227 = vmatpush.bf16.xpose.msra.mxu0 %v3213
    %3228 = vmatpush.bf16.xpose.msra.mxu0 %v3210
    %3229 = vmatmul.bf16.gmra.mxu0 %v3198
    %v3230 = vpop.f32.mrf.mxu0
    %v3231 = vadd.f32 %v1839, %v3230
    %v3232 = vpop.f32.mrf.mxu0
    %v3233 = vadd.f32 %v1840, %v3232
    %3234 = vmatmul.bf16.gmra.mxu0 %v3201
    %v3235 = vpop.f32.mrf.mxu0
    %v3236 = vadd.f32 %v1841, %v3235
    %v3237 = vpop.f32.mrf.mxu0
    %v3238 = vadd.f32 %v1842, %v3237
    %3239 = vmatmul.bf16.gmra.mxu0 %v3204
    %v3240 = vpop.f32.mrf.mxu0
    %v3241 = vadd.f32 %v1843, %v3240
    %v3242 = vpop.f32.mrf.mxu0
    %v3243 = vadd.f32 %v1844, %v3242
    %3244 = vmatmul.bf16.gmra.mxu0 %v3207
    %v3245 = vpop.f32.mrf.mxu0
    %v3246 = vadd.f32 %v1845, %v3245
    %v3247 = vpop.f32.mrf.mxu0
    %v3248 = vadd.f32 %v1846, %v3247
    %3249 = vdwg.mxu0
    %v3250 = vsel %vm1941, %v3231, -inf
    %3251 = vmax.xlane.f32.xlu0 %v3250
    %v3252 = vpop.xlane.xlu0 %3251
    %v3253 = vsel %vm1941, %v3233, -inf
    %3254 = vmax.xlane.f32.xlu0 %v3253
    %v3255 = vpop.xlane.xlu0 %3254
    %v3256 = vsel %vm1941, %v3236, -inf
    %3257 = vmax.xlane.f32.xlu0 %v3256
    %v3258 = vpop.xlane.xlu0 %3257
    %v3259 = vsel %vm1941, %v3238, -inf
    %3260 = vmax.xlane.f32.xlu0 %v3259
    %v3261 = vpop.xlane.xlu0 %3260
    %v3262 = vsel %vm1941, %v3241, -inf
    %3263 = vmax.xlane.f32.xlu0 %v3262
    %v3264 = vpop.xlane.xlu0 %3263
    %v3265 = vsel %vm1941, %v3243, -inf
    %3266 = vmax.xlane.f32.xlu0 %v3265
    %v3267 = vpop.xlane.xlu0 %3266
    %v3268 = vsel %vm1941, %v3246, -inf
    %3269 = vmax.xlane.f32.xlu0 %v3268
    %v3270 = vpop.xlane.xlu0 %3269
    %v3271 = vsel %vm1941, %v3248, -inf
    %3272 = vmax.xlane.f32.xlu0 %v3271
    %v3273 = vpop.xlane.xlu0 %3272
    %v3274 = vsub.f32 %v3231, %v3252
    %v3275 = vsub.f32 %v3233, %v3255
    %v3276 = vsub.f32 %v3236, %v3258
    %v3277 = vsub.f32 %v3238, %v3261
    %v3278 = vsub.f32 %v3241, %v3264
    %v3279 = vsub.f32 %v3243, %v3267
    %v3280 = vsub.f32 %v3246, %v3270
    %v3281 = vsub.f32 %v3248, %v3273
    %v3282 = vmul.f32 %v3274, 1.442695
    %v3283 = vpow.pop %v3282
    %v3284 = vmul.f32 %v3275, 1.442695
    %v3285 = vpow.pop %v3284
    %v3286 = vmul.f32 %v3276, 1.442695
    %v3287 = vpow.pop %v3286
    %v3288 = vmul.f32 %v3277, 1.442695
    %v3289 = vpow.pop %v3288
    %v3290 = vmul.f32 %v3278, 1.442695
    %v3291 = vpow.pop %v3290
    %v3292 = vmul.f32 %v3279, 1.442695
    %v3293 = vpow.pop %v3292
    %v3294 = vmul.f32 %v3280, 1.442695
    %v3295 = vpow.pop %v3294
    %v3296 = vmul.f32 %v3281, 1.442695
    %v3297 = vpow.pop %v3296
    %v3298 = vsel %vm1941, %v3283, 0.0
    %3299 = vadd.xlane.f32.xlu0 %v3298
    %v3300 = vpop.xlane.xlu0 %3299
    %v3301 = vsel %vm1941, %v3285, 0.0
    %3302 = vadd.xlane.f32.xlu0 %v3301
    %v3303 = vpop.xlane.xlu0 %3302
    %v3304 = vsel %vm1941, %v3287, 0.0
    %3305 = vadd.xlane.f32.xlu0 %v3304
    %v3306 = vpop.xlane.xlu0 %3305
    %v3307 = vsel %vm1941, %v3289, 0.0
    %3308 = vadd.xlane.f32.xlu0 %v3307
    %v3309 = vpop.xlane.xlu0 %3308
    %v3310 = vsel %vm1941, %v3291, 0.0
    %3311 = vadd.xlane.f32.xlu0 %v3310
    %v3312 = vpop.xlane.xlu0 %3311
    %v3313 = vsel %vm1941, %v3293, 0.0
    %3314 = vadd.xlane.f32.xlu0 %v3313
    %v3315 = vpop.xlane.xlu0 %3314
    %v3316 = vsel %vm1941, %v3295, 0.0
    %3317 = vadd.xlane.f32.xlu0 %v3316
    %v3318 = vpop.xlane.xlu0 %3317
    %v3319 = vsel %vm1941, %v3297, 0.0
    %3320 = vadd.xlane.f32.xlu0 %v3319
    %v3321 = vpop.xlane.xlu0 %3320
    %v3322 = vrcp.pop %v3300
    %v3323 = vrcp.pop %v3303
    %v3324 = vrcp.pop %v3306
    %v3325 = vrcp.pop %v3309
    %v3326 = vrcp.pop %v3312
    %v3327 = vrcp.pop %v3315
    %v3328 = vrcp.pop %v3318
    %v3329 = vrcp.pop %v3321
    %v3330 = vmul.f32 %v3283, %v3322
    %v3331 = vmul.f32 %v3285, %v3323
    %v3332 = vmul.f32 %v3287, %v3324
    %v3333 = vmul.f32 %v3289, %v3325
    %v3334 = vmul.f32 %v3291, %v3326
    %v3335 = vmul.f32 %v3293, %v3327
    %v3336 = vmul.f32 %v3295, %v3328
    %v3337 = vmul.f32 %v3297, %v3329
    %v3338 = vpack.c.bf16 %v3331, %v3330
    %v3339 = vpack.c.bf16 %v3333, %v3332
    %v3340 = vpack.c.bf16 %v3335, %v3334
    %v3341 = vpack.c.bf16 %v3337, %v3336
    %3342 = vrot.lane.b32.xlu0 %v2918, 64
    %v3343 = vpop.permute.xlu0 %3342
    %3344 = vrot.lane.b32.xlu0 %v2919, 64
    %v3345 = vpop.permute.xlu0 %3344
    %3346 = vrot.lane.b32.xlu0 %v2920, 64
    %v3347 = vpop.permute.xlu0 %3346
    %3348 = vrot.lane.b32.xlu0 %v2921, 64
    %v3349 = vpop.permute.xlu0 %3348
    %v3355 = vsel %vm1941, %v3338, 0
    %v3358 = vsel %vm1941, %v3339, 0
    %v3361 = vsel %vm1941, %v3340, 0
    %v3364 = vsel %vm1941, %v3341, 0
    %3366 = vmatpush.bf16.msra.mxu0 0
    %3367 = vmatpush.bf16.msra.mxu0 0
    %3368 = vmatpush.bf16.msra.mxu0 0
    %3369 = vmatpush.bf16.msra.mxu0 0
    %3370 = vmatpush.bf16.msra.mxu0 %v3349
    %3371 = vmatpush.bf16.msra.mxu0 %v3347
    %3372 = vmatpush.bf16.msra.mxu0 %v3345
    %3373 = vmatpush.bf16.msra.mxu0 %v3343
    %3374 = vmatmul.bf16.gmra.mxu0 %v3355
    %v3375 = vpop.f32.mrf.mxu0
    %v3376 = vadd.f32 0.0, %v3375
    %v3377 = vpop.f32.mrf.mxu0
    %v3378 = vadd.f32 0.0, %v3377
    %3379 = vmatmul.bf16.gmra.mxu0 %v3358
    %v3380 = vpop.f32.mrf.mxu0
    %v3381 = vadd.f32 0.0, %v3380
    %v3382 = vpop.f32.mrf.mxu0
    %v3383 = vadd.f32 0.0, %v3382
    %3384 = vmatmul.bf16.gmra.mxu0 %v3361
    %v3385 = vpop.f32.mrf.mxu0
    %v3386 = vadd.f32 0.0, %v3385
    %v3387 = vpop.f32.mrf.mxu0
    %v3388 = vadd.f32 0.0, %v3387
    %3389 = vmatmul.bf16.gmra.mxu0 %v3364
    %v3390 = vpop.f32.mrf.mxu0
    %v3391 = vadd.f32 0.0, %v3390
    %v3392 = vpop.f32.mrf.mxu0
    %v3393 = vadd.f32 0.0, %v3392
    %3394 = vdwg.mxu0
    %3395 = vrot.lane.b32.xlu0 %v2749, 32
    %v3396 = vpop.permute.xlu0 %3395
    %3397 = vrot.lane.b32.xlu0 %v2750, 32
    %v3398 = vpop.permute.xlu0 %3397
    %3399 = vrot.lane.b32.xlu0 %v2751, 32
    %v3400 = vpop.permute.xlu0 %3399
    %3401 = vrot.lane.b32.xlu0 %v2752, 32
    %v3402 = vpop.permute.xlu0 %3401
    %3403 = vrot.lane.b32.xlu0 %v2761, 32
    %v3404 = vpop.permute.xlu0 %3403
    %3405 = vrot.lane.b32.xlu0 %v2762, 32
    %v3406 = vpop.permute.xlu0 %3405
    %3407 = vrot.lane.b32.xlu0 %v2763, 32
    %v3408 = vpop.permute.xlu0 %3407
    %3409 = vrot.lane.b32.xlu0 %v2764, 32
    %v3410 = vpop.permute.xlu0 %3409
    %v3412 = vsel %vm1887, %v3396, 0
    %v3415 = vsel %vm1887, %v3398, 0
    %v3418 = vsel %vm1887, %v3400, 0
    %v3421 = vsel %vm1887, %v3402, 0
    %v3424 = vsel %vm1887, %v3404, 0
    %v3427 = vsel %vm1887, %v3406, 0
    %v3430 = vsel %vm1887, %v3408, 0
    %v3433 = vsel %vm1887, %v3410, 0
    %3435 = vmatpush.bf16.xpose.msra.mxu0 0
    %3436 = vmatpush.bf16.xpose.msra.mxu0 0
    %3437 = vmatpush.bf16.xpose.msra.mxu0 0
    %3438 = vmatpush.bf16.xpose.msra.mxu0 0
    %3439 = vmatpush.bf16.xpose.msra.mxu0 %v3433
    %3440 = vmatpush.bf16.xpose.msra.mxu0 %v3430
    %3441 = vmatpush.bf16.xpose.msra.mxu0 %v3427
    %3442 = vmatpush.bf16.xpose.msra.mxu0 %v3424
    %3443 = vmatmul.bf16.gmra.mxu0 %v3412
    %v3444 = vpop.f32.mrf.mxu0
    %v3445 = vadd.f32 %v1839, %v3444
    %v3446 = vpop.f32.mrf.mxu0
    %v3447 = vadd.f32 %v1840, %v3446
    %3448 = vmatmul.bf16.gmra.mxu0 %v3415
    %v3449 = vpop.f32.mrf.mxu0
    %v3450 = vadd.f32 %v1841, %v3449
    %v3451 = vpop.f32.mrf.mxu0
    %v3452 = vadd.f32 %v1842, %v3451
    %3453 = vmatmul.bf16.gmra.mxu0 %v3418
    %v3454 = vpop.f32.mrf.mxu0
    %v3455 = vadd.f32 %v1843, %v3454
    %v3456 = vpop.f32.mrf.mxu0
    %v3457 = vadd.f32 %v1844, %v3456
    %3458 = vmatmul.bf16.gmra.mxu0 %v3421
    %v3459 = vpop.f32.mrf.mxu0
    %v3460 = vadd.f32 %v1845, %v3459
    %v3461 = vpop.f32.mrf.mxu0
    %v3462 = vadd.f32 %v1846, %v3461
    %3463 = vdwg.mxu0
    %v3464 = vsel %vm1941, %v3445, -inf
    %3465 = vmax.xlane.f32.xlu0 %v3464
    %v3466 = vpop.xlane.xlu0 %3465
    %v3467 = vsel %vm1941, %v3447, -inf
    %3468 = vmax.xlane.f32.xlu0 %v3467
    %v3469 = vpop.xlane.xlu0 %3468
    %v3470 = vsel %vm1941, %v3450, -inf
    %3471 = vmax.xlane.f32.xlu0 %v3470
    %v3472 = vpop.xlane.xlu0 %3471
    %v3473 = vsel %vm1941, %v3452, -inf
    %3474 = vmax.xlane.f32.xlu0 %v3473
    %v3475 = vpop.xlane.xlu0 %3474
    %v3476 = vsel %vm1941, %v3455, -inf
    %3477 = vmax.xlane.f32.xlu0 %v3476
    %v3478 = vpop.xlane.xlu0 %3477
    %v3479 = vsel %vm1941, %v3457, -inf
    %3480 = vmax.xlane.f32.xlu0 %v3479
    %v3481 = vpop.xlane.xlu0 %3480
    %v3482 = vsel %vm1941, %v3460, -inf
    %3483 = vmax.xlane.f32.xlu0 %v3482
    %v3484 = vpop.xlane.xlu0 %3483
    %v3485 = vsel %vm1941, %v3462, -inf
    %3486 = vmax.xlane.f32.xlu0 %v3485
    %v3487 = vpop.xlane.xlu0 %3486
    %v3488 = vsub.f32 %v3445, %v3466
    %v3489 = vsub.f32 %v3447, %v3469
    %v3490 = vsub.f32 %v3450, %v3472
    %v3491 = vsub.f32 %v3452, %v3475
    %v3492 = vsub.f32 %v3455, %v3478
    %v3493 = vsub.f32 %v3457, %v3481
    %v3494 = vsub.f32 %v3460, %v3484
    %v3495 = vsub.f32 %v3462, %v3487
    %v3496 = vmul.f32 %v3488, 1.442695
    %v3497 = vpow.pop %v3496
    %v3498 = vmul.f32 %v3489, 1.442695
    %v3499 = vpow.pop %v3498
    %v3500 = vmul.f32 %v3490, 1.442695
    %v3501 = vpow.pop %v3500
    %v3502 = vmul.f32 %v3491, 1.442695
    %v3503 = vpow.pop %v3502
    %v3504 = vmul.f32 %v3492, 1.442695
    %v3505 = vpow.pop %v3504
    %v3506 = vmul.f32 %v3493, 1.442695
    %v3507 = vpow.pop %v3506
    %v3508 = vmul.f32 %v3494, 1.442695
    %v3509 = vpow.pop %v3508
    %v3510 = vmul.f32 %v3495, 1.442695
    %v3511 = vpow.pop %v3510
    %v3512 = vsel %vm1941, %v3497, 0.0
    %3513 = vadd.xlane.f32.xlu0 %v3512
    %v3514 = vpop.xlane.xlu0 %3513
    %v3515 = vsel %vm1941, %v3499, 0.0
    %3516 = vadd.xlane.f32.xlu0 %v3515
    %v3517 = vpop.xlane.xlu0 %3516
    %v3518 = vsel %vm1941, %v3501, 0.0
    %3519 = vadd.xlane.f32.xlu0 %v3518
    %v3520 = vpop.xlane.xlu0 %3519
    %v3521 = vsel %vm1941, %v3503, 0.0
    %3522 = vadd.xlane.f32.xlu0 %v3521
    %v3523 = vpop.xlane.xlu0 %3522
    %v3524 = vsel %vm1941, %v3505, 0.0
    %3525 = vadd.xlane.f32.xlu0 %v3524
    %v3526 = vpop.xlane.xlu0 %3525
    %v3527 = vsel %vm1941, %v3507, 0.0
    %3528 = vadd.xlane.f32.xlu0 %v3527
    %v3529 = vpop.xlane.xlu0 %3528
    %v3530 = vsel %vm1941, %v3509, 0.0
    %3531 = vadd.xlane.f32.xlu0 %v3530
    %v3532 = vpop.xlane.xlu0 %3531
    %v3533 = vsel %vm1941, %v3511, 0.0
    %3534 = vadd.xlane.f32.xlu0 %v3533
    %v3535 = vpop.xlane.xlu0 %3534
    %v3536 = vrcp.pop %v3514
    %v3537 = vrcp.pop %v3517
    %v3538 = vrcp.pop %v3520
    %v3539 = vrcp.pop %v3523
    %v3540 = vrcp.pop %v3526
    %v3541 = vrcp.pop %v3529
    %v3542 = vrcp.pop %v3532
    %v3543 = vrcp.pop %v3535
    %v3544 = vmul.f32 %v3497, %v3536
    %v3545 = vmul.f32 %v3499, %v3537
    %v3546 = vmul.f32 %v3501, %v3538
    %v3547 = vmul.f32 %v3503, %v3539
    %v3548 = vmul.f32 %v3505, %v3540
    %v3549 = vmul.f32 %v3507, %v3541
    %v3550 = vmul.f32 %v3509, %v3542
    %v3551 = vmul.f32 %v3511, %v3543
    %v3552 = vpack.c.bf16 %v3545, %v3544
    %v3553 = vpack.c.bf16 %v3547, %v3546
    %v3554 = vpack.c.bf16 %v3549, %v3548
    %v3555 = vpack.c.bf16 %v3551, %v3550
    %3556 = vrot.lane.b32.xlu0 %v2918, 32
    %v3557 = vpop.permute.xlu0 %3556
    %3558 = vrot.lane.b32.xlu0 %v2919, 32
    %v3559 = vpop.permute.xlu0 %3558
    %3560 = vrot.lane.b32.xlu0 %v2920, 32
    %v3561 = vpop.permute.xlu0 %3560
    %3562 = vrot.lane.b32.xlu0 %v2921, 32
    %v3563 = vpop.permute.xlu0 %3562
    %v3569 = vsel %vm1941, %v3552, 0
    %v3572 = vsel %vm1941, %v3553, 0
    %v3575 = vsel %vm1941, %v3554, 0
    %v3578 = vsel %vm1941, %v3555, 0
    %3580 = vmatpush.bf16.msra.mxu0 0
    %3581 = vmatpush.bf16.msra.mxu0 0
    %3582 = vmatpush.bf16.msra.mxu0 0
    %3583 = vmatpush.bf16.msra.mxu0 0
    %3584 = vmatpush.bf16.msra.mxu0 %v3563
    %3585 = vmatpush.bf16.msra.mxu0 %v3561
    %3586 = vmatpush.bf16.msra.mxu0 %v3559
    %3587 = vmatpush.bf16.msra.mxu0 %v3557
    %3588 = vmatmul.bf16.gmra.mxu0 %v3569
    %v3589 = vpop.f32.mrf.mxu0
    %v3590 = vadd.f32 0.0, %v3589
    %v3591 = vpop.f32.mrf.mxu0
    %v3592 = vadd.f32 0.0, %v3591
    %3593 = vmatmul.bf16.gmra.mxu0 %v3572
    %v3594 = vpop.f32.mrf.mxu0
    %v3595 = vadd.f32 0.0, %v3594
    %v3596 = vpop.f32.mrf.mxu0
    %v3597 = vadd.f32 0.0, %v3596
    %3598 = vmatmul.bf16.gmra.mxu0 %v3575
    %v3599 = vpop.f32.mrf.mxu0
    %v3600 = vadd.f32 0.0, %v3599
    %v3601 = vpop.f32.mrf.mxu0
    %v3602 = vadd.f32 0.0, %v3601
    %3603 = vmatmul.bf16.gmra.mxu0 %v3578
    %v3604 = vpop.f32.mrf.mxu0
    %v3605 = vadd.f32 0.0, %v3604
    %v3606 = vpop.f32.mrf.mxu0
    %v3607 = vadd.f32 0.0, %v3606
    %3608 = vdwg.mxu0
    %3617 = vrot.lane.b32.xlu0 %v2294, 32
    %v3618 = vpop.permute.xlu0 %3617
    %3619 = vrot.lane.b32.xlu0 %v2296, 32
    %v3620 = vpop.permute.xlu0 %3619
    %3621 = vrot.lane.b32.xlu0 %v2299, 32
    %v3622 = vpop.permute.xlu0 %3621
    %3623 = vrot.lane.b32.xlu0 %v2301, 32
    %v3624 = vpop.permute.xlu0 %3623
    %3625 = vrot.lane.b32.xlu0 %v2304, 32
    %v3626 = vpop.permute.xlu0 %3625
    %3627 = vrot.lane.b32.xlu0 %v2306, 32
    %v3628 = vpop.permute.xlu0 %3627
    %3629 = vrot.lane.b32.xlu0 %v2309, 32
    %v3630 = vpop.permute.xlu0 %3629
    %3631 = vrot.lane.b32.xlu0 %v2311, 32
    %v3632 = vpop.permute.xlu0 %3631
    %3649 = vrot.lane.b32.xlu0 %v2508, 64
    %v3650 = vpop.permute.xlu0 %3649
    %3651 = vrot.lane.b32.xlu0 %v2510, 64
    %v3652 = vpop.permute.xlu0 %3651
    %3653 = vrot.lane.b32.xlu0 %v2513, 64
    %v3654 = vpop.permute.xlu0 %3653
    %3655 = vrot.lane.b32.xlu0 %v2515, 64
    %v3656 = vpop.permute.xlu0 %3655
    %3657 = vrot.lane.b32.xlu0 %v2518, 64
    %v3658 = vpop.permute.xlu0 %3657
    %3659 = vrot.lane.b32.xlu0 %v2520, 64
    %v3660 = vpop.permute.xlu0 %3659
    %3661 = vrot.lane.b32.xlu0 %v2523, 64
    %v3662 = vpop.permute.xlu0 %3661
    %3663 = vrot.lane.b32.xlu0 %v2525, 64
    %v3664 = vpop.permute.xlu0 %3663
    %3681 = vrot.lane.b32.xlu0 %v2722, 96
    %v3682 = vpop.permute.xlu0 %3681
    %3683 = vrot.lane.b32.xlu0 %v2724, 96
    %v3684 = vpop.permute.xlu0 %3683
    %3685 = vrot.lane.b32.xlu0 %v2727, 96
    %v3686 = vpop.permute.xlu0 %3685
    %3687 = vrot.lane.b32.xlu0 %v2729, 96
    %v3688 = vpop.permute.xlu0 %3687
    %3689 = vrot.lane.b32.xlu0 %v2732, 96
    %v3690 = vpop.permute.xlu0 %3689
    %3691 = vrot.lane.b32.xlu0 %v2734, 96
    %v3692 = vpop.permute.xlu0 %3691
    %3693 = vrot.lane.b32.xlu0 %v2737, 96
    %v3694 = vpop.permute.xlu0 %3693
    %3695 = vrot.lane.b32.xlu0 %v2739, 96
    %v3696 = vpop.permute.xlu0 %3695
    %3713 = vrot.lane.b32.xlu0 %v3162, 32
    %v3714 = vpop.permute.xlu0 %3713
    %3715 = vrot.lane.b32.xlu0 %v3164, 32
    %v3716 = vpop.permute.xlu0 %3715
    %3717 = vrot.lane.b32.xlu0 %v3167, 32
    %v3718 = vpop.permute.xlu0 %3717
    %3719 = vrot.lane.b32.xlu0 %v3169, 32
    %v3720 = vpop.permute.xlu0 %3719
    %3721 = vrot.lane.b32.xlu0 %v3172, 32
    %v3722 = vpop.permute.xlu0 %3721
    %3723 = vrot.lane.b32.xlu0 %v3174, 32
    %v3724 = vpop.permute.xlu0 %3723
    %3725 = vrot.lane.b32.xlu0 %v3177, 32
    %v3726 = vpop.permute.xlu0 %3725
    %3727 = vrot.lane.b32.xlu0 %v3179, 32
    %v3728 = vpop.permute.xlu0 %3727
    %3745 = vrot.lane.b32.xlu0 %v3376, 64
    %v3746 = vpop.permute.xlu0 %3745
    %3747 = vrot.lane.b32.xlu0 %v3378, 64
    %v3748 = vpop.permute.xlu0 %3747
    %3749 = vrot.lane.b32.xlu0 %v3381, 64
    %v3750 = vpop.permute.xlu0 %3749
    %3751 = vrot.lane.b32.xlu0 %v3383, 64
    %v3752 = vpop.permute.xlu0 %3751
    %3753 = vrot.lane.b32.xlu0 %v3386, 64
    %v3754 = vpop.permute.xlu0 %3753
    %3755 = vrot.lane.b32.xlu0 %v3388, 64
    %v3756 = vpop.permute.xlu0 %3755
    %3757 = vrot.lane.b32.xlu0 %v3391, 64
    %v3758 = vpop.permute.xlu0 %3757
    %3759 = vrot.lane.b32.xlu0 %v3393, 64
    %v3760 = vpop.permute.xlu0 %3759
    %3777 = vrot.lane.b32.xlu0 %v3590, 96
    %v3778 = vpop.permute.xlu0 %3777
    %3779 = vrot.lane.b32.xlu0 %v3592, 96
    %v3780 = vpop.permute.xlu0 %3779
    %3781 = vrot.lane.b32.xlu0 %v3595, 96
    %v3782 = vpop.permute.xlu0 %3781
    %3783 = vrot.lane.b32.xlu0 %v3597, 96
    %v3784 = vpop.permute.xlu0 %3783
    %3785 = vrot.lane.b32.xlu0 %v3600, 96
    %v3786 = vpop.permute.xlu0 %3785
    %3787 = vrot.lane.b32.xlu0 %v3602, 96
    %v3788 = vpop.permute.xlu0 %3787
    %3789 = vrot.lane.b32.xlu0 %v3605, 96
    %v3790 = vpop.permute.xlu0 %3789
    %3791 = vrot.lane.b32.xlu0 %v3607, 96
    %v3792 = vpop.permute.xlu0 %3791
    %v3801 = vsel %vm1887, %v2080, %v3618
    %v3802 = vsel %vm1887, %v2082, %v3620
    %v3803 = vsel %vm1887, %v2085, %v3622
    %v3804 = vsel %vm1887, %v2087, %v3624
    %v3805 = vsel %vm1887, %v2090, %v3626
    %v3806 = vsel %vm1887, %v2092, %v3628
    %v3807 = vsel %vm1887, %v2095, %v3630
    %v3808 = vsel %vm1887, %v2097, %v3632
    %v3809 = vsel %vm1941, %v3801, %v3650
    %v3810 = vsel %vm1941, %v3802, %v3652
    %v3811 = vsel %vm1941, %v3803, %v3654
    %v3812 = vsel %vm1941, %v3804, %v3656
    %v3813 = vsel %vm1941, %v3805, %v3658
    %v3814 = vsel %vm1941, %v3806, %v3660
    %v3815 = vsel %vm1941, %v3807, %v3662
    %v3816 = vsel %vm1941, %v3808, %v3664
    %vm3817 = vcmask 785408
    %v3818 = vsel %vm3817, %v3809, %v3682
    %v3819 = vsel %vm3817, %v3810, %v3684
    %v3820 = vsel %vm3817, %v3811, %v3686
    %v3821 = vsel %vm3817, %v3812, %v3688
    %v3822 = vsel %vm3817, %v3813, %v3690
    %v3823 = vsel %vm3817, %v3814, %v3692
    %v3824 = vsel %vm3817, %v3815, %v3694
    %v3825 = vsel %vm3817, %v3816, %v3696
    %v3826 = vsel %vm1887, %v2948, %v3714
    %v3827 = vsel %vm1887, %v2950, %v3716
    %v3828 = vsel %vm1887, %v2953, %v3718
    %v3829 = vsel %vm1887, %v2955, %v3720
    %v3830 = vsel %vm1887, %v2958, %v3722
    %v3831 = vsel %vm1887, %v2960, %v3724
    %v3832 = vsel %vm1887, %v2963, %v3726
    %v3833 = vsel %vm1887, %v2965, %v3728
    %v3834 = vsel %vm1941, %v3826, %v3746
    %v3835 = vsel %vm1941, %v3827, %v3748
    %v3836 = vsel %vm1941, %v3828, %v3750
    %v3837 = vsel %vm1941, %v3829, %v3752
    %v3838 = vsel %vm1941, %v3830, %v3754
    %v3839 = vsel %vm1941, %v3831, %v3756
    %v3840 = vsel %vm1941, %v3832, %v3758
    %v3841 = vsel %vm1941, %v3833, %v3760
    %v3842 = vsel %vm3817, %v3834, %v3778
    %v3843 = vsel %vm3817, %v3835, %v3780
    %v3844 = vsel %vm3817, %v3836, %v3782
    %v3845 = vsel %vm3817, %v3837, %v3784
    %v3846 = vsel %vm3817, %v3838, %v3786
    %v3847 = vsel %vm3817, %v3839, %v3788
    %v3848 = vsel %vm3817, %v3840, %v3790
    %v3849 = vsel %vm3817, %v3841, %v3792
    %v3858 = vunpack.c.l.b16 %v1780
    %v3859 = vunpack.c.l.b16 %v1781
    %v3860 = vunpack.c.l.b16 %v1782
    %v3861 = vunpack.c.l.b16 %v1783
    %v3862 = vunpack.c.l.b16 %v1784
    %v3863 = vunpack.c.l.b16 %v1785
    %v3864 = vunpack.c.l.b16 %v1786
    %v3865 = vunpack.c.l.b16 %v1787
    %v3866 = vpack.c.b16 %v3859, %v3858
    %v3867 = vpack.c.b16 %v3861, %v3860
    %v3868 = vpack.c.b16 %v3863, %v3862
    %v3869 = vpack.c.b16 %v3865, %v3864
    %v3878 = vunpack.c.l.b16 %v1796
    %v3879 = vunpack.c.l.b16 %v1797
    %v3880 = vunpack.c.l.b16 %v1798
    %v3881 = vunpack.c.l.b16 %v1799
    %v3882 = vunpack.c.l.b16 %v1800
    %v3883 = vunpack.c.l.b16 %v1801
    %v3884 = vunpack.c.l.b16 %v1802
    %v3885 = vunpack.c.l.b16 %v1803
    %v3886 = vpack.c.b16 %v3879, %v3878
    %v3887 = vpack.c.b16 %v3881, %v3880
    %v3888 = vpack.c.b16 %v3883, %v3882
    %v3889 = vpack.c.b16 %v3885, %v3884
    %v3891 = vsel %vm1887, %v3866, 0
    %v3894 = vsel %vm1887, %v3867, 0
    %v3897 = vsel %vm1887, %v3868, 0
    %v3900 = vsel %vm1887, %v3869, 0
    %v3903 = vsel %vm1887, %v3886, 0
    %v3906 = vsel %vm1887, %v3887, 0
    %v3909 = vsel %vm1887, %v3888, 0
    %v3912 = vsel %vm1887, %v3889, 0
    %3914 = vmatpush.bf16.xpose.msra.mxu0 0
    %3915 = vmatpush.bf16.xpose.msra.mxu0 0
    %3916 = vmatpush.bf16.xpose.msra.mxu0 0
    %3917 = vmatpush.bf16.xpose.msra.mxu0 0
    %3918 = vmatpush.bf16.xpose.msra.mxu0 %v3912
    %3919 = vmatpush.bf16.xpose.msra.mxu0 %v3909
    %3920 = vmatpush.bf16.xpose.msra.mxu0 %v3906
    %3921 = vmatpush.bf16.xpose.msra.mxu0 %v3903
    %3922 = vmatmul.bf16.gmra.mxu0 %v3891
    %v3923 = vpop.f32.mrf.mxu0
    %v3924 = vadd.f32 %v1839, %v3923
    %v3925 = vpop.f32.mrf.mxu0
    %v3926 = vadd.f32 %v1840, %v3925
    %3927 = vmatmul.bf16.gmra.mxu0 %v3894
    %v3928 = vpop.f32.mrf.mxu0
    %v3929 = vadd.f32 %v1841, %v3928
    %v3930 = vpop.f32.mrf.mxu0
    %v3931 = vadd.f32 %v1842, %v3930
    %3932 = vmatmul.bf16.gmra.mxu0 %v3897
    %v3933 = vpop.f32.mrf.mxu0
    %v3934 = vadd.f32 %v1843, %v3933
    %v3935 = vpop.f32.mrf.mxu0
    %v3936 = vadd.f32 %v1844, %v3935
    %3937 = vmatmul.bf16.gmra.mxu0 %v3900
    %v3938 = vpop.f32.mrf.mxu0
    %v3939 = vadd.f32 %v1845, %v3938
    %v3940 = vpop.f32.mrf.mxu0
    %v3941 = vadd.f32 %v1846, %v3940
    %3942 = vdwg.mxu0
    %v3943 = vsel %vm1941, %v3924, -inf
    %3944 = vmax.xlane.f32.xlu0 %v3943
    %v3945 = vpop.xlane.xlu0 %3944
    %v3946 = vsel %vm1941, %v3926, -inf
    %3947 = vmax.xlane.f32.xlu0 %v3946
    %v3948 = vpop.xlane.xlu0 %3947
    %v3949 = vsel %vm1941, %v3929, -inf
    %3950 = vmax.xlane.f32.xlu0 %v3949
    %v3951 = vpop.xlane.xlu0 %3950
    %v3952 = vsel %vm1941, %v3931, -inf
    %3953 = vmax.xlane.f32.xlu0 %v3952
    %v3954 = vpop.xlane.xlu0 %3953
    %v3955 = vsel %vm1941, %v3934, -inf
    %3956 = vmax.xlane.f32.xlu0 %v3955
    %v3957 = vpop.xlane.xlu0 %3956
    %v3958 = vsel %vm1941, %v3936, -inf
    %3959 = vmax.xlane.f32.xlu0 %v3958
    %v3960 = vpop.xlane.xlu0 %3959
    %v3961 = vsel %vm1941, %v3939, -inf
    %3962 = vmax.xlane.f32.xlu0 %v3961
    %v3963 = vpop.xlane.xlu0 %3962
    %v3964 = vsel %vm1941, %v3941, -inf
    %3965 = vmax.xlane.f32.xlu0 %v3964
    %v3966 = vpop.xlane.xlu0 %3965
    %v3967 = vsub.f32 %v3924, %v3945
    %v3968 = vsub.f32 %v3926, %v3948
    %v3969 = vsub.f32 %v3929, %v3951
    %v3970 = vsub.f32 %v3931, %v3954
    %v3971 = vsub.f32 %v3934, %v3957
    %v3972 = vsub.f32 %v3936, %v3960
    %v3973 = vsub.f32 %v3939, %v3963
    %v3974 = vsub.f32 %v3941, %v3966
    %v3975 = vmul.f32 %v3967, 1.442695
    %v3976 = vpow.pop %v3975
    %v3977 = vmul.f32 %v3968, 1.442695
    %v3978 = vpow.pop %v3977
    %v3979 = vmul.f32 %v3969, 1.442695
    %v3980 = vpow.pop %v3979
    %v3981 = vmul.f32 %v3970, 1.442695
    %v3982 = vpow.pop %v3981
    %v3983 = vmul.f32 %v3971, 1.442695
    %v3984 = vpow.pop %v3983
    %v3985 = vmul.f32 %v3972, 1.442695
    %v3986 = vpow.pop %v3985
    %v3987 = vmul.f32 %v3973, 1.442695
    %v3988 = vpow.pop %v3987
    %v3989 = vmul.f32 %v3974, 1.442695
    %v3990 = vpow.pop %v3989
    %v3991 = vsel %vm1941, %v3976, 0.0
    %3992 = vadd.xlane.f32.xlu0 %v3991
    %v3993 = vpop.xlane.xlu0 %3992
    %v3994 = vsel %vm1941, %v3978, 0.0
    %3995 = vadd.xlane.f32.xlu0 %v3994
    %v3996 = vpop.xlane.xlu0 %3995
    %v3997 = vsel %vm1941, %v3980, 0.0
    %3998 = vadd.xlane.f32.xlu0 %v3997
    %v3999 = vpop.xlane.xlu0 %3998
    %v4000 = vsel %vm1941, %v3982, 0.0
    %4001 = vadd.xlane.f32.xlu0 %v4000
    %v4002 = vpop.xlane.xlu0 %4001
    %v4003 = vsel %vm1941, %v3984, 0.0
    %4004 = vadd.xlane.f32.xlu0 %v4003
    %v4005 = vpop.xlane.xlu0 %4004
    %v4006 = vsel %vm1941, %v3986, 0.0
    %4007 = vadd.xlane.f32.xlu0 %v4006
    %v4008 = vpop.xlane.xlu0 %4007
    %v4009 = vsel %vm1941, %v3988, 0.0
    %4010 = vadd.xlane.f32.xlu0 %v4009
    %v4011 = vpop.xlane.xlu0 %4010
    %v4012 = vsel %vm1941, %v3990, 0.0
    %4013 = vadd.xlane.f32.xlu0 %v4012
    %v4014 = vpop.xlane.xlu0 %4013
    %v4015 = vrcp.pop %v3993
    %v4016 = vrcp.pop %v3996
    %v4017 = vrcp.pop %v3999
    %v4018 = vrcp.pop %v4002
    %v4019 = vrcp.pop %v4005
    %v4020 = vrcp.pop %v4008
    %v4021 = vrcp.pop %v4011
    %v4022 = vrcp.pop %v4014
    %v4023 = vmul.f32 %v3976, %v4015
    %v4024 = vmul.f32 %v3978, %v4016
    %v4025 = vmul.f32 %v3980, %v4017
    %v4026 = vmul.f32 %v3982, %v4018
    %v4027 = vmul.f32 %v3984, %v4019
    %v4028 = vmul.f32 %v3986, %v4020
    %v4029 = vmul.f32 %v3988, %v4021
    %v4030 = vmul.f32 %v3990, %v4022
    %v4031 = vpack.c.bf16 %v4024, %v4023
    %v4032 = vpack.c.bf16 %v4026, %v4025
    %v4033 = vpack.c.bf16 %v4028, %v4027
    %v4034 = vpack.c.bf16 %v4030, %v4029
    %v4043 = vunpack.c.l.b16 %v1812
    %v4044 = vunpack.c.l.b16 %v1813
    %v4045 = vunpack.c.l.b16 %v1814
    %v4046 = vunpack.c.l.b16 %v1815
    %v4047 = vunpack.c.l.b16 %v1816
    %v4048 = vunpack.c.l.b16 %v1817
    %v4049 = vunpack.c.l.b16 %v1818
    %v4050 = vunpack.c.l.b16 %v1819
    %v4051 = vpack.c.b16 %v4044, %v4043
    %v4052 = vpack.c.b16 %v4046, %v4045
    %v4053 = vpack.c.b16 %v4048, %v4047
    %v4054 = vpack.c.b16 %v4050, %v4049
    %v4060 = vsel %vm1941, %v4031, 0
    %v4063 = vsel %vm1941, %v4032, 0
    %v4066 = vsel %vm1941, %v4033, 0
    %v4069 = vsel %vm1941, %v4034, 0
    %4071 = vmatpush.bf16.msra.mxu0 0
    %4072 = vmatpush.bf16.msra.mxu0 0
    %4073 = vmatpush.bf16.msra.mxu0 0
    %4074 = vmatpush.bf16.msra.mxu0 0
    %4075 = vmatpush.bf16.msra.mxu0 %v4054
    %4076 = vmatpush.bf16.msra.mxu0 %v4053
    %4077 = vmatpush.bf16.msra.mxu0 %v4052
    %4078 = vmatpush.bf16.msra.mxu0 %v4051
    %4079 = vmatmul.bf16.gmra.mxu0 %v4060
    %v4080 = vpop.f32.mrf.mxu0
    %v4081 = vadd.f32 0.0, %v4080
    %v4082 = vpop.f32.mrf.mxu0
    %v4083 = vadd.f32 0.0, %v4082
    %4084 = vmatmul.bf16.gmra.mxu0 %v4063
    %v4085 = vpop.f32.mrf.mxu0
    %v4086 = vadd.f32 0.0, %v4085
    %v4087 = vpop.f32.mrf.mxu0
    %v4088 = vadd.f32 0.0, %v4087
    %4089 = vmatmul.bf16.gmra.mxu0 %v4066
    %v4090 = vpop.f32.mrf.mxu0
    %v4091 = vadd.f32 0.0, %v4090
    %v4092 = vpop.f32.mrf.mxu0
    %v4093 = vadd.f32 0.0, %v4092
    %4094 = vmatmul.bf16.gmra.mxu0 %v4069
    %v4095 = vpop.f32.mrf.mxu0
    %v4096 = vadd.f32 0.0, %v4095
    %v4097 = vpop.f32.mrf.mxu0
    %v4098 = vadd.f32 0.0, %v4097
    %4099 = vdwg.mxu0
    %4100 = vrot.lane.b32.xlu0 %v3866, 96
    %v4101 = vpop.permute.xlu0 %4100
    %4102 = vrot.lane.b32.xlu0 %v3867, 96
    %v4103 = vpop.permute.xlu0 %4102
    %4104 = vrot.lane.b32.xlu0 %v3868, 96
    %v4105 = vpop.permute.xlu0 %4104
    %4106 = vrot.lane.b32.xlu0 %v3869, 96
    %v4107 = vpop.permute.xlu0 %4106
    %4108 = vrot.lane.b32.xlu0 %v3886, 96
    %v4109 = vpop.permute.xlu0 %4108
    %4110 = vrot.lane.b32.xlu0 %v3887, 96
    %v4111 = vpop.permute.xlu0 %4110
    %4112 = vrot.lane.b32.xlu0 %v3888, 96
    %v4113 = vpop.permute.xlu0 %4112
    %4114 = vrot.lane.b32.xlu0 %v3889, 96
    %v4115 = vpop.permute.xlu0 %4114
    %v4117 = vsel %vm1887, %v4101, 0
    %v4120 = vsel %vm1887, %v4103, 0
    %v4123 = vsel %vm1887, %v4105, 0
    %v4126 = vsel %vm1887, %v4107, 0
    %v4129 = vsel %vm1887, %v4109, 0
    %v4132 = vsel %vm1887, %v4111, 0
    %v4135 = vsel %vm1887, %v4113, 0
    %v4138 = vsel %vm1887, %v4115, 0
    %4140 = vmatpush.bf16.xpose.msra.mxu0 0
    %4141 = vmatpush.bf16.xpose.msra.mxu0 0
    %4142 = vmatpush.bf16.xpose.msra.mxu0 0
    %4143 = vmatpush.bf16.xpose.msra.mxu0 0
    %4144 = vmatpush.bf16.xpose.msra.mxu0 %v4138
    %4145 = vmatpush.bf16.xpose.msra.mxu0 %v4135
    %4146 = vmatpush.bf16.xpose.msra.mxu0 %v4132
    %4147 = vmatpush.bf16.xpose.msra.mxu0 %v4129
    %4148 = vmatmul.bf16.gmra.mxu0 %v4117
    %v4149 = vpop.f32.mrf.mxu0
    %v4150 = vadd.f32 %v1839, %v4149
    %v4151 = vpop.f32.mrf.mxu0
    %v4152 = vadd.f32 %v1840, %v4151
    %4153 = vmatmul.bf16.gmra.mxu0 %v4120
    %v4154 = vpop.f32.mrf.mxu0
    %v4155 = vadd.f32 %v1841, %v4154
    %v4156 = vpop.f32.mrf.mxu0
    %v4157 = vadd.f32 %v1842, %v4156
    %4158 = vmatmul.bf16.gmra.mxu0 %v4123
    %v4159 = vpop.f32.mrf.mxu0
    %v4160 = vadd.f32 %v1843, %v4159
    %v4161 = vpop.f32.mrf.mxu0
    %v4162 = vadd.f32 %v1844, %v4161
    %4163 = vmatmul.bf16.gmra.mxu0 %v4126
    %v4164 = vpop.f32.mrf.mxu0
    %v4165 = vadd.f32 %v1845, %v4164
    %v4166 = vpop.f32.mrf.mxu0
    %v4167 = vadd.f32 %v1846, %v4166
    %4168 = vdwg.mxu0
    %v4169 = vsel %vm1941, %v4150, -inf
    %4170 = vmax.xlane.f32.xlu0 %v4169
    %v4171 = vpop.xlane.xlu0 %4170
    %v4172 = vsel %vm1941, %v4152, -inf
    %4173 = vmax.xlane.f32.xlu0 %v4172
    %v4174 = vpop.xlane.xlu0 %4173
    %v4175 = vsel %vm1941, %v4155, -inf
    %4176 = vmax.xlane.f32.xlu0 %v4175
    %v4177 = vpop.xlane.xlu0 %4176
    %v4178 = vsel %vm1941, %v4157, -inf
    %4179 = vmax.xlane.f32.xlu0 %v4178
    %v4180 = vpop.xlane.xlu0 %4179
    %v4181 = vsel %vm1941, %v4160, -inf
    %4182 = vmax.xlane.f32.xlu0 %v4181
    %v4183 = vpop.xlane.xlu0 %4182
    %v4184 = vsel %vm1941, %v4162, -inf
    %4185 = vmax.xlane.f32.xlu0 %v4184
    %v4186 = vpop.xlane.xlu0 %4185
    %v4187 = vsel %vm1941, %v4165, -inf
    %4188 = vmax.xlane.f32.xlu0 %v4187
    %v4189 = vpop.xlane.xlu0 %4188
    %v4190 = vsel %vm1941, %v4167, -inf
    %4191 = vmax.xlane.f32.xlu0 %v4190
    %v4192 = vpop.xlane.xlu0 %4191
    %v4193 = vsub.f32 %v4150, %v4171
    %v4194 = vsub.f32 %v4152, %v4174
    %v4195 = vsub.f32 %v4155, %v4177
    %v4196 = vsub.f32 %v4157, %v4180
    %v4197 = vsub.f32 %v4160, %v4183
    %v4198 = vsub.f32 %v4162, %v4186
    %v4199 = vsub.f32 %v4165, %v4189
    %v4200 = vsub.f32 %v4167, %v4192
    %v4201 = vmul.f32 %v4193, 1.442695
    %v4202 = vpow.pop %v4201
    %v4203 = vmul.f32 %v4194, 1.442695
    %v4204 = vpow.pop %v4203
    %v4205 = vmul.f32 %v4195, 1.442695
    %v4206 = vpow.pop %v4205
    %v4207 = vmul.f32 %v4196, 1.442695
    %v4208 = vpow.pop %v4207
    %v4209 = vmul.f32 %v4197, 1.442695
    %v4210 = vpow.pop %v4209
    %v4211 = vmul.f32 %v4198, 1.442695
    %v4212 = vpow.pop %v4211
    %v4213 = vmul.f32 %v4199, 1.442695
    %v4214 = vpow.pop %v4213
    %v4215 = vmul.f32 %v4200, 1.442695
    %v4216 = vpow.pop %v4215
    %v4217 = vsel %vm1941, %v4202, 0.0
    %4218 = vadd.xlane.f32.xlu0 %v4217
    %v4219 = vpop.xlane.xlu0 %4218
    %v4220 = vsel %vm1941, %v4204, 0.0
    %4221 = vadd.xlane.f32.xlu0 %v4220
    %v4222 = vpop.xlane.xlu0 %4221
    %v4223 = vsel %vm1941, %v4206, 0.0
    %4224 = vadd.xlane.f32.xlu0 %v4223
    %v4225 = vpop.xlane.xlu0 %4224
    %v4226 = vsel %vm1941, %v4208, 0.0
    %4227 = vadd.xlane.f32.xlu0 %v4226
    %v4228 = vpop.xlane.xlu0 %4227
    %v4229 = vsel %vm1941, %v4210, 0.0
    %4230 = vadd.xlane.f32.xlu0 %v4229
    %v4231 = vpop.xlane.xlu0 %4230
    %v4232 = vsel %vm1941, %v4212, 0.0
    %4233 = vadd.xlane.f32.xlu0 %v4232
    %v4234 = vpop.xlane.xlu0 %4233
    %v4235 = vsel %vm1941, %v4214, 0.0
    %4236 = vadd.xlane.f32.xlu0 %v4235
    %v4237 = vpop.xlane.xlu0 %4236
    %v4238 = vsel %vm1941, %v4216, 0.0
    %4239 = vadd.xlane.f32.xlu0 %v4238
    %v4240 = vpop.xlane.xlu0 %4239
    %v4241 = vrcp.pop %v4219
    %v4242 = vrcp.pop %v4222
    %v4243 = vrcp.pop %v4225
    %v4244 = vrcp.pop %v4228
    %v4245 = vrcp.pop %v4231
    %v4246 = vrcp.pop %v4234
    %v4247 = vrcp.pop %v4237
    %v4248 = vrcp.pop %v4240
    %v4249 = vmul.f32 %v4202, %v4241
    %v4250 = vmul.f32 %v4204, %v4242
    %v4251 = vmul.f32 %v4206, %v4243
    %v4252 = vmul.f32 %v4208, %v4244
    %v4253 = vmul.f32 %v4210, %v4245
    %v4254 = vmul.f32 %v4212, %v4246
    %v4255 = vmul.f32 %v4214, %v4247
    %v4256 = vmul.f32 %v4216, %v4248
    %v4257 = vpack.c.bf16 %v4250, %v4249
    %v4258 = vpack.c.bf16 %v4252, %v4251
    %v4259 = vpack.c.bf16 %v4254, %v4253
    %v4260 = vpack.c.bf16 %v4256, %v4255
    %4261 = vrot.lane.b32.xlu0 %v4051, 96
    %v4262 = vpop.permute.xlu0 %4261
    %4263 = vrot.lane.b32.xlu0 %v4052, 96
    %v4264 = vpop.permute.xlu0 %4263
    %4265 = vrot.lane.b32.xlu0 %v4053, 96
    %v4266 = vpop.permute.xlu0 %4265
    %4267 = vrot.lane.b32.xlu0 %v4054, 96
    %v4268 = vpop.permute.xlu0 %4267
    %v4274 = vsel %vm1941, %v4257, 0
    %v4277 = vsel %vm1941, %v4258, 0
    %v4280 = vsel %vm1941, %v4259, 0
    %v4283 = vsel %vm1941, %v4260, 0
    %4285 = vmatpush.bf16.msra.mxu0 0
    %4286 = vmatpush.bf16.msra.mxu0 0
    %4287 = vmatpush.bf16.msra.mxu0 0
    %4288 = vmatpush.bf16.msra.mxu0 0
    %4289 = vmatpush.bf16.msra.mxu0 %v4268
    %4290 = vmatpush.bf16.msra.mxu0 %v4266
    %4291 = vmatpush.bf16.msra.mxu0 %v4264
    %4292 = vmatpush.bf16.msra.mxu0 %v4262
    %4293 = vmatmul.bf16.gmra.mxu0 %v4274
    %v4294 = vpop.f32.mrf.mxu0
    %v4295 = vadd.f32 0.0, %v4294
    %v4296 = vpop.f32.mrf.mxu0
    %v4297 = vadd.f32 0.0, %v4296
    %4298 = vmatmul.bf16.gmra.mxu0 %v4277
    %v4299 = vpop.f32.mrf.mxu0
    %v4300 = vadd.f32 0.0, %v4299
    %v4301 = vpop.f32.mrf.mxu0
    %v4302 = vadd.f32 0.0, %v4301
    %4303 = vmatmul.bf16.gmra.mxu0 %v4280
    %v4304 = vpop.f32.mrf.mxu0
    %v4305 = vadd.f32 0.0, %v4304
    %v4306 = vpop.f32.mrf.mxu0
    %v4307 = vadd.f32 0.0, %v4306
    %4308 = vmatmul.bf16.gmra.mxu0 %v4283
    %v4309 = vpop.f32.mrf.mxu0
    %v4310 = vadd.f32 0.0, %v4309
    %v4311 = vpop.f32.mrf.mxu0
    %v4312 = vadd.f32 0.0, %v4311
    %4313 = vdwg.mxu0
    %4314 = vrot.lane.b32.xlu0 %v3866, 64
    %v4315 = vpop.permute.xlu0 %4314
    %4316 = vrot.lane.b32.xlu0 %v3867, 64
    %v4317 = vpop.permute.xlu0 %4316
    %4318 = vrot.lane.b32.xlu0 %v3868, 64
    %v4319 = vpop.permute.xlu0 %4318
    %4320 = vrot.lane.b32.xlu0 %v3869, 64
    %v4321 = vpop.permute.xlu0 %4320
    %4322 = vrot.lane.b32.xlu0 %v3886, 64
    %v4323 = vpop.permute.xlu0 %4322
    %4324 = vrot.lane.b32.xlu0 %v3887, 64
    %v4325 = vpop.permute.xlu0 %4324
    %4326 = vrot.lane.b32.xlu0 %v3888, 64
    %v4327 = vpop.permute.xlu0 %4326
    %4328 = vrot.lane.b32.xlu0 %v3889, 64
    %v4329 = vpop.permute.xlu0 %4328
    %v4331 = vsel %vm1887, %v4315, 0
    %v4334 = vsel %vm1887, %v4317, 0
    %v4337 = vsel %vm1887, %v4319, 0
    %v4340 = vsel %vm1887, %v4321, 0
    %v4343 = vsel %vm1887, %v4323, 0
    %v4346 = vsel %vm1887, %v4325, 0
    %v4349 = vsel %vm1887, %v4327, 0
    %v4352 = vsel %vm1887, %v4329, 0
    %4354 = vmatpush.bf16.xpose.msra.mxu0 0
    %4355 = vmatpush.bf16.xpose.msra.mxu0 0
    %4356 = vmatpush.bf16.xpose.msra.mxu0 0
    %4357 = vmatpush.bf16.xpose.msra.mxu0 0
    %4358 = vmatpush.bf16.xpose.msra.mxu0 %v4352
    %4359 = vmatpush.bf16.xpose.msra.mxu0 %v4349
    %4360 = vmatpush.bf16.xpose.msra.mxu0 %v4346
    %4361 = vmatpush.bf16.xpose.msra.mxu0 %v4343
    %4362 = vmatmul.bf16.gmra.mxu0 %v4331
    %v4363 = vpop.f32.mrf.mxu0
    %v4364 = vadd.f32 %v1839, %v4363
    %v4365 = vpop.f32.mrf.mxu0
    %v4366 = vadd.f32 %v1840, %v4365
    %4367 = vmatmul.bf16.gmra.mxu0 %v4334
    %v4368 = vpop.f32.mrf.mxu0
    %v4369 = vadd.f32 %v1841, %v4368
    %v4370 = vpop.f32.mrf.mxu0
    %v4371 = vadd.f32 %v1842, %v4370
    %4372 = vmatmul.bf16.gmra.mxu0 %v4337
    %v4373 = vpop.f32.mrf.mxu0
    %v4374 = vadd.f32 %v1843, %v4373
    %v4375 = vpop.f32.mrf.mxu0
    %v4376 = vadd.f32 %v1844, %v4375
    %4377 = vmatmul.bf16.gmra.mxu0 %v4340
    %v4378 = vpop.f32.mrf.mxu0
    %v4379 = vadd.f32 %v1845, %v4378
    %v4380 = vpop.f32.mrf.mxu0
    %v4381 = vadd.f32 %v1846, %v4380
    %4382 = vdwg.mxu0
    %v4383 = vsel %vm1941, %v4364, -inf
    %4384 = vmax.xlane.f32.xlu0 %v4383
    %v4385 = vpop.xlane.xlu0 %4384
    %v4386 = vsel %vm1941, %v4366, -inf
    %4387 = vmax.xlane.f32.xlu0 %v4386
    %v4388 = vpop.xlane.xlu0 %4387
    %v4389 = vsel %vm1941, %v4369, -inf
    %4390 = vmax.xlane.f32.xlu0 %v4389
    %v4391 = vpop.xlane.xlu0 %4390
    %v4392 = vsel %vm1941, %v4371, -inf
    %4393 = vmax.xlane.f32.xlu0 %v4392
    %v4394 = vpop.xlane.xlu0 %4393
    %v4395 = vsel %vm1941, %v4374, -inf
    %4396 = vmax.xlane.f32.xlu0 %v4395
    %v4397 = vpop.xlane.xlu0 %4396
    %v4398 = vsel %vm1941, %v4376, -inf
    %4399 = vmax.xlane.f32.xlu0 %v4398
    %v4400 = vpop.xlane.xlu0 %4399
    %v4401 = vsel %vm1941, %v4379, -inf
    %4402 = vmax.xlane.f32.xlu0 %v4401
    %v4403 = vpop.xlane.xlu0 %4402
    %v4404 = vsel %vm1941, %v4381, -inf
    %4405 = vmax.xlane.f32.xlu0 %v4404
    %v4406 = vpop.xlane.xlu0 %4405
    %v4407 = vsub.f32 %v4364, %v4385
    %v4408 = vsub.f32 %v4366, %v4388
    %v4409 = vsub.f32 %v4369, %v4391
    %v4410 = vsub.f32 %v4371, %v4394
    %v4411 = vsub.f32 %v4374, %v4397
    %v4412 = vsub.f32 %v4376, %v4400
    %v4413 = vsub.f32 %v4379, %v4403
    %v4414 = vsub.f32 %v4381, %v4406
    %v4415 = vmul.f32 %v4407, 1.442695
    %v4416 = vpow.pop %v4415
    %v4417 = vmul.f32 %v4408, 1.442695
    %v4418 = vpow.pop %v4417
    %v4419 = vmul.f32 %v4409, 1.442695
    %v4420 = vpow.pop %v4419
    %v4421 = vmul.f32 %v4410, 1.442695
    %v4422 = vpow.pop %v4421
    %v4423 = vmul.f32 %v4411, 1.442695
    %v4424 = vpow.pop %v4423
    %v4425 = vmul.f32 %v4412, 1.442695
    %v4426 = vpow.pop %v4425
    %v4427 = vmul.f32 %v4413, 1.442695
    %v4428 = vpow.pop %v4427
    %v4429 = vmul.f32 %v4414, 1.442695
    %v4430 = vpow.pop %v4429
    %v4431 = vsel %vm1941, %v4416, 0.0
    %4432 = vadd.xlane.f32.xlu0 %v4431
    %v4433 = vpop.xlane.xlu0 %4432
    %v4434 = vsel %vm1941, %v4418, 0.0
    %4435 = vadd.xlane.f32.xlu0 %v4434
    %v4436 = vpop.xlane.xlu0 %4435
    %v4437 = vsel %vm1941, %v4420, 0.0
    %4438 = vadd.xlane.f32.xlu0 %v4437
    %v4439 = vpop.xlane.xlu0 %4438
    %v4440 = vsel %vm1941, %v4422, 0.0
    %4441 = vadd.xlane.f32.xlu0 %v4440
    %v4442 = vpop.xlane.xlu0 %4441
    %v4443 = vsel %vm1941, %v4424, 0.0
    %4444 = vadd.xlane.f32.xlu0 %v4443
    %v4445 = vpop.xlane.xlu0 %4444
    %v4446 = vsel %vm1941, %v4426, 0.0
    %4447 = vadd.xlane.f32.xlu0 %v4446
    %v4448 = vpop.xlane.xlu0 %4447
    %v4449 = vsel %vm1941, %v4428, 0.0
    %4450 = vadd.xlane.f32.xlu0 %v4449
    %v4451 = vpop.xlane.xlu0 %4450
    %v4452 = vsel %vm1941, %v4430, 0.0
    %4453 = vadd.xlane.f32.xlu0 %v4452
    %v4454 = vpop.xlane.xlu0 %4453
    %v4455 = vrcp.pop %v4433
    %v4456 = vrcp.pop %v4436
    %v4457 = vrcp.pop %v4439
    %v4458 = vrcp.pop %v4442
    %v4459 = vrcp.pop %v4445
    %v4460 = vrcp.pop %v4448
    %v4461 = vrcp.pop %v4451
    %v4462 = vrcp.pop %v4454
    %v4463 = vmul.f32 %v4416, %v4455
    %v4464 = vmul.f32 %v4418, %v4456
    %v4465 = vmul.f32 %v4420, %v4457
    %v4466 = vmul.f32 %v4422, %v4458
    %v4467 = vmul.f32 %v4424, %v4459
    %v4468 = vmul.f32 %v4426, %v4460
    %v4469 = vmul.f32 %v4428, %v4461
    %v4470 = vmul.f32 %v4430, %v4462
    %v4471 = vpack.c.bf16 %v4464, %v4463
    %v4472 = vpack.c.bf16 %v4466, %v4465
    %v4473 = vpack.c.bf16 %v4468, %v4467
    %v4474 = vpack.c.bf16 %v4470, %v4469
    %4475 = vrot.lane.b32.xlu0 %v4051, 64
    %v4476 = vpop.permute.xlu0 %4475
    %4477 = vrot.lane.b32.xlu0 %v4052, 64
    %v4478 = vpop.permute.xlu0 %4477
    %4479 = vrot.lane.b32.xlu0 %v4053, 64
    %v4480 = vpop.permute.xlu0 %4479
    %4481 = vrot.lane.b32.xlu0 %v4054, 64
    %v4482 = vpop.permute.xlu0 %4481
    %v4488 = vsel %vm1941, %v4471, 0
    %v4491 = vsel %vm1941, %v4472, 0
    %v4494 = vsel %vm1941, %v4473, 0
    %v4497 = vsel %vm1941, %v4474, 0
    %4499 = vmatpush.bf16.msra.mxu0 0
    %4500 = vmatpush.bf16.msra.mxu0 0
    %4501 = vmatpush.bf16.msra.mxu0 0
    %4502 = vmatpush.bf16.msra.mxu0 0
    %4503 = vmatpush.bf16.msra.mxu0 %v4482
    %4504 = vmatpush.bf16.msra.mxu0 %v4480
    %4505 = vmatpush.bf16.msra.mxu0 %v4478
    %4506 = vmatpush.bf16.msra.mxu0 %v4476
    %4507 = vmatmul.bf16.gmra.mxu0 %v4488
    %v4508 = vpop.f32.mrf.mxu0
    %v4509 = vadd.f32 0.0, %v4508
    %v4510 = vpop.f32.mrf.mxu0
    %v4511 = vadd.f32 0.0, %v4510
    %4512 = vmatmul.bf16.gmra.mxu0 %v4491
    %v4513 = vpop.f32.mrf.mxu0
    %v4514 = vadd.f32 0.0, %v4513
    %v4515 = vpop.f32.mrf.mxu0
    %v4516 = vadd.f32 0.0, %v4515
    %4517 = vmatmul.bf16.gmra.mxu0 %v4494
    %v4518 = vpop.f32.mrf.mxu0
    %v4519 = vadd.f32 0.0, %v4518
    %v4520 = vpop.f32.mrf.mxu0
    %v4521 = vadd.f32 0.0, %v4520
    %4522 = vmatmul.bf16.gmra.mxu0 %v4497
    %v4523 = vpop.f32.mrf.mxu0
    %v4524 = vadd.f32 0.0, %v4523
    %v4525 = vpop.f32.mrf.mxu0
    %v4526 = vadd.f32 0.0, %v4525
    %4527 = vdwg.mxu0
    %4528 = vrot.lane.b32.xlu0 %v3866, 32
    %v4529 = vpop.permute.xlu0 %4528
    %4530 = vrot.lane.b32.xlu0 %v3867, 32
    %v4531 = vpop.permute.xlu0 %4530
    %4532 = vrot.lane.b32.xlu0 %v3868, 32
    %v4533 = vpop.permute.xlu0 %4532
    %4534 = vrot.lane.b32.xlu0 %v3869, 32
    %v4535 = vpop.permute.xlu0 %4534
    %4536 = vrot.lane.b32.xlu0 %v3886, 32
    %v4537 = vpop.permute.xlu0 %4536
    %4538 = vrot.lane.b32.xlu0 %v3887, 32
    %v4539 = vpop.permute.xlu0 %4538
    %4540 = vrot.lane.b32.xlu0 %v3888, 32
    %v4541 = vpop.permute.xlu0 %4540
    %4542 = vrot.lane.b32.xlu0 %v3889, 32
    %v4543 = vpop.permute.xlu0 %4542
    %v4545 = vsel %vm1887, %v4529, 0
    %v4548 = vsel %vm1887, %v4531, 0
    %v4551 = vsel %vm1887, %v4533, 0
    %v4554 = vsel %vm1887, %v4535, 0
    %v4557 = vsel %vm1887, %v4537, 0
    %v4560 = vsel %vm1887, %v4539, 0
    %v4563 = vsel %vm1887, %v4541, 0
    %v4566 = vsel %vm1887, %v4543, 0
    %4568 = vmatpush.bf16.xpose.msra.mxu0 0
    %4569 = vmatpush.bf16.xpose.msra.mxu0 0
    %4570 = vmatpush.bf16.xpose.msra.mxu0 0
    %4571 = vmatpush.bf16.xpose.msra.mxu0 0
    %4572 = vmatpush.bf16.xpose.msra.mxu0 %v4566
    %4573 = vmatpush.bf16.xpose.msra.mxu0 %v4563
    %4574 = vmatpush.bf16.xpose.msra.mxu0 %v4560
    %4575 = vmatpush.bf16.xpose.msra.mxu0 %v4557
    %4576 = vmatmul.bf16.gmra.mxu0 %v4545
    %v4577 = vpop.f32.mrf.mxu0
    %v4578 = vadd.f32 %v1839, %v4577
    %v4579 = vpop.f32.mrf.mxu0
    %v4580 = vadd.f32 %v1840, %v4579
    %4581 = vmatmul.bf16.gmra.mxu0 %v4548
    %v4582 = vpop.f32.mrf.mxu0
    %v4583 = vadd.f32 %v1841, %v4582
    %v4584 = vpop.f32.mrf.mxu0
    %v4585 = vadd.f32 %v1842, %v4584
    %4586 = vmatmul.bf16.gmra.mxu0 %v4551
    %v4587 = vpop.f32.mrf.mxu0
    %v4588 = vadd.f32 %v1843, %v4587
    %v4589 = vpop.f32.mrf.mxu0
    %v4590 = vadd.f32 %v1844, %v4589
    %4591 = vmatmul.bf16.gmra.mxu0 %v4554
    %v4592 = vpop.f32.mrf.mxu0
    %v4593 = vadd.f32 %v1845, %v4592
    %v4594 = vpop.f32.mrf.mxu0
    %v4595 = vadd.f32 %v1846, %v4594
    %4596 = vdwg.mxu0
    %v4597 = vsel %vm1941, %v4578, -inf
    %4598 = vmax.xlane.f32.xlu0 %v4597
    %v4599 = vpop.xlane.xlu0 %4598
    %v4600 = vsel %vm1941, %v4580, -inf
    %4601 = vmax.xlane.f32.xlu0 %v4600
    %v4602 = vpop.xlane.xlu0 %4601
    %v4603 = vsel %vm1941, %v4583, -inf
    %4604 = vmax.xlane.f32.xlu0 %v4603
    %v4605 = vpop.xlane.xlu0 %4604
    %v4606 = vsel %vm1941, %v4585, -inf
    %4607 = vmax.xlane.f32.xlu0 %v4606
    %v4608 = vpop.xlane.xlu0 %4607
    %v4609 = vsel %vm1941, %v4588, -inf
    %4610 = vmax.xlane.f32.xlu0 %v4609
    %v4611 = vpop.xlane.xlu0 %4610
    %v4612 = vsel %vm1941, %v4590, -inf
    %4613 = vmax.xlane.f32.xlu0 %v4612
    %v4614 = vpop.xlane.xlu0 %4613
    %v4615 = vsel %vm1941, %v4593, -inf
    %4616 = vmax.xlane.f32.xlu0 %v4615
    %v4617 = vpop.xlane.xlu0 %4616
    %v4618 = vsel %vm1941, %v4595, -inf
    %4619 = vmax.xlane.f32.xlu0 %v4618
    %v4620 = vpop.xlane.xlu0 %4619
    %v4621 = vsub.f32 %v4578, %v4599
    %v4622 = vsub.f32 %v4580, %v4602
    %v4623 = vsub.f32 %v4583, %v4605
    %v4624 = vsub.f32 %v4585, %v4608
    %v4625 = vsub.f32 %v4588, %v4611
    %v4626 = vsub.f32 %v4590, %v4614
    %v4627 = vsub.f32 %v4593, %v4617
    %v4628 = vsub.f32 %v4595, %v4620
    %v4629 = vmul.f32 %v4621, 1.442695
    %v4630 = vpow.pop %v4629
    %v4631 = vmul.f32 %v4622, 1.442695
    %v4632 = vpow.pop %v4631
    %v4633 = vmul.f32 %v4623, 1.442695
    %v4634 = vpow.pop %v4633
    %v4635 = vmul.f32 %v4624, 1.442695
    %v4636 = vpow.pop %v4635
    %v4637 = vmul.f32 %v4625, 1.442695
    %v4638 = vpow.pop %v4637
    %v4639 = vmul.f32 %v4626, 1.442695
    %v4640 = vpow.pop %v4639
    %v4641 = vmul.f32 %v4627, 1.442695
    %v4642 = vpow.pop %v4641
    %v4643 = vmul.f32 %v4628, 1.442695
    %v4644 = vpow.pop %v4643
    %v4645 = vsel %vm1941, %v4630, 0.0
    %4646 = vadd.xlane.f32.xlu0 %v4645
    %v4647 = vpop.xlane.xlu0 %4646
    %v4648 = vsel %vm1941, %v4632, 0.0
    %4649 = vadd.xlane.f32.xlu0 %v4648
    %v4650 = vpop.xlane.xlu0 %4649
    %v4651 = vsel %vm1941, %v4634, 0.0
    %4652 = vadd.xlane.f32.xlu0 %v4651
    %v4653 = vpop.xlane.xlu0 %4652
    %v4654 = vsel %vm1941, %v4636, 0.0
    %4655 = vadd.xlane.f32.xlu0 %v4654
    %v4656 = vpop.xlane.xlu0 %4655
    %v4657 = vsel %vm1941, %v4638, 0.0
    %4658 = vadd.xlane.f32.xlu0 %v4657
    %v4659 = vpop.xlane.xlu0 %4658
    %v4660 = vsel %vm1941, %v4640, 0.0
    %4661 = vadd.xlane.f32.xlu0 %v4660
    %v4662 = vpop.xlane.xlu0 %4661
    %v4663 = vsel %vm1941, %v4642, 0.0
    %4664 = vadd.xlane.f32.xlu0 %v4663
    %v4665 = vpop.xlane.xlu0 %4664
    %v4666 = vsel %vm1941, %v4644, 0.0
    %4667 = vadd.xlane.f32.xlu0 %v4666
    %v4668 = vpop.xlane.xlu0 %4667
    %v4669 = vrcp.pop %v4647
    %v4670 = vrcp.pop %v4650
    %v4671 = vrcp.pop %v4653
    %v4672 = vrcp.pop %v4656
    %v4673 = vrcp.pop %v4659
    %v4674 = vrcp.pop %v4662
    %v4675 = vrcp.pop %v4665
    %v4676 = vrcp.pop %v4668
    %v4677 = vmul.f32 %v4630, %v4669
    %v4678 = vmul.f32 %v4632, %v4670
    %v4679 = vmul.f32 %v4634, %v4671
    %v4680 = vmul.f32 %v4636, %v4672
    %v4681 = vmul.f32 %v4638, %v4673
    %v4682 = vmul.f32 %v4640, %v4674
    %v4683 = vmul.f32 %v4642, %v4675
    %v4684 = vmul.f32 %v4644, %v4676
    %v4685 = vpack.c.bf16 %v4678, %v4677
    %v4686 = vpack.c.bf16 %v4680, %v4679
    %v4687 = vpack.c.bf16 %v4682, %v4681
    %v4688 = vpack.c.bf16 %v4684, %v4683
    %4689 = vrot.lane.b32.xlu0 %v4051, 32
    %v4690 = vpop.permute.xlu0 %4689
    %4691 = vrot.lane.b32.xlu0 %v4052, 32
    %v4692 = vpop.permute.xlu0 %4691
    %4693 = vrot.lane.b32.xlu0 %v4053, 32
    %v4694 = vpop.permute.xlu0 %4693
    %4695 = vrot.lane.b32.xlu0 %v4054, 32
    %v4696 = vpop.permute.xlu0 %4695
    %v4702 = vsel %vm1941, %v4685, 0
    %v4705 = vsel %vm1941, %v4686, 0
    %v4708 = vsel %vm1941, %v4687, 0
    %v4711 = vsel %vm1941, %v4688, 0
    %4713 = vmatpush.bf16.msra.mxu0 0
    %4714 = vmatpush.bf16.msra.mxu0 0
    %4715 = vmatpush.bf16.msra.mxu0 0
    %4716 = vmatpush.bf16.msra.mxu0 0
    %4717 = vmatpush.bf16.msra.mxu0 %v4696
    %4718 = vmatpush.bf16.msra.mxu0 %v4694
    %4719 = vmatpush.bf16.msra.mxu0 %v4692
    %4720 = vmatpush.bf16.msra.mxu0 %v4690
    %4721 = vmatmul.bf16.gmra.mxu0 %v4702
    %v4722 = vpop.f32.mrf.mxu0
    %v4723 = vadd.f32 0.0, %v4722
    %v4724 = vpop.f32.mrf.mxu0
    %v4725 = vadd.f32 0.0, %v4724
    %4726 = vmatmul.bf16.gmra.mxu0 %v4705
    %v4727 = vpop.f32.mrf.mxu0
    %v4728 = vadd.f32 0.0, %v4727
    %v4729 = vpop.f32.mrf.mxu0
    %v4730 = vadd.f32 0.0, %v4729
    %4731 = vmatmul.bf16.gmra.mxu0 %v4708
    %v4732 = vpop.f32.mrf.mxu0
    %v4733 = vadd.f32 0.0, %v4732
    %v4734 = vpop.f32.mrf.mxu0
    %v4735 = vadd.f32 0.0, %v4734
    %4736 = vmatmul.bf16.gmra.mxu0 %v4711
    %v4737 = vpop.f32.mrf.mxu0
    %v4738 = vadd.f32 0.0, %v4737
    %v4739 = vpop.f32.mrf.mxu0
    %v4740 = vadd.f32 0.0, %v4739
    %4741 = vdwg.mxu0
    %v4742 = vunpack.c.h.b16 %v1780
    %v4743 = vunpack.c.h.b16 %v1781
    %v4744 = vunpack.c.h.b16 %v1782
    %v4745 = vunpack.c.h.b16 %v1783
    %v4746 = vunpack.c.h.b16 %v1784
    %v4747 = vunpack.c.h.b16 %v1785
    %v4748 = vunpack.c.h.b16 %v1786
    %v4749 = vunpack.c.h.b16 %v1787
    %v4750 = vpack.c.b16 %v4743, %v4742
    %v4751 = vpack.c.b16 %v4745, %v4744
    %v4752 = vpack.c.b16 %v4747, %v4746
    %v4753 = vpack.c.b16 %v4749, %v4748
    %v4754 = vunpack.c.h.b16 %v1796
    %v4755 = vunpack.c.h.b16 %v1797
    %v4756 = vunpack.c.h.b16 %v1798
    %v4757 = vunpack.c.h.b16 %v1799
    %v4758 = vunpack.c.h.b16 %v1800
    %v4759 = vunpack.c.h.b16 %v1801
    %v4760 = vunpack.c.h.b16 %v1802
    %v4761 = vunpack.c.h.b16 %v1803
    %v4762 = vpack.c.b16 %v4755, %v4754
    %v4763 = vpack.c.b16 %v4757, %v4756
    %v4764 = vpack.c.b16 %v4759, %v4758
    %v4765 = vpack.c.b16 %v4761, %v4760
    %v4767 = vsel %vm1887, %v4750, 0
    %v4770 = vsel %vm1887, %v4751, 0
    %v4773 = vsel %vm1887, %v4752, 0
    %v4776 = vsel %vm1887, %v4753, 0
    %v4779 = vsel %vm1887, %v4762, 0
    %v4782 = vsel %vm1887, %v4763, 0
    %v4785 = vsel %vm1887, %v4764, 0
    %v4788 = vsel %vm1887, %v4765, 0
    %4790 = vmatpush.bf16.xpose.msra.mxu0 0
    %4791 = vmatpush.bf16.xpose.msra.mxu0 0
    %4792 = vmatpush.bf16.xpose.msra.mxu0 0
    %4793 = vmatpush.bf16.xpose.msra.mxu0 0
    %4794 = vmatpush.bf16.xpose.msra.mxu0 %v4788
    %4795 = vmatpush.bf16.xpose.msra.mxu0 %v4785
    %4796 = vmatpush.bf16.xpose.msra.mxu0 %v4782
    %4797 = vmatpush.bf16.xpose.msra.mxu0 %v4779
    %4798 = vmatmul.bf16.gmra.mxu0 %v4767
    %v4799 = vpop.f32.mrf.mxu0
    %v4800 = vadd.f32 %v1839, %v4799
    %v4801 = vpop.f32.mrf.mxu0
    %v4802 = vadd.f32 %v1840, %v4801
    %4803 = vmatmul.bf16.gmra.mxu0 %v4770
    %v4804 = vpop.f32.mrf.mxu0
    %v4805 = vadd.f32 %v1841, %v4804
    %v4806 = vpop.f32.mrf.mxu0
    %v4807 = vadd.f32 %v1842, %v4806
    %4808 = vmatmul.bf16.gmra.mxu0 %v4773
    %v4809 = vpop.f32.mrf.mxu0
    %v4810 = vadd.f32 %v1843, %v4809
    %v4811 = vpop.f32.mrf.mxu0
    %v4812 = vadd.f32 %v1844, %v4811
    %4813 = vmatmul.bf16.gmra.mxu0 %v4776
    %v4814 = vpop.f32.mrf.mxu0
    %v4815 = vadd.f32 %v1845, %v4814
    %v4816 = vpop.f32.mrf.mxu0
    %v4817 = vadd.f32 %v1846, %v4816
    %4818 = vdwg.mxu0
    %v4819 = vsel %vm1941, %v4800, -inf
    %4820 = vmax.xlane.f32.xlu0 %v4819
    %v4821 = vpop.xlane.xlu0 %4820
    %v4822 = vsel %vm1941, %v4802, -inf
    %4823 = vmax.xlane.f32.xlu0 %v4822
    %v4824 = vpop.xlane.xlu0 %4823
    %v4825 = vsel %vm1941, %v4805, -inf
    %4826 = vmax.xlane.f32.xlu0 %v4825
    %v4827 = vpop.xlane.xlu0 %4826
    %v4828 = vsel %vm1941, %v4807, -inf
    %4829 = vmax.xlane.f32.xlu0 %v4828
    %v4830 = vpop.xlane.xlu0 %4829
    %v4831 = vsel %vm1941, %v4810, -inf
    %4832 = vmax.xlane.f32.xlu0 %v4831
    %v4833 = vpop.xlane.xlu0 %4832
    %v4834 = vsel %vm1941, %v4812, -inf
    %4835 = vmax.xlane.f32.xlu0 %v4834
    %v4836 = vpop.xlane.xlu0 %4835
    %v4837 = vsel %vm1941, %v4815, -inf
    %4838 = vmax.xlane.f32.xlu0 %v4837
    %v4839 = vpop.xlane.xlu0 %4838
    %v4840 = vsel %vm1941, %v4817, -inf
    %4841 = vmax.xlane.f32.xlu0 %v4840
    %v4842 = vpop.xlane.xlu0 %4841
    %v4843 = vsub.f32 %v4800, %v4821
    %v4844 = vsub.f32 %v4802, %v4824
    %v4845 = vsub.f32 %v4805, %v4827
    %v4846 = vsub.f32 %v4807, %v4830
    %v4847 = vsub.f32 %v4810, %v4833
    %v4848 = vsub.f32 %v4812, %v4836
    %v4849 = vsub.f32 %v4815, %v4839
    %v4850 = vsub.f32 %v4817, %v4842
    %v4851 = vmul.f32 %v4843, 1.442695
    %v4852 = vpow.pop %v4851
    %v4853 = vmul.f32 %v4844, 1.442695
    %v4854 = vpow.pop %v4853
    %v4855 = vmul.f32 %v4845, 1.442695
    %v4856 = vpow.pop %v4855
    %v4857 = vmul.f32 %v4846, 1.442695
    %v4858 = vpow.pop %v4857
    %v4859 = vmul.f32 %v4847, 1.442695
    %v4860 = vpow.pop %v4859
    %v4861 = vmul.f32 %v4848, 1.442695
    %v4862 = vpow.pop %v4861
    %v4863 = vmul.f32 %v4849, 1.442695
    %v4864 = vpow.pop %v4863
    %v4865 = vmul.f32 %v4850, 1.442695
    %v4866 = vpow.pop %v4865
    %v4867 = vsel %vm1941, %v4852, 0.0
    %4868 = vadd.xlane.f32.xlu0 %v4867
    %v4869 = vpop.xlane.xlu0 %4868
    %v4870 = vsel %vm1941, %v4854, 0.0
    %4871 = vadd.xlane.f32.xlu0 %v4870
    %v4872 = vpop.xlane.xlu0 %4871
    %v4873 = vsel %vm1941, %v4856, 0.0
    %4874 = vadd.xlane.f32.xlu0 %v4873
    %v4875 = vpop.xlane.xlu0 %4874
    %v4876 = vsel %vm1941, %v4858, 0.0
    %4877 = vadd.xlane.f32.xlu0 %v4876
    %v4878 = vpop.xlane.xlu0 %4877
    %v4879 = vsel %vm1941, %v4860, 0.0
    %4880 = vadd.xlane.f32.xlu0 %v4879
    %v4881 = vpop.xlane.xlu0 %4880
    %v4882 = vsel %vm1941, %v4862, 0.0
    %4883 = vadd.xlane.f32.xlu0 %v4882
    %v4884 = vpop.xlane.xlu0 %4883
    %v4885 = vsel %vm1941, %v4864, 0.0
    %4886 = vadd.xlane.f32.xlu0 %v4885
    %v4887 = vpop.xlane.xlu0 %4886
    %v4888 = vsel %vm1941, %v4866, 0.0
    %4889 = vadd.xlane.f32.xlu0 %v4888
    %v4890 = vpop.xlane.xlu0 %4889
    %v4891 = vrcp.pop %v4869
    %v4892 = vrcp.pop %v4872
    %v4893 = vrcp.pop %v4875
    %v4894 = vrcp.pop %v4878
    %v4895 = vrcp.pop %v4881
    %v4896 = vrcp.pop %v4884
    %v4897 = vrcp.pop %v4887
    %v4898 = vrcp.pop %v4890
    %v4899 = vmul.f32 %v4852, %v4891
    %v4900 = vmul.f32 %v4854, %v4892
    %v4901 = vmul.f32 %v4856, %v4893
    %v4902 = vmul.f32 %v4858, %v4894
    %v4903 = vmul.f32 %v4860, %v4895
    %v4904 = vmul.f32 %v4862, %v4896
    %v4905 = vmul.f32 %v4864, %v4897
    %v4906 = vmul.f32 %v4866, %v4898
    %v4907 = vpack.c.bf16 %v4900, %v4899
    %v4908 = vpack.c.bf16 %v4902, %v4901
    %v4909 = vpack.c.bf16 %v4904, %v4903
    %v4910 = vpack.c.bf16 %v4906, %v4905
    %v4911 = vunpack.c.h.b16 %v1812
    %v4912 = vunpack.c.h.b16 %v1813
    %v4913 = vunpack.c.h.b16 %v1814
    %v4914 = vunpack.c.h.b16 %v1815
    %v4915 = vunpack.c.h.b16 %v1816
    %v4916 = vunpack.c.h.b16 %v1817
    %v4917 = vunpack.c.h.b16 %v1818
    %v4918 = vunpack.c.h.b16 %v1819
    %v4919 = vpack.c.b16 %v4912, %v4911
    %v4920 = vpack.c.b16 %v4914, %v4913
    %v4921 = vpack.c.b16 %v4916, %v4915
    %v4922 = vpack.c.b16 %v4918, %v4917
    %v4928 = vsel %vm1941, %v4907, 0
    %v4931 = vsel %vm1941, %v4908, 0
    %v4934 = vsel %vm1941, %v4909, 0
    %v4937 = vsel %vm1941, %v4910, 0
    %4939 = vmatpush.bf16.msra.mxu0 0
    %4940 = vmatpush.bf16.msra.mxu0 0
    %4941 = vmatpush.bf16.msra.mxu0 0
    %4942 = vmatpush.bf16.msra.mxu0 0
    %4943 = vmatpush.bf16.msra.mxu0 %v4922
    %4944 = vmatpush.bf16.msra.mxu0 %v4921
    %4945 = vmatpush.bf16.msra.mxu0 %v4920
    %4946 = vmatpush.bf16.msra.mxu0 %v4919
    %4947 = vmatmul.bf16.gmra.mxu0 %v4928
    %v4948 = vpop.f32.mrf.mxu0
    %v4949 = vadd.f32 0.0, %v4948
    %v4950 = vpop.f32.mrf.mxu0
    %v4951 = vadd.f32 0.0, %v4950
    %4952 = vmatmul.bf16.gmra.mxu0 %v4931
    %v4953 = vpop.f32.mrf.mxu0
    %v4954 = vadd.f32 0.0, %v4953
    %v4955 = vpop.f32.mrf.mxu0
    %v4956 = vadd.f32 0.0, %v4955
    %4957 = vmatmul.bf16.gmra.mxu0 %v4934
    %v4958 = vpop.f32.mrf.mxu0
    %v4959 = vadd.f32 0.0, %v4958
    %v4960 = vpop.f32.mrf.mxu0
    %v4961 = vadd.f32 0.0, %v4960
    %4962 = vmatmul.bf16.gmra.mxu0 %v4937
    %v4963 = vpop.f32.mrf.mxu0
    %v4964 = vadd.f32 0.0, %v4963
    %v4965 = vpop.f32.mrf.mxu0
    %v4966 = vadd.f32 0.0, %v4965
    %4967 = vdwg.mxu0
    %4968 = vrot.lane.b32.xlu0 %v4750, 96
    %v4969 = vpop.permute.xlu0 %4968
    %4970 = vrot.lane.b32.xlu0 %v4751, 96
    %v4971 = vpop.permute.xlu0 %4970
    %4972 = vrot.lane.b32.xlu0 %v4752, 96
    %v4973 = vpop.permute.xlu0 %4972
    %4974 = vrot.lane.b32.xlu0 %v4753, 96
    %v4975 = vpop.permute.xlu0 %4974
    %4976 = vrot.lane.b32.xlu0 %v4762, 96
    %v4977 = vpop.permute.xlu0 %4976
    %4978 = vrot.lane.b32.xlu0 %v4763, 96
    %v4979 = vpop.permute.xlu0 %4978
    %4980 = vrot.lane.b32.xlu0 %v4764, 96
    %v4981 = vpop.permute.xlu0 %4980
    %4982 = vrot.lane.b32.xlu0 %v4765, 96
    %v4983 = vpop.permute.xlu0 %4982
    %v4985 = vsel %vm1887, %v4969, 0
    %v4988 = vsel %vm1887, %v4971, 0
    %v4991 = vsel %vm1887, %v4973, 0
    %v4994 = vsel %vm1887, %v4975, 0
    %v4997 = vsel %vm1887, %v4977, 0
    %v5000 = vsel %vm1887, %v4979, 0
    %v5003 = vsel %vm1887, %v4981, 0
    %v5006 = vsel %vm1887, %v4983, 0
    %5008 = vmatpush.bf16.xpose.msra.mxu0 0
    %5009 = vmatpush.bf16.xpose.msra.mxu0 0
    %5010 = vmatpush.bf16.xpose.msra.mxu0 0
    %5011 = vmatpush.bf16.xpose.msra.mxu0 0
    %5012 = vmatpush.bf16.xpose.msra.mxu0 %v5006
    %5013 = vmatpush.bf16.xpose.msra.mxu0 %v5003
    %5014 = vmatpush.bf16.xpose.msra.mxu0 %v5000
    %5015 = vmatpush.bf16.xpose.msra.mxu0 %v4997
    %5016 = vmatmul.bf16.gmra.mxu0 %v4985
    %v5017 = vpop.f32.mrf.mxu0
    %v5018 = vadd.f32 %v1839, %v5017
    %v5019 = vpop.f32.mrf.mxu0
    %v5020 = vadd.f32 %v1840, %v5019
    %5021 = vmatmul.bf16.gmra.mxu0 %v4988
    %v5022 = vpop.f32.mrf.mxu0
    %v5023 = vadd.f32 %v1841, %v5022
    %v5024 = vpop.f32.mrf.mxu0
    %v5025 = vadd.f32 %v1842, %v5024
    %5026 = vmatmul.bf16.gmra.mxu0 %v4991
    %v5027 = vpop.f32.mrf.mxu0
    %v5028 = vadd.f32 %v1843, %v5027
    %v5029 = vpop.f32.mrf.mxu0
    %v5030 = vadd.f32 %v1844, %v5029
    %5031 = vmatmul.bf16.gmra.mxu0 %v4994
    %v5032 = vpop.f32.mrf.mxu0
    %v5033 = vadd.f32 %v1845, %v5032
    %v5034 = vpop.f32.mrf.mxu0
    %v5035 = vadd.f32 %v1846, %v5034
    %5036 = vdwg.mxu0
    %v5037 = vsel %vm1941, %v5018, -inf
    %5038 = vmax.xlane.f32.xlu0 %v5037
    %v5039 = vpop.xlane.xlu0 %5038
    %v5040 = vsel %vm1941, %v5020, -inf
    %5041 = vmax.xlane.f32.xlu0 %v5040
    %v5042 = vpop.xlane.xlu0 %5041
    %v5043 = vsel %vm1941, %v5023, -inf
    %5044 = vmax.xlane.f32.xlu0 %v5043
    %v5045 = vpop.xlane.xlu0 %5044
    %v5046 = vsel %vm1941, %v5025, -inf
    %5047 = vmax.xlane.f32.xlu0 %v5046
    %v5048 = vpop.xlane.xlu0 %5047
    %v5049 = vsel %vm1941, %v5028, -inf
    %5050 = vmax.xlane.f32.xlu0 %v5049
    %v5051 = vpop.xlane.xlu0 %5050
    %v5052 = vsel %vm1941, %v5030, -inf
    %5053 = vmax.xlane.f32.xlu0 %v5052
    %v5054 = vpop.xlane.xlu0 %5053
    %v5055 = vsel %vm1941, %v5033, -inf
    %5056 = vmax.xlane.f32.xlu0 %v5055
    %v5057 = vpop.xlane.xlu0 %5056
    %v5058 = vsel %vm1941, %v5035, -inf
    %5059 = vmax.xlane.f32.xlu0 %v5058
    %v5060 = vpop.xlane.xlu0 %5059
    %v5061 = vsub.f32 %v5018, %v5039
    %v5062 = vsub.f32 %v5020, %v5042
    %v5063 = vsub.f32 %v5023, %v5045
    %v5064 = vsub.f32 %v5025, %v5048
    %v5065 = vsub.f32 %v5028, %v5051
    %v5066 = vsub.f32 %v5030, %v5054
    %v5067 = vsub.f32 %v5033, %v5057
    %v5068 = vsub.f32 %v5035, %v5060
    %v5069 = vmul.f32 %v5061, 1.442695
    %v5070 = vpow.pop %v5069
    %v5071 = vmul.f32 %v5062, 1.442695
    %v5072 = vpow.pop %v5071
    %v5073 = vmul.f32 %v5063, 1.442695
    %v5074 = vpow.pop %v5073
    %v5075 = vmul.f32 %v5064, 1.442695
    %v5076 = vpow.pop %v5075
    %v5077 = vmul.f32 %v5065, 1.442695
    %v5078 = vpow.pop %v5077
    %v5079 = vmul.f32 %v5066, 1.442695
    %v5080 = vpow.pop %v5079
    %v5081 = vmul.f32 %v5067, 1.442695
    %v5082 = vpow.pop %v5081
    %v5083 = vmul.f32 %v5068, 1.442695
    %v5084 = vpow.pop %v5083
    %v5085 = vsel %vm1941, %v5070, 0.0
    %5086 = vadd.xlane.f32.xlu0 %v5085
    %v5087 = vpop.xlane.xlu0 %5086
    %v5088 = vsel %vm1941, %v5072, 0.0
    %5089 = vadd.xlane.f32.xlu0 %v5088
    %v5090 = vpop.xlane.xlu0 %5089
    %v5091 = vsel %vm1941, %v5074, 0.0
    %5092 = vadd.xlane.f32.xlu0 %v5091
    %v5093 = vpop.xlane.xlu0 %5092
    %v5094 = vsel %vm1941, %v5076, 0.0
    %5095 = vadd.xlane.f32.xlu0 %v5094
    %v5096 = vpop.xlane.xlu0 %5095
    %v5097 = vsel %vm1941, %v5078, 0.0
    %5098 = vadd.xlane.f32.xlu0 %v5097
    %v5099 = vpop.xlane.xlu0 %5098
    %v5100 = vsel %vm1941, %v5080, 0.0
    %5101 = vadd.xlane.f32.xlu0 %v5100
    %v5102 = vpop.xlane.xlu0 %5101
    %v5103 = vsel %vm1941, %v5082, 0.0
    %5104 = vadd.xlane.f32.xlu0 %v5103
    %v5105 = vpop.xlane.xlu0 %5104
    %v5106 = vsel %vm1941, %v5084, 0.0
    %5107 = vadd.xlane.f32.xlu0 %v5106
    %v5108 = vpop.xlane.xlu0 %5107
    %v5109 = vrcp.pop %v5087
    %v5110 = vrcp.pop %v5090
    %v5111 = vrcp.pop %v5093
    %v5112 = vrcp.pop %v5096
    %v5113 = vrcp.pop %v5099
    %v5114 = vrcp.pop %v5102
    %v5115 = vrcp.pop %v5105
    %v5116 = vrcp.pop %v5108
    %v5117 = vmul.f32 %v5070, %v5109
    %v5118 = vmul.f32 %v5072, %v5110
    %v5119 = vmul.f32 %v5074, %v5111
    %v5120 = vmul.f32 %v5076, %v5112
    %v5121 = vmul.f32 %v5078, %v5113
    %v5122 = vmul.f32 %v5080, %v5114
    %v5123 = vmul.f32 %v5082, %v5115
    %v5124 = vmul.f32 %v5084, %v5116
    %v5125 = vpack.c.bf16 %v5118, %v5117
    %v5126 = vpack.c.bf16 %v5120, %v5119
    %v5127 = vpack.c.bf16 %v5122, %v5121
    %v5128 = vpack.c.bf16 %v5124, %v5123
    %5129 = vrot.lane.b32.xlu0 %v4919, 96
    %v5130 = vpop.permute.xlu0 %5129
    %5131 = vrot.lane.b32.xlu0 %v4920, 96
    %v5132 = vpop.permute.xlu0 %5131
    %5133 = vrot.lane.b32.xlu0 %v4921, 96
    %v5134 = vpop.permute.xlu0 %5133
    %5135 = vrot.lane.b32.xlu0 %v4922, 96
    %v5136 = vpop.permute.xlu0 %5135
    %v5142 = vsel %vm1941, %v5125, 0
    %v5145 = vsel %vm1941, %v5126, 0
    %v5148 = vsel %vm1941, %v5127, 0
    %v5151 = vsel %vm1941, %v5128, 0
    %5153 = vmatpush.bf16.msra.mxu0 0
    %5154 = vmatpush.bf16.msra.mxu0 0
    %5155 = vmatpush.bf16.msra.mxu0 0
    %5156 = vmatpush.bf16.msra.mxu0 0
    %5157 = vmatpush.bf16.msra.mxu0 %v5136
    %5158 = vmatpush.bf16.msra.mxu0 %v5134
    %5159 = vmatpush.bf16.msra.mxu0 %v5132
    %5160 = vmatpush.bf16.msra.mxu0 %v5130
    %5161 = vmatmul.bf16.gmra.mxu0 %v5142
    %v5162 = vpop.f32.mrf.mxu0
    %v5163 = vadd.f32 0.0, %v5162
    %v5164 = vpop.f32.mrf.mxu0
    %v5165 = vadd.f32 0.0, %v5164
    %5166 = vmatmul.bf16.gmra.mxu0 %v5145
    %v5167 = vpop.f32.mrf.mxu0
    %v5168 = vadd.f32 0.0, %v5167
    %v5169 = vpop.f32.mrf.mxu0
    %v5170 = vadd.f32 0.0, %v5169
    %5171 = vmatmul.bf16.gmra.mxu0 %v5148
    %v5172 = vpop.f32.mrf.mxu0
    %v5173 = vadd.f32 0.0, %v5172
    %v5174 = vpop.f32.mrf.mxu0
    %v5175 = vadd.f32 0.0, %v5174
    %5176 = vmatmul.bf16.gmra.mxu0 %v5151
    %v5177 = vpop.f32.mrf.mxu0
    %v5178 = vadd.f32 0.0, %v5177
    %v5179 = vpop.f32.mrf.mxu0
    %v5180 = vadd.f32 0.0, %v5179
    %5181 = vdwg.mxu0
    %5182 = vrot.lane.b32.xlu0 %v4750, 64
    %v5183 = vpop.permute.xlu0 %5182
    %5184 = vrot.lane.b32.xlu0 %v4751, 64
    %v5185 = vpop.permute.xlu0 %5184
    %5186 = vrot.lane.b32.xlu0 %v4752, 64
    %v5187 = vpop.permute.xlu0 %5186
    %5188 = vrot.lane.b32.xlu0 %v4753, 64
    %v5189 = vpop.permute.xlu0 %5188
    %5190 = vrot.lane.b32.xlu0 %v4762, 64
    %v5191 = vpop.permute.xlu0 %5190
    %5192 = vrot.lane.b32.xlu0 %v4763, 64
    %v5193 = vpop.permute.xlu0 %5192
    %5194 = vrot.lane.b32.xlu0 %v4764, 64
    %v5195 = vpop.permute.xlu0 %5194
    %5196 = vrot.lane.b32.xlu0 %v4765, 64
    %v5197 = vpop.permute.xlu0 %5196
    %v5199 = vsel %vm1887, %v5183, 0
    %v5202 = vsel %vm1887, %v5185, 0
    %v5205 = vsel %vm1887, %v5187, 0
    %v5208 = vsel %vm1887, %v5189, 0
    %v5211 = vsel %vm1887, %v5191, 0
    %v5214 = vsel %vm1887, %v5193, 0
    %v5217 = vsel %vm1887, %v5195, 0
    %v5220 = vsel %vm1887, %v5197, 0
    %5222 = vmatpush.bf16.xpose.msra.mxu0 0
    %5223 = vmatpush.bf16.xpose.msra.mxu0 0
    %5224 = vmatpush.bf16.xpose.msra.mxu0 0
    %5225 = vmatpush.bf16.xpose.msra.mxu0 0
    %5226 = vmatpush.bf16.xpose.msra.mxu0 %v5220
    %5227 = vmatpush.bf16.xpose.msra.mxu0 %v5217
    %5228 = vmatpush.bf16.xpose.msra.mxu0 %v5214
    %5229 = vmatpush.bf16.xpose.msra.mxu0 %v5211
    %5230 = vmatmul.bf16.gmra.mxu0 %v5199
    %v5231 = vpop.f32.mrf.mxu0
    %v5232 = vadd.f32 %v1839, %v5231
    %v5233 = vpop.f32.mrf.mxu0
    %v5234 = vadd.f32 %v1840, %v5233
    %5235 = vmatmul.bf16.gmra.mxu0 %v5202
    %v5236 = vpop.f32.mrf.mxu0
    %v5237 = vadd.f32 %v1841, %v5236
    %v5238 = vpop.f32.mrf.mxu0
    %v5239 = vadd.f32 %v1842, %v5238
    %5240 = vmatmul.bf16.gmra.mxu0 %v5205
    %v5241 = vpop.f32.mrf.mxu0
    %v5242 = vadd.f32 %v1843, %v5241
    %v5243 = vpop.f32.mrf.mxu0
    %v5244 = vadd.f32 %v1844, %v5243
    %5245 = vmatmul.bf16.gmra.mxu0 %v5208
    %v5246 = vpop.f32.mrf.mxu0
    %v5247 = vadd.f32 %v1845, %v5246
    %v5248 = vpop.f32.mrf.mxu0
    %v5249 = vadd.f32 %v1846, %v5248
    %5250 = vdwg.mxu0
    %v5251 = vsel %vm1941, %v5232, -inf
    %5252 = vmax.xlane.f32.xlu0 %v5251
    %v5253 = vpop.xlane.xlu0 %5252
    %v5254 = vsel %vm1941, %v5234, -inf
    %5255 = vmax.xlane.f32.xlu0 %v5254
    %v5256 = vpop.xlane.xlu0 %5255
    %v5257 = vsel %vm1941, %v5237, -inf
    %5258 = vmax.xlane.f32.xlu0 %v5257
    %v5259 = vpop.xlane.xlu0 %5258
    %v5260 = vsel %vm1941, %v5239, -inf
    %5261 = vmax.xlane.f32.xlu0 %v5260
    %v5262 = vpop.xlane.xlu0 %5261
    %v5263 = vsel %vm1941, %v5242, -inf
    %5264 = vmax.xlane.f32.xlu0 %v5263
    %v5265 = vpop.xlane.xlu0 %5264
    %v5266 = vsel %vm1941, %v5244, -inf
    %5267 = vmax.xlane.f32.xlu0 %v5266
    %v5268 = vpop.xlane.xlu0 %5267
    %v5269 = vsel %vm1941, %v5247, -inf
    %5270 = vmax.xlane.f32.xlu0 %v5269
    %v5271 = vpop.xlane.xlu0 %5270
    %v5272 = vsel %vm1941, %v5249, -inf
    %5273 = vmax.xlane.f32.xlu0 %v5272
    %v5274 = vpop.xlane.xlu0 %5273
    %v5275 = vsub.f32 %v5232, %v5253
    %v5276 = vsub.f32 %v5234, %v5256
    %v5277 = vsub.f32 %v5237, %v5259
    %v5278 = vsub.f32 %v5239, %v5262
    %v5279 = vsub.f32 %v5242, %v5265
    %v5280 = vsub.f32 %v5244, %v5268
    %v5281 = vsub.f32 %v5247, %v5271
    %v5282 = vsub.f32 %v5249, %v5274
    %v5283 = vmul.f32 %v5275, 1.442695
    %v5284 = vpow.pop %v5283
    %v5285 = vmul.f32 %v5276, 1.442695
    %v5286 = vpow.pop %v5285
    %v5287 = vmul.f32 %v5277, 1.442695
    %v5288 = vpow.pop %v5287
    %v5289 = vmul.f32 %v5278, 1.442695
    %v5290 = vpow.pop %v5289
    %v5291 = vmul.f32 %v5279, 1.442695
    %v5292 = vpow.pop %v5291
    %v5293 = vmul.f32 %v5280, 1.442695
    %v5294 = vpow.pop %v5293
    %v5295 = vmul.f32 %v5281, 1.442695
    %v5296 = vpow.pop %v5295
    %v5297 = vmul.f32 %v5282, 1.442695
    %v5298 = vpow.pop %v5297
    %v5299 = vsel %vm1941, %v5284, 0.0
    %5300 = vadd.xlane.f32.xlu0 %v5299
    %v5301 = vpop.xlane.xlu0 %5300
    %v5302 = vsel %vm1941, %v5286, 0.0
    %5303 = vadd.xlane.f32.xlu0 %v5302
    %v5304 = vpop.xlane.xlu0 %5303
    %v5305 = vsel %vm1941, %v5288, 0.0
    %5306 = vadd.xlane.f32.xlu0 %v5305
    %v5307 = vpop.xlane.xlu0 %5306
    %v5308 = vsel %vm1941, %v5290, 0.0
    %5309 = vadd.xlane.f32.xlu0 %v5308
    %v5310 = vpop.xlane.xlu0 %5309
    %v5311 = vsel %vm1941, %v5292, 0.0
    %5312 = vadd.xlane.f32.xlu0 %v5311
    %v5313 = vpop.xlane.xlu0 %5312
    %v5314 = vsel %vm1941, %v5294, 0.0
    %5315 = vadd.xlane.f32.xlu0 %v5314
    %v5316 = vpop.xlane.xlu0 %5315
    %v5317 = vsel %vm1941, %v5296, 0.0
    %5318 = vadd.xlane.f32.xlu0 %v5317
    %v5319 = vpop.xlane.xlu0 %5318
    %v5320 = vsel %vm1941, %v5298, 0.0
    %5321 = vadd.xlane.f32.xlu0 %v5320
    %v5322 = vpop.xlane.xlu0 %5321
    %v5323 = vrcp.pop %v5301
    %v5324 = vrcp.pop %v5304
    %v5325 = vrcp.pop %v5307
    %v5326 = vrcp.pop %v5310
    %v5327 = vrcp.pop %v5313
    %v5328 = vrcp.pop %v5316
    %v5329 = vrcp.pop %v5319
    %v5330 = vrcp.pop %v5322
    %v5331 = vmul.f32 %v5284, %v5323
    %v5332 = vmul.f32 %v5286, %v5324
    %v5333 = vmul.f32 %v5288, %v5325
    %v5334 = vmul.f32 %v5290, %v5326
    %v5335 = vmul.f32 %v5292, %v5327
    %v5336 = vmul.f32 %v5294, %v5328
    %v5337 = vmul.f32 %v5296, %v5329
    %v5338 = vmul.f32 %v5298, %v5330
    %v5339 = vpack.c.bf16 %v5332, %v5331
    %v5340 = vpack.c.bf16 %v5334, %v5333
    %v5341 = vpack.c.bf16 %v5336, %v5335
    %v5342 = vpack.c.bf16 %v5338, %v5337
    %5343 = vrot.lane.b32.xlu0 %v4919, 64
    %v5344 = vpop.permute.xlu0 %5343
    %5345 = vrot.lane.b32.xlu0 %v4920, 64
    %v5346 = vpop.permute.xlu0 %5345
    %5347 = vrot.lane.b32.xlu0 %v4921, 64
    %v5348 = vpop.permute.xlu0 %5347
    %5349 = vrot.lane.b32.xlu0 %v4922, 64
    %v5350 = vpop.permute.xlu0 %5349
    %v5356 = vsel %vm1941, %v5339, 0
    %v5359 = vsel %vm1941, %v5340, 0
    %v5362 = vsel %vm1941, %v5341, 0
    %v5365 = vsel %vm1941, %v5342, 0
    %5367 = vmatpush.bf16.msra.mxu0 0
    %5368 = vmatpush.bf16.msra.mxu0 0
    %5369 = vmatpush.bf16.msra.mxu0 0
    %5370 = vmatpush.bf16.msra.mxu0 0
    %5371 = vmatpush.bf16.msra.mxu0 %v5350
    %5372 = vmatpush.bf16.msra.mxu0 %v5348
    %5373 = vmatpush.bf16.msra.mxu0 %v5346
    %5374 = vmatpush.bf16.msra.mxu0 %v5344
    %5375 = vmatmul.bf16.gmra.mxu0 %v5356
    %v5376 = vpop.f32.mrf.mxu0
    %v5377 = vadd.f32 0.0, %v5376
    %v5378 = vpop.f32.mrf.mxu0
    %v5379 = vadd.f32 0.0, %v5378
    %5380 = vmatmul.bf16.gmra.mxu0 %v5359
    %v5381 = vpop.f32.mrf.mxu0
    %v5382 = vadd.f32 0.0, %v5381
    %v5383 = vpop.f32.mrf.mxu0
    %v5384 = vadd.f32 0.0, %v5383
    %5385 = vmatmul.bf16.gmra.mxu0 %v5362
    %v5386 = vpop.f32.mrf.mxu0
    %v5387 = vadd.f32 0.0, %v5386
    %v5388 = vpop.f32.mrf.mxu0
    %v5389 = vadd.f32 0.0, %v5388
    %5390 = vmatmul.bf16.gmra.mxu0 %v5365
    %v5391 = vpop.f32.mrf.mxu0
    %v5392 = vadd.f32 0.0, %v5391
    %v5393 = vpop.f32.mrf.mxu0
    %v5394 = vadd.f32 0.0, %v5393
    %5395 = vdwg.mxu0
    %5396 = vrot.lane.b32.xlu0 %v4750, 32
    %v5397 = vpop.permute.xlu0 %5396
    %5398 = vrot.lane.b32.xlu0 %v4751, 32
    %v5399 = vpop.permute.xlu0 %5398
    %5400 = vrot.lane.b32.xlu0 %v4752, 32
    %v5401 = vpop.permute.xlu0 %5400
    %5402 = vrot.lane.b32.xlu0 %v4753, 32
    %v5403 = vpop.permute.xlu0 %5402
    %5404 = vrot.lane.b32.xlu0 %v4762, 32
    %v5405 = vpop.permute.xlu0 %5404
    %5406 = vrot.lane.b32.xlu0 %v4763, 32
    %v5407 = vpop.permute.xlu0 %5406
    %5408 = vrot.lane.b32.xlu0 %v4764, 32
    %v5409 = vpop.permute.xlu0 %5408
    %5410 = vrot.lane.b32.xlu0 %v4765, 32
    %v5411 = vpop.permute.xlu0 %5410
    %v5413 = vsel %vm1887, %v5397, 0
    %v5416 = vsel %vm1887, %v5399, 0
    %v5419 = vsel %vm1887, %v5401, 0
    %v5422 = vsel %vm1887, %v5403, 0
    %v5425 = vsel %vm1887, %v5405, 0
    %v5428 = vsel %vm1887, %v5407, 0
    %v5431 = vsel %vm1887, %v5409, 0
    %v5434 = vsel %vm1887, %v5411, 0
    %5436 = vmatpush.bf16.xpose.msra.mxu0 0
    %5437 = vmatpush.bf16.xpose.msra.mxu0 0
    %5438 = vmatpush.bf16.xpose.msra.mxu0 0
    %5439 = vmatpush.bf16.xpose.msra.mxu0 0
    %5440 = vmatpush.bf16.xpose.msra.mxu0 %v5434
    %5441 = vmatpush.bf16.xpose.msra.mxu0 %v5431
    %5442 = vmatpush.bf16.xpose.msra.mxu0 %v5428
    %5443 = vmatpush.bf16.xpose.msra.mxu0 %v5425
    %5444 = vmatmul.bf16.gmra.mxu0 %v5413
    %v5445 = vpop.f32.mrf.mxu0
    %v5446 = vadd.f32 %v1839, %v5445
    %v5447 = vpop.f32.mrf.mxu0
    %v5448 = vadd.f32 %v1840, %v5447
    %5449 = vmatmul.bf16.gmra.mxu0 %v5416
    %v5450 = vpop.f32.mrf.mxu0
    %v5451 = vadd.f32 %v1841, %v5450
    %v5452 = vpop.f32.mrf.mxu0
    %v5453 = vadd.f32 %v1842, %v5452
    %5454 = vmatmul.bf16.gmra.mxu0 %v5419
    %v5455 = vpop.f32.mrf.mxu0
    %v5456 = vadd.f32 %v1843, %v5455
    %v5457 = vpop.f32.mrf.mxu0
    %v5458 = vadd.f32 %v1844, %v5457
    %5459 = vmatmul.bf16.gmra.mxu0 %v5422
    %v5460 = vpop.f32.mrf.mxu0
    %v5461 = vadd.f32 %v1845, %v5460
    %v5462 = vpop.f32.mrf.mxu0
    %v5463 = vadd.f32 %v1846, %v5462
    %5464 = vdwg.mxu0
    %v5465 = vsel %vm1941, %v5446, -inf
    %5466 = vmax.xlane.f32.xlu0 %v5465
    %v5467 = vpop.xlane.xlu0 %5466
    %v5468 = vsel %vm1941, %v5448, -inf
    %5469 = vmax.xlane.f32.xlu0 %v5468
    %v5470 = vpop.xlane.xlu0 %5469
    %v5471 = vsel %vm1941, %v5451, -inf
    %5472 = vmax.xlane.f32.xlu0 %v5471
    %v5473 = vpop.xlane.xlu0 %5472
    %v5474 = vsel %vm1941, %v5453, -inf
    %5475 = vmax.xlane.f32.xlu0 %v5474
    %v5476 = vpop.xlane.xlu0 %5475
    %v5477 = vsel %vm1941, %v5456, -inf
    %5478 = vmax.xlane.f32.xlu0 %v5477
    %v5479 = vpop.xlane.xlu0 %5478
    %v5480 = vsel %vm1941, %v5458, -inf
    %5481 = vmax.xlane.f32.xlu0 %v5480
    %v5482 = vpop.xlane.xlu0 %5481
    %v5483 = vsel %vm1941, %v5461, -inf
    %5484 = vmax.xlane.f32.xlu0 %v5483
    %v5485 = vpop.xlane.xlu0 %5484
    %v5486 = vsel %vm1941, %v5463, -inf
    %5487 = vmax.xlane.f32.xlu0 %v5486
    %v5488 = vpop.xlane.xlu0 %5487
    %v5489 = vsub.f32 %v5446, %v5467
    %v5490 = vsub.f32 %v5448, %v5470
    %v5491 = vsub.f32 %v5451, %v5473
    %v5492 = vsub.f32 %v5453, %v5476
    %v5493 = vsub.f32 %v5456, %v5479
    %v5494 = vsub.f32 %v5458, %v5482
    %v5495 = vsub.f32 %v5461, %v5485
    %v5496 = vsub.f32 %v5463, %v5488
    %v5497 = vmul.f32 %v5489, 1.442695
    %v5498 = vpow.pop %v5497
    %v5499 = vmul.f32 %v5490, 1.442695
    %v5500 = vpow.pop %v5499
    %v5501 = vmul.f32 %v5491, 1.442695
    %v5502 = vpow.pop %v5501
    %v5503 = vmul.f32 %v5492, 1.442695
    %v5504 = vpow.pop %v5503
    %v5505 = vmul.f32 %v5493, 1.442695
    %v5506 = vpow.pop %v5505
    %v5507 = vmul.f32 %v5494, 1.442695
    %v5508 = vpow.pop %v5507
    %v5509 = vmul.f32 %v5495, 1.442695
    %v5510 = vpow.pop %v5509
    %v5511 = vmul.f32 %v5496, 1.442695
    %v5512 = vpow.pop %v5511
    %v5513 = vsel %vm1941, %v5498, 0.0
    %5514 = vadd.xlane.f32.xlu0 %v5513
    %v5515 = vpop.xlane.xlu0 %5514
    %v5516 = vsel %vm1941, %v5500, 0.0
    %5517 = vadd.xlane.f32.xlu0 %v5516
    %v5518 = vpop.xlane.xlu0 %5517
    %v5519 = vsel %vm1941, %v5502, 0.0
    %5520 = vadd.xlane.f32.xlu0 %v5519
    %v5521 = vpop.xlane.xlu0 %5520
    %v5522 = vsel %vm1941, %v5504, 0.0
    %5523 = vadd.xlane.f32.xlu0 %v5522
    %v5524 = vpop.xlane.xlu0 %5523
    %v5525 = vsel %vm1941, %v5506, 0.0
    %5526 = vadd.xlane.f32.xlu0 %v5525
    %v5527 = vpop.xlane.xlu0 %5526
    %v5528 = vsel %vm1941, %v5508, 0.0
    %5529 = vadd.xlane.f32.xlu0 %v5528
    %v5530 = vpop.xlane.xlu0 %5529
    %v5531 = vsel %vm1941, %v5510, 0.0
    %5532 = vadd.xlane.f32.xlu0 %v5531
    %v5533 = vpop.xlane.xlu0 %5532
    %v5534 = vsel %vm1941, %v5512, 0.0
    %5535 = vadd.xlane.f32.xlu0 %v5534
    %v5536 = vpop.xlane.xlu0 %5535
    %v5537 = vrcp.pop %v5515
    %v5538 = vrcp.pop %v5518
    %v5539 = vrcp.pop %v5521
    %v5540 = vrcp.pop %v5524
    %v5541 = vrcp.pop %v5527
    %v5542 = vrcp.pop %v5530
    %v5543 = vrcp.pop %v5533
    %v5544 = vrcp.pop %v5536
    %v5545 = vmul.f32 %v5498, %v5537
    %v5546 = vmul.f32 %v5500, %v5538
    %v5547 = vmul.f32 %v5502, %v5539
    %v5548 = vmul.f32 %v5504, %v5540
    %v5549 = vmul.f32 %v5506, %v5541
    %v5550 = vmul.f32 %v5508, %v5542
    %v5551 = vmul.f32 %v5510, %v5543
    %v5552 = vmul.f32 %v5512, %v5544
    %v5553 = vpack.c.bf16 %v5546, %v5545
    %v5554 = vpack.c.bf16 %v5548, %v5547
    %v5555 = vpack.c.bf16 %v5550, %v5549
    %v5556 = vpack.c.bf16 %v5552, %v5551
    %5557 = vrot.lane.b32.xlu0 %v4919, 32
    %v5558 = vpop.permute.xlu0 %5557
    %5559 = vrot.lane.b32.xlu0 %v4920, 32
    %v5560 = vpop.permute.xlu0 %5559
    %5561 = vrot.lane.b32.xlu0 %v4921, 32
    %v5562 = vpop.permute.xlu0 %5561
    %5563 = vrot.lane.b32.xlu0 %v4922, 32
    %v5564 = vpop.permute.xlu0 %5563
    %v5570 = vsel %vm1941, %v5553, 0
    %v5573 = vsel %vm1941, %v5554, 0
    %v5576 = vsel %vm1941, %v5555, 0
    %v5579 = vsel %vm1941, %v5556, 0
    %5581 = vmatpush.bf16.msra.mxu0 0
    %5582 = vmatpush.bf16.msra.mxu0 0
    %5583 = vmatpush.bf16.msra.mxu0 0
    %5584 = vmatpush.bf16.msra.mxu0 0
    %5585 = vmatpush.bf16.msra.mxu0 %v5564
    %5586 = vmatpush.bf16.msra.mxu0 %v5562
    %5587 = vmatpush.bf16.msra.mxu0 %v5560
    %5588 = vmatpush.bf16.msra.mxu0 %v5558
    %5589 = vmatmul.bf16.gmra.mxu0 %v5570
    %v5590 = vpop.f32.mrf.mxu0
    %v5591 = vadd.f32 0.0, %v5590
    %v5592 = vpop.f32.mrf.mxu0
    %v5593 = vadd.f32 0.0, %v5592
    %5594 = vmatmul.bf16.gmra.mxu0 %v5573
    %v5595 = vpop.f32.mrf.mxu0
    %v5596 = vadd.f32 0.0, %v5595
    %v5597 = vpop.f32.mrf.mxu0
    %v5598 = vadd.f32 0.0, %v5597
    %5599 = vmatmul.bf16.gmra.mxu0 %v5576
    %v5600 = vpop.f32.mrf.mxu0
    %v5601 = vadd.f32 0.0, %v5600
    %v5602 = vpop.f32.mrf.mxu0
    %v5603 = vadd.f32 0.0, %v5602
    %5604 = vmatmul.bf16.gmra.mxu0 %v5579
    %v5605 = vpop.f32.mrf.mxu0
    %v5606 = vadd.f32 0.0, %v5605
    %v5607 = vpop.f32.mrf.mxu0
    %v5608 = vadd.f32 0.0, %v5607
    %5609 = vdwg.mxu0
    %5618 = vrot.lane.b32.xlu0 %v4295, 32
    %v5619 = vpop.permute.xlu0 %5618
    %5620 = vrot.lane.b32.xlu0 %v4297, 32
    %v5621 = vpop.permute.xlu0 %5620
    %5622 = vrot.lane.b32.xlu0 %v4300, 32
    %v5623 = vpop.permute.xlu0 %5622
    %5624 = vrot.lane.b32.xlu0 %v4302, 32
    %v5625 = vpop.permute.xlu0 %5624
    %5626 = vrot.lane.b32.xlu0 %v4305, 32
    %v5627 = vpop.permute.xlu0 %5626
    %5628 = vrot.lane.b32.xlu0 %v4307, 32
    %v5629 = vpop.permute.xlu0 %5628
    %5630 = vrot.lane.b32.xlu0 %v4310, 32
    %v5631 = vpop.permute.xlu0 %5630
    %5632 = vrot.lane.b32.xlu0 %v4312, 32
    %v5633 = vpop.permute.xlu0 %5632
    %5650 = vrot.lane.b32.xlu0 %v4509, 64
    %v5651 = vpop.permute.xlu0 %5650
    %5652 = vrot.lane.b32.xlu0 %v4511, 64
    %v5653 = vpop.permute.xlu0 %5652
    %5654 = vrot.lane.b32.xlu0 %v4514, 64
    %v5655 = vpop.permute.xlu0 %5654
    %5656 = vrot.lane.b32.xlu0 %v4516, 64
    %v5657 = vpop.permute.xlu0 %5656
    %5658 = vrot.lane.b32.xlu0 %v4519, 64
    %v5659 = vpop.permute.xlu0 %5658
    %5660 = vrot.lane.b32.xlu0 %v4521, 64
    %v5661 = vpop.permute.xlu0 %5660
    %5662 = vrot.lane.b32.xlu0 %v4524, 64
    %v5663 = vpop.permute.xlu0 %5662
    %5664 = vrot.lane.b32.xlu0 %v4526, 64
    %v5665 = vpop.permute.xlu0 %5664
    %5682 = vrot.lane.b32.xlu0 %v4723, 96
    %v5683 = vpop.permute.xlu0 %5682
    %5684 = vrot.lane.b32.xlu0 %v4725, 96
    %v5685 = vpop.permute.xlu0 %5684
    %5686 = vrot.lane.b32.xlu0 %v4728, 96
    %v5687 = vpop.permute.xlu0 %5686
    %5688 = vrot.lane.b32.xlu0 %v4730, 96
    %v5689 = vpop.permute.xlu0 %5688
    %5690 = vrot.lane.b32.xlu0 %v4733, 96
    %v5691 = vpop.permute.xlu0 %5690
    %5692 = vrot.lane.b32.xlu0 %v4735, 96
    %v5693 = vpop.permute.xlu0 %5692
    %5694 = vrot.lane.b32.xlu0 %v4738, 96
    %v5695 = vpop.permute.xlu0 %5694
    %5696 = vrot.lane.b32.xlu0 %v4740, 96
    %v5697 = vpop.permute.xlu0 %5696
    %5714 = vrot.lane.b32.xlu0 %v5163, 32
    %v5715 = vpop.permute.xlu0 %5714
    %5716 = vrot.lane.b32.xlu0 %v5165, 32
    %v5717 = vpop.permute.xlu0 %5716
    %5718 = vrot.lane.b32.xlu0 %v5168, 32
    %v5719 = vpop.permute.xlu0 %5718
    %5720 = vrot.lane.b32.xlu0 %v5170, 32
    %v5721 = vpop.permute.xlu0 %5720
    %5722 = vrot.lane.b32.xlu0 %v5173, 32
    %v5723 = vpop.permute.xlu0 %5722
    %5724 = vrot.lane.b32.xlu0 %v5175, 32
    %v5725 = vpop.permute.xlu0 %5724
    %5726 = vrot.lane.b32.xlu0 %v5178, 32
    %v5727 = vpop.permute.xlu0 %5726
    %5728 = vrot.lane.b32.xlu0 %v5180, 32
    %v5729 = vpop.permute.xlu0 %5728
    %5746 = vrot.lane.b32.xlu0 %v5377, 64
    %v5747 = vpop.permute.xlu0 %5746
    %5748 = vrot.lane.b32.xlu0 %v5379, 64
    %v5749 = vpop.permute.xlu0 %5748
    %5750 = vrot.lane.b32.xlu0 %v5382, 64
    %v5751 = vpop.permute.xlu0 %5750
    %5752 = vrot.lane.b32.xlu0 %v5384, 64
    %v5753 = vpop.permute.xlu0 %5752
    %5754 = vrot.lane.b32.xlu0 %v5387, 64
    %v5755 = vpop.permute.xlu0 %5754
    %5756 = vrot.lane.b32.xlu0 %v5389, 64
    %v5757 = vpop.permute.xlu0 %5756
    %5758 = vrot.lane.b32.xlu0 %v5392, 64
    %v5759 = vpop.permute.xlu0 %5758
    %5760 = vrot.lane.b32.xlu0 %v5394, 64
    %v5761 = vpop.permute.xlu0 %5760
    %5778 = vrot.lane.b32.xlu0 %v5591, 96
    %v5779 = vpop.permute.xlu0 %5778
    %5780 = vrot.lane.b32.xlu0 %v5593, 96
    %v5781 = vpop.permute.xlu0 %5780
    %5782 = vrot.lane.b32.xlu0 %v5596, 96
    %v5783 = vpop.permute.xlu0 %5782
    %5784 = vrot.lane.b32.xlu0 %v5598, 96
    %v5785 = vpop.permute.xlu0 %5784
    %5786 = vrot.lane.b32.xlu0 %v5601, 96
    %v5787 = vpop.permute.xlu0 %5786
    %5788 = vrot.lane.b32.xlu0 %v5603, 96
    %v5789 = vpop.permute.xlu0 %5788
    %5790 = vrot.lane.b32.xlu0 %v5606, 96
    %v5791 = vpop.permute.xlu0 %5790
    %5792 = vrot.lane.b32.xlu0 %v5608, 96
    %v5793 = vpop.permute.xlu0 %5792
    %v5802 = vsel %vm1887, %v4081, %v5619
    %v5803 = vsel %vm1887, %v4083, %v5621
    %v5804 = vsel %vm1887, %v4086, %v5623
    %v5805 = vsel %vm1887, %v4088, %v5625
    %v5806 = vsel %vm1887, %v4091, %v5627
    %v5807 = vsel %vm1887, %v4093, %v5629
    %v5808 = vsel %vm1887, %v4096, %v5631
    %v5809 = vsel %vm1887, %v4098, %v5633
    %v5810 = vsel %vm1941, %v5802, %v5651
    %v5811 = vsel %vm1941, %v5803, %v5653
    %v5812 = vsel %vm1941, %v5804, %v5655
    %v5813 = vsel %vm1941, %v5805, %v5657
    %v5814 = vsel %vm1941, %v5806, %v5659
    %v5815 = vsel %vm1941, %v5807, %v5661
    %v5816 = vsel %vm1941, %v5808, %v5663
    %v5817 = vsel %vm1941, %v5809, %v5665
    %v5818 = vsel %vm3817, %v5810, %v5683
    %v5819 = vsel %vm3817, %v5811, %v5685
    %v5820 = vsel %vm3817, %v5812, %v5687
    %v5821 = vsel %vm3817, %v5813, %v5689
    %v5822 = vsel %vm3817, %v5814, %v5691
    %v5823 = vsel %vm3817, %v5815, %v5693
    %v5824 = vsel %vm3817, %v5816, %v5695
    %v5825 = vsel %vm3817, %v5817, %v5697
    %v5826 = vsel %vm1887, %v4949, %v5715
    %v5827 = vsel %vm1887, %v4951, %v5717
    %v5828 = vsel %vm1887, %v4954, %v5719
    %v5829 = vsel %vm1887, %v4956, %v5721
    %v5830 = vsel %vm1887, %v4959, %v5723
    %v5831 = vsel %vm1887, %v4961, %v5725
    %v5832 = vsel %vm1887, %v4964, %v5727
    %v5833 = vsel %vm1887, %v4966, %v5729
    %v5834 = vsel %vm1941, %v5826, %v5747
    %v5835 = vsel %vm1941, %v5827, %v5749
    %v5836 = vsel %vm1941, %v5828, %v5751
    %v5837 = vsel %vm1941, %v5829, %v5753
    %v5838 = vsel %vm1941, %v5830, %v5755
    %v5839 = vsel %vm1941, %v5831, %v5757
    %v5840 = vsel %vm1941, %v5832, %v5759
    %v5841 = vsel %vm1941, %v5833, %v5761
    %v5842 = vsel %vm3817, %v5834, %v5779
    %v5843 = vsel %vm3817, %v5835, %v5781
    %v5844 = vsel %vm3817, %v5836, %v5783
    %v5845 = vsel %vm3817, %v5837, %v5785
    %v5846 = vsel %vm3817, %v5838, %v5787
    %v5847 = vsel %vm3817, %v5839, %v5789
    %v5848 = vsel %vm3817, %v5840, %v5791
    %v5849 = vsel %vm3817, %v5841, %v5793
    %v5850 = vpack.c.bf16 %v3819, %v3818
    %v5851 = vpack.c.bf16 %v3843, %v3842
    %v5852 = vpack.c.bf16 %v3821, %v3820
    %v5853 = vpack.c.bf16 %v3845, %v3844
    %v5854 = vpack.c.bf16 %v3823, %v3822
    %v5855 = vpack.c.bf16 %v3847, %v3846
    %v5856 = vpack.c.bf16 %v3825, %v3824
    %v5857 = vpack.c.bf16 %v3849, %v3848
    %v5858 = vpack.c.bf16 %v5819, %v5818
    %v5859 = vpack.c.bf16 %v5843, %v5842
    %v5860 = vpack.c.bf16 %v5821, %v5820
    %v5861 = vpack.c.bf16 %v5845, %v5844
    %v5862 = vpack.c.bf16 %v5823, %v5822
    %v5863 = vpack.c.bf16 %v5847, %v5846
    %v5864 = vpack.c.bf16 %v5825, %v5824
    %v5865 = vpack.c.bf16 %v5849, %v5848
    %v5866 = vld [vmem:[#allocation8] sm:$0xff]
    %v5867 = vld [vmem:[#allocation8 + $0x8] sm:$0xff]
    %v5868 = vld [vmem:[#allocation8 + $0x10] sm:$0xff]
    %v5869 = vld [vmem:[#allocation8 + $0x18] sm:$0xff]
    %v5870 = vld [vmem:[#allocation8 + $0x20] sm:$0xff]
    %v5871 = vld [vmem:[#allocation8 + $0x28] sm:$0xff]
    %v5872 = vld [vmem:[#allocation8 + $0x30] sm:$0xff]
    %v5873 = vld [vmem:[#allocation8 + $0x38] sm:$0xff]
    %v5874 = vld [vmem:[#allocation8 + $0x40] sm:$0xff]
    %v5875 = vld [vmem:[#allocation8 + $0x48] sm:$0xff]
    %v5876 = vld [vmem:[#allocation8 + $0x50] sm:$0xff]
    %v5877 = vld [vmem:[#allocation8 + $0x58] sm:$0xff]
    %v5878 = vld [vmem:[#allocation8 + $0x60] sm:$0xff]
    %v5879 = vld [vmem:[#allocation8 + $0x68] sm:$0xff]
    %v5880 = vld [vmem:[#allocation8 + $0x70] sm:$0xff]
    %v5881 = vld [vmem:[#allocation8 + $0x78] sm:$0xff]
    %v5882 = vld [vmem:[#allocation8 + $0x80] sm:$0xff]
    %v5883 = vld [vmem:[#allocation8 + $0x88] sm:$0xff]
    %v5884 = vld [vmem:[#allocation8 + $0x90] sm:$0xff]
    %v5885 = vld [vmem:[#allocation8 + $0x98] sm:$0xff]
    %v5886 = vld [vmem:[#allocation8 + $0xa0] sm:$0xff]
    %v5887 = vld [vmem:[#allocation8 + $0xa8] sm:$0xff]
    %v5888 = vld [vmem:[#allocation8 + $0xb0] sm:$0xff]
    %v5889 = vld [vmem:[#allocation8 + $0xb8] sm:$0xff]
    %v5890 = vld [vmem:[#allocation8 + $0xc0] sm:$0xff]
    %v5891 = vld [vmem:[#allocation8 + $0xc8] sm:$0xff]
    %v5892 = vld [vmem:[#allocation8 + $0xd0] sm:$0xff]
    %v5893 = vld [vmem:[#allocation8 + $0xd8] sm:$0xff]
    %v5894 = vld [vmem:[#allocation8 + $0xe0] sm:$0xff]
    %v5895 = vld [vmem:[#allocation8 + $0xe8] sm:$0xff]
    %v5896 = vld [vmem:[#allocation8 + $0xf0] sm:$0xff]
    %v5897 = vld [vmem:[#allocation8 + $0xf8] sm:$0xff]
    %v5898 = vld [vmem:[%s4] sm:$0x3]
    %v5900 = vperm.slane %v5898, 0
    %v5901 = vperm.slane %v5898, 1
    %v5936 = vunpack.c.l.b16 %v5866
    %v5937 = vunpack.c.h.b16 %v5866
    %v5938 = vunpack.c.l.b16 %v5867
    %v5939 = vunpack.c.h.b16 %v5867
    %v5940 = vunpack.c.l.b16 %v5868
    %v5941 = vunpack.c.h.b16 %v5868
    %v5942 = vunpack.c.l.b16 %v5869
    %v5943 = vunpack.c.h.b16 %v5869
    %v5944 = vunpack.c.l.b16 %v5870
    %v5945 = vunpack.c.h.b16 %v5870
    %v5946 = vunpack.c.l.b16 %v5871
    %v5947 = vunpack.c.h.b16 %v5871
    %v5948 = vunpack.c.l.b16 %v5872
    %v5949 = vunpack.c.h.b16 %v5872
    %v5950 = vunpack.c.l.b16 %v5873
    %v5951 = vunpack.c.h.b16 %v5873
    %v5952 = vunpack.c.l.b16 %v5874
    %v5953 = vunpack.c.h.b16 %v5874
    %v5954 = vunpack.c.l.b16 %v5875
    %v5955 = vunpack.c.h.b16 %v5875
    %v5956 = vunpack.c.l.b16 %v5876
    %v5957 = vunpack.c.h.b16 %v5876
    %v5958 = vunpack.c.l.b16 %v5877
    %v5959 = vunpack.c.h.b16 %v5877
    %v5960 = vunpack.c.l.b16 %v5878
    %v5961 = vunpack.c.h.b16 %v5878
    %v5962 = vunpack.c.l.b16 %v5879
    %v5963 = vunpack.c.h.b16 %v5879
    %v5964 = vunpack.c.l.b16 %v5880
    %v5965 = vunpack.c.h.b16 %v5880
    %v5966 = vunpack.c.l.b16 %v5881
    %v5967 = vunpack.c.h.b16 %v5881
    %v5968 = vunpack.c.l.b16 %v5882
    %v5969 = vunpack.c.h.b16 %v5882
    %v5970 = vunpack.c.l.b16 %v5883
    %v5971 = vunpack.c.h.b16 %v5883
    %v5972 = vunpack.c.l.b16 %v5884
    %v5973 = vunpack.c.h.b16 %v5884
    %v5974 = vunpack.c.l.b16 %v5885
    %v5975 = vunpack.c.h.b16 %v5885
    %v5976 = vunpack.c.l.b16 %v5886
    %v5977 = vunpack.c.h.b16 %v5886
    %v5978 = vunpack.c.l.b16 %v5887
    %v5979 = vunpack.c.h.b16 %v5887
    %v5980 = vunpack.c.l.b16 %v5888
    %v5981 = vunpack.c.h.b16 %v5888
    %v5982 = vunpack.c.l.b16 %v5889
    %v5983 = vunpack.c.h.b16 %v5889
    %v5984 = vunpack.c.l.b16 %v5890
    %v5985 = vunpack.c.h.b16 %v5890
    %v5986 = vunpack.c.l.b16 %v5891
    %v5987 = vunpack.c.h.b16 %v5891
    %v5988 = vunpack.c.l.b16 %v5892
    %v5989 = vunpack.c.h.b16 %v5892
    %v5990 = vunpack.c.l.b16 %v5893
    %v5991 = vunpack.c.h.b16 %v5893
    %v5992 = vunpack.c.l.b16 %v5894
    %v5993 = vunpack.c.h.b16 %v5894
    %v5994 = vunpack.c.l.b16 %v5895
    %v5995 = vunpack.c.h.b16 %v5895
    %v5996 = vunpack.c.l.b16 %v5896
    %v5997 = vunpack.c.h.b16 %v5896
    %v5998 = vunpack.c.l.b16 %v5897
    %v5999 = vunpack.c.h.b16 %v5897
    %v6000 = vpack.c.b16 %v5938, %v5936
    %v6001 = vpack.c.b16 %v5939, %v5937
    %v6002 = vpack.c.b16 %v5942, %v5940
    %v6003 = vpack.c.b16 %v5943, %v5941
    %v6004 = vpack.c.b16 %v5946, %v5944
    %v6005 = vpack.c.b16 %v5947, %v5945
    %v6006 = vpack.c.b16 %v5950, %v5948
    %v6007 = vpack.c.b16 %v5951, %v5949
    %v6008 = vpack.c.b16 %v5954, %v5952
    %v6009 = vpack.c.b16 %v5955, %v5953
    %v6010 = vpack.c.b16 %v5958, %v5956
    %v6011 = vpack.c.b16 %v5959, %v5957
    %v6012 = vpack.c.b16 %v5962, %v5960
    %v6013 = vpack.c.b16 %v5963, %v5961
    %v6014 = vpack.c.b16 %v5966, %v5964
    %v6015 = vpack.c.b16 %v5967, %v5965
    %v6016 = vpack.c.b16 %v5970, %v5968
    %v6017 = vpack.c.b16 %v5971, %v5969
    %v6018 = vpack.c.b16 %v5974, %v5972
    %v6019 = vpack.c.b16 %v5975, %v5973
    %v6020 = vpack.c.b16 %v5978, %v5976
    %v6021 = vpack.c.b16 %v5979, %v5977
    %v6022 = vpack.c.b16 %v5982, %v5980
    %v6023 = vpack.c.b16 %v5983, %v5981
    %v6024 = vpack.c.b16 %v5986, %v5984
    %v6025 = vpack.c.b16 %v5987, %v5985
    %v6026 = vpack.c.b16 %v5990, %v5988
    %v6027 = vpack.c.b16 %v5991, %v5989
    %v6028 = vpack.c.b16 %v5994, %v5992
    %v6029 = vpack.c.b16 %v5995, %v5993
    %v6030 = vpack.c.b16 %v5998, %v5996
    %v6031 = vpack.c.b16 %v5999, %v5997
    %6064 = vmatpush.bf16.msra.mxu0 %v6014
    %6065 = vmatpush.bf16.msra.mxu0 %v6012
    %6066 = vmatpush.bf16.msra.mxu0 %v6010
    %6067 = vmatpush.bf16.msra.mxu0 %v6008
    %6068 = vmatpush.bf16.msra.mxu0 %v6006
    %6069 = vmatpush.bf16.msra.mxu0 %v6004
    %6070 = vmatpush.bf16.msra.mxu0 %v6002
    %6071 = vmatpush.bf16.msra.mxu0 %v6000
    %6072 = vmatmul.bf16.gmra.mxu0 %v5850
    %v6073 = vpop.f32.mrf.mxu0
    %v6074 = vadd.f32 %v5900, %v6073
    %v6075 = vpop.f32.mrf.mxu0
    %v6076 = vadd.f32 %v5900, %v6075
    %6077 = vmatmul.bf16.gmra.mxu0 %v5852
    %v6078 = vpop.f32.mrf.mxu0
    %v6079 = vadd.f32 %v5900, %v6078
    %v6080 = vpop.f32.mrf.mxu0
    %v6081 = vadd.f32 %v5900, %v6080
    %6082 = vmatmul.bf16.gmra.mxu0 %v5854
    %v6083 = vpop.f32.mrf.mxu0
    %v6084 = vadd.f32 %v5900, %v6083
    %v6085 = vpop.f32.mrf.mxu0
    %v6086 = vadd.f32 %v5900, %v6085
    %6087 = vmatmul.bf16.gmra.mxu0 %v5856
    %v6088 = vpop.f32.mrf.mxu0
    %v6089 = vadd.f32 %v5900, %v6088
    %v6090 = vpop.f32.mrf.mxu0
    %v6091 = vadd.f32 %v5900, %v6090
    %6092 = vmatmul.bf16.gmra.mxu0 %v5858
    %v6093 = vpop.f32.mrf.mxu0
    %v6094 = vadd.f32 %v5900, %v6093
    %v6095 = vpop.f32.mrf.mxu0
    %v6096 = vadd.f32 %v5900, %v6095
    %6097 = vmatmul.bf16.gmra.mxu0 %v5860
    %v6098 = vpop.f32.mrf.mxu0
    %v6099 = vadd.f32 %v5900, %v6098
    %v6100 = vpop.f32.mrf.mxu0
    %v6101 = vadd.f32 %v5900, %v6100
    %6102 = vmatmul.bf16.gmra.mxu0 %v5862
    %v6103 = vpop.f32.mrf.mxu0
    %v6104 = vadd.f32 %v5900, %v6103
    %v6105 = vpop.f32.mrf.mxu0
    %v6106 = vadd.f32 %v5900, %v6105
    %6107 = vmatmul.bf16.gmra.mxu0 %v5864
    %v6108 = vpop.f32.mrf.mxu0
    %v6109 = vadd.f32 %v5900, %v6108
    %v6110 = vpop.f32.mrf.mxu0
    %v6111 = vadd.f32 %v5900, %v6110
    %6112 = vdwg.mxu0
    %6113 = vmatpush.bf16.msra.mxu0 %v6030
    %6114 = vmatpush.bf16.msra.mxu0 %v6028
    %6115 = vmatpush.bf16.msra.mxu0 %v6026
    %6116 = vmatpush.bf16.msra.mxu0 %v6024
    %6117 = vmatpush.bf16.msra.mxu0 %v6022
    %6118 = vmatpush.bf16.msra.mxu0 %v6020
    %6119 = vmatpush.bf16.msra.mxu0 %v6018
    %6120 = vmatpush.bf16.msra.mxu0 %v6016
    %6121 = vmatmul.bf16.gmra.mxu0 %v5851
    %v6122 = vpop.f32.mrf.mxu0
    %v6123 = vadd.f32 %v6074, %v6122
    %v6124 = vpop.f32.mrf.mxu0
    %v6125 = vadd.f32 %v6076, %v6124
    %6126 = vmatmul.bf16.gmra.mxu0 %v5853
    %v6127 = vpop.f32.mrf.mxu0
    %v6128 = vadd.f32 %v6079, %v6127
    %v6129 = vpop.f32.mrf.mxu0
    %v6130 = vadd.f32 %v6081, %v6129
    %6131 = vmatmul.bf16.gmra.mxu0 %v5855
    %v6132 = vpop.f32.mrf.mxu0
    %v6133 = vadd.f32 %v6084, %v6132
    %v6134 = vpop.f32.mrf.mxu0
    %v6135 = vadd.f32 %v6086, %v6134
    %6136 = vmatmul.bf16.gmra.mxu0 %v5857
    %v6137 = vpop.f32.mrf.mxu0
    %v6138 = vadd.f32 %v6089, %v6137
    %v6139 = vpop.f32.mrf.mxu0
    %v6140 = vadd.f32 %v6091, %v6139
    %6141 = vmatmul.bf16.gmra.mxu0 %v5859
    %v6142 = vpop.f32.mrf.mxu0
    %v6143 = vadd.f32 %v6094, %v6142
    %v6144 = vpop.f32.mrf.mxu0
    %v6145 = vadd.f32 %v6096, %v6144
    %6146 = vmatmul.bf16.gmra.mxu0 %v5861
    %v6147 = vpop.f32.mrf.mxu0
    %v6148 = vadd.f32 %v6099, %v6147
    %v6149 = vpop.f32.mrf.mxu0
    %v6150 = vadd.f32 %v6101, %v6149
    %6151 = vmatmul.bf16.gmra.mxu0 %v5863
    %v6152 = vpop.f32.mrf.mxu0
    %v6153 = vadd.f32 %v6104, %v6152
    %v6154 = vpop.f32.mrf.mxu0
    %v6155 = vadd.f32 %v6106, %v6154
    %6156 = vmatmul.bf16.gmra.mxu0 %v5865
    %v6157 = vpop.f32.mrf.mxu0
    %v6158 = vadd.f32 %v6109, %v6157
    %v6159 = vpop.f32.mrf.mxu0
    %v6160 = vadd.f32 %v6111, %v6159
    %6161 = vdwg.mxu0
    %6162 = vmatpush.bf16.msra.mxu0 %v6015
    %6163 = vmatpush.bf16.msra.mxu0 %v6013
    %6164 = vmatpush.bf16.msra.mxu0 %v6011
    %6165 = vmatpush.bf16.msra.mxu0 %v6009
    %6166 = vmatpush.bf16.msra.mxu0 %v6007
    %6167 = vmatpush.bf16.msra.mxu0 %v6005
    %6168 = vmatpush.bf16.msra.mxu0 %v6003
    %6169 = vmatpush.bf16.msra.mxu0 %v6001
    %6170 = vmatmul.bf16.gmra.mxu0 %v5850
    %v6171 = vpop.f32.mrf.mxu0
    %v6172 = vadd.f32 %v5901, %v6171
    %v6173 = vpop.f32.mrf.mxu0
    %v6174 = vadd.f32 %v5901, %v6173
    %6175 = vmatmul.bf16.gmra.mxu0 %v5852
    %v6176 = vpop.f32.mrf.mxu0
    %v6177 = vadd.f32 %v5901, %v6176
    %v6178 = vpop.f32.mrf.mxu0
    %v6179 = vadd.f32 %v5901, %v6178
    %6180 = vmatmul.bf16.gmra.mxu0 %v5854
    %v6181 = vpop.f32.mrf.mxu0
    %v6182 = vadd.f32 %v5901, %v6181
    %v6183 = vpop.f32.mrf.mxu0
    %v6184 = vadd.f32 %v5901, %v6183
    %6185 = vmatmul.bf16.gmra.mxu0 %v5856
    %v6186 = vpop.f32.mrf.mxu0
    %v6187 = vadd.f32 %v5901, %v6186
    %v6188 = vpop.f32.mrf.mxu0
    %v6189 = vadd.f32 %v5901, %v6188
    %6190 = vmatmul.bf16.gmra.mxu0 %v5858
    %v6191 = vpop.f32.mrf.mxu0
    %v6192 = vadd.f32 %v5901, %v6191
    %v6193 = vpop.f32.mrf.mxu0
    %v6194 = vadd.f32 %v5901, %v6193
    %6195 = vmatmul.bf16.gmra.mxu0 %v5860
    %v6196 = vpop.f32.mrf.mxu0
    %v6197 = vadd.f32 %v5901, %v6196
    %v6198 = vpop.f32.mrf.mxu0
    %v6199 = vadd.f32 %v5901, %v6198
    %6200 = vmatmul.bf16.gmra.mxu0 %v5862
    %v6201 = vpop.f32.mrf.mxu0
    %v6202 = vadd.f32 %v5901, %v6201
    %v6203 = vpop.f32.mrf.mxu0
    %v6204 = vadd.f32 %v5901, %v6203
    %6205 = vmatmul.bf16.gmra.mxu0 %v5864
    %v6206 = vpop.f32.mrf.mxu0
    %v6207 = vadd.f32 %v5901, %v6206
    %v6208 = vpop.f32.mrf.mxu0
    %v6209 = vadd.f32 %v5901, %v6208
    %6210 = vdwg.mxu0
    %6211 = vmatpush.bf16.msra.mxu0 %v6031
    %6212 = vmatpush.bf16.msra.mxu0 %v6029
    %6213 = vmatpush.bf16.msra.mxu0 %v6027
    %6214 = vmatpush.bf16.msra.mxu0 %v6025
    %6215 = vmatpush.bf16.msra.mxu0 %v6023
    %6216 = vmatpush.bf16.msra.mxu0 %v6021
    %6217 = vmatpush.bf16.msra.mxu0 %v6019
    %6218 = vmatpush.bf16.msra.mxu0 %v6017
    %6219 = vmatmul.bf16.gmra.mxu0 %v5851
    %v6220 = vpop.f32.mrf.mxu0
    %v6221 = vadd.f32 %v6172, %v6220
    %v6222 = vpop.f32.mrf.mxu0
    %v6223 = vadd.f32 %v6174, %v6222
    %6224 = vmatmul.bf16.gmra.mxu0 %v5853
    %v6225 = vpop.f32.mrf.mxu0
    %v6226 = vadd.f32 %v6177, %v6225
    %v6227 = vpop.f32.mrf.mxu0
    %v6228 = vadd.f32 %v6179, %v6227
    %6229 = vmatmul.bf16.gmra.mxu0 %v5855
    %v6230 = vpop.f32.mrf.mxu0
    %v6231 = vadd.f32 %v6182, %v6230
    %v6232 = vpop.f32.mrf.mxu0
    %v6233 = vadd.f32 %v6184, %v6232
    %6234 = vmatmul.bf16.gmra.mxu0 %v5857
    %v6235 = vpop.f32.mrf.mxu0
    %v6236 = vadd.f32 %v6187, %v6235
    %v6237 = vpop.f32.mrf.mxu0
    %v6238 = vadd.f32 %v6189, %v6237
    %6239 = vmatmul.bf16.gmra.mxu0 %v5859
    %v6240 = vpop.f32.mrf.mxu0
    %v6241 = vadd.f32 %v6192, %v6240
    %v6242 = vpop.f32.mrf.mxu0
    %v6243 = vadd.f32 %v6194, %v6242
    %6244 = vmatmul.bf16.gmra.mxu0 %v5861
    %v6245 = vpop.f32.mrf.mxu0
    %v6246 = vadd.f32 %v6197, %v6245
    %v6247 = vpop.f32.mrf.mxu0
    %v6248 = vadd.f32 %v6199, %v6247
    %6249 = vmatmul.bf16.gmra.mxu0 %v5863
    %v6250 = vpop.f32.mrf.mxu0
    %v6251 = vadd.f32 %v6202, %v6250
    %v6252 = vpop.f32.mrf.mxu0
    %v6253 = vadd.f32 %v6204, %v6252
    %6254 = vmatmul.bf16.gmra.mxu0 %v5865
    %v6255 = vpop.f32.mrf.mxu0
    %v6256 = vadd.f32 %v6207, %v6255
    %v6257 = vpop.f32.mrf.mxu0
    %v6258 = vadd.f32 %v6209, %v6257
    %6259 = vdwg.mxu0
    %v6260 = vadd.f32 %v139, %v6123
    %v6261 = vadd.f32 %v140, %v6221
    %v6262 = vadd.f32 %v141, %v6125
    %v6263 = vadd.f32 %v142, %v6223
    %v6264 = vadd.f32 %v143, %v6128
    %v6265 = vadd.f32 %v144, %v6226
    %v6266 = vadd.f32 %v145, %v6130
    %v6267 = vadd.f32 %v146, %v6228
    %v6268 = vadd.f32 %v147, %v6133
    %v6269 = vadd.f32 %v148, %v6231
    %v6270 = vadd.f32 %v149, %v6135
    %v6271 = vadd.f32 %v150, %v6233
    %v6272 = vadd.f32 %v151, %v6138
    %v6273 = vadd.f32 %v152, %v6236
    %v6274 = vadd.f32 %v153, %v6140
    %v6275 = vadd.f32 %v154, %v6238
    %v6276 = vadd.f32 %v155, %v6143
    %v6277 = vadd.f32 %v156, %v6241
    %v6278 = vadd.f32 %v157, %v6145
    %v6279 = vadd.f32 %v158, %v6243
    %v6280 = vadd.f32 %v159, %v6148
    %v6281 = vadd.f32 %v160, %v6246
    %v6282 = vadd.f32 %v161, %v6150
    %v6283 = vadd.f32 %v162, %v6248
    %v6284 = vadd.f32 %v163, %v6153
    %v6285 = vadd.f32 %v164, %v6251
    %v6286 = vadd.f32 %v165, %v6155
    %v6287 = vadd.f32 %v166, %v6253
    %v6288 = vadd.f32 %v167, %v6158
    %v6289 = vadd.f32 %v168, %v6256
    %v6290 = vadd.f32 %v169, %v6160
    %v6291 = vadd.f32 %v170, %v6258
    %v6292 = vadd.f32 %v6260, %v6261
    %6293 = vadd.xlane.f32.xlu0 %v6292
    %v6294 = vpop.xlane.xlu0 %6293
    %v6295 = vadd.f32 %v6262, %v6263
    %6296 = vadd.xlane.f32.xlu0 %v6295
    %v6297 = vpop.xlane.xlu0 %6296
    %v6298 = vadd.f32 %v6264, %v6265
    %6299 = vadd.xlane.f32.xlu0 %v6298
    %v6300 = vpop.xlane.xlu0 %6299
    %v6301 = vadd.f32 %v6266, %v6267
    %6302 = vadd.xlane.f32.xlu0 %v6301
    %v6303 = vpop.xlane.xlu0 %6302
    %v6304 = vadd.f32 %v6268, %v6269
    %6305 = vadd.xlane.f32.xlu0 %v6304
    %v6306 = vpop.xlane.xlu0 %6305
    %v6307 = vadd.f32 %v6270, %v6271
    %6308 = vadd.xlane.f32.xlu0 %v6307
    %v6309 = vpop.xlane.xlu0 %6308
    %v6310 = vadd.f32 %v6272, %v6273
    %6311 = vadd.xlane.f32.xlu0 %v6310
    %v6312 = vpop.xlane.xlu0 %6311
    %v6313 = vadd.f32 %v6274, %v6275
    %6314 = vadd.xlane.f32.xlu0 %v6313
    %v6315 = vpop.xlane.xlu0 %6314
    %v6316 = vadd.f32 %v6276, %v6277
    %6317 = vadd.xlane.f32.xlu0 %v6316
    %v6318 = vpop.xlane.xlu0 %6317
    %v6319 = vadd.f32 %v6278, %v6279
    %6320 = vadd.xlane.f32.xlu0 %v6319
    %v6321 = vpop.xlane.xlu0 %6320
    %v6322 = vadd.f32 %v6280, %v6281
    %6323 = vadd.xlane.f32.xlu0 %v6322
    %v6324 = vpop.xlane.xlu0 %6323
    %v6325 = vadd.f32 %v6282, %v6283
    %6326 = vadd.xlane.f32.xlu0 %v6325
    %v6327 = vpop.xlane.xlu0 %6326
    %v6328 = vadd.f32 %v6284, %v6285
    %6329 = vadd.xlane.f32.xlu0 %v6328
    %v6330 = vpop.xlane.xlu0 %6329
    %v6331 = vadd.f32 %v6286, %v6287
    %6332 = vadd.xlane.f32.xlu0 %v6331
    %v6333 = vpop.xlane.xlu0 %6332
    %v6334 = vadd.f32 %v6288, %v6289
    %6335 = vadd.xlane.f32.xlu0 %v6334
    %v6336 = vpop.xlane.xlu0 %6335
    %v6337 = vadd.f32 %v6290, %v6291
    %6338 = vadd.xlane.f32.xlu0 %v6337
    %v6339 = vpop.xlane.xlu0 %6338
    %v6340 = vmul.f32 %v6294, %v225
    %v6341 = vmul.f32 %v6297, %v225
    %v6342 = vmul.f32 %v6300, %v225
    %v6343 = vmul.f32 %v6303, %v225
    %v6344 = vmul.f32 %v6306, %v225
    %v6345 = vmul.f32 %v6309, %v225
    %v6346 = vmul.f32 %v6312, %v225
    %v6347 = vmul.f32 %v6315, %v225
    %v6348 = vmul.f32 %v6318, %v225
    %v6349 = vmul.f32 %v6321, %v225
    %v6350 = vmul.f32 %v6324, %v225
    %v6351 = vmul.f32 %v6327, %v225
    %v6352 = vmul.f32 %v6330, %v225
    %v6353 = vmul.f32 %v6333, %v225
    %v6354 = vmul.f32 %v6336, %v225
    %v6355 = vmul.f32 %v6339, %v225
    %v6356 = vsub.f32 %v6260, %v6340
    %v6357 = vsub.f32 %v6261, %v6340
    %v6358 = vsub.f32 %v6262, %v6341
    %v6359 = vsub.f32 %v6263, %v6341
    %v6360 = vsub.f32 %v6264, %v6342
    %v6361 = vsub.f32 %v6265, %v6342
    %v6362 = vsub.f32 %v6266, %v6343
    %v6363 = vsub.f32 %v6267, %v6343
    %v6364 = vsub.f32 %v6268, %v6344
    %v6365 = vsub.f32 %v6269, %v6344
    %v6366 = vsub.f32 %v6270, %v6345
    %v6367 = vsub.f32 %v6271, %v6345
    %v6368 = vsub.f32 %v6272, %v6346
    %v6369 = vsub.f32 %v6273, %v6346
    %v6370 = vsub.f32 %v6274, %v6347
    %v6371 = vsub.f32 %v6275, %v6347
    %v6372 = vsub.f32 %v6276, %v6348
    %v6373 = vsub.f32 %v6277, %v6348
    %v6374 = vsub.f32 %v6278, %v6349
    %v6375 = vsub.f32 %v6279, %v6349
    %v6376 = vsub.f32 %v6280, %v6350
    %v6377 = vsub.f32 %v6281, %v6350
    %v6378 = vsub.f32 %v6282, %v6351
    %v6379 = vsub.f32 %v6283, %v6351
    %v6380 = vsub.f32 %v6284, %v6352
    %v6381 = vsub.f32 %v6285, %v6352
    %v6382 = vsub.f32 %v6286, %v6353
    %v6383 = vsub.f32 %v6287, %v6353
    %v6384 = vsub.f32 %v6288, %v6354
    %v6385 = vsub.f32 %v6289, %v6354
    %v6386 = vsub.f32 %v6290, %v6355
    %v6387 = vsub.f32 %v6291, %v6355
    %v6388 = vmul.f32 %v6356, %v6356
    %v6389 = vmul.f32 %v6357, %v6357
    %v6390 = vmul.f32 %v6358, %v6358
    %v6391 = vmul.f32 %v6359, %v6359
    %v6392 = vmul.f32 %v6360, %v6360
    %v6393 = vmul.f32 %v6361, %v6361
    %v6394 = vmul.f32 %v6362, %v6362
    %v6395 = vmul.f32 %v6363, %v6363
    %v6396 = vmul.f32 %v6364, %v6364
    %v6397 = vmul.f32 %v6365, %v6365
    %v6398 = vmul.f32 %v6366, %v6366
    %v6399 = vmul.f32 %v6367, %v6367
    %v6400 = vmul.f32 %v6368, %v6368
    %v6401 = vmul.f32 %v6369, %v6369
    %v6402 = vmul.f32 %v6370, %v6370
    %v6403 = vmul.f32 %v6371, %v6371
    %v6404 = vmul.f32 %v6372, %v6372
    %v6405 = vmul.f32 %v6373, %v6373
    %v6406 = vmul.f32 %v6374, %v6374
    %v6407 = vmul.f32 %v6375, %v6375
    %v6408 = vmul.f32 %v6376, %v6376
    %v6409 = vmul.f32 %v6377, %v6377
    %v6410 = vmul.f32 %v6378, %v6378
    %v6411 = vmul.f32 %v6379, %v6379
    %v6412 = vmul.f32 %v6380, %v6380
    %v6413 = vmul.f32 %v6381, %v6381
    %v6414 = vmul.f32 %v6382, %v6382
    %v6415 = vmul.f32 %v6383, %v6383
    %v6416 = vmul.f32 %v6384, %v6384
    %v6417 = vmul.f32 %v6385, %v6385
    %v6418 = vmul.f32 %v6386, %v6386
    %v6419 = vmul.f32 %v6387, %v6387
    %v6420 = vadd.f32 %v6388, %v6389
    %6421 = vadd.xlane.f32.xlu0 %v6420
    %v6422 = vpop.xlane.xlu0 %6421
    %v6423 = vadd.f32 %v6390, %v6391
    %6424 = vadd.xlane.f32.xlu0 %v6423
    %v6425 = vpop.xlane.xlu0 %6424
    %v6426 = vadd.f32 %v6392, %v6393
    %6427 = vadd.xlane.f32.xlu0 %v6426
    %v6428 = vpop.xlane.xlu0 %6427
    %v6429 = vadd.f32 %v6394, %v6395
    %6430 = vadd.xlane.f32.xlu0 %v6429
    %v6431 = vpop.xlane.xlu0 %6430
    %v6432 = vadd.f32 %v6396, %v6397
    %6433 = vadd.xlane.f32.xlu0 %v6432
    %v6434 = vpop.xlane.xlu0 %6433
    %v6435 = vadd.f32 %v6398, %v6399
    %6436 = vadd.xlane.f32.xlu0 %v6435
    %v6437 = vpop.xlane.xlu0 %6436
    %v6438 = vadd.f32 %v6400, %v6401
    %6439 = vadd.xlane.f32.xlu0 %v6438
    %v6440 = vpop.xlane.xlu0 %6439
    %v6441 = vadd.f32 %v6402, %v6403
    %6442 = vadd.xlane.f32.xlu0 %v6441
    %v6443 = vpop.xlane.xlu0 %6442
    %v6444 = vadd.f32 %v6404, %v6405
    %6445 = vadd.xlane.f32.xlu0 %v6444
    %v6446 = vpop.xlane.xlu0 %6445
    %v6447 = vadd.f32 %v6406, %v6407
    %6448 = vadd.xlane.f32.xlu0 %v6447
    %v6449 = vpop.xlane.xlu0 %6448
    %v6450 = vadd.f32 %v6408, %v6409
    %6451 = vadd.xlane.f32.xlu0 %v6450
    %v6452 = vpop.xlane.xlu0 %6451
    %v6453 = vadd.f32 %v6410, %v6411
    %6454 = vadd.xlane.f32.xlu0 %v6453
    %v6455 = vpop.xlane.xlu0 %6454
    %v6456 = vadd.f32 %v6412, %v6413
    %6457 = vadd.xlane.f32.xlu0 %v6456
    %v6458 = vpop.xlane.xlu0 %6457
    %v6459 = vadd.f32 %v6414, %v6415
    %6460 = vadd.xlane.f32.xlu0 %v6459
    %v6461 = vpop.xlane.xlu0 %6460
    %v6462 = vadd.f32 %v6416, %v6417
    %6463 = vadd.xlane.f32.xlu0 %v6462
    %v6464 = vpop.xlane.xlu0 %6463
    %v6465 = vadd.f32 %v6418, %v6419
    %6466 = vadd.xlane.f32.xlu0 %v6465
    %v6467 = vpop.xlane.xlu0 %6466
    %v6468 = vmul.f32 %v6422, %v225
    %v6469 = vmul.f32 %v6425, %v225
    %v6470 = vmul.f32 %v6428, %v225
    %v6471 = vmul.f32 %v6431, %v225
    %v6472 = vmul.f32 %v6434, %v225
    %v6473 = vmul.f32 %v6437, %v225
    %v6474 = vmul.f32 %v6440, %v225
    %v6475 = vmul.f32 %v6443, %v225
    %v6476 = vmul.f32 %v6446, %v225
    %v6477 = vmul.f32 %v6449, %v225
    %v6478 = vmul.f32 %v6452, %v225
    %v6479 = vmul.f32 %v6455, %v225
    %v6480 = vmul.f32 %v6458, %v225
    %v6481 = vmul.f32 %v6461, %v225
    %v6482 = vmul.f32 %v6464, %v225
    %v6483 = vmul.f32 %v6467, %v225
    %v6484 = vadd.f32 %v6468, 1e-05
    %v6485 = vadd.f32 %v6469, 1e-05
    %v6486 = vadd.f32 %v6470, 1e-05
    %v6487 = vadd.f32 %v6471, 1e-05
    %v6488 = vadd.f32 %v6472, 1e-05
    %v6489 = vadd.f32 %v6473, 1e-05
    %v6490 = vadd.f32 %v6474, 1e-05
    %v6491 = vadd.f32 %v6475, 1e-05
    %v6492 = vadd.f32 %v6476, 1e-05
    %v6493 = vadd.f32 %v6477, 1e-05
    %v6494 = vadd.f32 %v6478, 1e-05
    %v6495 = vadd.f32 %v6479, 1e-05
    %v6496 = vadd.f32 %v6480, 1e-05
    %v6497 = vadd.f32 %v6481, 1e-05
    %v6498 = vadd.f32 %v6482, 1e-05
    %v6499 = vadd.f32 %v6483, 1e-05
    %v6500 = vrsqrt.pop %v6484
    %v6501 = vmul.f32 %v6500, %v6484
    %v6502 = vmul.f32 %v6501, %v6500
    %v6503 = vmul.f32 0.5, %v6502
    %v6504 = vsub.f32 1.5, %v6503
    %v6505 = vmul.f32 %v6500, %v6504
    %vm6506 = vweird.f32 %v6484
    %vm6507 = vweird.f32 %v6500
    %vm6508 = vmor %vm6506, %vm6507
    %v6509 = vsel %vm6508, %v6500, %v6505
    %v6510 = vrsqrt.pop %v6485
    %v6511 = vmul.f32 %v6510, %v6485
    %v6512 = vmul.f32 %v6511, %v6510
    %v6513 = vmul.f32 0.5, %v6512
    %v6514 = vsub.f32 1.5, %v6513
    %v6515 = vmul.f32 %v6510, %v6514
    %vm6516 = vweird.f32 %v6485
    %vm6517 = vweird.f32 %v6510
    %vm6518 = vmor %vm6516, %vm6517
    %v6519 = vsel %vm6518, %v6510, %v6515
    %v6520 = vrsqrt.pop %v6486
    %v6521 = vmul.f32 %v6520, %v6486
    %v6522 = vmul.f32 %v6521, %v6520
    %v6523 = vmul.f32 0.5, %v6522
    %v6524 = vsub.f32 1.5, %v6523
    %v6525 = vmul.f32 %v6520, %v6524
    %vm6526 = vweird.f32 %v6486
    %vm6527 = vweird.f32 %v6520
    %vm6528 = vmor %vm6526, %vm6527
    %v6529 = vsel %vm6528, %v6520, %v6525
    %v6530 = vrsqrt.pop %v6487
    %v6531 = vmul.f32 %v6530, %v6487
    %v6532 = vmul.f32 %v6531, %v6530
    %v6533 = vmul.f32 0.5, %v6532
    %v6534 = vsub.f32 1.5, %v6533
    %v6535 = vmul.f32 %v6530, %v6534
    %vm6536 = vweird.f32 %v6487
    %vm6537 = vweird.f32 %v6530
    %vm6538 = vmor %vm6536, %vm6537
    %v6539 = vsel %vm6538, %v6530, %v6535
    %v6540 = vrsqrt.pop %v6488
    %v6541 = vmul.f32 %v6540, %v6488
    %v6542 = vmul.f32 %v6541, %v6540
    %v6543 = vmul.f32 0.5, %v6542
    %v6544 = vsub.f32 1.5, %v6543
    %v6545 = vmul.f32 %v6540, %v6544
    %vm6546 = vweird.f32 %v6488
    %vm6547 = vweird.f32 %v6540
    %vm6548 = vmor %vm6546, %vm6547
    %v6549 = vsel %vm6548, %v6540, %v6545
    %v6550 = vrsqrt.pop %v6489
    %v6551 = vmul.f32 %v6550, %v6489
    %v6552 = vmul.f32 %v6551, %v6550
    %v6553 = vmul.f32 0.5, %v6552
    %v6554 = vsub.f32 1.5, %v6553
    %v6555 = vmul.f32 %v6550, %v6554
    %vm6556 = vweird.f32 %v6489
    %vm6557 = vweird.f32 %v6550
    %vm6558 = vmor %vm6556, %vm6557
    %v6559 = vsel %vm6558, %v6550, %v6555
    %v6560 = vrsqrt.pop %v6490
    %v6561 = vmul.f32 %v6560, %v6490
    %v6562 = vmul.f32 %v6561, %v6560
    %v6563 = vmul.f32 0.5, %v6562
    %v6564 = vsub.f32 1.5, %v6563
    %v6565 = vmul.f32 %v6560, %v6564
    %vm6566 = vweird.f32 %v6490
    %vm6567 = vweird.f32 %v6560
    %vm6568 = vmor %vm6566, %vm6567
    %v6569 = vsel %vm6568, %v6560, %v6565
    %v6570 = vrsqrt.pop %v6491
    %v6571 = vmul.f32 %v6570, %v6491
    %v6572 = vmul.f32 %v6571, %v6570
    %v6573 = vmul.f32 0.5, %v6572
    %v6574 = vsub.f32 1.5, %v6573
    %v6575 = vmul.f32 %v6570, %v6574
    %vm6576 = vweird.f32 %v6491
    %vm6577 = vweird.f32 %v6570
    %vm6578 = vmor %vm6576, %vm6577
    %v6579 = vsel %vm6578, %v6570, %v6575
    %v6580 = vrsqrt.pop %v6492
    %v6581 = vmul.f32 %v6580, %v6492
    %v6582 = vmul.f32 %v6581, %v6580
    %v6583 = vmul.f32 0.5, %v6582
    %v6584 = vsub.f32 1.5, %v6583
    %v6585 = vmul.f32 %v6580, %v6584
    %vm6586 = vweird.f32 %v6492
    %vm6587 = vweird.f32 %v6580
    %vm6588 = vmor %vm6586, %vm6587
    %v6589 = vsel %vm6588, %v6580, %v6585
    %v6590 = vrsqrt.pop %v6493
    %v6591 = vmul.f32 %v6590, %v6493
    %v6592 = vmul.f32 %v6591, %v6590
    %v6593 = vmul.f32 0.5, %v6592
    %v6594 = vsub.f32 1.5, %v6593
    %v6595 = vmul.f32 %v6590, %v6594
    %vm6596 = vweird.f32 %v6493
    %vm6597 = vweird.f32 %v6590
    %vm6598 = vmor %vm6596, %vm6597
    %v6599 = vsel %vm6598, %v6590, %v6595
    %v6600 = vrsqrt.pop %v6494
    %v6601 = vmul.f32 %v6600, %v6494
    %v6602 = vmul.f32 %v6601, %v6600
    %v6603 = vmul.f32 0.5, %v6602
    %v6604 = vsub.f32 1.5, %v6603
    %v6605 = vmul.f32 %v6600, %v6604
    %vm6606 = vweird.f32 %v6494
    %vm6607 = vweird.f32 %v6600
    %vm6608 = vmor %vm6606, %vm6607
    %v6609 = vsel %vm6608, %v6600, %v6605
    %v6610 = vrsqrt.pop %v6495
    %v6611 = vmul.f32 %v6610, %v6495
    %v6612 = vmul.f32 %v6611, %v6610
    %v6613 = vmul.f32 0.5, %v6612
    %v6614 = vsub.f32 1.5, %v6613
    %v6615 = vmul.f32 %v6610, %v6614
    %vm6616 = vweird.f32 %v6495
    %vm6617 = vweird.f32 %v6610
    %vm6618 = vmor %vm6616, %vm6617
    %v6619 = vsel %vm6618, %v6610, %v6615
    %v6620 = vrsqrt.pop %v6496
    %v6621 = vmul.f32 %v6620, %v6496
    %v6622 = vmul.f32 %v6621, %v6620
    %v6623 = vmul.f32 0.5, %v6622
    %v6624 = vsub.f32 1.5, %v6623
    %v6625 = vmul.f32 %v6620, %v6624
    %vm6626 = vweird.f32 %v6496
    %vm6627 = vweird.f32 %v6620
    %vm6628 = vmor %vm6626, %vm6627
    %v6629 = vsel %vm6628, %v6620, %v6625
    %v6630 = vrsqrt.pop %v6497
    %v6631 = vmul.f32 %v6630, %v6497
    %v6632 = vmul.f32 %v6631, %v6630
    %v6633 = vmul.f32 0.5, %v6632
    %v6634 = vsub.f32 1.5, %v6633
    %v6635 = vmul.f32 %v6630, %v6634
    %vm6636 = vweird.f32 %v6497
    %vm6637 = vweird.f32 %v6630
    %vm6638 = vmor %vm6636, %vm6637
    %v6639 = vsel %vm6638, %v6630, %v6635
    %v6640 = vrsqrt.pop %v6498
    %v6641 = vmul.f32 %v6640, %v6498
    %v6642 = vmul.f32 %v6641, %v6640
    %v6643 = vmul.f32 0.5, %v6642
    %v6644 = vsub.f32 1.5, %v6643
    %v6645 = vmul.f32 %v6640, %v6644
    %vm6646 = vweird.f32 %v6498
    %vm6647 = vweird.f32 %v6640
    %vm6648 = vmor %vm6646, %vm6647
    %v6649 = vsel %vm6648, %v6640, %v6645
    %v6650 = vrsqrt.pop %v6499
    %v6651 = vmul.f32 %v6650, %v6499
    %v6652 = vmul.f32 %v6651, %v6650
    %v6653 = vmul.f32 0.5, %v6652
    %v6654 = vsub.f32 1.5, %v6653
    %v6655 = vmul.f32 %v6650, %v6654
    %vm6656 = vweird.f32 %v6499
    %vm6657 = vweird.f32 %v6650
    %vm6658 = vmor %vm6656, %vm6657
    %v6659 = vsel %vm6658, %v6650, %v6655
    %v6660 = vmul.f32 %v6356, %v6509
    %v6661 = vmul.f32 %v6357, %v6509
    %v6662 = vmul.f32 %v6358, %v6519
    %v6663 = vmul.f32 %v6359, %v6519
    %v6664 = vmul.f32 %v6360, %v6529
    %v6665 = vmul.f32 %v6361, %v6529
    %v6666 = vmul.f32 %v6362, %v6539
    %v6667 = vmul.f32 %v6363, %v6539
    %v6668 = vmul.f32 %v6364, %v6549
    %v6669 = vmul.f32 %v6365, %v6549
    %v6670 = vmul.f32 %v6366, %v6559
    %v6671 = vmul.f32 %v6367, %v6559
    %v6672 = vmul.f32 %v6368, %v6569
    %v6673 = vmul.f32 %v6369, %v6569
    %v6674 = vmul.f32 %v6370, %v6579
    %v6675 = vmul.f32 %v6371, %v6579
    %v6676 = vmul.f32 %v6372, %v6589
    %v6677 = vmul.f32 %v6373, %v6589
    %v6678 = vmul.f32 %v6374, %v6599
    %v6679 = vmul.f32 %v6375, %v6599
    %v6680 = vmul.f32 %v6376, %v6609
    %v6681 = vmul.f32 %v6377, %v6609
    %v6682 = vmul.f32 %v6378, %v6619
    %v6683 = vmul.f32 %v6379, %v6619
    %v6684 = vmul.f32 %v6380, %v6629
    %v6685 = vmul.f32 %v6381, %v6629
    %v6686 = vmul.f32 %v6382, %v6639
    %v6687 = vmul.f32 %v6383, %v6639
    %v6688 = vmul.f32 %v6384, %v6649
    %v6689 = vmul.f32 %v6385, %v6649
    %v6690 = vmul.f32 %v6386, %v6659
    %v6691 = vmul.f32 %v6387, %v6659
    %v6692 = vpack.c.bf16 %v6662, %v6660
    %v6693 = vpack.c.bf16 %v6663, %v6661
    %v6694 = vpack.c.bf16 %v6666, %v6664
    %v6695 = vpack.c.bf16 %v6667, %v6665
    %v6696 = vpack.c.bf16 %v6670, %v6668
    %v6697 = vpack.c.bf16 %v6671, %v6669
    %v6698 = vpack.c.bf16 %v6674, %v6672
    %v6699 = vpack.c.bf16 %v6675, %v6673
    %v6700 = vpack.c.bf16 %v6678, %v6676
    %v6701 = vpack.c.bf16 %v6679, %v6677
    %v6702 = vpack.c.bf16 %v6682, %v6680
    %v6703 = vpack.c.bf16 %v6683, %v6681
    %v6704 = vpack.c.bf16 %v6686, %v6684
    %v6705 = vpack.c.bf16 %v6687, %v6685
    %v6706 = vpack.c.bf16 %v6690, %v6688
    %v6707 = vpack.c.bf16 %v6691, %v6689
    %v6708 = vld [vmem:[#allocation10] sm:$0xff]
    %v6709 = vld [vmem:[#allocation10 + $0x8] sm:$0xff]
    %v6710 = vld [vmem:[#allocation10 + $0x10] sm:$0xff]
    %v6711 = vld [vmem:[#allocation10 + $0x18] sm:$0xff]
    %v6712 = vld [vmem:[#allocation10 + $0x20] sm:$0xff]
    %v6713 = vld [vmem:[#allocation10 + $0x28] sm:$0xff]
    %v6714 = vld [vmem:[#allocation10 + $0x30] sm:$0xff]
    %v6715 = vld [vmem:[#allocation10 + $0x38] sm:$0xff]
    %v6716 = vld [vmem:[#allocation10 + $0x40] sm:$0xff]
    %v6717 = vld [vmem:[#allocation10 + $0x48] sm:$0xff]
    %v6718 = vld [vmem:[#allocation10 + $0x50] sm:$0xff]
    %v6719 = vld [vmem:[#allocation10 + $0x58] sm:$0xff]
    %v6720 = vld [vmem:[#allocation10 + $0x60] sm:$0xff]
    %v6721 = vld [vmem:[#allocation10 + $0x68] sm:$0xff]
    %v6722 = vld [vmem:[#allocation10 + $0x70] sm:$0xff]
    %v6723 = vld [vmem:[#allocation10 + $0x78] sm:$0xff]
    %v6724 = vld [vmem:[#allocation10 + $0x80] sm:$0xff]
    %v6725 = vld [vmem:[#allocation10 + $0x88] sm:$0xff]
    %v6726 = vld [vmem:[#allocation10 + $0x90] sm:$0xff]
    %v6727 = vld [vmem:[#allocation10 + $0x98] sm:$0xff]
    %v6728 = vld [vmem:[#allocation10 + $0xa0] sm:$0xff]
    %v6729 = vld [vmem:[#allocation10 + $0xa8] sm:$0xff]
    %v6730 = vld [vmem:[#allocation10 + $0xb0] sm:$0xff]
    %v6731 = vld [vmem:[#allocation10 + $0xb8] sm:$0xff]
    %v6732 = vld [vmem:[#allocation10 + $0xc0] sm:$0xff]
    %v6733 = vld [vmem:[#allocation10 + $0xc8] sm:$0xff]
    %v6734 = vld [vmem:[#allocation10 + $0xd0] sm:$0xff]
    %v6735 = vld [vmem:[#allocation10 + $0xd8] sm:$0xff]
    %v6736 = vld [vmem:[#allocation10 + $0xe0] sm:$0xff]
    %v6737 = vld [vmem:[#allocation10 + $0xe8] sm:$0xff]
    %v6738 = vld [vmem:[#allocation10 + $0xf0] sm:$0xff]
    %v6739 = vld [vmem:[#allocation10 + $0xf8] sm:$0xff]
    %v6740 = vld [vmem:[#allocation10 + $0x100] sm:$0xff]
    %v6741 = vld [vmem:[#allocation10 + $0x108] sm:$0xff]
    %v6742 = vld [vmem:[#allocation10 + $0x110] sm:$0xff]
    %v6743 = vld [vmem:[#allocation10 + $0x118] sm:$0xff]
    %v6744 = vld [vmem:[#allocation10 + $0x120] sm:$0xff]
    %v6745 = vld [vmem:[#allocation10 + $0x128] sm:$0xff]
    %v6746 = vld [vmem:[#allocation10 + $0x130] sm:$0xff]
    %v6747 = vld [vmem:[#allocation10 + $0x138] sm:$0xff]
    %v6748 = vld [vmem:[#allocation10 + $0x140] sm:$0xff]
    %v6749 = vld [vmem:[#allocation10 + $0x148] sm:$0xff]
    %v6750 = vld [vmem:[#allocation10 + $0x150] sm:$0xff]
    %v6751 = vld [vmem:[#allocation10 + $0x158] sm:$0xff]
    %v6752 = vld [vmem:[#allocation10 + $0x160] sm:$0xff]
    %v6753 = vld [vmem:[#allocation10 + $0x168] sm:$0xff]
    %v6754 = vld [vmem:[#allocation10 + $0x170] sm:$0xff]
    %v6755 = vld [vmem:[#allocation10 + $0x178] sm:$0xff]
    %v6756 = vld [vmem:[#allocation10 + $0x180] sm:$0xff]
    %v6757 = vld [vmem:[#allocation10 + $0x188] sm:$0xff]
    %v6758 = vld [vmem:[#allocation10 + $0x190] sm:$0xff]
    %v6759 = vld [vmem:[#allocation10 + $0x198] sm:$0xff]
    %v6760 = vld [vmem:[#allocation10 + $0x1a0] sm:$0xff]
    %v6761 = vld [vmem:[#allocation10 + $0x1a8] sm:$0xff]
    %v6762 = vld [vmem:[#allocation10 + $0x1b0] sm:$0xff]
    %v6763 = vld [vmem:[#allocation10 + $0x1b8] sm:$0xff]
    %v6764 = vld [vmem:[#allocation10 + $0x1c0] sm:$0xff]
    %v6765 = vld [vmem:[#allocation10 + $0x1c8] sm:$0xff]
    %v6766 = vld [vmem:[#allocation10 + $0x1d0] sm:$0xff]
    %v6767 = vld [vmem:[#allocation10 + $0x1d8] sm:$0xff]
    %v6768 = vld [vmem:[#allocation10 + $0x1e0] sm:$0xff]
    %v6769 = vld [vmem:[#allocation10 + $0x1e8] sm:$0xff]
    %v6770 = vld [vmem:[#allocation10 + $0x1f0] sm:$0xff]
    %v6771 = vld [vmem:[#allocation10 + $0x1f8] sm:$0xff]
    %v6772 = vld [vmem:[#allocation10 + $0x200] sm:$0xff]
    %v6773 = vld [vmem:[#allocation10 + $0x208] sm:$0xff]
    %v6774 = vld [vmem:[#allocation10 + $0x210] sm:$0xff]
    %v6775 = vld [vmem:[#allocation10 + $0x218] sm:$0xff]
    %v6776 = vld [vmem:[#allocation10 + $0x220] sm:$0xff]
    %v6777 = vld [vmem:[#allocation10 + $0x228] sm:$0xff]
    %v6778 = vld [vmem:[#allocation10 + $0x230] sm:$0xff]
    %v6779 = vld [vmem:[#allocation10 + $0x238] sm:$0xff]
    %v6780 = vld [vmem:[#allocation10 + $0x240] sm:$0xff]
    %v6781 = vld [vmem:[#allocation10 + $0x248] sm:$0xff]
    %v6782 = vld [vmem:[#allocation10 + $0x250] sm:$0xff]
    %v6783 = vld [vmem:[#allocation10 + $0x258] sm:$0xff]
    %v6784 = vld [vmem:[#allocation10 + $0x260] sm:$0xff]
    %v6785 = vld [vmem:[#allocation10 + $0x268] sm:$0xff]
    %v6786 = vld [vmem:[#allocation10 + $0x270] sm:$0xff]
    %v6787 = vld [vmem:[#allocation10 + $0x278] sm:$0xff]
    %v6788 = vld [vmem:[#allocation10 + $0x280] sm:$0xff]
    %v6789 = vld [vmem:[#allocation10 + $0x288] sm:$0xff]
    %v6790 = vld [vmem:[#allocation10 + $0x290] sm:$0xff]
    %v6791 = vld [vmem:[#allocation10 + $0x298] sm:$0xff]
    %v6792 = vld [vmem:[#allocation10 + $0x2a0] sm:$0xff]
    %v6793 = vld [vmem:[#allocation10 + $0x2a8] sm:$0xff]
    %v6794 = vld [vmem:[#allocation10 + $0x2b0] sm:$0xff]
    %v6795 = vld [vmem:[#allocation10 + $0x2b8] sm:$0xff]
    %v6796 = vld [vmem:[#allocation10 + $0x2c0] sm:$0xff]
    %v6797 = vld [vmem:[#allocation10 + $0x2c8] sm:$0xff]
    %v6798 = vld [vmem:[#allocation10 + $0x2d0] sm:$0xff]
    %v6799 = vld [vmem:[#allocation10 + $0x2d8] sm:$0xff]
    %v6800 = vld [vmem:[#allocation10 + $0x2e0] sm:$0xff]
    %v6801 = vld [vmem:[#allocation10 + $0x2e8] sm:$0xff]
    %v6802 = vld [vmem:[#allocation10 + $0x2f0] sm:$0xff]
    %v6803 = vld [vmem:[#allocation10 + $0x2f8] sm:$0xff]
    %v6804 = vld [vmem:[#allocation10 + $0x300] sm:$0xff]
    %v6805 = vld [vmem:[#allocation10 + $0x308] sm:$0xff]
    %v6806 = vld [vmem:[#allocation10 + $0x310] sm:$0xff]
    %v6807 = vld [vmem:[#allocation10 + $0x318] sm:$0xff]
    %v6808 = vld [vmem:[#allocation10 + $0x320] sm:$0xff]
    %v6809 = vld [vmem:[#allocation10 + $0x328] sm:$0xff]
    %v6810 = vld [vmem:[#allocation10 + $0x330] sm:$0xff]
    %v6811 = vld [vmem:[#allocation10 + $0x338] sm:$0xff]
    %v6812 = vld [vmem:[#allocation10 + $0x340] sm:$0xff]
    %v6813 = vld [vmem:[#allocation10 + $0x348] sm:$0xff]
    %v6814 = vld [vmem:[#allocation10 + $0x350] sm:$0xff]
    %v6815 = vld [vmem:[#allocation10 + $0x358] sm:$0xff]
    %v6816 = vld [vmem:[#allocation10 + $0x360] sm:$0xff]
    %v6817 = vld [vmem:[#allocation10 + $0x368] sm:$0xff]
    %v6818 = vld [vmem:[#allocation10 + $0x370] sm:$0xff]
    %v6819 = vld [vmem:[#allocation10 + $0x378] sm:$0xff]
    %v6820 = vld [vmem:[#allocation10 + $0x380] sm:$0xff]
    %v6821 = vld [vmem:[#allocation10 + $0x388] sm:$0xff]
    %v6822 = vld [vmem:[#allocation10 + $0x390] sm:$0xff]
    %v6823 = vld [vmem:[#allocation10 + $0x398] sm:$0xff]
    %v6824 = vld [vmem:[#allocation10 + $0x3a0] sm:$0xff]
    %v6825 = vld [vmem:[#allocation10 + $0x3a8] sm:$0xff]
    %v6826 = vld [vmem:[#allocation10 + $0x3b0] sm:$0xff]
    %v6827 = vld [vmem:[#allocation10 + $0x3b8] sm:$0xff]
    %v6828 = vld [vmem:[#allocation10 + $0x3c0] sm:$0xff]
    %v6829 = vld [vmem:[#allocation10 + $0x3c8] sm:$0xff]
    %v6830 = vld [vmem:[#allocation10 + $0x3d0] sm:$0xff]
    %v6831 = vld [vmem:[#allocation10 + $0x3d8] sm:$0xff]
    %v6832 = vld [vmem:[#allocation10 + $0x3e0] sm:$0xff]
    %v6833 = vld [vmem:[#allocation10 + $0x3e8] sm:$0xff]
    %v6834 = vld [vmem:[#allocation10 + $0x3f0] sm:$0xff]
    %v6835 = vld [vmem:[#allocation10 + $0x3f8] sm:$0xff]
    %v6836 = vld [vmem:[#allocation11] sm:$0xff]
    %v6838 = vperm.slane %v6836, 0
    %v6839 = vperm.slane %v6836, 1
    %v6840 = vperm.slane %v6836, 2
    %v6841 = vperm.slane %v6836, 3
    %v6842 = vperm.slane %v6836, 4
    %v6843 = vperm.slane %v6836, 5
    %v6844 = vperm.slane %v6836, 6
    %v6845 = vperm.slane %v6836, 7
    %v6982 = vunpack.c.l.b16 %v6708
    %v6983 = vunpack.c.h.b16 %v6708
    %v6984 = vunpack.c.l.b16 %v6709
    %v6985 = vunpack.c.h.b16 %v6709
    %v6986 = vunpack.c.l.b16 %v6710
    %v6987 = vunpack.c.h.b16 %v6710
    %v6988 = vunpack.c.l.b16 %v6711
    %v6989 = vunpack.c.h.b16 %v6711
    %v6990 = vunpack.c.l.b16 %v6712
    %v6991 = vunpack.c.h.b16 %v6712
    %v6992 = vunpack.c.l.b16 %v6713
    %v6993 = vunpack.c.h.b16 %v6713
    %v6994 = vunpack.c.l.b16 %v6714
    %v6995 = vunpack.c.h.b16 %v6714
    %v6996 = vunpack.c.l.b16 %v6715
    %v6997 = vunpack.c.h.b16 %v6715
    %v6998 = vunpack.c.l.b16 %v6716
    %v6999 = vunpack.c.h.b16 %v6716
    %v7000 = vunpack.c.l.b16 %v6717
    %v7001 = vunpack.c.h.b16 %v6717
    %v7002 = vunpack.c.l.b16 %v6718
    %v7003 = vunpack.c.h.b16 %v6718
    %v7004 = vunpack.c.l.b16 %v6719
    %v7005 = vunpack.c.h.b16 %v6719
    %v7006 = vunpack.c.l.b16 %v6720
    %v7007 = vunpack.c.h.b16 %v6720
    %v7008 = vunpack.c.l.b16 %v6721
    %v7009 = vunpack.c.h.b16 %v6721
    %v7010 = vunpack.c.l.b16 %v6722
    %v7011 = vunpack.c.h.b16 %v6722
    %v7012 = vunpack.c.l.b16 %v6723
    %v7013 = vunpack.c.h.b16 %v6723
    %v7014 = vunpack.c.l.b16 %v6724
    %v7015 = vunpack.c.h.b16 %v6724
    %v7016 = vunpack.c.l.b16 %v6725
    %v7017 = vunpack.c.h.b16 %v6725
    %v7018 = vunpack.c.l.b16 %v6726
    %v7019 = vunpack.c.h.b16 %v6726
    %v7020 = vunpack.c.l.b16 %v6727
    %v7021 = vunpack.c.h.b16 %v6727
    %v7022 = vunpack.c.l.b16 %v6728
    %v7023 = vunpack.c.h.b16 %v6728
    %v7024 = vunpack.c.l.b16 %v6729
    %v7025 = vunpack.c.h.b16 %v6729
    %v7026 = vunpack.c.l.b16 %v6730
    %v7027 = vunpack.c.h.b16 %v6730
    %v7028 = vunpack.c.l.b16 %v6731
    %v7029 = vunpack.c.h.b16 %v6731
    %v7030 = vunpack.c.l.b16 %v6732
    %v7031 = vunpack.c.h.b16 %v6732
    %v7032 = vunpack.c.l.b16 %v6733
    %v7033 = vunpack.c.h.b16 %v6733
    %v7034 = vunpack.c.l.b16 %v6734
    %v7035 = vunpack.c.h.b16 %v6734
    %v7036 = vunpack.c.l.b16 %v6735
    %v7037 = vunpack.c.h.b16 %v6735
    %v7038 = vunpack.c.l.b16 %v6736
    %v7039 = vunpack.c.h.b16 %v6736
    %v7040 = vunpack.c.l.b16 %v6737
    %v7041 = vunpack.c.h.b16 %v6737
    %v7042 = vunpack.c.l.b16 %v6738
    %v7043 = vunpack.c.h.b16 %v6738
    %v7044 = vunpack.c.l.b16 %v6739
    %v7045 = vunpack.c.h.b16 %v6739
    %v7046 = vunpack.c.l.b16 %v6740
    %v7047 = vunpack.c.h.b16 %v6740
    %v7048 = vunpack.c.l.b16 %v6741
    %v7049 = vunpack.c.h.b16 %v6741
    %v7050 = vunpack.c.l.b16 %v6742
    %v7051 = vunpack.c.h.b16 %v6742
    %v7052 = vunpack.c.l.b16 %v6743
    %v7053 = vunpack.c.h.b16 %v6743
    %v7054 = vunpack.c.l.b16 %v6744
    %v7055 = vunpack.c.h.b16 %v6744
    %v7056 = vunpack.c.l.b16 %v6745
    %v7057 = vunpack.c.h.b16 %v6745
    %v7058 = vunpack.c.l.b16 %v6746
    %v7059 = vunpack.c.h.b16 %v6746
    %v7060 = vunpack.c.l.b16 %v6747
    %v7061 = vunpack.c.h.b16 %v6747
    %v7062 = vunpack.c.l.b16 %v6748
    %v7063 = vunpack.c.h.b16 %v6748
    %v7064 = vunpack.c.l.b16 %v6749
    %v7065 = vunpack.c.h.b16 %v6749
    %v7066 = vunpack.c.l.b16 %v6750
    %v7067 = vunpack.c.h.b16 %v6750
    %v7068 = vunpack.c.l.b16 %v6751
    %v7069 = vunpack.c.h.b16 %v6751
    %v7070 = vunpack.c.l.b16 %v6752
    %v7071 = vunpack.c.h.b16 %v6752
    %v7072 = vunpack.c.l.b16 %v6753
    %v7073 = vunpack.c.h.b16 %v6753
    %v7074 = vunpack.c.l.b16 %v6754
    %v7075 = vunpack.c.h.b16 %v6754
    %v7076 = vunpack.c.l.b16 %v6755
    %v7077 = vunpack.c.h.b16 %v6755
    %v7078 = vunpack.c.l.b16 %v6756
    %v7079 = vunpack.c.h.b16 %v6756
    %v7080 = vunpack.c.l.b16 %v6757
    %v7081 = vunpack.c.h.b16 %v6757
    %v7082 = vunpack.c.l.b16 %v6758
    %v7083 = vunpack.c.h.b16 %v6758
    %v7084 = vunpack.c.l.b16 %v6759
    %v7085 = vunpack.c.h.b16 %v6759
    %v7086 = vunpack.c.l.b16 %v6760
    %v7087 = vunpack.c.h.b16 %v6760
    %v7088 = vunpack.c.l.b16 %v6761
    %v7089 = vunpack.c.h.b16 %v6761
    %v7090 = vunpack.c.l.b16 %v6762
    %v7091 = vunpack.c.h.b16 %v6762
    %v7092 = vunpack.c.l.b16 %v6763
    %v7093 = vunpack.c.h.b16 %v6763
    %v7094 = vunpack.c.l.b16 %v6764
    %v7095 = vunpack.c.h.b16 %v6764
    %v7096 = vunpack.c.l.b16 %v6765
    %v7097 = vunpack.c.h.b16 %v6765
    %v7098 = vunpack.c.l.b16 %v6766
    %v7099 = vunpack.c.h.b16 %v6766
    %v7100 = vunpack.c.l.b16 %v6767
    %v7101 = vunpack.c.h.b16 %v6767
    %v7102 = vunpack.c.l.b16 %v6768
    %v7103 = vunpack.c.h.b16 %v6768
    %v7104 = vunpack.c.l.b16 %v6769
    %v7105 = vunpack.c.h.b16 %v6769
    %v7106 = vunpack.c.l.b16 %v6770
    %v7107 = vunpack.c.h.b16 %v6770
    %v7108 = vunpack.c.l.b16 %v6771
    %v7109 = vunpack.c.h.b16 %v6771
    %v7110 = vunpack.c.l.b16 %v6772
    %v7111 = vunpack.c.h.b16 %v6772
    %v7112 = vunpack.c.l.b16 %v6773
    %v7113 = vunpack.c.h.b16 %v6773
    %v7114 = vunpack.c.l.b16 %v6774
    %v7115 = vunpack.c.h.b16 %v6774
    %v7116 = vunpack.c.l.b16 %v6775
    %v7117 = vunpack.c.h.b16 %v6775
    %v7118 = vunpack.c.l.b16 %v6776
    %v7119 = vunpack.c.h.b16 %v6776
    %v7120 = vunpack.c.l.b16 %v6777
    %v7121 = vunpack.c.h.b16 %v6777
    %v7122 = vunpack.c.l.b16 %v6778
    %v7123 = vunpack.c.h.b16 %v6778
    %v7124 = vunpack.c.l.b16 %v6779
    %v7125 = vunpack.c.h.b16 %v6779
    %v7126 = vunpack.c.l.b16 %v6780
    %v7127 = vunpack.c.h.b16 %v6780
    %v7128 = vunpack.c.l.b16 %v6781
    %v7129 = vunpack.c.h.b16 %v6781
    %v7130 = vunpack.c.l.b16 %v6782
    %v7131 = vunpack.c.h.b16 %v6782
    %v7132 = vunpack.c.l.b16 %v6783
    %v7133 = vunpack.c.h.b16 %v6783
    %v7134 = vunpack.c.l.b16 %v6784
    %v7135 = vunpack.c.h.b16 %v6784
    %v7136 = vunpack.c.l.b16 %v6785
    %v7137 = vunpack.c.h.b16 %v6785
    %v7138 = vunpack.c.l.b16 %v6786
    %v7139 = vunpack.c.h.b16 %v6786
    %v7140 = vunpack.c.l.b16 %v6787
    %v7141 = vunpack.c.h.b16 %v6787
    %v7142 = vunpack.c.l.b16 %v6788
    %v7143 = vunpack.c.h.b16 %v6788
    %v7144 = vunpack.c.l.b16 %v6789
    %v7145 = vunpack.c.h.b16 %v6789
    %v7146 = vunpack.c.l.b16 %v6790
    %v7147 = vunpack.c.h.b16 %v6790
    %v7148 = vunpack.c.l.b16 %v6791
    %v7149 = vunpack.c.h.b16 %v6791
    %v7150 = vunpack.c.l.b16 %v6792
    %v7151 = vunpack.c.h.b16 %v6792
    %v7152 = vunpack.c.l.b16 %v6793
    %v7153 = vunpack.c.h.b16 %v6793
    %v7154 = vunpack.c.l.b16 %v6794
    %v7155 = vunpack.c.h.b16 %v6794
    %v7156 = vunpack.c.l.b16 %v6795
    %v7157 = vunpack.c.h.b16 %v6795
    %v7158 = vunpack.c.l.b16 %v6796
    %v7159 = vunpack.c.h.b16 %v6796
    %v7160 = vunpack.c.l.b16 %v6797
    %v7161 = vunpack.c.h.b16 %v6797
    %v7162 = vunpack.c.l.b16 %v6798
    %v7163 = vunpack.c.h.b16 %v6798
    %v7164 = vunpack.c.l.b16 %v6799
    %v7165 = vunpack.c.h.b16 %v6799
    %v7166 = vunpack.c.l.b16 %v6800
    %v7167 = vunpack.c.h.b16 %v6800
    %v7168 = vunpack.c.l.b16 %v6801
    %v7169 = vunpack.c.h.b16 %v6801
    %v7170 = vunpack.c.l.b16 %v6802
    %v7171 = vunpack.c.h.b16 %v6802
    %v7172 = vunpack.c.l.b16 %v6803
    %v7173 = vunpack.c.h.b16 %v6803
    %v7174 = vunpack.c.l.b16 %v6804
    %v7175 = vunpack.c.h.b16 %v6804
    %v7176 = vunpack.c.l.b16 %v6805
    %v7177 = vunpack.c.h.b16 %v6805
    %v7178 = vunpack.c.l.b16 %v6806
    %v7179 = vunpack.c.h.b16 %v6806
    %v7180 = vunpack.c.l.b16 %v6807
    %v7181 = vunpack.c.h.b16 %v6807
    %v7182 = vunpack.c.l.b16 %v6808
    %v7183 = vunpack.c.h.b16 %v6808
    %v7184 = vunpack.c.l.b16 %v6809
    %v7185 = vunpack.c.h.b16 %v6809
    %v7186 = vunpack.c.l.b16 %v6810
    %v7187 = vunpack.c.h.b16 %v6810
    %v7188 = vunpack.c.l.b16 %v6811
    %v7189 = vunpack.c.h.b16 %v6811
    %v7190 = vunpack.c.l.b16 %v6812
    %v7191 = vunpack.c.h.b16 %v6812
    %v7192 = vunpack.c.l.b16 %v6813
    %v7193 = vunpack.c.h.b16 %v6813
    %v7194 = vunpack.c.l.b16 %v6814
    %v7195 = vunpack.c.h.b16 %v6814
    %v7196 = vunpack.c.l.b16 %v6815
    %v7197 = vunpack.c.h.b16 %v6815
    %v7198 = vunpack.c.l.b16 %v6816
    %v7199 = vunpack.c.h.b16 %v6816
    %v7200 = vunpack.c.l.b16 %v6817
    %v7201 = vunpack.c.h.b16 %v6817
    %v7202 = vunpack.c.l.b16 %v6818
    %v7203 = vunpack.c.h.b16 %v6818
    %v7204 = vunpack.c.l.b16 %v6819
    %v7205 = vunpack.c.h.b16 %v6819
    %v7206 = vunpack.c.l.b16 %v6820
    %v7207 = vunpack.c.h.b16 %v6820
    %v7208 = vunpack.c.l.b16 %v6821
    %v7209 = vunpack.c.h.b16 %v6821
    %v7210 = vunpack.c.l.b16 %v6822
    %v7211 = vunpack.c.h.b16 %v6822
    %v7212 = vunpack.c.l.b16 %v6823
    %v7213 = vunpack.c.h.b16 %v6823
    %v7214 = vunpack.c.l.b16 %v6824
    %v7215 = vunpack.c.h.b16 %v6824
    %v7216 = vunpack.c.l.b16 %v6825
    %v7217 = vunpack.c.h.b16 %v6825
    %v7218 = vunpack.c.l.b16 %v6826
    %v7219 = vunpack.c.h.b16 %v6826
    %v7220 = vunpack.c.l.b16 %v6827
    %v7221 = vunpack.c.h.b16 %v6827
    %v7222 = vunpack.c.l.b16 %v6828
    %v7223 = vunpack.c.h.b16 %v6828
    %v7224 = vunpack.c.l.b16 %v6829
    %v7225 = vunpack.c.h.b16 %v6829
    %v7226 = vunpack.c.l.b16 %v6830
    %v7227 = vunpack.c.h.b16 %v6830
    %v7228 = vunpack.c.l.b16 %v6831
    %v7229 = vunpack.c.h.b16 %v6831
    %v7230 = vunpack.c.l.b16 %v6832
    %v7231 = vunpack.c.h.b16 %v6832
    %v7232 = vunpack.c.l.b16 %v6833
    %v7233 = vunpack.c.h.b16 %v6833
    %v7234 = vunpack.c.l.b16 %v6834
    %v7235 = vunpack.c.h.b16 %v6834
    %v7236 = vunpack.c.l.b16 %v6835
    %v7237 = vunpack.c.h.b16 %v6835
    %v7238 = vpack.c.b16 %v6990, %v6982
    %v7239 = vpack.c.b16 %v6991, %v6983
    %v7240 = vpack.c.b16 %v6992, %v6984
    %v7241 = vpack.c.b16 %v6993, %v6985
    %v7242 = vpack.c.b16 %v6994, %v6986
    %v7243 = vpack.c.b16 %v6995, %v6987
    %v7244 = vpack.c.b16 %v6996, %v6988
    %v7245 = vpack.c.b16 %v6997, %v6989
    %v7246 = vpack.c.b16 %v7006, %v6998
    %v7247 = vpack.c.b16 %v7007, %v6999
    %v7248 = vpack.c.b16 %v7008, %v7000
    %v7249 = vpack.c.b16 %v7009, %v7001
    %v7250 = vpack.c.b16 %v7010, %v7002
    %v7251 = vpack.c.b16 %v7011, %v7003
    %v7252 = vpack.c.b16 %v7012, %v7004
    %v7253 = vpack.c.b16 %v7013, %v7005
    %v7254 = vpack.c.b16 %v7022, %v7014
    %v7255 = vpack.c.b16 %v7023, %v7015
    %v7256 = vpack.c.b16 %v7024, %v7016
    %v7257 = vpack.c.b16 %v7025, %v7017
    %v7258 = vpack.c.b16 %v7026, %v7018
    %v7259 = vpack.c.b16 %v7027, %v7019
    %v7260 = vpack.c.b16 %v7028, %v7020
    %v7261 = vpack.c.b16 %v7029, %v7021
    %v7262 = vpack.c.b16 %v7038, %v7030
    %v7263 = vpack.c.b16 %v7039, %v7031
    %v7264 = vpack.c.b16 %v7040, %v7032
    %v7265 = vpack.c.b16 %v7041, %v7033
    %v7266 = vpack.c.b16 %v7042, %v7034
    %v7267 = vpack.c.b16 %v7043, %v7035
    %v7268 = vpack.c.b16 %v7044, %v7036
    %v7269 = vpack.c.b16 %v7045, %v7037
    %v7270 = vpack.c.b16 %v7054, %v7046
    %v7271 = vpack.c.b16 %v7055, %v7047
    %v7272 = vpack.c.b16 %v7056, %v7048
    %v7273 = vpack.c.b16 %v7057, %v7049
    %v7274 = vpack.c.b16 %v7058, %v7050
    %v7275 = vpack.c.b16 %v7059, %v7051
    %v7276 = vpack.c.b16 %v7060, %v7052
    %v7277 = vpack.c.b16 %v7061, %v7053
    %v7278 = vpack.c.b16 %v7070, %v7062
    %v7279 = vpack.c.b16 %v7071, %v7063
    %v7280 = vpack.c.b16 %v7072, %v7064
    %v7281 = vpack.c.b16 %v7073, %v7065
    %v7282 = vpack.c.b16 %v7074, %v7066
    %v7283 = vpack.c.b16 %v7075, %v7067
    %v7284 = vpack.c.b16 %v7076, %v7068
    %v7285 = vpack.c.b16 %v7077, %v7069
    %v7286 = vpack.c.b16 %v7086, %v7078
    %v7287 = vpack.c.b16 %v7087, %v7079
    %v7288 = vpack.c.b16 %v7088, %v7080
    %v7289 = vpack.c.b16 %v7089, %v7081
    %v7290 = vpack.c.b16 %v7090, %v7082
    %v7291 = vpack.c.b16 %v7091, %v7083
    %v7292 = vpack.c.b16 %v7092, %v7084
    %v7293 = vpack.c.b16 %v7093, %v7085
    %v7294 = vpack.c.b16 %v7102, %v7094
    %v7295 = vpack.c.b16 %v7103, %v7095
    %v7296 = vpack.c.b16 %v7104, %v7096
    %v7297 = vpack.c.b16 %v7105, %v7097
    %v7298 = vpack.c.b16 %v7106, %v7098
    %v7299 = vpack.c.b16 %v7107, %v7099
    %v7300 = vpack.c.b16 %v7108, %v7100
    %v7301 = vpack.c.b16 %v7109, %v7101
    %v7302 = vpack.c.b16 %v7118, %v7110
    %v7303 = vpack.c.b16 %v7119, %v7111
    %v7304 = vpack.c.b16 %v7120, %v7112
    %v7305 = vpack.c.b16 %v7121, %v7113
    %v7306 = vpack.c.b16 %v7122, %v7114
    %v7307 = vpack.c.b16 %v7123, %v7115
    %v7308 = vpack.c.b16 %v7124, %v7116
    %v7309 = vpack.c.b16 %v7125, %v7117
    %v7310 = vpack.c.b16 %v7134, %v7126
    %v7311 = vpack.c.b16 %v7135, %v7127
    %v7312 = vpack.c.b16 %v7136, %v7128
    %v7313 = vpack.c.b16 %v7137, %v7129
    %v7314 = vpack.c.b16 %v7138, %v7130
    %v7315 = vpack.c.b16 %v7139, %v7131
    %v7316 = vpack.c.b16 %v7140, %v7132
    %v7317 = vpack.c.b16 %v7141, %v7133
    %v7318 = vpack.c.b16 %v7150, %v7142
    %v7319 = vpack.c.b16 %v7151, %v7143
    %v7320 = vpack.c.b16 %v7152, %v7144
    %v7321 = vpack.c.b16 %v7153, %v7145
    %v7322 = vpack.c.b16 %v7154, %v7146
    %v7323 = vpack.c.b16 %v7155, %v7147
    %v7324 = vpack.c.b16 %v7156, %v7148
    %v7325 = vpack.c.b16 %v7157, %v7149
    %v7326 = vpack.c.b16 %v7166, %v7158
    %v7327 = vpack.c.b16 %v7167, %v7159
    %v7328 = vpack.c.b16 %v7168, %v7160
    %v7329 = vpack.c.b16 %v7169, %v7161
    %v7330 = vpack.c.b16 %v7170, %v7162
    %v7331 = vpack.c.b16 %v7171, %v7163
    %v7332 = vpack.c.b16 %v7172, %v7164
    %v7333 = vpack.c.b16 %v7173, %v7165
    %v7334 = vpack.c.b16 %v7182, %v7174
    %v7335 = vpack.c.b16 %v7183, %v7175
    %v7336 = vpack.c.b16 %v7184, %v7176
    %v7337 = vpack.c.b16 %v7185, %v7177
    %v7338 = vpack.c.b16 %v7186, %v7178
    %v7339 = vpack.c.b16 %v7187, %v7179
    %v7340 = vpack.c.b16 %v7188, %v7180
    %v7341 = vpack.c.b16 %v7189, %v7181
    %v7342 = vpack.c.b16 %v7198, %v7190
    %v7343 = vpack.c.b16 %v7199, %v7191
    %v7344 = vpack.c.b16 %v7200, %v7192
    %v7345 = vpack.c.b16 %v7201, %v7193
    %v7346 = vpack.c.b16 %v7202, %v7194
    %v7347 = vpack.c.b16 %v7203, %v7195
    %v7348 = vpack.c.b16 %v7204, %v7196
    %v7349 = vpack.c.b16 %v7205, %v7197
    %v7350 = vpack.c.b16 %v7214, %v7206
    %v7351 = vpack.c.b16 %v7215, %v7207
    %v7352 = vpack.c.b16 %v7216, %v7208
    %v7353 = vpack.c.b16 %v7217, %v7209
    %v7354 = vpack.c.b16 %v7218, %v7210
    %v7355 = vpack.c.b16 %v7219, %v7211
    %v7356 = vpack.c.b16 %v7220, %v7212
    %v7357 = vpack.c.b16 %v7221, %v7213
    %v7358 = vpack.c.b16 %v7230, %v7222
    %v7359 = vpack.c.b16 %v7231, %v7223
    %v7360 = vpack.c.b16 %v7232, %v7224
    %v7361 = vpack.c.b16 %v7233, %v7225
    %v7362 = vpack.c.b16 %v7234, %v7226
    %v7363 = vpack.c.b16 %v7235, %v7227
    %v7364 = vpack.c.b16 %v7236, %v7228
    %v7365 = vpack.c.b16 %v7237, %v7229
    %7494 = vmatpush.bf16.msra.mxu0 %v7294
    %7495 = vmatpush.bf16.msra.mxu0 %v7286
    %7496 = vmatpush.bf16.msra.mxu0 %v7278
    %7497 = vmatpush.bf16.msra.mxu0 %v7270
    %7498 = vmatpush.bf16.msra.mxu0 %v7262
    %7499 = vmatpush.bf16.msra.mxu0 %v7254
    %7500 = vmatpush.bf16.msra.mxu0 %v7246
    %7501 = vmatpush.bf16.msra.mxu0 %v7238
    %7502 = vmatmul.bf16.gmra.mxu0 %v6692
    %v7503 = vpop.f32.mrf.mxu0
    %v7504 = vadd.f32 %v6838, %v7503
    %v7505 = vpop.f32.mrf.mxu0
    %v7506 = vadd.f32 %v6838, %v7505
    %7507 = vmatmul.bf16.gmra.mxu0 %v6694
    %v7508 = vpop.f32.mrf.mxu0
    %v7509 = vadd.f32 %v6838, %v7508
    %v7510 = vpop.f32.mrf.mxu0
    %v7511 = vadd.f32 %v6838, %v7510
    %7512 = vmatmul.bf16.gmra.mxu0 %v6696
    %v7513 = vpop.f32.mrf.mxu0
    %v7514 = vadd.f32 %v6838, %v7513
    %v7515 = vpop.f32.mrf.mxu0
    %v7516 = vadd.f32 %v6838, %v7515
    %7517 = vmatmul.bf16.gmra.mxu0 %v6698
    %v7518 = vpop.f32.mrf.mxu0
    %v7519 = vadd.f32 %v6838, %v7518
    %v7520 = vpop.f32.mrf.mxu0
    %v7521 = vadd.f32 %v6838, %v7520
    %7522 = vmatmul.bf16.gmra.mxu0 %v6700
    %v7523 = vpop.f32.mrf.mxu0
    %v7524 = vadd.f32 %v6838, %v7523
    %v7525 = vpop.f32.mrf.mxu0
    %v7526 = vadd.f32 %v6838, %v7525
    %7527 = vmatmul.bf16.gmra.mxu0 %v6702
    %v7528 = vpop.f32.mrf.mxu0
    %v7529 = vadd.f32 %v6838, %v7528
    %v7530 = vpop.f32.mrf.mxu0
    %v7531 = vadd.f32 %v6838, %v7530
    %7532 = vmatmul.bf16.gmra.mxu0 %v6704
    %v7533 = vpop.f32.mrf.mxu0
    %v7534 = vadd.f32 %v6838, %v7533
    %v7535 = vpop.f32.mrf.mxu0
    %v7536 = vadd.f32 %v6838, %v7535
    %7537 = vmatmul.bf16.gmra.mxu0 %v6706
    %v7538 = vpop.f32.mrf.mxu0
    %v7539 = vadd.f32 %v6838, %v7538
    %v7540 = vpop.f32.mrf.mxu0
    %v7541 = vadd.f32 %v6838, %v7540
    %7542 = vdwg.mxu0
    %7543 = vmatpush.bf16.msra.mxu0 %v7358
    %7544 = vmatpush.bf16.msra.mxu0 %v7350
    %7545 = vmatpush.bf16.msra.mxu0 %v7342
    %7546 = vmatpush.bf16.msra.mxu0 %v7334
    %7547 = vmatpush.bf16.msra.mxu0 %v7326
    %7548 = vmatpush.bf16.msra.mxu0 %v7318
    %7549 = vmatpush.bf16.msra.mxu0 %v7310
    %7550 = vmatpush.bf16.msra.mxu0 %v7302
    %7551 = vmatmul.bf16.gmra.mxu0 %v6693
    %v7552 = vpop.f32.mrf.mxu0
    %v7553 = vadd.f32 %v7504, %v7552
    %v7554 = vpop.f32.mrf.mxu0
    %v7555 = vadd.f32 %v7506, %v7554
    %7556 = vmatmul.bf16.gmra.mxu0 %v6695
    %v7557 = vpop.f32.mrf.mxu0
    %v7558 = vadd.f32 %v7509, %v7557
    %v7559 = vpop.f32.mrf.mxu0
    %v7560 = vadd.f32 %v7511, %v7559
    %7561 = vmatmul.bf16.gmra.mxu0 %v6697
    %v7562 = vpop.f32.mrf.mxu0
    %v7563 = vadd.f32 %v7514, %v7562
    %v7564 = vpop.f32.mrf.mxu0
    %v7565 = vadd.f32 %v7516, %v7564
    %7566 = vmatmul.bf16.gmra.mxu0 %v6699
    %v7567 = vpop.f32.mrf.mxu0
    %v7568 = vadd.f32 %v7519, %v7567
    %v7569 = vpop.f32.mrf.mxu0
    %v7570 = vadd.f32 %v7521, %v7569
    %7571 = vmatmul.bf16.gmra.mxu0 %v6701
    %v7572 = vpop.f32.mrf.mxu0
    %v7573 = vadd.f32 %v7524, %v7572
    %v7574 = vpop.f32.mrf.mxu0
    %v7575 = vadd.f32 %v7526, %v7574
    %7576 = vmatmul.bf16.gmra.mxu0 %v6703
    %v7577 = vpop.f32.mrf.mxu0
    %v7578 = vadd.f32 %v7529, %v7577
    %v7579 = vpop.f32.mrf.mxu0
    %v7580 = vadd.f32 %v7531, %v7579
    %7581 = vmatmul.bf16.gmra.mxu0 %v6705
    %v7582 = vpop.f32.mrf.mxu0
    %v7583 = vadd.f32 %v7534, %v7582
    %v7584 = vpop.f32.mrf.mxu0
    %v7585 = vadd.f32 %v7536, %v7584
    %7586 = vmatmul.bf16.gmra.mxu0 %v6707
    %v7587 = vpop.f32.mrf.mxu0
    %v7588 = vadd.f32 %v7539, %v7587
    %v7589 = vpop.f32.mrf.mxu0
    %v7590 = vadd.f32 %v7541, %v7589
    %7591 = vdwg.mxu0
    %7592 = vmatpush.bf16.msra.mxu0 %v7295
    %7593 = vmatpush.bf16.msra.mxu0 %v7287
    %7594 = vmatpush.bf16.msra.mxu0 %v7279
    %7595 = vmatpush.bf16.msra.mxu0 %v7271
    %7596 = vmatpush.bf16.msra.mxu0 %v7263
    %7597 = vmatpush.bf16.msra.mxu0 %v7255
    %7598 = vmatpush.bf16.msra.mxu0 %v7247
    %7599 = vmatpush.bf16.msra.mxu0 %v7239
    %7600 = vmatmul.bf16.gmra.mxu0 %v6692
    %v7601 = vpop.f32.mrf.mxu0
    %v7602 = vadd.f32 %v6839, %v7601
    %v7603 = vpop.f32.mrf.mxu0
    %v7604 = vadd.f32 %v6839, %v7603
    %7605 = vmatmul.bf16.gmra.mxu0 %v6694
    %v7606 = vpop.f32.mrf.mxu0
    %v7607 = vadd.f32 %v6839, %v7606
    %v7608 = vpop.f32.mrf.mxu0
    %v7609 = vadd.f32 %v6839, %v7608
    %7610 = vmatmul.bf16.gmra.mxu0 %v6696
    %v7611 = vpop.f32.mrf.mxu0
    %v7612 = vadd.f32 %v6839, %v7611
    %v7613 = vpop.f32.mrf.mxu0
    %v7614 = vadd.f32 %v6839, %v7613
    %7615 = vmatmul.bf16.gmra.mxu0 %v6698
    %v7616 = vpop.f32.mrf.mxu0
    %v7617 = vadd.f32 %v6839, %v7616
    %v7618 = vpop.f32.mrf.mxu0
    %v7619 = vadd.f32 %v6839, %v7618
    %7620 = vmatmul.bf16.gmra.mxu0 %v6700
    %v7621 = vpop.f32.mrf.mxu0
    %v7622 = vadd.f32 %v6839, %v7621
    %v7623 = vpop.f32.mrf.mxu0
    %v7624 = vadd.f32 %v6839, %v7623
    %7625 = vmatmul.bf16.gmra.mxu0 %v6702
    %v7626 = vpop.f32.mrf.mxu0
    %v7627 = vadd.f32 %v6839, %v7626
    %v7628 = vpop.f32.mrf.mxu0
    %v7629 = vadd.f32 %v6839, %v7628
    %7630 = vmatmul.bf16.gmra.mxu0 %v6704
    %v7631 = vpop.f32.mrf.mxu0
    %v7632 = vadd.f32 %v6839, %v7631
    %v7633 = vpop.f32.mrf.mxu0
    %v7634 = vadd.f32 %v6839, %v7633
    %7635 = vmatmul.bf16.gmra.mxu0 %v6706
    %v7636 = vpop.f32.mrf.mxu0
    %v7637 = vadd.f32 %v6839, %v7636
    %v7638 = vpop.f32.mrf.mxu0
    %v7639 = vadd.f32 %v6839, %v7638
    %7640 = vdwg.mxu0
    %7641 = vmatpush.bf16.msra.mxu0 %v7359
    %7642 = vmatpush.bf16.msra.mxu0 %v7351
    %7643 = vmatpush.bf16.msra.mxu0 %v7343
    %7644 = vmatpush.bf16.msra.mxu0 %v7335
    %7645 = vmatpush.bf16.msra.mxu0 %v7327
    %7646 = vmatpush.bf16.msra.mxu0 %v7319
    %7647 = vmatpush.bf16.msra.mxu0 %v7311
    %7648 = vmatpush.bf16.msra.mxu0 %v7303
    %7649 = vmatmul.bf16.gmra.mxu0 %v6693
    %v7650 = vpop.f32.mrf.mxu0
    %v7651 = vadd.f32 %v7602, %v7650
    %v7652 = vpop.f32.mrf.mxu0
    %v7653 = vadd.f32 %v7604, %v7652
    %7654 = vmatmul.bf16.gmra.mxu0 %v6695
    %v7655 = vpop.f32.mrf.mxu0
    %v7656 = vadd.f32 %v7607, %v7655
    %v7657 = vpop.f32.mrf.mxu0
    %v7658 = vadd.f32 %v7609, %v7657
    %7659 = vmatmul.bf16.gmra.mxu0 %v6697
    %v7660 = vpop.f32.mrf.mxu0
    %v7661 = vadd.f32 %v7612, %v7660
    %v7662 = vpop.f32.mrf.mxu0
    %v7663 = vadd.f32 %v7614, %v7662
    %7664 = vmatmul.bf16.gmra.mxu0 %v6699
    %v7665 = vpop.f32.mrf.mxu0
    %v7666 = vadd.f32 %v7617, %v7665
    %v7667 = vpop.f32.mrf.mxu0
    %v7668 = vadd.f32 %v7619, %v7667
    %7669 = vmatmul.bf16.gmra.mxu0 %v6701
    %v7670 = vpop.f32.mrf.mxu0
    %v7671 = vadd.f32 %v7622, %v7670
    %v7672 = vpop.f32.mrf.mxu0
    %v7673 = vadd.f32 %v7624, %v7672
    %7674 = vmatmul.bf16.gmra.mxu0 %v6703
    %v7675 = vpop.f32.mrf.mxu0
    %v7676 = vadd.f32 %v7627, %v7675
    %v7677 = vpop.f32.mrf.mxu0
    %v7678 = vadd.f32 %v7629, %v7677
    %7679 = vmatmul.bf16.gmra.mxu0 %v6705
    %v7680 = vpop.f32.mrf.mxu0
    %v7681 = vadd.f32 %v7632, %v7680
    %v7682 = vpop.f32.mrf.mxu0
    %v7683 = vadd.f32 %v7634, %v7682
    %7684 = vmatmul.bf16.gmra.mxu0 %v6707
    %v7685 = vpop.f32.mrf.mxu0
    %v7686 = vadd.f32 %v7637, %v7685
    %v7687 = vpop.f32.mrf.mxu0
    %v7688 = vadd.f32 %v7639, %v7687
    %7689 = vdwg.mxu0
    %7690 = vmatpush.bf16.msra.mxu0 %v7296
    %7691 = vmatpush.bf16.msra.mxu0 %v7288
    %7692 = vmatpush.bf16.msra.mxu0 %v7280
    %7693 = vmatpush.bf16.msra.mxu0 %v7272
    %7694 = vmatpush.bf16.msra.mxu0 %v7264
    %7695 = vmatpush.bf16.msra.mxu0 %v7256
    %7696 = vmatpush.bf16.msra.mxu0 %v7248
    %7697 = vmatpush.bf16.msra.mxu0 %v7240
    %7698 = vmatmul.bf16.gmra.mxu0 %v6692
    %v7699 = vpop.f32.mrf.mxu0
    %v7700 = vadd.f32 %v6840, %v7699
    %v7701 = vpop.f32.mrf.mxu0
    %v7702 = vadd.f32 %v6840, %v7701
    %7703 = vmatmul.bf16.gmra.mxu0 %v6694
    %v7704 = vpop.f32.mrf.mxu0
    %v7705 = vadd.f32 %v6840, %v7704
    %v7706 = vpop.f32.mrf.mxu0
    %v7707 = vadd.f32 %v6840, %v7706
    %7708 = vmatmul.bf16.gmra.mxu0 %v6696
    %v7709 = vpop.f32.mrf.mxu0
    %v7710 = vadd.f32 %v6840, %v7709
    %v7711 = vpop.f32.mrf.mxu0
    %v7712 = vadd.f32 %v6840, %v7711
    %7713 = vmatmul.bf16.gmra.mxu0 %v6698
    %v7714 = vpop.f32.mrf.mxu0
    %v7715 = vadd.f32 %v6840, %v7714
    %v7716 = vpop.f32.mrf.mxu0
    %v7717 = vadd.f32 %v6840, %v7716
    %7718 = vmatmul.bf16.gmra.mxu0 %v6700
    %v7719 = vpop.f32.mrf.mxu0
    %v7720 = vadd.f32 %v6840, %v7719
    %v7721 = vpop.f32.mrf.mxu0
    %v7722 = vadd.f32 %v6840, %v7721
    %7723 = vmatmul.bf16.gmra.mxu0 %v6702
    %v7724 = vpop.f32.mrf.mxu0
    %v7725 = vadd.f32 %v6840, %v7724
    %v7726 = vpop.f32.mrf.mxu0
    %v7727 = vadd.f32 %v6840, %v7726
    %7728 = vmatmul.bf16.gmra.mxu0 %v6704
    %v7729 = vpop.f32.mrf.mxu0
    %v7730 = vadd.f32 %v6840, %v7729
    %v7731 = vpop.f32.mrf.mxu0
    %v7732 = vadd.f32 %v6840, %v7731
    %7733 = vmatmul.bf16.gmra.mxu0 %v6706
    %v7734 = vpop.f32.mrf.mxu0
    %v7735 = vadd.f32 %v6840, %v7734
    %v7736 = vpop.f32.mrf.mxu0
    %v7737 = vadd.f32 %v6840, %v7736
    %7738 = vdwg.mxu0
    %7739 = vmatpush.bf16.msra.mxu0 %v7360
    %7740 = vmatpush.bf16.msra.mxu0 %v7352
    %7741 = vmatpush.bf16.msra.mxu0 %v7344
    %7742 = vmatpush.bf16.msra.mxu0 %v7336
    %7743 = vmatpush.bf16.msra.mxu0 %v7328
    %7744 = vmatpush.bf16.msra.mxu0 %v7320
    %7745 = vmatpush.bf16.msra.mxu0 %v7312
    %7746 = vmatpush.bf16.msra.mxu0 %v7304
    %7747 = vmatmul.bf16.gmra.mxu0 %v6693
    %v7748 = vpop.f32.mrf.mxu0
    %v7749 = vadd.f32 %v7700, %v7748
    %v7750 = vpop.f32.mrf.mxu0
    %v7751 = vadd.f32 %v7702, %v7750
    %7752 = vmatmul.bf16.gmra.mxu0 %v6695
    %v7753 = vpop.f32.mrf.mxu0
    %v7754 = vadd.f32 %v7705, %v7753
    %v7755 = vpop.f32.mrf.mxu0
    %v7756 = vadd.f32 %v7707, %v7755
    %7757 = vmatmul.bf16.gmra.mxu0 %v6697
    %v7758 = vpop.f32.mrf.mxu0
    %v7759 = vadd.f32 %v7710, %v7758
    %v7760 = vpop.f32.mrf.mxu0
    %v7761 = vadd.f32 %v7712, %v7760
    %7762 = vmatmul.bf16.gmra.mxu0 %v6699
    %v7763 = vpop.f32.mrf.mxu0
    %v7764 = vadd.f32 %v7715, %v7763
    %v7765 = vpop.f32.mrf.mxu0
    %v7766 = vadd.f32 %v7717, %v7765
    %7767 = vmatmul.bf16.gmra.mxu0 %v6701
    %v7768 = vpop.f32.mrf.mxu0
    %v7769 = vadd.f32 %v7720, %v7768
    %v7770 = vpop.f32.mrf.mxu0
    %v7771 = vadd.f32 %v7722, %v7770
    %7772 = vmatmul.bf16.gmra.mxu0 %v6703
    %v7773 = vpop.f32.mrf.mxu0
    %v7774 = vadd.f32 %v7725, %v7773
    %v7775 = vpop.f32.mrf.mxu0
    %v7776 = vadd.f32 %v7727, %v7775
    %7777 = vmatmul.bf16.gmra.mxu0 %v6705
    %v7778 = vpop.f32.mrf.mxu0
    %v7779 = vadd.f32 %v7730, %v7778
    %v7780 = vpop.f32.mrf.mxu0
    %v7781 = vadd.f32 %v7732, %v7780
    %7782 = vmatmul.bf16.gmra.mxu0 %v6707
    %v7783 = vpop.f32.mrf.mxu0
    %v7784 = vadd.f32 %v7735, %v7783
    %v7785 = vpop.f32.mrf.mxu0
    %v7786 = vadd.f32 %v7737, %v7785
    %7787 = vdwg.mxu0
    %7788 = vmatpush.bf16.msra.mxu0 %v7297
    %7789 = vmatpush.bf16.msra.mxu0 %v7289
    %7790 = vmatpush.bf16.msra.mxu0 %v7281
    %7791 = vmatpush.bf16.msra.mxu0 %v7273
    %7792 = vmatpush.bf16.msra.mxu0 %v7265
    %7793 = vmatpush.bf16.msra.mxu0 %v7257
    %7794 = vmatpush.bf16.msra.mxu0 %v7249
    %7795 = vmatpush.bf16.msra.mxu0 %v7241
    %7796 = vmatmul.bf16.gmra.mxu0 %v6692
    %v7797 = vpop.f32.mrf.mxu0
    %v7798 = vadd.f32 %v6841, %v7797
    %v7799 = vpop.f32.mrf.mxu0
    %v7800 = vadd.f32 %v6841, %v7799
    %7801 = vmatmul.bf16.gmra.mxu0 %v6694
    %v7802 = vpop.f32.mrf.mxu0
    %v7803 = vadd.f32 %v6841, %v7802
    %v7804 = vpop.f32.mrf.mxu0
    %v7805 = vadd.f32 %v6841, %v7804
    %7806 = vmatmul.bf16.gmra.mxu0 %v6696
    %v7807 = vpop.f32.mrf.mxu0
    %v7808 = vadd.f32 %v6841, %v7807
    %v7809 = vpop.f32.mrf.mxu0
    %v7810 = vadd.f32 %v6841, %v7809
    %7811 = vmatmul.bf16.gmra.mxu0 %v6698
    %v7812 = vpop.f32.mrf.mxu0
    %v7813 = vadd.f32 %v6841, %v7812
    %v7814 = vpop.f32.mrf.mxu0
    %v7815 = vadd.f32 %v6841, %v7814
    %7816 = vmatmul.bf16.gmra.mxu0 %v6700
    %v7817 = vpop.f32.mrf.mxu0
    %v7818 = vadd.f32 %v6841, %v7817
    %v7819 = vpop.f32.mrf.mxu0
    %v7820 = vadd.f32 %v6841, %v7819
    %7821 = vmatmul.bf16.gmra.mxu0 %v6702
    %v7822 = vpop.f32.mrf.mxu0
    %v7823 = vadd.f32 %v6841, %v7822
    %v7824 = vpop.f32.mrf.mxu0
    %v7825 = vadd.f32 %v6841, %v7824
    %7826 = vmatmul.bf16.gmra.mxu0 %v6704
    %v7827 = vpop.f32.mrf.mxu0
    %v7828 = vadd.f32 %v6841, %v7827
    %v7829 = vpop.f32.mrf.mxu0
    %v7830 = vadd.f32 %v6841, %v7829
    %7831 = vmatmul.bf16.gmra.mxu0 %v6706
    %v7832 = vpop.f32.mrf.mxu0
    %v7833 = vadd.f32 %v6841, %v7832
    %v7834 = vpop.f32.mrf.mxu0
    %v7835 = vadd.f32 %v6841, %v7834
    %7836 = vdwg.mxu0
    %7837 = vmatpush.bf16.msra.mxu0 %v7361
    %7838 = vmatpush.bf16.msra.mxu0 %v7353
    %7839 = vmatpush.bf16.msra.mxu0 %v7345
    %7840 = vmatpush.bf16.msra.mxu0 %v7337
    %7841 = vmatpush.bf16.msra.mxu0 %v7329
    %7842 = vmatpush.bf16.msra.mxu0 %v7321
    %7843 = vmatpush.bf16.msra.mxu0 %v7313
    %7844 = vmatpush.bf16.msra.mxu0 %v7305
    %7845 = vmatmul.bf16.gmra.mxu0 %v6693
    %v7846 = vpop.f32.mrf.mxu0
    %v7847 = vadd.f32 %v7798, %v7846
    %v7848 = vpop.f32.mrf.mxu0
    %v7849 = vadd.f32 %v7800, %v7848
    %7850 = vmatmul.bf16.gmra.mxu0 %v6695
    %v7851 = vpop.f32.mrf.mxu0
    %v7852 = vadd.f32 %v7803, %v7851
    %v7853 = vpop.f32.mrf.mxu0
    %v7854 = vadd.f32 %v7805, %v7853
    %7855 = vmatmul.bf16.gmra.mxu0 %v6697
    %v7856 = vpop.f32.mrf.mxu0
    %v7857 = vadd.f32 %v7808, %v7856
    %v7858 = vpop.f32.mrf.mxu0
    %v7859 = vadd.f32 %v7810, %v7858
    %7860 = vmatmul.bf16.gmra.mxu0 %v6699
    %v7861 = vpop.f32.mrf.mxu0
    %v7862 = vadd.f32 %v7813, %v7861
    %v7863 = vpop.f32.mrf.mxu0
    %v7864 = vadd.f32 %v7815, %v7863
    %7865 = vmatmul.bf16.gmra.mxu0 %v6701
    %v7866 = vpop.f32.mrf.mxu0
    %v7867 = vadd.f32 %v7818, %v7866
    %v7868 = vpop.f32.mrf.mxu0
    %v7869 = vadd.f32 %v7820, %v7868
    %7870 = vmatmul.bf16.gmra.mxu0 %v6703
    %v7871 = vpop.f32.mrf.mxu0
    %v7872 = vadd.f32 %v7823, %v7871
    %v7873 = vpop.f32.mrf.mxu0
    %v7874 = vadd.f32 %v7825, %v7873
    %7875 = vmatmul.bf16.gmra.mxu0 %v6705
    %v7876 = vpop.f32.mrf.mxu0
    %v7877 = vadd.f32 %v7828, %v7876
    %v7878 = vpop.f32.mrf.mxu0
    %v7879 = vadd.f32 %v7830, %v7878
    %7880 = vmatmul.bf16.gmra.mxu0 %v6707
    %v7881 = vpop.f32.mrf.mxu0
    %v7882 = vadd.f32 %v7833, %v7881
    %v7883 = vpop.f32.mrf.mxu0
    %v7884 = vadd.f32 %v7835, %v7883
    %7885 = vdwg.mxu0
    %7886 = vmatpush.bf16.msra.mxu0 %v7298
    %7887 = vmatpush.bf16.msra.mxu0 %v7290
    %7888 = vmatpush.bf16.msra.mxu0 %v7282
    %7889 = vmatpush.bf16.msra.mxu0 %v7274
    %7890 = vmatpush.bf16.msra.mxu0 %v7266
    %7891 = vmatpush.bf16.msra.mxu0 %v7258
    %7892 = vmatpush.bf16.msra.mxu0 %v7250
    %7893 = vmatpush.bf16.msra.mxu0 %v7242
    %7894 = vmatmul.bf16.gmra.mxu0 %v6692
    %v7895 = vpop.f32.mrf.mxu0
    %v7896 = vadd.f32 %v6842, %v7895
    %v7897 = vpop.f32.mrf.mxu0
    %v7898 = vadd.f32 %v6842, %v7897
    %7899 = vmatmul.bf16.gmra.mxu0 %v6694
    %v7900 = vpop.f32.mrf.mxu0
    %v7901 = vadd.f32 %v6842, %v7900
    %v7902 = vpop.f32.mrf.mxu0
    %v7903 = vadd.f32 %v6842, %v7902
    %7904 = vmatmul.bf16.gmra.mxu0 %v6696
    %v7905 = vpop.f32.mrf.mxu0
    %v7906 = vadd.f32 %v6842, %v7905
    %v7907 = vpop.f32.mrf.mxu0
    %v7908 = vadd.f32 %v6842, %v7907
    %7909 = vmatmul.bf16.gmra.mxu0 %v6698
    %v7910 = vpop.f32.mrf.mxu0
    %v7911 = vadd.f32 %v6842, %v7910
    %v7912 = vpop.f32.mrf.mxu0
    %v7913 = vadd.f32 %v6842, %v7912
    %7914 = vmatmul.bf16.gmra.mxu0 %v6700
    %v7915 = vpop.f32.mrf.mxu0
    %v7916 = vadd.f32 %v6842, %v7915
    %v7917 = vpop.f32.mrf.mxu0
    %v7918 = vadd.f32 %v6842, %v7917
    %7919 = vmatmul.bf16.gmra.mxu0 %v6702
    %v7920 = vpop.f32.mrf.mxu0
    %v7921 = vadd.f32 %v6842, %v7920
    %v7922 = vpop.f32.mrf.mxu0
    %v7923 = vadd.f32 %v6842, %v7922
    %7924 = vmatmul.bf16.gmra.mxu0 %v6704
    %v7925 = vpop.f32.mrf.mxu0
    %v7926 = vadd.f32 %v6842, %v7925
    %v7927 = vpop.f32.mrf.mxu0
    %v7928 = vadd.f32 %v6842, %v7927
    %7929 = vmatmul.bf16.gmra.mxu0 %v6706
    %v7930 = vpop.f32.mrf.mxu0
    %v7931 = vadd.f32 %v6842, %v7930
    %v7932 = vpop.f32.mrf.mxu0
    %v7933 = vadd.f32 %v6842, %v7932
    %7934 = vdwg.mxu0
    %7935 = vmatpush.bf16.msra.mxu0 %v7362
    %7936 = vmatpush.bf16.msra.mxu0 %v7354
    %7937 = vmatpush.bf16.msra.mxu0 %v7346
    %7938 = vmatpush.bf16.msra.mxu0 %v7338
    %7939 = vmatpush.bf16.msra.mxu0 %v7330
    %7940 = vmatpush.bf16.msra.mxu0 %v7322
    %7941 = vmatpush.bf16.msra.mxu0 %v7314
    %7942 = vmatpush.bf16.msra.mxu0 %v7306
    %7943 = vmatmul.bf16.gmra.mxu0 %v6693
    %v7944 = vpop.f32.mrf.mxu0
    %v7945 = vadd.f32 %v7896, %v7944
    %v7946 = vpop.f32.mrf.mxu0
    %v7947 = vadd.f32 %v7898, %v7946
    %7948 = vmatmul.bf16.gmra.mxu0 %v6695
    %v7949 = vpop.f32.mrf.mxu0
    %v7950 = vadd.f32 %v7901, %v7949
    %v7951 = vpop.f32.mrf.mxu0
    %v7952 = vadd.f32 %v7903, %v7951
    %7953 = vmatmul.bf16.gmra.mxu0 %v6697
    %v7954 = vpop.f32.mrf.mxu0
    %v7955 = vadd.f32 %v7906, %v7954
    %v7956 = vpop.f32.mrf.mxu0
    %v7957 = vadd.f32 %v7908, %v7956
    %7958 = vmatmul.bf16.gmra.mxu0 %v6699
    %v7959 = vpop.f32.mrf.mxu0
    %v7960 = vadd.f32 %v7911, %v7959
    %v7961 = vpop.f32.mrf.mxu0
    %v7962 = vadd.f32 %v7913, %v7961
    %7963 = vmatmul.bf16.gmra.mxu0 %v6701
    %v7964 = vpop.f32.mrf.mxu0
    %v7965 = vadd.f32 %v7916, %v7964
    %v7966 = vpop.f32.mrf.mxu0
    %v7967 = vadd.f32 %v7918, %v7966
    %7968 = vmatmul.bf16.gmra.mxu0 %v6703
    %v7969 = vpop.f32.mrf.mxu0
    %v7970 = vadd.f32 %v7921, %v7969
    %v7971 = vpop.f32.mrf.mxu0
    %v7972 = vadd.f32 %v7923, %v7971
    %7973 = vmatmul.bf16.gmra.mxu0 %v6705
    %v7974 = vpop.f32.mrf.mxu0
    %v7975 = vadd.f32 %v7926, %v7974
    %v7976 = vpop.f32.mrf.mxu0
    %v7977 = vadd.f32 %v7928, %v7976
    %7978 = vmatmul.bf16.gmra.mxu0 %v6707
    %v7979 = vpop.f32.mrf.mxu0
    %v7980 = vadd.f32 %v7931, %v7979
    %v7981 = vpop.f32.mrf.mxu0
    %v7982 = vadd.f32 %v7933, %v7981
    %7983 = vdwg.mxu0
    %7984 = vmatpush.bf16.msra.mxu0 %v7299
    %7985 = vmatpush.bf16.msra.mxu0 %v7291
    %7986 = vmatpush.bf16.msra.mxu0 %v7283
    %7987 = vmatpush.bf16.msra.mxu0 %v7275
    %7988 = vmatpush.bf16.msra.mxu0 %v7267
    %7989 = vmatpush.bf16.msra.mxu0 %v7259
    %7990 = vmatpush.bf16.msra.mxu0 %v7251
    %7991 = vmatpush.bf16.msra.mxu0 %v7243
    %7992 = vmatmul.bf16.gmra.mxu0 %v6692
    %v7993 = vpop.f32.mrf.mxu0
    %v7994 = vadd.f32 %v6843, %v7993
    %v7995 = vpop.f32.mrf.mxu0
    %v7996 = vadd.f32 %v6843, %v7995
    %7997 = vmatmul.bf16.gmra.mxu0 %v6694
    %v7998 = vpop.f32.mrf.mxu0
    %v7999 = vadd.f32 %v6843, %v7998
    %v8000 = vpop.f32.mrf.mxu0
    %v8001 = vadd.f32 %v6843, %v8000
    %8002 = vmatmul.bf16.gmra.mxu0 %v6696
    %v8003 = vpop.f32.mrf.mxu0
    %v8004 = vadd.f32 %v6843, %v8003
    %v8005 = vpop.f32.mrf.mxu0
    %v8006 = vadd.f32 %v6843, %v8005
    %8007 = vmatmul.bf16.gmra.mxu0 %v6698
    %v8008 = vpop.f32.mrf.mxu0
    %v8009 = vadd.f32 %v6843, %v8008
    %v8010 = vpop.f32.mrf.mxu0
    %v8011 = vadd.f32 %v6843, %v8010
    %8012 = vmatmul.bf16.gmra.mxu0 %v6700
    %v8013 = vpop.f32.mrf.mxu0
    %v8014 = vadd.f32 %v6843, %v8013
    %v8015 = vpop.f32.mrf.mxu0
    %v8016 = vadd.f32 %v6843, %v8015
    %8017 = vmatmul.bf16.gmra.mxu0 %v6702
    %v8018 = vpop.f32.mrf.mxu0
    %v8019 = vadd.f32 %v6843, %v8018
    %v8020 = vpop.f32.mrf.mxu0
    %v8021 = vadd.f32 %v6843, %v8020
    %8022 = vmatmul.bf16.gmra.mxu0 %v6704
    %v8023 = vpop.f32.mrf.mxu0
    %v8024 = vadd.f32 %v6843, %v8023
    %v8025 = vpop.f32.mrf.mxu0
    %v8026 = vadd.f32 %v6843, %v8025
    %8027 = vmatmul.bf16.gmra.mxu0 %v6706
    %v8028 = vpop.f32.mrf.mxu0
    %v8029 = vadd.f32 %v6843, %v8028
    %v8030 = vpop.f32.mrf.mxu0
    %v8031 = vadd.f32 %v6843, %v8030
    %8032 = vdwg.mxu0
    %8033 = vmatpush.bf16.msra.mxu0 %v7363
    %8034 = vmatpush.bf16.msra.mxu0 %v7355
    %8035 = vmatpush.bf16.msra.mxu0 %v7347
    %8036 = vmatpush.bf16.msra.mxu0 %v7339
    %8037 = vmatpush.bf16.msra.mxu0 %v7331
    %8038 = vmatpush.bf16.msra.mxu0 %v7323
    %8039 = vmatpush.bf16.msra.mxu0 %v7315
    %8040 = vmatpush.bf16.msra.mxu0 %v7307
    %8041 = vmatmul.bf16.gmra.mxu0 %v6693
    %v8042 = vpop.f32.mrf.mxu0
    %v8043 = vadd.f32 %v7994, %v8042
    %v8044 = vpop.f32.mrf.mxu0
    %v8045 = vadd.f32 %v7996, %v8044
    %8046 = vmatmul.bf16.gmra.mxu0 %v6695
    %v8047 = vpop.f32.mrf.mxu0
    %v8048 = vadd.f32 %v7999, %v8047
    %v8049 = vpop.f32.mrf.mxu0
    %v8050 = vadd.f32 %v8001, %v8049
    %8051 = vmatmul.bf16.gmra.mxu0 %v6697
    %v8052 = vpop.f32.mrf.mxu0
    %v8053 = vadd.f32 %v8004, %v8052
    %v8054 = vpop.f32.mrf.mxu0
    %v8055 = vadd.f32 %v8006, %v8054
    %8056 = vmatmul.bf16.gmra.mxu0 %v6699
    %v8057 = vpop.f32.mrf.mxu0
    %v8058 = vadd.f32 %v8009, %v8057
    %v8059 = vpop.f32.mrf.mxu0
    %v8060 = vadd.f32 %v8011, %v8059
    %8061 = vmatmul.bf16.gmra.mxu0 %v6701
    %v8062 = vpop.f32.mrf.mxu0
    %v8063 = vadd.f32 %v8014, %v8062
    %v8064 = vpop.f32.mrf.mxu0
    %v8065 = vadd.f32 %v8016, %v8064
    %8066 = vmatmul.bf16.gmra.mxu0 %v6703
    %v8067 = vpop.f32.mrf.mxu0
    %v8068 = vadd.f32 %v8019, %v8067
    %v8069 = vpop.f32.mrf.mxu0
    %v8070 = vadd.f32 %v8021, %v8069
    %8071 = vmatmul.bf16.gmra.mxu0 %v6705
    %v8072 = vpop.f32.mrf.mxu0
    %v8073 = vadd.f32 %v8024, %v8072
    %v8074 = vpop.f32.mrf.mxu0
    %v8075 = vadd.f32 %v8026, %v8074
    %8076 = vmatmul.bf16.gmra.mxu0 %v6707
    %v8077 = vpop.f32.mrf.mxu0
    %v8078 = vadd.f32 %v8029, %v8077
    %v8079 = vpop.f32.mrf.mxu0
    %v8080 = vadd.f32 %v8031, %v8079
    %8081 = vdwg.mxu0
    %8082 = vmatpush.bf16.msra.mxu0 %v7300
    %8083 = vmatpush.bf16.msra.mxu0 %v7292
    %8084 = vmatpush.bf16.msra.mxu0 %v7284
    %8085 = vmatpush.bf16.msra.mxu0 %v7276
    %8086 = vmatpush.bf16.msra.mxu0 %v7268
    %8087 = vmatpush.bf16.msra.mxu0 %v7260
    %8088 = vmatpush.bf16.msra.mxu0 %v7252
    %8089 = vmatpush.bf16.msra.mxu0 %v7244
    %8090 = vmatmul.bf16.gmra.mxu0 %v6692
    %v8091 = vpop.f32.mrf.mxu0
    %v8092 = vadd.f32 %v6844, %v8091
    %v8093 = vpop.f32.mrf.mxu0
    %v8094 = vadd.f32 %v6844, %v8093
    %8095 = vmatmul.bf16.gmra.mxu0 %v6694
    %v8096 = vpop.f32.mrf.mxu0
    %v8097 = vadd.f32 %v6844, %v8096
    %v8098 = vpop.f32.mrf.mxu0
    %v8099 = vadd.f32 %v6844, %v8098
    %8100 = vmatmul.bf16.gmra.mxu0 %v6696
    %v8101 = vpop.f32.mrf.mxu0
    %v8102 = vadd.f32 %v6844, %v8101
    %v8103 = vpop.f32.mrf.mxu0
    %v8104 = vadd.f32 %v6844, %v8103
    %8105 = vmatmul.bf16.gmra.mxu0 %v6698
    %v8106 = vpop.f32.mrf.mxu0
    %v8107 = vadd.f32 %v6844, %v8106
    %v8108 = vpop.f32.mrf.mxu0
    %v8109 = vadd.f32 %v6844, %v8108
    %8110 = vmatmul.bf16.gmra.mxu0 %v6700
    %v8111 = vpop.f32.mrf.mxu0
    %v8112 = vadd.f32 %v6844, %v8111
    %v8113 = vpop.f32.mrf.mxu0
    %v8114 = vadd.f32 %v6844, %v8113
    %8115 = vmatmul.bf16.gmra.mxu0 %v6702
    %v8116 = vpop.f32.mrf.mxu0
    %v8117 = vadd.f32 %v6844, %v8116
    %v8118 = vpop.f32.mrf.mxu0
    %v8119 = vadd.f32 %v6844, %v8118
    %8120 = vmatmul.bf16.gmra.mxu0 %v6704
    %v8121 = vpop.f32.mrf.mxu0
    %v8122 = vadd.f32 %v6844, %v8121
    %v8123 = vpop.f32.mrf.mxu0
    %v8124 = vadd.f32 %v6844, %v8123
    %8125 = vmatmul.bf16.gmra.mxu0 %v6706
    %v8126 = vpop.f32.mrf.mxu0
    %v8127 = vadd.f32 %v6844, %v8126
    %v8128 = vpop.f32.mrf.mxu0
    %v8129 = vadd.f32 %v6844, %v8128
    %8130 = vdwg.mxu0
    %8131 = vmatpush.bf16.msra.mxu0 %v7364
    %8132 = vmatpush.bf16.msra.mxu0 %v7356
    %8133 = vmatpush.bf16.msra.mxu0 %v7348
    %8134 = vmatpush.bf16.msra.mxu0 %v7340
    %8135 = vmatpush.bf16.msra.mxu0 %v7332
    %8136 = vmatpush.bf16.msra.mxu0 %v7324
    %8137 = vmatpush.bf16.msra.mxu0 %v7316
    %8138 = vmatpush.bf16.msra.mxu0 %v7308
    %8139 = vmatmul.bf16.gmra.mxu0 %v6693
    %v8140 = vpop.f32.mrf.mxu0
    %v8141 = vadd.f32 %v8092, %v8140
    %v8142 = vpop.f32.mrf.mxu0
    %v8143 = vadd.f32 %v8094, %v8142
    %8144 = vmatmul.bf16.gmra.mxu0 %v6695
    %v8145 = vpop.f32.mrf.mxu0
    %v8146 = vadd.f32 %v8097, %v8145
    %v8147 = vpop.f32.mrf.mxu0
    %v8148 = vadd.f32 %v8099, %v8147
    %8149 = vmatmul.bf16.gmra.mxu0 %v6697
    %v8150 = vpop.f32.mrf.mxu0
    %v8151 = vadd.f32 %v8102, %v8150
    %v8152 = vpop.f32.mrf.mxu0
    %v8153 = vadd.f32 %v8104, %v8152
    %8154 = vmatmul.bf16.gmra.mxu0 %v6699
    %v8155 = vpop.f32.mrf.mxu0
    %v8156 = vadd.f32 %v8107, %v8155
    %v8157 = vpop.f32.mrf.mxu0
    %v8158 = vadd.f32 %v8109, %v8157
    %8159 = vmatmul.bf16.gmra.mxu0 %v6701
    %v8160 = vpop.f32.mrf.mxu0
    %v8161 = vadd.f32 %v8112, %v8160
    %v8162 = vpop.f32.mrf.mxu0
    %v8163 = vadd.f32 %v8114, %v8162
    %8164 = vmatmul.bf16.gmra.mxu0 %v6703
    %v8165 = vpop.f32.mrf.mxu0
    %v8166 = vadd.f32 %v8117, %v8165
    %v8167 = vpop.f32.mrf.mxu0
    %v8168 = vadd.f32 %v8119, %v8167
    %8169 = vmatmul.bf16.gmra.mxu0 %v6705
    %v8170 = vpop.f32.mrf.mxu0
    %v8171 = vadd.f32 %v8122, %v8170
    %v8172 = vpop.f32.mrf.mxu0
    %v8173 = vadd.f32 %v8124, %v8172
    %8174 = vmatmul.bf16.gmra.mxu0 %v6707
    %v8175 = vpop.f32.mrf.mxu0
    %v8176 = vadd.f32 %v8127, %v8175
    %v8177 = vpop.f32.mrf.mxu0
    %v8178 = vadd.f32 %v8129, %v8177
    %8179 = vdwg.mxu0
    %8180 = vmatpush.bf16.msra.mxu0 %v7301
    %8181 = vmatpush.bf16.msra.mxu0 %v7293
    %8182 = vmatpush.bf16.msra.mxu0 %v7285
    %8183 = vmatpush.bf16.msra.mxu0 %v7277
    %8184 = vmatpush.bf16.msra.mxu0 %v7269
    %8185 = vmatpush.bf16.msra.mxu0 %v7261
    %8186 = vmatpush.bf16.msra.mxu0 %v7253
    %8187 = vmatpush.bf16.msra.mxu0 %v7245
    %8188 = vmatmul.bf16.gmra.mxu0 %v6692
    %v8189 = vpop.f32.mrf.mxu0
    %v8190 = vadd.f32 %v6845, %v8189
    %v8191 = vpop.f32.mrf.mxu0
    %v8192 = vadd.f32 %v6845, %v8191
    %8193 = vmatmul.bf16.gmra.mxu0 %v6694
    %v8194 = vpop.f32.mrf.mxu0
    %v8195 = vadd.f32 %v6845, %v8194
    %v8196 = vpop.f32.mrf.mxu0
    %v8197 = vadd.f32 %v6845, %v8196
    %8198 = vmatmul.bf16.gmra.mxu0 %v6696
    %v8199 = vpop.f32.mrf.mxu0
    %v8200 = vadd.f32 %v6845, %v8199
    %v8201 = vpop.f32.mrf.mxu0
    %v8202 = vadd.f32 %v6845, %v8201
    %8203 = vmatmul.bf16.gmra.mxu0 %v6698
    %v8204 = vpop.f32.mrf.mxu0
    %v8205 = vadd.f32 %v6845, %v8204
    %v8206 = vpop.f32.mrf.mxu0
    %v8207 = vadd.f32 %v6845, %v8206
    %8208 = vmatmul.bf16.gmra.mxu0 %v6700
    %v8209 = vpop.f32.mrf.mxu0
    %v8210 = vadd.f32 %v6845, %v8209
    %v8211 = vpop.f32.mrf.mxu0
    %v8212 = vadd.f32 %v6845, %v8211
    %8213 = vmatmul.bf16.gmra.mxu0 %v6702
    %v8214 = vpop.f32.mrf.mxu0
    %v8215 = vadd.f32 %v6845, %v8214
    %v8216 = vpop.f32.mrf.mxu0
    %v8217 = vadd.f32 %v6845, %v8216
    %8218 = vmatmul.bf16.gmra.mxu0 %v6704
    %v8219 = vpop.f32.mrf.mxu0
    %v8220 = vadd.f32 %v6845, %v8219
    %v8221 = vpop.f32.mrf.mxu0
    %v8222 = vadd.f32 %v6845, %v8221
    %8223 = vmatmul.bf16.gmra.mxu0 %v6706
    %v8224 = vpop.f32.mrf.mxu0
    %v8225 = vadd.f32 %v6845, %v8224
    %v8226 = vpop.f32.mrf.mxu0
    %v8227 = vadd.f32 %v6845, %v8226
    %8228 = vdwg.mxu0
    %8229 = vmatpush.bf16.msra.mxu0 %v7365
    %8230 = vmatpush.bf16.msra.mxu0 %v7357
    %8231 = vmatpush.bf16.msra.mxu0 %v7349
    %8232 = vmatpush.bf16.msra.mxu0 %v7341
    %8233 = vmatpush.bf16.msra.mxu0 %v7333
    %8234 = vmatpush.bf16.msra.mxu0 %v7325
    %8235 = vmatpush.bf16.msra.mxu0 %v7317
    %8236 = vmatpush.bf16.msra.mxu0 %v7309
    %8237 = vmatmul.bf16.gmra.mxu0 %v6693
    %v8238 = vpop.f32.mrf.mxu0
    %v8239 = vadd.f32 %v8190, %v8238
    %v8240 = vpop.f32.mrf.mxu0
    %v8241 = vadd.f32 %v8192, %v8240
    %8242 = vmatmul.bf16.gmra.mxu0 %v6695
    %v8243 = vpop.f32.mrf.mxu0
    %v8244 = vadd.f32 %v8195, %v8243
    %v8245 = vpop.f32.mrf.mxu0
    %v8246 = vadd.f32 %v8197, %v8245
    %8247 = vmatmul.bf16.gmra.mxu0 %v6697
    %v8248 = vpop.f32.mrf.mxu0
    %v8249 = vadd.f32 %v8200, %v8248
    %v8250 = vpop.f32.mrf.mxu0
    %v8251 = vadd.f32 %v8202, %v8250
    %8252 = vmatmul.bf16.gmra.mxu0 %v6699
    %v8253 = vpop.f32.mrf.mxu0
    %v8254 = vadd.f32 %v8205, %v8253
    %v8255 = vpop.f32.mrf.mxu0
    %v8256 = vadd.f32 %v8207, %v8255
    %8257 = vmatmul.bf16.gmra.mxu0 %v6701
    %v8258 = vpop.f32.mrf.mxu0
    %v8259 = vadd.f32 %v8210, %v8258
    %v8260 = vpop.f32.mrf.mxu0
    %v8261 = vadd.f32 %v8212, %v8260
    %8262 = vmatmul.bf16.gmra.mxu0 %v6703
    %v8263 = vpop.f32.mrf.mxu0
    %v8264 = vadd.f32 %v8215, %v8263
    %v8265 = vpop.f32.mrf.mxu0
    %v8266 = vadd.f32 %v8217, %v8265
    %8267 = vmatmul.bf16.gmra.mxu0 %v6705
    %v8268 = vpop.f32.mrf.mxu0
    %v8269 = vadd.f32 %v8220, %v8268
    %v8270 = vpop.f32.mrf.mxu0
    %v8271 = vadd.f32 %v8222, %v8270
    %8272 = vmatmul.bf16.gmra.mxu0 %v6707
    %v8273 = vpop.f32.mrf.mxu0
    %v8274 = vadd.f32 %v8225, %v8273
    %v8275 = vpop.f32.mrf.mxu0
    %v8276 = vadd.f32 %v8227, %v8275
    %8277 = vdwg.mxu0
    %v8278 = vmul.f32 %v7553, 0.5
    %v8279 = vmul.f32 %v7651, 0.5
    %v8280 = vmul.f32 %v7749, 0.5
    %v8281 = vmul.f32 %v7847, 0.5
    %v8282 = vmul.f32 %v7945, 0.5
    %v8283 = vmul.f32 %v8043, 0.5
    %v8284 = vmul.f32 %v8141, 0.5
    %v8285 = vmul.f32 %v8239, 0.5
    %v8286 = vmul.f32 %v7555, 0.5
    %v8287 = vmul.f32 %v7653, 0.5
    %v8288 = vmul.f32 %v7751, 0.5
    %v8289 = vmul.f32 %v7849, 0.5
    %v8290 = vmul.f32 %v7947, 0.5
    %v8291 = vmul.f32 %v8045, 0.5
    %v8292 = vmul.f32 %v8143, 0.5
    %v8293 = vmul.f32 %v8241, 0.5
    %v8294 = vmul.f32 %v7558, 0.5
    %v8295 = vmul.f32 %v7656, 0.5
    %v8296 = vmul.f32 %v7754, 0.5
    %v8297 = vmul.f32 %v7852, 0.5
    %v8298 = vmul.f32 %v7950, 0.5
    %v8299 = vmul.f32 %v8048, 0.5
    %v8300 = vmul.f32 %v8146, 0.5
    %v8301 = vmul.f32 %v8244, 0.5
    %v8302 = vmul.f32 %v7560, 0.5
    %v8303 = vmul.f32 %v7658, 0.5
    %v8304 = vmul.f32 %v7756, 0.5
    %v8305 = vmul.f32 %v7854, 0.5
    %v8306 = vmul.f32 %v7952, 0.5
    %v8307 = vmul.f32 %v8050, 0.5
    %v8308 = vmul.f32 %v8148, 0.5
    %v8309 = vmul.f32 %v8246, 0.5
    %v8310 = vmul.f32 %v7563, 0.5
    %v8311 = vmul.f32 %v7661, 0.5
    %v8312 = vmul.f32 %v7759, 0.5
    %v8313 = vmul.f32 %v7857, 0.5
    %v8314 = vmul.f32 %v7955, 0.5
    %v8315 = vmul.f32 %v8053, 0.5
    %v8316 = vmul.f32 %v8151, 0.5
    %v8317 = vmul.f32 %v8249, 0.5
    %v8318 = vmul.f32 %v7565, 0.5
    %v8319 = vmul.f32 %v7663, 0.5
    %v8320 = vmul.f32 %v7761, 0.5
    %v8321 = vmul.f32 %v7859, 0.5
    %v8322 = vmul.f32 %v7957, 0.5
    %v8323 = vmul.f32 %v8055, 0.5
    %v8324 = vmul.f32 %v8153, 0.5
    %v8325 = vmul.f32 %v8251, 0.5
    %v8326 = vmul.f32 %v7568, 0.5
    %v8327 = vmul.f32 %v7666, 0.5
    %v8328 = vmul.f32 %v7764, 0.5
    %v8329 = vmul.f32 %v7862, 0.5
    %v8330 = vmul.f32 %v7960, 0.5
    %v8331 = vmul.f32 %v8058, 0.5
    %v8332 = vmul.f32 %v8156, 0.5
    %v8333 = vmul.f32 %v8254, 0.5
    %v8334 = vmul.f32 %v7570, 0.5
    %v8335 = vmul.f32 %v7668, 0.5
    %v8336 = vmul.f32 %v7766, 0.5
    %v8337 = vmul.f32 %v7864, 0.5
    %v8338 = vmul.f32 %v7962, 0.5
    %v8339 = vmul.f32 %v8060, 0.5
    %v8340 = vmul.f32 %v8158, 0.5
    %v8341 = vmul.f32 %v8256, 0.5
    %v8342 = vmul.f32 %v7573, 0.5
    %v8343 = vmul.f32 %v7671, 0.5
    %v8344 = vmul.f32 %v7769, 0.5
    %v8345 = vmul.f32 %v7867, 0.5
    %v8346 = vmul.f32 %v7965, 0.5
    %v8347 = vmul.f32 %v8063, 0.5
    %v8348 = vmul.f32 %v8161, 0.5
    %v8349 = vmul.f32 %v8259, 0.5
    %v8350 = vmul.f32 %v7575, 0.5
    %v8351 = vmul.f32 %v7673, 0.5
    %v8352 = vmul.f32 %v7771, 0.5
    %v8353 = vmul.f32 %v7869, 0.5
    %v8354 = vmul.f32 %v7967, 0.5
    %v8355 = vmul.f32 %v8065, 0.5
    %v8356 = vmul.f32 %v8163, 0.5
    %v8357 = vmul.f32 %v8261, 0.5
    %v8358 = vmul.f32 %v7578, 0.5
    %v8359 = vmul.f32 %v7676, 0.5
    %v8360 = vmul.f32 %v7774, 0.5
    %v8361 = vmul.f32 %v7872, 0.5
    %v8362 = vmul.f32 %v7970, 0.5
    %v8363 = vmul.f32 %v8068, 0.5
    %v8364 = vmul.f32 %v8166, 0.5
    %v8365 = vmul.f32 %v8264, 0.5
    %v8366 = vmul.f32 %v7580, 0.5
    %v8367 = vmul.f32 %v7678, 0.5
    %v8368 = vmul.f32 %v7776, 0.5
    %v8369 = vmul.f32 %v7874, 0.5
    %v8370 = vmul.f32 %v7972, 0.5
    %v8371 = vmul.f32 %v8070, 0.5
    %v8372 = vmul.f32 %v8168, 0.5
    %v8373 = vmul.f32 %v8266, 0.5
    %v8374 = vmul.f32 %v7583, 0.5
    %v8375 = vmul.f32 %v7681, 0.5
    %v8376 = vmul.f32 %v7779, 0.5
    %v8377 = vmul.f32 %v7877, 0.5
    %v8378 = vmul.f32 %v7975, 0.5
    %v8379 = vmul.f32 %v8073, 0.5
    %v8380 = vmul.f32 %v8171, 0.5
    %v8381 = vmul.f32 %v8269, 0.5
    %v8382 = vmul.f32 %v7585, 0.5
    %v8383 = vmul.f32 %v7683, 0.5
    %v8384 = vmul.f32 %v7781, 0.5
    %v8385 = vmul.f32 %v7879, 0.5
    %v8386 = vmul.f32 %v7977, 0.5
    %v8387 = vmul.f32 %v8075, 0.5
    %v8388 = vmul.f32 %v8173, 0.5
    %v8389 = vmul.f32 %v8271, 0.5
    %v8390 = vmul.f32 %v7588, 0.5
    %v8391 = vmul.f32 %v7686, 0.5
    %v8392 = vmul.f32 %v7784, 0.5
    %v8393 = vmul.f32 %v7882, 0.5
    %v8394 = vmul.f32 %v7980, 0.5
    %v8395 = vmul.f32 %v8078, 0.5
    %v8396 = vmul.f32 %v8176, 0.5
    %v8397 = vmul.f32 %v8274, 0.5
    %v8398 = vmul.f32 %v7590, 0.5
    %v8399 = vmul.f32 %v7688, 0.5
    %v8400 = vmul.f32 %v7786, 0.5
    %v8401 = vmul.f32 %v7884, 0.5
    %v8402 = vmul.f32 %v7982, 0.5
    %v8403 = vmul.f32 %v8080, 0.5
    %v8404 = vmul.f32 %v8178, 0.5
    %v8405 = vmul.f32 %v8276, 0.5
    %v8406 = vmul.f32 %v7553, 0.044715
    %v8407 = vmul.f32 %v7651, 0.044715
    %v8408 = vmul.f32 %v7749, 0.044715
    %v8409 = vmul.f32 %v7847, 0.044715
    %v8410 = vmul.f32 %v7945, 0.044715
    %v8411 = vmul.f32 %v8043, 0.044715
    %v8412 = vmul.f32 %v8141, 0.044715
    %v8413 = vmul.f32 %v8239, 0.044715
    %v8414 = vmul.f32 %v7555, 0.044715
    %v8415 = vmul.f32 %v7653, 0.044715
    %v8416 = vmul.f32 %v7751, 0.044715
    %v8417 = vmul.f32 %v7849, 0.044715
    %v8418 = vmul.f32 %v7947, 0.044715
    %v8419 = vmul.f32 %v8045, 0.044715
    %v8420 = vmul.f32 %v8143, 0.044715
    %v8421 = vmul.f32 %v8241, 0.044715
    %v8422 = vmul.f32 %v7558, 0.044715
    %v8423 = vmul.f32 %v7656, 0.044715
    %v8424 = vmul.f32 %v7754, 0.044715
    %v8425 = vmul.f32 %v7852, 0.044715
    %v8426 = vmul.f32 %v7950, 0.044715
    %v8427 = vmul.f32 %v8048, 0.044715
    %v8428 = vmul.f32 %v8146, 0.044715
    %v8429 = vmul.f32 %v8244, 0.044715
    %v8430 = vmul.f32 %v7560, 0.044715
    %v8431 = vmul.f32 %v7658, 0.044715
    %v8432 = vmul.f32 %v7756, 0.044715
    %v8433 = vmul.f32 %v7854, 0.044715
    %v8434 = vmul.f32 %v7952, 0.044715
    %v8435 = vmul.f32 %v8050, 0.044715
    %v8436 = vmul.f32 %v8148, 0.044715
    %v8437 = vmul.f32 %v8246, 0.044715
    %v8438 = vmul.f32 %v7563, 0.044715
    %v8439 = vmul.f32 %v7661, 0.044715
    %v8440 = vmul.f32 %v7759, 0.044715
    %v8441 = vmul.f32 %v7857, 0.044715
    %v8442 = vmul.f32 %v7955, 0.044715
    %v8443 = vmul.f32 %v8053, 0.044715
    %v8444 = vmul.f32 %v8151, 0.044715
    %v8445 = vmul.f32 %v8249, 0.044715
    %v8446 = vmul.f32 %v7565, 0.044715
    %v8447 = vmul.f32 %v7663, 0.044715
    %v8448 = vmul.f32 %v7761, 0.044715
    %v8449 = vmul.f32 %v7859, 0.044715
    %v8450 = vmul.f32 %v7957, 0.044715
    %v8451 = vmul.f32 %v8055, 0.044715
    %v8452 = vmul.f32 %v8153, 0.044715
    %v8453 = vmul.f32 %v8251, 0.044715
    %v8454 = vmul.f32 %v7568, 0.044715
    %v8455 = vmul.f32 %v7666, 0.044715
    %v8456 = vmul.f32 %v7764, 0.044715
    %v8457 = vmul.f32 %v7862, 0.044715
    %v8458 = vmul.f32 %v7960, 0.044715
    %v8459 = vmul.f32 %v8058, 0.044715
    %v8460 = vmul.f32 %v8156, 0.044715
    %v8461 = vmul.f32 %v8254, 0.044715
    %v8462 = vmul.f32 %v7570, 0.044715
    %v8463 = vmul.f32 %v7668, 0.044715
    %v8464 = vmul.f32 %v7766, 0.044715
    %v8465 = vmul.f32 %v7864, 0.044715
    %v8466 = vmul.f32 %v7962, 0.044715
    %v8467 = vmul.f32 %v8060, 0.044715
    %v8468 = vmul.f32 %v8158, 0.044715
    %v8469 = vmul.f32 %v8256, 0.044715
    %v8470 = vmul.f32 %v7573, 0.044715
    %v8471 = vmul.f32 %v7671, 0.044715
    %v8472 = vmul.f32 %v7769, 0.044715
    %v8473 = vmul.f32 %v7867, 0.044715
    %v8474 = vmul.f32 %v7965, 0.044715
    %v8475 = vmul.f32 %v8063, 0.044715
    %v8476 = vmul.f32 %v8161, 0.044715
    %v8477 = vmul.f32 %v8259, 0.044715
    %v8478 = vmul.f32 %v7575, 0.044715
    %v8479 = vmul.f32 %v7673, 0.044715
    %v8480 = vmul.f32 %v7771, 0.044715
    %v8481 = vmul.f32 %v7869, 0.044715
    %v8482 = vmul.f32 %v7967, 0.044715
    %v8483 = vmul.f32 %v8065, 0.044715
    %v8484 = vmul.f32 %v8163, 0.044715
    %v8485 = vmul.f32 %v8261, 0.044715
    %v8486 = vmul.f32 %v7578, 0.044715
    %v8487 = vmul.f32 %v7676, 0.044715
    %v8488 = vmul.f32 %v7774, 0.044715
    %v8489 = vmul.f32 %v7872, 0.044715
    %v8490 = vmul.f32 %v7970, 0.044715
    %v8491 = vmul.f32 %v8068, 0.044715
    %v8492 = vmul.f32 %v8166, 0.044715
    %v8493 = vmul.f32 %v8264, 0.044715
    %v8494 = vmul.f32 %v7580, 0.044715
    %v8495 = vmul.f32 %v7678, 0.044715
    %v8496 = vmul.f32 %v7776, 0.044715
    %v8497 = vmul.f32 %v7874, 0.044715
    %v8498 = vmul.f32 %v7972, 0.044715
    %v8499 = vmul.f32 %v8070, 0.044715
    %v8500 = vmul.f32 %v8168, 0.044715
    %v8501 = vmul.f32 %v8266, 0.044715
    %v8502 = vmul.f32 %v7583, 0.044715
    %v8503 = vmul.f32 %v7681, 0.044715
    %v8504 = vmul.f32 %v7779, 0.044715
    %v8505 = vmul.f32 %v7877, 0.044715
    %v8506 = vmul.f32 %v7975, 0.044715
    %v8507 = vmul.f32 %v8073, 0.044715
    %v8508 = vmul.f32 %v8171, 0.044715
    %v8509 = vmul.f32 %v8269, 0.044715
    %v8510 = vmul.f32 %v7585, 0.044715
    %v8511 = vmul.f32 %v7683, 0.044715
    %v8512 = vmul.f32 %v7781, 0.044715
    %v8513 = vmul.f32 %v7879, 0.044715
    %v8514 = vmul.f32 %v7977, 0.044715
    %v8515 = vmul.f32 %v8075, 0.044715
    %v8516 = vmul.f32 %v8173, 0.044715
    %v8517 = vmul.f32 %v8271, 0.044715
    %v8518 = vmul.f32 %v7588, 0.044715
    %v8519 = vmul.f32 %v7686, 0.044715
    %v8520 = vmul.f32 %v7784, 0.044715
    %v8521 = vmul.f32 %v7882, 0.044715
    %v8522 = vmul.f32 %v7980, 0.044715
    %v8523 = vmul.f32 %v8078, 0.044715
    %v8524 = vmul.f32 %v8176, 0.044715
    %v8525 = vmul.f32 %v8274, 0.044715
    %v8526 = vmul.f32 %v7590, 0.044715
    %v8527 = vmul.f32 %v7688, 0.044715
    %v8528 = vmul.f32 %v7786, 0.044715
    %v8529 = vmul.f32 %v7884, 0.044715
    %v8530 = vmul.f32 %v7982, 0.044715
    %v8531 = vmul.f32 %v8080, 0.044715
    %v8532 = vmul.f32 %v8178, 0.044715
    %v8533 = vmul.f32 %v8276, 0.044715
    %v8534 = vmul.f32 %v8406, %v7553
    %v8535 = vmul.f32 %v8407, %v7651
    %v8536 = vmul.f32 %v8408, %v7749
    %v8537 = vmul.f32 %v8409, %v7847
    %v8538 = vmul.f32 %v8410, %v7945
    %v8539 = vmul.f32 %v8411, %v8043
    %v8540 = vmul.f32 %v8412, %v8141
    %v8541 = vmul.f32 %v8413, %v8239
    %v8542 = vmul.f32 %v8414, %v7555
    %v8543 = vmul.f32 %v8415, %v7653
    %v8544 = vmul.f32 %v8416, %v7751
    %v8545 = vmul.f32 %v8417, %v7849
    %v8546 = vmul.f32 %v8418, %v7947
    %v8547 = vmul.f32 %v8419, %v8045
    %v8548 = vmul.f32 %v8420, %v8143
    %v8549 = vmul.f32 %v8421, %v8241
    %v8550 = vmul.f32 %v8422, %v7558
    %v8551 = vmul.f32 %v8423, %v7656
    %v8552 = vmul.f32 %v8424, %v7754
    %v8553 = vmul.f32 %v8425, %v7852
    %v8554 = vmul.f32 %v8426, %v7950
    %v8555 = vmul.f32 %v8427, %v8048
    %v8556 = vmul.f32 %v8428, %v8146
    %v8557 = vmul.f32 %v8429, %v8244
    %v8558 = vmul.f32 %v8430, %v7560
    %v8559 = vmul.f32 %v8431, %v7658
    %v8560 = vmul.f32 %v8432, %v7756
    %v8561 = vmul.f32 %v8433, %v7854
    %v8562 = vmul.f32 %v8434, %v7952
    %v8563 = vmul.f32 %v8435, %v8050
    %v8564 = vmul.f32 %v8436, %v8148
    %v8565 = vmul.f32 %v8437, %v8246
    %v8566 = vmul.f32 %v8438, %v7563
    %v8567 = vmul.f32 %v8439, %v7661
    %v8568 = vmul.f32 %v8440, %v7759
    %v8569 = vmul.f32 %v8441, %v7857
    %v8570 = vmul.f32 %v8442, %v7955
    %v8571 = vmul.f32 %v8443, %v8053
    %v8572 = vmul.f32 %v8444, %v8151
    %v8573 = vmul.f32 %v8445, %v8249
    %v8574 = vmul.f32 %v8446, %v7565
    %v8575 = vmul.f32 %v8447, %v7663
    %v8576 = vmul.f32 %v8448, %v7761
    %v8577 = vmul.f32 %v8449, %v7859
    %v8578 = vmul.f32 %v8450, %v7957
    %v8579 = vmul.f32 %v8451, %v8055
    %v8580 = vmul.f32 %v8452, %v8153
    %v8581 = vmul.f32 %v8453, %v8251
    %v8582 = vmul.f32 %v8454, %v7568
    %v8583 = vmul.f32 %v8455, %v7666
    %v8584 = vmul.f32 %v8456, %v7764
    %v8585 = vmul.f32 %v8457, %v7862
    %v8586 = vmul.f32 %v8458, %v7960
    %v8587 = vmul.f32 %v8459, %v8058
    %v8588 = vmul.f32 %v8460, %v8156
    %v8589 = vmul.f32 %v8461, %v8254
    %v8590 = vmul.f32 %v8462, %v7570
    %v8591 = vmul.f32 %v8463, %v7668
    %v8592 = vmul.f32 %v8464, %v7766
    %v8593 = vmul.f32 %v8465, %v7864
    %v8594 = vmul.f32 %v8466, %v7962
    %v8595 = vmul.f32 %v8467, %v8060
    %v8596 = vmul.f32 %v8468, %v8158
    %v8597 = vmul.f32 %v8469, %v8256
    %v8598 = vmul.f32 %v8470, %v7573
    %v8599 = vmul.f32 %v8471, %v7671
    %v8600 = vmul.f32 %v8472, %v7769
    %v8601 = vmul.f32 %v8473, %v7867
    %v8602 = vmul.f32 %v8474, %v7965
    %v8603 = vmul.f32 %v8475, %v8063
    %v8604 = vmul.f32 %v8476, %v8161
    %v8605 = vmul.f32 %v8477, %v8259
    %v8606 = vmul.f32 %v8478, %v7575
    %v8607 = vmul.f32 %v8479, %v7673
    %v8608 = vmul.f32 %v8480, %v7771
    %v8609 = vmul.f32 %v8481, %v7869
    %v8610 = vmul.f32 %v8482, %v7967
    %v8611 = vmul.f32 %v8483, %v8065
    %v8612 = vmul.f32 %v8484, %v8163
    %v8613 = vmul.f32 %v8485, %v8261
    %v8614 = vmul.f32 %v8486, %v7578
    %v8615 = vmul.f32 %v8487, %v7676
    %v8616 = vmul.f32 %v8488, %v7774
    %v8617 = vmul.f32 %v8489, %v7872
    %v8618 = vmul.f32 %v8490, %v7970
    %v8619 = vmul.f32 %v8491, %v8068
    %v8620 = vmul.f32 %v8492, %v8166
    %v8621 = vmul.f32 %v8493, %v8264
    %v8622 = vmul.f32 %v8494, %v7580
    %v8623 = vmul.f32 %v8495, %v7678
    %v8624 = vmul.f32 %v8496, %v7776
    %v8625 = vmul.f32 %v8497, %v7874
    %v8626 = vmul.f32 %v8498, %v7972
    %v8627 = vmul.f32 %v8499, %v8070
    %v8628 = vmul.f32 %v8500, %v8168
    %v8629 = vmul.f32 %v8501, %v8266
    %v8630 = vmul.f32 %v8502, %v7583
    %v8631 = vmul.f32 %v8503, %v7681
    %v8632 = vmul.f32 %v8504, %v7779
    %v8633 = vmul.f32 %v8505, %v7877
    %v8634 = vmul.f32 %v8506, %v7975
    %v8635 = vmul.f32 %v8507, %v8073
    %v8636 = vmul.f32 %v8508, %v8171
    %v8637 = vmul.f32 %v8509, %v8269
    %v8638 = vmul.f32 %v8510, %v7585
    %v8639 = vmul.f32 %v8511, %v7683
    %v8640 = vmul.f32 %v8512, %v7781
    %v8641 = vmul.f32 %v8513, %v7879
    %v8642 = vmul.f32 %v8514, %v7977
    %v8643 = vmul.f32 %v8515, %v8075
    %v8644 = vmul.f32 %v8516, %v8173
    %v8645 = vmul.f32 %v8517, %v8271
    %v8646 = vmul.f32 %v8518, %v7588
    %v8647 = vmul.f32 %v8519, %v7686
    %v8648 = vmul.f32 %v8520, %v7784
    %v8649 = vmul.f32 %v8521, %v7882
    %v8650 = vmul.f32 %v8522, %v7980
    %v8651 = vmul.f32 %v8523, %v8078
    %v8652 = vmul.f32 %v8524, %v8176
    %v8653 = vmul.f32 %v8525, %v8274
    %v8654 = vmul.f32 %v8526, %v7590
    %v8655 = vmul.f32 %v8527, %v7688
    %v8656 = vmul.f32 %v8528, %v7786
    %v8657 = vmul.f32 %v8529, %v7884
    %v8658 = vmul.f32 %v8530, %v7982
    %v8659 = vmul.f32 %v8531, %v8080
    %v8660 = vmul.f32 %v8532, %v8178
    %v8661 = vmul.f32 %v8533, %v8276
    %v8662 = vmul.f32 %v8534, %v7553
    %v8663 = vmul.f32 %v8535, %v7651
    %v8664 = vmul.f32 %v8536, %v7749
    %v8665 = vmul.f32 %v8537, %v7847
    %v8666 = vmul.f32 %v8538, %v7945
    %v8667 = vmul.f32 %v8539, %v8043
    %v8668 = vmul.f32 %v8540, %v8141
    %v8669 = vmul.f32 %v8541, %v8239
    %v8670 = vmul.f32 %v8542, %v7555
    %v8671 = vmul.f32 %v8543, %v7653
    %v8672 = vmul.f32 %v8544, %v7751
    %v8673 = vmul.f32 %v8545, %v7849
    %v8674 = vmul.f32 %v8546, %v7947
    %v8675 = vmul.f32 %v8547, %v8045
    %v8676 = vmul.f32 %v8548, %v8143
    %v8677 = vmul.f32 %v8549, %v8241
    %v8678 = vmul.f32 %v8550, %v7558
    %v8679 = vmul.f32 %v8551, %v7656
    %v8680 = vmul.f32 %v8552, %v7754
    %v8681 = vmul.f32 %v8553, %v7852
    %v8682 = vmul.f32 %v8554, %v7950
    %v8683 = vmul.f32 %v8555, %v8048
    %v8684 = vmul.f32 %v8556, %v8146
    %v8685 = vmul.f32 %v8557, %v8244
    %v8686 = vmul.f32 %v8558, %v7560
    %v8687 = vmul.f32 %v8559, %v7658
    %v8688 = vmul.f32 %v8560, %v7756
    %v8689 = vmul.f32 %v8561, %v7854
    %v8690 = vmul.f32 %v8562, %v7952
    %v8691 = vmul.f32 %v8563, %v8050
    %v8692 = vmul.f32 %v8564, %v8148
    %v8693 = vmul.f32 %v8565, %v8246
    %v8694 = vmul.f32 %v8566, %v7563
    %v8695 = vmul.f32 %v8567, %v7661
    %v8696 = vmul.f32 %v8568, %v7759
    %v8697 = vmul.f32 %v8569, %v7857
    %v8698 = vmul.f32 %v8570, %v7955
    %v8699 = vmul.f32 %v8571, %v8053
    %v8700 = vmul.f32 %v8572, %v8151
    %v8701 = vmul.f32 %v8573, %v8249
    %v8702 = vmul.f32 %v8574, %v7565
    %v8703 = vmul.f32 %v8575, %v7663
    %v8704 = vmul.f32 %v8576, %v7761
    %v8705 = vmul.f32 %v8577, %v7859
    %v8706 = vmul.f32 %v8578, %v7957
    %v8707 = vmul.f32 %v8579, %v8055
    %v8708 = vmul.f32 %v8580, %v8153
    %v8709 = vmul.f32 %v8581, %v8251
    %v8710 = vmul.f32 %v8582, %v7568
    %v8711 = vmul.f32 %v8583, %v7666
    %v8712 = vmul.f32 %v8584, %v7764
    %v8713 = vmul.f32 %v8585, %v7862
    %v8714 = vmul.f32 %v8586, %v7960
    %v8715 = vmul.f32 %v8587, %v8058
    %v8716 = vmul.f32 %v8588, %v8156
    %v8717 = vmul.f32 %v8589, %v8254
    %v8718 = vmul.f32 %v8590, %v7570
    %v8719 = vmul.f32 %v8591, %v7668
    %v8720 = vmul.f32 %v8592, %v7766
    %v8721 = vmul.f32 %v8593, %v7864
    %v8722 = vmul.f32 %v8594, %v7962
    %v8723 = vmul.f32 %v8595, %v8060
    %v8724 = vmul.f32 %v8596, %v8158
    %v8725 = vmul.f32 %v8597, %v8256
    %v8726 = vmul.f32 %v8598, %v7573
    %v8727 = vmul.f32 %v8599, %v7671
    %v8728 = vmul.f32 %v8600, %v7769
    %v8729 = vmul.f32 %v8601, %v7867
    %v8730 = vmul.f32 %v8602, %v7965
    %v8731 = vmul.f32 %v8603, %v8063
    %v8732 = vmul.f32 %v8604, %v8161
    %v8733 = vmul.f32 %v8605, %v8259
    %v8734 = vmul.f32 %v8606, %v7575
    %v8735 = vmul.f32 %v8607, %v7673
    %v8736 = vmul.f32 %v8608, %v7771
    %v8737 = vmul.f32 %v8609, %v7869
    %v8738 = vmul.f32 %v8610, %v7967
    %v8739 = vmul.f32 %v8611, %v8065
    %v8740 = vmul.f32 %v8612, %v8163
    %v8741 = vmul.f32 %v8613, %v8261
    %v8742 = vmul.f32 %v8614, %v7578
    %v8743 = vmul.f32 %v8615, %v7676
    %v8744 = vmul.f32 %v8616, %v7774
    %v8745 = vmul.f32 %v8617, %v7872
    %v8746 = vmul.f32 %v8618, %v7970
    %v8747 = vmul.f32 %v8619, %v8068
    %v8748 = vmul.f32 %v8620, %v8166
    %v8749 = vmul.f32 %v8621, %v8264
    %v8750 = vmul.f32 %v8622, %v7580
    %v8751 = vmul.f32 %v8623, %v7678
    %v8752 = vmul.f32 %v8624, %v7776
    %v8753 = vmul.f32 %v8625, %v7874
    %v8754 = vmul.f32 %v8626, %v7972
    %v8755 = vmul.f32 %v8627, %v8070
    %v8756 = vmul.f32 %v8628, %v8168
    %v8757 = vmul.f32 %v8629, %v8266
    %v8758 = vmul.f32 %v8630, %v7583
    %v8759 = vmul.f32 %v8631, %v7681
    %v8760 = vmul.f32 %v8632, %v7779
    %v8761 = vmul.f32 %v8633, %v7877
    %v8762 = vmul.f32 %v8634, %v7975
    %v8763 = vmul.f32 %v8635, %v8073
    %v8764 = vmul.f32 %v8636, %v8171
    %v8765 = vmul.f32 %v8637, %v8269
    %v8766 = vmul.f32 %v8638, %v7585
    %v8767 = vmul.f32 %v8639, %v7683
    %v8768 = vmul.f32 %v8640, %v7781
    %v8769 = vmul.f32 %v8641, %v7879
    %v8770 = vmul.f32 %v8642, %v7977
    %v8771 = vmul.f32 %v8643, %v8075
    %v8772 = vmul.f32 %v8644, %v8173
    %v8773 = vmul.f32 %v8645, %v8271
    %v8774 = vmul.f32 %v8646, %v7588
    %v8775 = vmul.f32 %v8647, %v7686
    %v8776 = vmul.f32 %v8648, %v7784
    %v8777 = vmul.f32 %v8649, %v7882
    %v8778 = vmul.f32 %v8650, %v7980
    %v8779 = vmul.f32 %v8651, %v8078
    %v8780 = vmul.f32 %v8652, %v8176
    %v8781 = vmul.f32 %v8653, %v8274
    %v8782 = vmul.f32 %v8654, %v7590
    %v8783 = vmul.f32 %v8655, %v7688
    %v8784 = vmul.f32 %v8656, %v7786
    %v8785 = vmul.f32 %v8657, %v7884
    %v8786 = vmul.f32 %v8658, %v7982
    %v8787 = vmul.f32 %v8659, %v8080
    %v8788 = vmul.f32 %v8660, %v8178
    %v8789 = vmul.f32 %v8661, %v8276
    %v8790 = vadd.f32 %v7553, %v8662
    %v8791 = vadd.f32 %v7651, %v8663
    %v8792 = vadd.f32 %v7749, %v8664
    %v8793 = vadd.f32 %v7847, %v8665
    %v8794 = vadd.f32 %v7945, %v8666
    %v8795 = vadd.f32 %v8043, %v8667
    %v8796 = vadd.f32 %v8141, %v8668
    %v8797 = vadd.f32 %v8239, %v8669
    %v8798 = vadd.f32 %v7555, %v8670
    %v8799 = vadd.f32 %v7653, %v8671
    %v8800 = vadd.f32 %v7751, %v8672
    %v8801 = vadd.f32 %v7849, %v8673
    %v8802 = vadd.f32 %v7947, %v8674
    %v8803 = vadd.f32 %v8045, %v8675
    %v8804 = vadd.f32 %v8143, %v8676
    %v8805 = vadd.f32 %v8241, %v8677
    %v8806 = vadd.f32 %v7558, %v8678
    %v8807 = vadd.f32 %v7656, %v8679
    %v8808 = vadd.f32 %v7754, %v8680
    %v8809 = vadd.f32 %v7852, %v8681
    %v8810 = vadd.f32 %v7950, %v8682
    %v8811 = vadd.f32 %v8048, %v8683
    %v8812 = vadd.f32 %v8146, %v8684
    %v8813 = vadd.f32 %v8244, %v8685
    %v8814 = vadd.f32 %v7560, %v8686
    %v8815 = vadd.f32 %v7658, %v8687
    %v8816 = vadd.f32 %v7756, %v8688
    %v8817 = vadd.f32 %v7854, %v8689
    %v8818 = vadd.f32 %v7952, %v8690
    %v8819 = vadd.f32 %v8050, %v8691
    %v8820 = vadd.f32 %v8148, %v8692
    %v8821 = vadd.f32 %v8246, %v8693
    %v8822 = vadd.f32 %v7563, %v8694
    %v8823 = vadd.f32 %v7661, %v8695
    %v8824 = vadd.f32 %v7759, %v8696
    %v8825 = vadd.f32 %v7857, %v8697
    %v8826 = vadd.f32 %v7955, %v8698
    %v8827 = vadd.f32 %v8053, %v8699
    %v8828 = vadd.f32 %v8151, %v8700
    %v8829 = vadd.f32 %v8249, %v8701
    %v8830 = vadd.f32 %v7565, %v8702
    %v8831 = vadd.f32 %v7663, %v8703
    %v8832 = vadd.f32 %v7761, %v8704
    %v8833 = vadd.f32 %v7859, %v8705
    %v8834 = vadd.f32 %v7957, %v8706
    %v8835 = vadd.f32 %v8055, %v8707
    %v8836 = vadd.f32 %v8153, %v8708
    %v8837 = vadd.f32 %v8251, %v8709
    %v8838 = vadd.f32 %v7568, %v8710
    %v8839 = vadd.f32 %v7666, %v8711
    %v8840 = vadd.f32 %v7764, %v8712
    %v8841 = vadd.f32 %v7862, %v8713
    %v8842 = vadd.f32 %v7960, %v8714
    %v8843 = vadd.f32 %v8058, %v8715
    %v8844 = vadd.f32 %v8156, %v8716
    %v8845 = vadd.f32 %v8254, %v8717
    %v8846 = vadd.f32 %v7570, %v8718
    %v8847 = vadd.f32 %v7668, %v8719
    %v8848 = vadd.f32 %v7766, %v8720
    %v8849 = vadd.f32 %v7864, %v8721
    %v8850 = vadd.f32 %v7962, %v8722
    %v8851 = vadd.f32 %v8060, %v8723
    %v8852 = vadd.f32 %v8158, %v8724
    %v8853 = vadd.f32 %v8256, %v8725
    %v8854 = vadd.f32 %v7573, %v8726
    %v8855 = vadd.f32 %v7671, %v8727
    %v8856 = vadd.f32 %v7769, %v8728
    %v8857 = vadd.f32 %v7867, %v8729
    %v8858 = vadd.f32 %v7965, %v8730
    %v8859 = vadd.f32 %v8063, %v8731
    %v8860 = vadd.f32 %v8161, %v8732
    %v8861 = vadd.f32 %v8259, %v8733
    %v8862 = vadd.f32 %v7575, %v8734
    %v8863 = vadd.f32 %v7673, %v8735
    %v8864 = vadd.f32 %v7771, %v8736
    %v8865 = vadd.f32 %v7869, %v8737
    %v8866 = vadd.f32 %v7967, %v8738
    %v8867 = vadd.f32 %v8065, %v8739
    %v8868 = vadd.f32 %v8163, %v8740
    %v8869 = vadd.f32 %v8261, %v8741
    %v8870 = vadd.f32 %v7578, %v8742
    %v8871 = vadd.f32 %v7676, %v8743
    %v8872 = vadd.f32 %v7774, %v8744
    %v8873 = vadd.f32 %v7872, %v8745
    %v8874 = vadd.f32 %v7970, %v8746
    %v8875 = vadd.f32 %v8068, %v8747
    %v8876 = vadd.f32 %v8166, %v8748
    %v8877 = vadd.f32 %v8264, %v8749
    %v8878 = vadd.f32 %v7580, %v8750
    %v8879 = vadd.f32 %v7678, %v8751
    %v8880 = vadd.f32 %v7776, %v8752
    %v8881 = vadd.f32 %v7874, %v8753
    %v8882 = vadd.f32 %v7972, %v8754
    %v8883 = vadd.f32 %v8070, %v8755
    %v8884 = vadd.f32 %v8168, %v8756
    %v8885 = vadd.f32 %v8266, %v8757
    %v8886 = vadd.f32 %v7583, %v8758
    %v8887 = vadd.f32 %v7681, %v8759
    %v8888 = vadd.f32 %v7779, %v8760
    %v8889 = vadd.f32 %v7877, %v8761
    %v8890 = vadd.f32 %v7975, %v8762
    %v8891 = vadd.f32 %v8073, %v8763
    %v8892 = vadd.f32 %v8171, %v8764
    %v8893 = vadd.f32 %v8269, %v8765
    %v8894 = vadd.f32 %v7585, %v8766
    %v8895 = vadd.f32 %v7683, %v8767
    %v8896 = vadd.f32 %v7781, %v8768
    %v8897 = vadd.f32 %v7879, %v8769
    %v8898 = vadd.f32 %v7977, %v8770
    %v8899 = vadd.f32 %v8075, %v8771
    %v8900 = vadd.f32 %v8173, %v8772
    %v8901 = vadd.f32 %v8271, %v8773
    %v8902 = vadd.f32 %v7588, %v8774
    %v8903 = vadd.f32 %v7686, %v8775
    %v8904 = vadd.f32 %v7784, %v8776
    %v8905 = vadd.f32 %v7882, %v8777
    %v8906 = vadd.f32 %v7980, %v8778
    %v8907 = vadd.f32 %v8078, %v8779
    %v8908 = vadd.f32 %v8176, %v8780
    %v8909 = vadd.f32 %v8274, %v8781
    %v8910 = vadd.f32 %v7590, %v8782
    %v8911 = vadd.f32 %v7688, %v8783
    %v8912 = vadd.f32 %v7786, %v8784
    %v8913 = vadd.f32 %v7884, %v8785
    %v8914 = vadd.f32 %v7982, %v8786
    %v8915 = vadd.f32 %v8080, %v8787
    %v8916 = vadd.f32 %v8178, %v8788
    %v8917 = vadd.f32 %v8276, %v8789
    %v8918 = vmul.f32 %v8790, 0.7978846
    %v8919 = vmul.f32 %v8791, 0.7978846
    %v8920 = vmul.f32 %v8792, 0.7978846
    %v8921 = vmul.f32 %v8793, 0.7978846
    %v8922 = vmul.f32 %v8794, 0.7978846
    %v8923 = vmul.f32 %v8795, 0.7978846
    %v8924 = vmul.f32 %v8796, 0.7978846
    %v8925 = vmul.f32 %v8797, 0.7978846
    %v8926 = vmul.f32 %v8798, 0.7978846
    %v8927 = vmul.f32 %v8799, 0.7978846
    %v8928 = vmul.f32 %v8800, 0.7978846
    %v8929 = vmul.f32 %v8801, 0.7978846
    %v8930 = vmul.f32 %v8802, 0.7978846
    %v8931 = vmul.f32 %v8803, 0.7978846
    %v8932 = vmul.f32 %v8804, 0.7978846
    %v8933 = vmul.f32 %v8805, 0.7978846
    %v8934 = vmul.f32 %v8806, 0.7978846
    %v8935 = vmul.f32 %v8807, 0.7978846
    %v8936 = vmul.f32 %v8808, 0.7978846
    %v8937 = vmul.f32 %v8809, 0.7978846
    %v8938 = vmul.f32 %v8810, 0.7978846
    %v8939 = vmul.f32 %v8811, 0.7978846
    %v8940 = vmul.f32 %v8812, 0.7978846
    %v8941 = vmul.f32 %v8813, 0.7978846
    %v8942 = vmul.f32 %v8814, 0.7978846
    %v8943 = vmul.f32 %v8815, 0.7978846
    %v8944 = vmul.f32 %v8816, 0.7978846
    %v8945 = vmul.f32 %v8817, 0.7978846
    %v8946 = vmul.f32 %v8818, 0.7978846
    %v8947 = vmul.f32 %v8819, 0.7978846
    %v8948 = vmul.f32 %v8820, 0.7978846
    %v8949 = vmul.f32 %v8821, 0.7978846
    %v8950 = vmul.f32 %v8822, 0.7978846
    %v8951 = vmul.f32 %v8823, 0.7978846
    %v8952 = vmul.f32 %v8824, 0.7978846
    %v8953 = vmul.f32 %v8825, 0.7978846
    %v8954 = vmul.f32 %v8826, 0.7978846
    %v8955 = vmul.f32 %v8827, 0.7978846
    %v8956 = vmul.f32 %v8828, 0.7978846
    %v8957 = vmul.f32 %v8829, 0.7978846
    %v8958 = vmul.f32 %v8830, 0.7978846
    %v8959 = vmul.f32 %v8831, 0.7978846
    %v8960 = vmul.f32 %v8832, 0.7978846
    %v8961 = vmul.f32 %v8833, 0.7978846
    %v8962 = vmul.f32 %v8834, 0.7978846
    %v8963 = vmul.f32 %v8835, 0.7978846
    %v8964 = vmul.f32 %v8836, 0.7978846
    %v8965 = vmul.f32 %v8837, 0.7978846
    %v8966 = vmul.f32 %v8838, 0.7978846
    %v8967 = vmul.f32 %v8839, 0.7978846
    %v8968 = vmul.f32 %v8840, 0.7978846
    %v8969 = vmul.f32 %v8841, 0.7978846
    %v8970 = vmul.f32 %v8842, 0.7978846
    %v8971 = vmul.f32 %v8843, 0.7978846
    %v8972 = vmul.f32 %v8844, 0.7978846
    %v8973 = vmul.f32 %v8845, 0.7978846
    %v8974 = vmul.f32 %v8846, 0.7978846
    %v8975 = vmul.f32 %v8847, 0.7978846
    %v8976 = vmul.f32 %v8848, 0.7978846
    %v8977 = vmul.f32 %v8849, 0.7978846
    %v8978 = vmul.f32 %v8850, 0.7978846
    %v8979 = vmul.f32 %v8851, 0.7978846
    %v8980 = vmul.f32 %v8852, 0.7978846
    %v8981 = vmul.f32 %v8853, 0.7978846
    %v8982 = vmul.f32 %v8854, 0.7978846
    %v8983 = vmul.f32 %v8855, 0.7978846
    %v8984 = vmul.f32 %v8856, 0.7978846
    %v8985 = vmul.f32 %v8857, 0.7978846
    %v8986 = vmul.f32 %v8858, 0.7978846
    %v8987 = vmul.f32 %v8859, 0.7978846
    %v8988 = vmul.f32 %v8860, 0.7978846
    %v8989 = vmul.f32 %v8861, 0.7978846
    %v8990 = vmul.f32 %v8862, 0.7978846
    %v8991 = vmul.f32 %v8863, 0.7978846
    %v8992 = vmul.f32 %v8864, 0.7978846
    %v8993 = vmul.f32 %v8865, 0.7978846
    %v8994 = vmul.f32 %v8866, 0.7978846
    %v8995 = vmul.f32 %v8867, 0.7978846
    %v8996 = vmul.f32 %v8868, 0.7978846
    %v8997 = vmul.f32 %v8869, 0.7978846
    %v8998 = vmul.f32 %v8870, 0.7978846
    %v8999 = vmul.f32 %v8871, 0.7978846
    %v9000 = vmul.f32 %v8872, 0.7978846
    %v9001 = vmul.f32 %v8873, 0.7978846
    %v9002 = vmul.f32 %v8874, 0.7978846
    %v9003 = vmul.f32 %v8875, 0.7978846
    %v9004 = vmul.f32 %v8876, 0.7978846
    %v9005 = vmul.f32 %v8877, 0.7978846
    %v9006 = vmul.f32 %v8878, 0.7978846
    %v9007 = vmul.f32 %v8879, 0.7978846
    %v9008 = vmul.f32 %v8880, 0.7978846
    %v9009 = vmul.f32 %v8881, 0.7978846
    %v9010 = vmul.f32 %v8882, 0.7978846
    %v9011 = vmul.f32 %v8883, 0.7978846
    %v9012 = vmul.f32 %v8884, 0.7978846
    %v9013 = vmul.f32 %v8885, 0.7978846
    %v9014 = vmul.f32 %v8886, 0.7978846
    %v9015 = vmul.f32 %v8887, 0.7978846
    %v9016 = vmul.f32 %v8888, 0.7978846
    %v9017 = vmul.f32 %v8889, 0.7978846
    %v9018 = vmul.f32 %v8890, 0.7978846
    %v9019 = vmul.f32 %v8891, 0.7978846
    %v9020 = vmul.f32 %v8892, 0.7978846
    %v9021 = vmul.f32 %v8893, 0.7978846
    %v9022 = vmul.f32 %v8894, 0.7978846
    %v9023 = vmul.f32 %v8895, 0.7978846
    %v9024 = vmul.f32 %v8896, 0.7978846
    %v9025 = vmul.f32 %v8897, 0.7978846
    %v9026 = vmul.f32 %v8898, 0.7978846
    %v9027 = vmul.f32 %v8899, 0.7978846
    %v9028 = vmul.f32 %v8900, 0.7978846
    %v9029 = vmul.f32 %v8901, 0.7978846
    %v9030 = vmul.f32 %v8902, 0.7978846
    %v9031 = vmul.f32 %v8903, 0.7978846
    %v9032 = vmul.f32 %v8904, 0.7978846
    %v9033 = vmul.f32 %v8905, 0.7978846
    %v9034 = vmul.f32 %v8906, 0.7978846
    %v9035 = vmul.f32 %v8907, 0.7978846
    %v9036 = vmul.f32 %v8908, 0.7978846
    %v9037 = vmul.f32 %v8909, 0.7978846
    %v9038 = vmul.f32 %v8910, 0.7978846
    %v9039 = vmul.f32 %v8911, 0.7978846
    %v9040 = vmul.f32 %v8912, 0.7978846
    %v9041 = vmul.f32 %v8913, 0.7978846
    %v9042 = vmul.f32 %v8914, 0.7978846
    %v9043 = vmul.f32 %v8915, 0.7978846
    %v9044 = vmul.f32 %v8916, 0.7978846
    %v9045 = vmul.f32 %v8917, 0.7978846
    %v9046 = vtanh.pop %v8918
    %v9047 = vtanh.pop %v8919
    %v9048 = vtanh.pop %v8920
    %v9049 = vtanh.pop %v8921
    %v9050 = vtanh.pop %v8922
    %v9051 = vtanh.pop %v8923
    %v9052 = vtanh.pop %v8924
    %v9053 = vtanh.pop %v8925
    %v9054 = vtanh.pop %v8926
    %v9055 = vtanh.pop %v8927
    %v9056 = vtanh.pop %v8928
    %v9057 = vtanh.pop %v8929
    %v9058 = vtanh.pop %v8930
    %v9059 = vtanh.pop %v8931
    %v9060 = vtanh.pop %v8932
    %v9061 = vtanh.pop %v8933
    %v9062 = vtanh.pop %v8934
    %v9063 = vtanh.pop %v8935
    %v9064 = vtanh.pop %v8936
    %v9065 = vtanh.pop %v8937
    %v9066 = vtanh.pop %v8938
    %v9067 = vtanh.pop %v8939
    %v9068 = vtanh.pop %v8940
    %v9069 = vtanh.pop %v8941
    %v9070 = vtanh.pop %v8942
    %v9071 = vtanh.pop %v8943
    %v9072 = vtanh.pop %v8944
    %v9073 = vtanh.pop %v8945
    %v9074 = vtanh.pop %v8946
    %v9075 = vtanh.pop %v8947
    %v9076 = vtanh.pop %v8948
    %v9077 = vtanh.pop %v8949
    %v9078 = vtanh.pop %v8950
    %v9079 = vtanh.pop %v8951
    %v9080 = vtanh.pop %v8952
    %v9081 = vtanh.pop %v8953
    %v9082 = vtanh.pop %v8954
    %v9083 = vtanh.pop %v8955
    %v9084 = vtanh.pop %v8956
    %v9085 = vtanh.pop %v8957
    %v9086 = vtanh.pop %v8958
    %v9087 = vtanh.pop %v8959
    %v9088 = vtanh.pop %v8960
    %v9089 = vtanh.pop %v8961
    %v9090 = vtanh.pop %v8962
    %v9091 = vtanh.pop %v8963
    %v9092 = vtanh.pop %v8964
    %v9093 = vtanh.pop %v8965
    %v9094 = vtanh.pop %v8966
    %v9095 = vtanh.pop %v8967
    %v9096 = vtanh.pop %v8968
    %v9097 = vtanh.pop %v8969
    %v9098 = vtanh.pop %v8970
    %v9099 = vtanh.pop %v8971
    %v9100 = vtanh.pop %v8972
    %v9101 = vtanh.pop %v8973
    %v9102 = vtanh.pop %v8974
    %v9103 = vtanh.pop %v8975
    %v9104 = vtanh.pop %v8976
    %v9105 = vtanh.pop %v8977
    %v9106 = vtanh.pop %v8978
    %v9107 = vtanh.pop %v8979
    %v9108 = vtanh.pop %v8980
    %v9109 = vtanh.pop %v8981
    %v9110 = vtanh.pop %v8982
    %v9111 = vtanh.pop %v8983
    %v9112 = vtanh.pop %v8984
    %v9113 = vtanh.pop %v8985
    %v9114 = vtanh.pop %v8986
    %v9115 = vtanh.pop %v8987
    %v9116 = vtanh.pop %v8988
    %v9117 = vtanh.pop %v8989
    %v9118 = vtanh.pop %v8990
    %v9119 = vtanh.pop %v8991
    %v9120 = vtanh.pop %v8992
    %v9121 = vtanh.pop %v8993
    %v9122 = vtanh.pop %v8994
    %v9123 = vtanh.pop %v8995
    %v9124 = vtanh.pop %v8996
    %v9125 = vtanh.pop %v8997
    %v9126 = vtanh.pop %v8998
    %v9127 = vtanh.pop %v8999
    %v9128 = vtanh.pop %v9000
    %v9129 = vtanh.pop %v9001
    %v9130 = vtanh.pop %v9002
    %v9131 = vtanh.pop %v9003
    %v9132 = vtanh.pop %v9004
    %v9133 = vtanh.pop %v9005
    %v9134 = vtanh.pop %v9006
    %v9135 = vtanh.pop %v9007
    %v9136 = vtanh.pop %v9008
    %v9137 = vtanh.pop %v9009
    %v9138 = vtanh.pop %v9010
    %v9139 = vtanh.pop %v9011
    %v9140 = vtanh.pop %v9012
    %v9141 = vtanh.pop %v9013
    %v9142 = vtanh.pop %v9014
    %v9143 = vtanh.pop %v9015
    %v9144 = vtanh.pop %v9016
    %v9145 = vtanh.pop %v9017
    %v9146 = vtanh.pop %v9018
    %v9147 = vtanh.pop %v9019
    %v9148 = vtanh.pop %v9020
    %v9149 = vtanh.pop %v9021
    %v9150 = vtanh.pop %v9022
    %v9151 = vtanh.pop %v9023
    %v9152 = vtanh.pop %v9024
    %v9153 = vtanh.pop %v9025
    %v9154 = vtanh.pop %v9026
    %v9155 = vtanh.pop %v9027
    %v9156 = vtanh.pop %v9028
    %v9157 = vtanh.pop %v9029
    %v9158 = vtanh.pop %v9030
    %v9159 = vtanh.pop %v9031
    %v9160 = vtanh.pop %v9032
    %v9161 = vtanh.pop %v9033
    %v9162 = vtanh.pop %v9034
    %v9163 = vtanh.pop %v9035
    %v9164 = vtanh.pop %v9036
    %v9165 = vtanh.pop %v9037
    %v9166 = vtanh.pop %v9038
    %v9167 = vtanh.pop %v9039
    %v9168 = vtanh.pop %v9040
    %v9169 = vtanh.pop %v9041
    %v9170 = vtanh.pop %v9042
    %v9171 = vtanh.pop %v9043
    %v9172 = vtanh.pop %v9044
    %v9173 = vtanh.pop %v9045
    %v9174 = vadd.f32 %v9046, 1.0
    %v9175 = vadd.f32 %v9047, 1.0
    %v9176 = vadd.f32 %v9048, 1.0
    %v9177 = vadd.f32 %v9049, 1.0
    %v9178 = vadd.f32 %v9050, 1.0
    %v9179 = vadd.f32 %v9051, 1.0
    %v9180 = vadd.f32 %v9052, 1.0
    %v9181 = vadd.f32 %v9053, 1.0
    %v9182 = vadd.f32 %v9054, 1.0
    %v9183 = vadd.f32 %v9055, 1.0
    %v9184 = vadd.f32 %v9056, 1.0
    %v9185 = vadd.f32 %v9057, 1.0
    %v9186 = vadd.f32 %v9058, 1.0
    %v9187 = vadd.f32 %v9059, 1.0
    %v9188 = vadd.f32 %v9060, 1.0
    %v9189 = vadd.f32 %v9061, 1.0
    %v9190 = vadd.f32 %v9062, 1.0
    %v9191 = vadd.f32 %v9063, 1.0
    %v9192 = vadd.f32 %v9064, 1.0
    %v9193 = vadd.f32 %v9065, 1.0
    %v9194 = vadd.f32 %v9066, 1.0
    %v9195 = vadd.f32 %v9067, 1.0
    %v9196 = vadd.f32 %v9068, 1.0
    %v9197 = vadd.f32 %v9069, 1.0
    %v9198 = vadd.f32 %v9070, 1.0
    %v9199 = vadd.f32 %v9071, 1.0
    %v9200 = vadd.f32 %v9072, 1.0
    %v9201 = vadd.f32 %v9073, 1.0
    %v9202 = vadd.f32 %v9074, 1.0
    %v9203 = vadd.f32 %v9075, 1.0
    %v9204 = vadd.f32 %v9076, 1.0
    %v9205 = vadd.f32 %v9077, 1.0
    %v9206 = vadd.f32 %v9078, 1.0
    %v9207 = vadd.f32 %v9079, 1.0
    %v9208 = vadd.f32 %v9080, 1.0
    %v9209 = vadd.f32 %v9081, 1.0
    %v9210 = vadd.f32 %v9082, 1.0
    %v9211 = vadd.f32 %v9083, 1.0
    %v9212 = vadd.f32 %v9084, 1.0
    %v9213 = vadd.f32 %v9085, 1.0
    %v9214 = vadd.f32 %v9086, 1.0
    %v9215 = vadd.f32 %v9087, 1.0
    %v9216 = vadd.f32 %v9088, 1.0
    %v9217 = vadd.f32 %v9089, 1.0
    %v9218 = vadd.f32 %v9090, 1.0
    %v9219 = vadd.f32 %v9091, 1.0
    %v9220 = vadd.f32 %v9092, 1.0
    %v9221 = vadd.f32 %v9093, 1.0
    %v9222 = vadd.f32 %v9094, 1.0
    %v9223 = vadd.f32 %v9095, 1.0
    %v9224 = vadd.f32 %v9096, 1.0
    %v9225 = vadd.f32 %v9097, 1.0
    %v9226 = vadd.f32 %v9098, 1.0
    %v9227 = vadd.f32 %v9099, 1.0
    %v9228 = vadd.f32 %v9100, 1.0
    %v9229 = vadd.f32 %v9101, 1.0
    %v9230 = vadd.f32 %v9102, 1.0
    %v9231 = vadd.f32 %v9103, 1.0
    %v9232 = vadd.f32 %v9104, 1.0
    %v9233 = vadd.f32 %v9105, 1.0
    %v9234 = vadd.f32 %v9106, 1.0
    %v9235 = vadd.f32 %v9107, 1.0
    %v9236 = vadd.f32 %v9108, 1.0
    %v9237 = vadd.f32 %v9109, 1.0
    %v9238 = vadd.f32 %v9110, 1.0
    %v9239 = vadd.f32 %v9111, 1.0
    %v9240 = vadd.f32 %v9112, 1.0
    %v9241 = vadd.f32 %v9113, 1.0
    %v9242 = vadd.f32 %v9114, 1.0
    %v9243 = vadd.f32 %v9115, 1.0
    %v9244 = vadd.f32 %v9116, 1.0
    %v9245 = vadd.f32 %v9117, 1.0
    %v9246 = vadd.f32 %v9118, 1.0
    %v9247 = vadd.f32 %v9119, 1.0
    %v9248 = vadd.f32 %v9120, 1.0
    %v9249 = vadd.f32 %v9121, 1.0
    %v9250 = vadd.f32 %v9122, 1.0
    %v9251 = vadd.f32 %v9123, 1.0
    %v9252 = vadd.f32 %v9124, 1.0
    %v9253 = vadd.f32 %v9125, 1.0
    %v9254 = vadd.f32 %v9126, 1.0
    %v9255 = vadd.f32 %v9127, 1.0
    %v9256 = vadd.f32 %v9128, 1.0
    %v9257 = vadd.f32 %v9129, 1.0
    %v9258 = vadd.f32 %v9130, 1.0
    %v9259 = vadd.f32 %v9131, 1.0
    %v9260 = vadd.f32 %v9132, 1.0
    %v9261 = vadd.f32 %v9133, 1.0
    %v9262 = vadd.f32 %v9134, 1.0
    %v9263 = vadd.f32 %v9135, 1.0
    %v9264 = vadd.f32 %v9136, 1.0
    %v9265 = vadd.f32 %v9137, 1.0
    %v9266 = vadd.f32 %v9138, 1.0
    %v9267 = vadd.f32 %v9139, 1.0
    %v9268 = vadd.f32 %v9140, 1.0
    %v9269 = vadd.f32 %v9141, 1.0
    %v9270 = vadd.f32 %v9142, 1.0
    %v9271 = vadd.f32 %v9143, 1.0
    %v9272 = vadd.f32 %v9144, 1.0
    %v9273 = vadd.f32 %v9145, 1.0
    %v9274 = vadd.f32 %v9146, 1.0
    %v9275 = vadd.f32 %v9147, 1.0
    %v9276 = vadd.f32 %v9148, 1.0
    %v9277 = vadd.f32 %v9149, 1.0
    %v9278 = vadd.f32 %v9150, 1.0
    %v9279 = vadd.f32 %v9151, 1.0
    %v9280 = vadd.f32 %v9152, 1.0
    %v9281 = vadd.f32 %v9153, 1.0
    %v9282 = vadd.f32 %v9154, 1.0
    %v9283 = vadd.f32 %v9155, 1.0
    %v9284 = vadd.f32 %v9156, 1.0
    %v9285 = vadd.f32 %v9157, 1.0
    %v9286 = vadd.f32 %v9158, 1.0
    %v9287 = vadd.f32 %v9159, 1.0
    %v9288 = vadd.f32 %v9160, 1.0
    %v9289 = vadd.f32 %v9161, 1.0
    %v9290 = vadd.f32 %v9162, 1.0
    %v9291 = vadd.f32 %v9163, 1.0
    %v9292 = vadd.f32 %v9164, 1.0
    %v9293 = vadd.f32 %v9165, 1.0
    %v9294 = vadd.f32 %v9166, 1.0
    %v9295 = vadd.f32 %v9167, 1.0
    %v9296 = vadd.f32 %v9168, 1.0
    %v9297 = vadd.f32 %v9169, 1.0
    %v9298 = vadd.f32 %v9170, 1.0
    %v9299 = vadd.f32 %v9171, 1.0
    %v9300 = vadd.f32 %v9172, 1.0
    %v9301 = vadd.f32 %v9173, 1.0
    %v9302 = vmul.f32 %v8278, %v9174
    %v9303 = vmul.f32 %v8279, %v9175
    %v9304 = vmul.f32 %v8280, %v9176
    %v9305 = vmul.f32 %v8281, %v9177
    %v9306 = vmul.f32 %v8282, %v9178
    %v9307 = vmul.f32 %v8283, %v9179
    %v9308 = vmul.f32 %v8284, %v9180
    %v9309 = vmul.f32 %v8285, %v9181
    %v9310 = vmul.f32 %v8286, %v9182
    %v9311 = vmul.f32 %v8287, %v9183
    %v9312 = vmul.f32 %v8288, %v9184
    %v9313 = vmul.f32 %v8289, %v9185
    %v9314 = vmul.f32 %v8290, %v9186
    %v9315 = vmul.f32 %v8291, %v9187
    %v9316 = vmul.f32 %v8292, %v9188
    %v9317 = vmul.f32 %v8293, %v9189
    %v9318 = vmul.f32 %v8294, %v9190
    %v9319 = vmul.f32 %v8295, %v9191
    %v9320 = vmul.f32 %v8296, %v9192
    %v9321 = vmul.f32 %v8297, %v9193
    %v9322 = vmul.f32 %v8298, %v9194
    %v9323 = vmul.f32 %v8299, %v9195
    %v9324 = vmul.f32 %v8300, %v9196
    %v9325 = vmul.f32 %v8301, %v9197
    %v9326 = vmul.f32 %v8302, %v9198
    %v9327 = vmul.f32 %v8303, %v9199
    %v9328 = vmul.f32 %v8304, %v9200
    %v9329 = vmul.f32 %v8305, %v9201
    %v9330 = vmul.f32 %v8306, %v9202
    %v9331 = vmul.f32 %v8307, %v9203
    %v9332 = vmul.f32 %v8308, %v9204
    %v9333 = vmul.f32 %v8309, %v9205
    %v9334 = vmul.f32 %v8310, %v9206
    %v9335 = vmul.f32 %v8311, %v9207
    %v9336 = vmul.f32 %v8312, %v9208
    %v9337 = vmul.f32 %v8313, %v9209
    %v9338 = vmul.f32 %v8314, %v9210
    %v9339 = vmul.f32 %v8315, %v9211
    %v9340 = vmul.f32 %v8316, %v9212
    %v9341 = vmul.f32 %v8317, %v9213
    %v9342 = vmul.f32 %v8318, %v9214
    %v9343 = vmul.f32 %v8319, %v9215
    %v9344 = vmul.f32 %v8320, %v9216
    %v9345 = vmul.f32 %v8321, %v9217
    %v9346 = vmul.f32 %v8322, %v9218
    %v9347 = vmul.f32 %v8323, %v9219
    %v9348 = vmul.f32 %v8324, %v9220
    %v9349 = vmul.f32 %v8325, %v9221
    %v9350 = vmul.f32 %v8326, %v9222
    %v9351 = vmul.f32 %v8327, %v9223
    %v9352 = vmul.f32 %v8328, %v9224
    %v9353 = vmul.f32 %v8329, %v9225
    %v9354 = vmul.f32 %v8330, %v9226
    %v9355 = vmul.f32 %v8331, %v9227
    %v9356 = vmul.f32 %v8332, %v9228
    %v9357 = vmul.f32 %v8333, %v9229
    %v9358 = vmul.f32 %v8334, %v9230
    %v9359 = vmul.f32 %v8335, %v9231
    %v9360 = vmul.f32 %v8336, %v9232
    %v9361 = vmul.f32 %v8337, %v9233
    %v9362 = vmul.f32 %v8338, %v9234
    %v9363 = vmul.f32 %v8339, %v9235
    %v9364 = vmul.f32 %v8340, %v9236
    %v9365 = vmul.f32 %v8341, %v9237
    %v9366 = vmul.f32 %v8342, %v9238
    %v9367 = vmul.f32 %v8343, %v9239
    %v9368 = vmul.f32 %v8344, %v9240
    %v9369 = vmul.f32 %v8345, %v9241
    %v9370 = vmul.f32 %v8346, %v9242
    %v9371 = vmul.f32 %v8347, %v9243
    %v9372 = vmul.f32 %v8348, %v9244
    %v9373 = vmul.f32 %v8349, %v9245
    %v9374 = vmul.f32 %v8350, %v9246
    %v9375 = vmul.f32 %v8351, %v9247
    %v9376 = vmul.f32 %v8352, %v9248
    %v9377 = vmul.f32 %v8353, %v9249
    %v9378 = vmul.f32 %v8354, %v9250
    %v9379 = vmul.f32 %v8355, %v9251
    %v9380 = vmul.f32 %v8356, %v9252
    %v9381 = vmul.f32 %v8357, %v9253
    %v9382 = vmul.f32 %v8358, %v9254
    %v9383 = vmul.f32 %v8359, %v9255
    %v9384 = vmul.f32 %v8360, %v9256
    %v9385 = vmul.f32 %v8361, %v9257
    %v9386 = vmul.f32 %v8362, %v9258
    %v9387 = vmul.f32 %v8363, %v9259
    %v9388 = vmul.f32 %v8364, %v9260
    %v9389 = vmul.f32 %v8365, %v9261
    %v9390 = vmul.f32 %v8366, %v9262
    %v9391 = vmul.f32 %v8367, %v9263
    %v9392 = vmul.f32 %v8368, %v9264
    %v9393 = vmul.f32 %v8369, %v9265
    %v9394 = vmul.f32 %v8370, %v9266
    %v9395 = vmul.f32 %v8371, %v9267
    %v9396 = vmul.f32 %v8372, %v9268
    %v9397 = vmul.f32 %v8373, %v9269
    %v9398 = vmul.f32 %v8374, %v9270
    %v9399 = vmul.f32 %v8375, %v9271
    %v9400 = vmul.f32 %v8376, %v9272
    %v9401 = vmul.f32 %v8377, %v9273
    %v9402 = vmul.f32 %v8378, %v9274
    %v9403 = vmul.f32 %v8379, %v9275
    %v9404 = vmul.f32 %v8380, %v9276
    %v9405 = vmul.f32 %v8381, %v9277
    %v9406 = vmul.f32 %v8382, %v9278
    %v9407 = vmul.f32 %v8383, %v9279
    %v9408 = vmul.f32 %v8384, %v9280
    %v9409 = vmul.f32 %v8385, %v9281
    %v9410 = vmul.f32 %v8386, %v9282
    %v9411 = vmul.f32 %v8387, %v9283
    %v9412 = vmul.f32 %v8388, %v9284
    %v9413 = vmul.f32 %v8389, %v9285
    %v9414 = vmul.f32 %v8390, %v9286
    %v9415 = vmul.f32 %v8391, %v9287
    %v9416 = vmul.f32 %v8392, %v9288
    %v9417 = vmul.f32 %v8393, %v9289
    %v9418 = vmul.f32 %v8394, %v9290
    %v9419 = vmul.f32 %v8395, %v9291
    %v9420 = vmul.f32 %v8396, %v9292
    %v9421 = vmul.f32 %v8397, %v9293
    %v9422 = vmul.f32 %v8398, %v9294
    %v9423 = vmul.f32 %v8399, %v9295
    %v9424 = vmul.f32 %v8400, %v9296
    %v9425 = vmul.f32 %v8401, %v9297
    %v9426 = vmul.f32 %v8402, %v9298
    %v9427 = vmul.f32 %v8403, %v9299
    %v9428 = vmul.f32 %v8404, %v9300
    %v9429 = vmul.f32 %v8405, %v9301
    %v9430 = vpack.c.bf16 %v9310, %v9302
    %v9431 = vpack.c.bf16 %v9311, %v9303
    %v9432 = vpack.c.bf16 %v9312, %v9304
    %v9433 = vpack.c.bf16 %v9313, %v9305
    %v9434 = vpack.c.bf16 %v9314, %v9306
    %v9435 = vpack.c.bf16 %v9315, %v9307
    %v9436 = vpack.c.bf16 %v9316, %v9308
    %v9437 = vpack.c.bf16 %v9317, %v9309
    %v9438 = vpack.c.bf16 %v9326, %v9318
    %v9439 = vpack.c.bf16 %v9327, %v9319
    %v9440 = vpack.c.bf16 %v9328, %v9320
    %v9441 = vpack.c.bf16 %v9329, %v9321
    %v9442 = vpack.c.bf16 %v9330, %v9322
    %v9443 = vpack.c.bf16 %v9331, %v9323
    %v9444 = vpack.c.bf16 %v9332, %v9324
    %v9445 = vpack.c.bf16 %v9333, %v9325
    %v9446 = vpack.c.bf16 %v9342, %v9334
    %v9447 = vpack.c.bf16 %v9343, %v9335
    %v9448 = vpack.c.bf16 %v9344, %v9336
    %v9449 = vpack.c.bf16 %v9345, %v9337
    %v9450 = vpack.c.bf16 %v9346, %v9338
    %v9451 = vpack.c.bf16 %v9347, %v9339
    %v9452 = vpack.c.bf16 %v9348, %v9340
    %v9453 = vpack.c.bf16 %v9349, %v9341
    %v9454 = vpack.c.bf16 %v9358, %v9350
    %v9455 = vpack.c.bf16 %v9359, %v9351
    %v9456 = vpack.c.bf16 %v9360, %v9352
    %v9457 = vpack.c.bf16 %v9361, %v9353
    %v9458 = vpack.c.bf16 %v9362, %v9354
    %v9459 = vpack.c.bf16 %v9363, %v9355
    %v9460 = vpack.c.bf16 %v9364, %v9356
    %v9461 = vpack.c.bf16 %v9365, %v9357
    %v9462 = vpack.c.bf16 %v9374, %v9366
    %v9463 = vpack.c.bf16 %v9375, %v9367
    %v9464 = vpack.c.bf16 %v9376, %v9368
    %v9465 = vpack.c.bf16 %v9377, %v9369
    %v9466 = vpack.c.bf16 %v9378, %v9370
    %v9467 = vpack.c.bf16 %v9379, %v9371
    %v9468 = vpack.c.bf16 %v9380, %v9372
    %v9469 = vpack.c.bf16 %v9381, %v9373
    %v9470 = vpack.c.bf16 %v9390, %v9382
    %v9471 = vpack.c.bf16 %v9391, %v9383
    %v9472 = vpack.c.bf16 %v9392, %v9384
    %v9473 = vpack.c.bf16 %v9393, %v9385
    %v9474 = vpack.c.bf16 %v9394, %v9386
    %v9475 = vpack.c.bf16 %v9395, %v9387
    %v9476 = vpack.c.bf16 %v9396, %v9388
    %v9477 = vpack.c.bf16 %v9397, %v9389
    %v9478 = vpack.c.bf16 %v9406, %v9398
    %v9479 = vpack.c.bf16 %v9407, %v9399
    %v9480 = vpack.c.bf16 %v9408, %v9400
    %v9481 = vpack.c.bf16 %v9409, %v9401
    %v9482 = vpack.c.bf16 %v9410, %v9402
    %v9483 = vpack.c.bf16 %v9411, %v9403
    %v9484 = vpack.c.bf16 %v9412, %v9404
    %v9485 = vpack.c.bf16 %v9413, %v9405
    %v9486 = vpack.c.bf16 %v9422, %v9414
    %v9487 = vpack.c.bf16 %v9423, %v9415
    %v9488 = vpack.c.bf16 %v9424, %v9416
    %v9489 = vpack.c.bf16 %v9425, %v9417
    %v9490 = vpack.c.bf16 %v9426, %v9418
    %v9491 = vpack.c.bf16 %v9427, %v9419
    %v9492 = vpack.c.bf16 %v9428, %v9420
    %v9493 = vpack.c.bf16 %v9429, %v9421
    %v9494 = vld [vmem:[#allocation13] sm:$0xff]
    %v9495 = vld [vmem:[#allocation13 + $0x8] sm:$0xff]
    %v9496 = vld [vmem:[#allocation13 + $0x10] sm:$0xff]
    %v9497 = vld [vmem:[#allocation13 + $0x18] sm:$0xff]
    %v9498 = vld [vmem:[#allocation13 + $0x20] sm:$0xff]
    %v9499 = vld [vmem:[#allocation13 + $0x28] sm:$0xff]
    %v9500 = vld [vmem:[#allocation13 + $0x30] sm:$0xff]
    %v9501 = vld [vmem:[#allocation13 + $0x38] sm:$0xff]
    %v9502 = vld [vmem:[#allocation13 + $0x40] sm:$0xff]
    %v9503 = vld [vmem:[#allocation13 + $0x48] sm:$0xff]
    %v9504 = vld [vmem:[#allocation13 + $0x50] sm:$0xff]
    %v9505 = vld [vmem:[#allocation13 + $0x58] sm:$0xff]
    %v9506 = vld [vmem:[#allocation13 + $0x60] sm:$0xff]
    %v9507 = vld [vmem:[#allocation13 + $0x68] sm:$0xff]
    %v9508 = vld [vmem:[#allocation13 + $0x70] sm:$0xff]
    %v9509 = vld [vmem:[#allocation13 + $0x78] sm:$0xff]
    %v9510 = vld [vmem:[#allocation13 + $0x80] sm:$0xff]
    %v9511 = vld [vmem:[#allocation13 + $0x88] sm:$0xff]
    %v9512 = vld [vmem:[#allocation13 + $0x90] sm:$0xff]
    %v9513 = vld [vmem:[#allocation13 + $0x98] sm:$0xff]
    %v9514 = vld [vmem:[#allocation13 + $0xa0] sm:$0xff]
    %v9515 = vld [vmem:[#allocation13 + $0xa8] sm:$0xff]
    %v9516 = vld [vmem:[#allocation13 + $0xb0] sm:$0xff]
    %v9517 = vld [vmem:[#allocation13 + $0xb8] sm:$0xff]
    %v9518 = vld [vmem:[#allocation13 + $0xc0] sm:$0xff]
    %v9519 = vld [vmem:[#allocation13 + $0xc8] sm:$0xff]
    %v9520 = vld [vmem:[#allocation13 + $0xd0] sm:$0xff]
    %v9521 = vld [vmem:[#allocation13 + $0xd8] sm:$0xff]
    %v9522 = vld [vmem:[#allocation13 + $0xe0] sm:$0xff]
    %v9523 = vld [vmem:[#allocation13 + $0xe8] sm:$0xff]
    %v9524 = vld [vmem:[#allocation13 + $0xf0] sm:$0xff]
    %v9525 = vld [vmem:[#allocation13 + $0xf8] sm:$0xff]
    %v9526 = vld [vmem:[#allocation13 + $0x100] sm:$0xff]
    %v9527 = vld [vmem:[#allocation13 + $0x108] sm:$0xff]
    %v9528 = vld [vmem:[#allocation13 + $0x110] sm:$0xff]
    %v9529 = vld [vmem:[#allocation13 + $0x118] sm:$0xff]
    %v9530 = vld [vmem:[#allocation13 + $0x120] sm:$0xff]
    %v9531 = vld [vmem:[#allocation13 + $0x128] sm:$0xff]
    %v9532 = vld [vmem:[#allocation13 + $0x130] sm:$0xff]
    %v9533 = vld [vmem:[#allocation13 + $0x138] sm:$0xff]
    %v9534 = vld [vmem:[#allocation13 + $0x140] sm:$0xff]
    %v9535 = vld [vmem:[#allocation13 + $0x148] sm:$0xff]
    %v9536 = vld [vmem:[#allocation13 + $0x150] sm:$0xff]
    %v9537 = vld [vmem:[#allocation13 + $0x158] sm:$0xff]
    %v9538 = vld [vmem:[#allocation13 + $0x160] sm:$0xff]
    %v9539 = vld [vmem:[#allocation13 + $0x168] sm:$0xff]
    %v9540 = vld [vmem:[#allocation13 + $0x170] sm:$0xff]
    %v9541 = vld [vmem:[#allocation13 + $0x178] sm:$0xff]
    %v9542 = vld [vmem:[#allocation13 + $0x180] sm:$0xff]
    %v9543 = vld [vmem:[#allocation13 + $0x188] sm:$0xff]
    %v9544 = vld [vmem:[#allocation13 + $0x190] sm:$0xff]
    %v9545 = vld [vmem:[#allocation13 + $0x198] sm:$0xff]
    %v9546 = vld [vmem:[#allocation13 + $0x1a0] sm:$0xff]
    %v9547 = vld [vmem:[#allocation13 + $0x1a8] sm:$0xff]
    %v9548 = vld [vmem:[#allocation13 + $0x1b0] sm:$0xff]
    %v9549 = vld [vmem:[#allocation13 + $0x1b8] sm:$0xff]
    %v9550 = vld [vmem:[#allocation13 + $0x1c0] sm:$0xff]
    %v9551 = vld [vmem:[#allocation13 + $0x1c8] sm:$0xff]
    %v9552 = vld [vmem:[#allocation13 + $0x1d0] sm:$0xff]
    %v9553 = vld [vmem:[#allocation13 + $0x1d8] sm:$0xff]
    %v9554 = vld [vmem:[#allocation13 + $0x1e0] sm:$0xff]
    %v9555 = vld [vmem:[#allocation13 + $0x1e8] sm:$0xff]
    %v9556 = vld [vmem:[#allocation13 + $0x1f0] sm:$0xff]
    %v9557 = vld [vmem:[#allocation13 + $0x1f8] sm:$0xff]
    %v9558 = vld [vmem:[#allocation13 + $0x200] sm:$0xff]
    %v9559 = vld [vmem:[#allocation13 + $0x208] sm:$0xff]
    %v9560 = vld [vmem:[#allocation13 + $0x210] sm:$0xff]
    %v9561 = vld [vmem:[#allocation13 + $0x218] sm:$0xff]
    %v9562 = vld [vmem:[#allocation13 + $0x220] sm:$0xff]
    %v9563 = vld [vmem:[#allocation13 + $0x228] sm:$0xff]
    %v9564 = vld [vmem:[#allocation13 + $0x230] sm:$0xff]
    %v9565 = vld [vmem:[#allocation13 + $0x238] sm:$0xff]
    %v9566 = vld [vmem:[#allocation13 + $0x240] sm:$0xff]
    %v9567 = vld [vmem:[#allocation13 + $0x248] sm:$0xff]
    %v9568 = vld [vmem:[#allocation13 + $0x250] sm:$0xff]
    %v9569 = vld [vmem:[#allocation13 + $0x258] sm:$0xff]
    %v9570 = vld [vmem:[#allocation13 + $0x260] sm:$0xff]
    %v9571 = vld [vmem:[#allocation13 + $0x268] sm:$0xff]
    %v9572 = vld [vmem:[#allocation13 + $0x270] sm:$0xff]
    %v9573 = vld [vmem:[#allocation13 + $0x278] sm:$0xff]
    %v9574 = vld [vmem:[#allocation13 + $0x280] sm:$0xff]
    %v9575 = vld [vmem:[#allocation13 + $0x288] sm:$0xff]
    %v9576 = vld [vmem:[#allocation13 + $0x290] sm:$0xff]
    %v9577 = vld [vmem:[#allocation13 + $0x298] sm:$0xff]
    %v9578 = vld [vmem:[#allocation13 + $0x2a0] sm:$0xff]
    %v9579 = vld [vmem:[#allocation13 + $0x2a8] sm:$0xff]
    %v9580 = vld [vmem:[#allocation13 + $0x2b0] sm:$0xff]
    %v9581 = vld [vmem:[#allocation13 + $0x2b8] sm:$0xff]
    %v9582 = vld [vmem:[#allocation13 + $0x2c0] sm:$0xff]
    %v9583 = vld [vmem:[#allocation13 + $0x2c8] sm:$0xff]
    %v9584 = vld [vmem:[#allocation13 + $0x2d0] sm:$0xff]
    %v9585 = vld [vmem:[#allocation13 + $0x2d8] sm:$0xff]
    %v9586 = vld [vmem:[#allocation13 + $0x2e0] sm:$0xff]
    %v9587 = vld [vmem:[#allocation13 + $0x2e8] sm:$0xff]
    %v9588 = vld [vmem:[#allocation13 + $0x2f0] sm:$0xff]
    %v9589 = vld [vmem:[#allocation13 + $0x2f8] sm:$0xff]
    %v9590 = vld [vmem:[#allocation13 + $0x300] sm:$0xff]
    %v9591 = vld [vmem:[#allocation13 + $0x308] sm:$0xff]
    %v9592 = vld [vmem:[#allocation13 + $0x310] sm:$0xff]
    %v9593 = vld [vmem:[#allocation13 + $0x318] sm:$0xff]
    %v9594 = vld [vmem:[#allocation13 + $0x320] sm:$0xff]
    %v9595 = vld [vmem:[#allocation13 + $0x328] sm:$0xff]
    %v9596 = vld [vmem:[#allocation13 + $0x330] sm:$0xff]
    %v9597 = vld [vmem:[#allocation13 + $0x338] sm:$0xff]
    %v9598 = vld [vmem:[#allocation13 + $0x340] sm:$0xff]
    %v9599 = vld [vmem:[#allocation13 + $0x348] sm:$0xff]
    %v9600 = vld [vmem:[#allocation13 + $0x350] sm:$0xff]
    %v9601 = vld [vmem:[#allocation13 + $0x358] sm:$0xff]
    %v9602 = vld [vmem:[#allocation13 + $0x360] sm:$0xff]
    %v9603 = vld [vmem:[#allocation13 + $0x368] sm:$0xff]
    %v9604 = vld [vmem:[#allocation13 + $0x370] sm:$0xff]
    %v9605 = vld [vmem:[#allocation13 + $0x378] sm:$0xff]
    %v9606 = vld [vmem:[#allocation13 + $0x380] sm:$0xff]
    %v9607 = vld [vmem:[#allocation13 + $0x388] sm:$0xff]
    %v9608 = vld [vmem:[#allocation13 + $0x390] sm:$0xff]
    %v9609 = vld [vmem:[#allocation13 + $0x398] sm:$0xff]
    %v9610 = vld [vmem:[#allocation13 + $0x3a0] sm:$0xff]
    %v9611 = vld [vmem:[#allocation13 + $0x3a8] sm:$0xff]
    %v9612 = vld [vmem:[#allocation13 + $0x3b0] sm:$0xff]
    %v9613 = vld [vmem:[#allocation13 + $0x3b8] sm:$0xff]
    %v9614 = vld [vmem:[#allocation13 + $0x3c0] sm:$0xff]
    %v9615 = vld [vmem:[#allocation13 + $0x3c8] sm:$0xff]
    %v9616 = vld [vmem:[#allocation13 + $0x3d0] sm:$0xff]
    %v9617 = vld [vmem:[#allocation13 + $0x3d8] sm:$0xff]
    %v9618 = vld [vmem:[#allocation13 + $0x3e0] sm:$0xff]
    %v9619 = vld [vmem:[#allocation13 + $0x3e8] sm:$0xff]
    %v9620 = vld [vmem:[#allocation13 + $0x3f0] sm:$0xff]
    %v9621 = vld [vmem:[#allocation13 + $0x3f8] sm:$0xff]
    %v9622 = vld [vmem:[%s8] sm:$0x3]
    %v9624 = vperm.slane %v9622, 0
    %v9625 = vperm.slane %v9622, 1
    %v9756 = vunpack.c.l.b16 %v9494
    %v9757 = vunpack.c.h.b16 %v9494
    %v9758 = vunpack.c.l.b16 %v9495
    %v9759 = vunpack.c.h.b16 %v9495
    %v9760 = vunpack.c.l.b16 %v9496
    %v9761 = vunpack.c.h.b16 %v9496
    %v9762 = vunpack.c.l.b16 %v9497
    %v9763 = vunpack.c.h.b16 %v9497
    %v9764 = vunpack.c.l.b16 %v9498
    %v9765 = vunpack.c.h.b16 %v9498
    %v9766 = vunpack.c.l.b16 %v9499
    %v9767 = vunpack.c.h.b16 %v9499
    %v9768 = vunpack.c.l.b16 %v9500
    %v9769 = vunpack.c.h.b16 %v9500
    %v9770 = vunpack.c.l.b16 %v9501
    %v9771 = vunpack.c.h.b16 %v9501
    %v9772 = vunpack.c.l.b16 %v9502
    %v9773 = vunpack.c.h.b16 %v9502
    %v9774 = vunpack.c.l.b16 %v9503
    %v9775 = vunpack.c.h.b16 %v9503
    %v9776 = vunpack.c.l.b16 %v9504
    %v9777 = vunpack.c.h.b16 %v9504
    %v9778 = vunpack.c.l.b16 %v9505
    %v9779 = vunpack.c.h.b16 %v9505
    %v9780 = vunpack.c.l.b16 %v9506
    %v9781 = vunpack.c.h.b16 %v9506
    %v9782 = vunpack.c.l.b16 %v9507
    %v9783 = vunpack.c.h.b16 %v9507
    %v9784 = vunpack.c.l.b16 %v9508
    %v9785 = vunpack.c.h.b16 %v9508
    %v9786 = vunpack.c.l.b16 %v9509
    %v9787 = vunpack.c.h.b16 %v9509
    %v9788 = vunpack.c.l.b16 %v9510
    %v9789 = vunpack.c.h.b16 %v9510
    %v9790 = vunpack.c.l.b16 %v9511
    %v9791 = vunpack.c.h.b16 %v9511
    %v9792 = vunpack.c.l.b16 %v9512
    %v9793 = vunpack.c.h.b16 %v9512
    %v9794 = vunpack.c.l.b16 %v9513
    %v9795 = vunpack.c.h.b16 %v9513
    %v9796 = vunpack.c.l.b16 %v9514
    %v9797 = vunpack.c.h.b16 %v9514
    %v9798 = vunpack.c.l.b16 %v9515
    %v9799 = vunpack.c.h.b16 %v9515
    %v9800 = vunpack.c.l.b16 %v9516
    %v9801 = vunpack.c.h.b16 %v9516
    %v9802 = vunpack.c.l.b16 %v9517
    %v9803 = vunpack.c.h.b16 %v9517
    %v9804 = vunpack.c.l.b16 %v9518
    %v9805 = vunpack.c.h.b16 %v9518
    %v9806 = vunpack.c.l.b16 %v9519
    %v9807 = vunpack.c.h.b16 %v9519
    %v9808 = vunpack.c.l.b16 %v9520
    %v9809 = vunpack.c.h.b16 %v9520
    %v9810 = vunpack.c.l.b16 %v9521
    %v9811 = vunpack.c.h.b16 %v9521
    %v9812 = vunpack.c.l.b16 %v9522
    %v9813 = vunpack.c.h.b16 %v9522
    %v9814 = vunpack.c.l.b16 %v9523
    %v9815 = vunpack.c.h.b16 %v9523
    %v9816 = vunpack.c.l.b16 %v9524
    %v9817 = vunpack.c.h.b16 %v9524
    %v9818 = vunpack.c.l.b16 %v9525
    %v9819 = vunpack.c.h.b16 %v9525
    %v9820 = vunpack.c.l.b16 %v9526
    %v9821 = vunpack.c.h.b16 %v9526
    %v9822 = vunpack.c.l.b16 %v9527
    %v9823 = vunpack.c.h.b16 %v9527
    %v9824 = vunpack.c.l.b16 %v9528
    %v9825 = vunpack.c.h.b16 %v9528
    %v9826 = vunpack.c.l.b16 %v9529
    %v9827 = vunpack.c.h.b16 %v9529
    %v9828 = vunpack.c.l.b16 %v9530
    %v9829 = vunpack.c.h.b16 %v9530
    %v9830 = vunpack.c.l.b16 %v9531
    %v9831 = vunpack.c.h.b16 %v9531
    %v9832 = vunpack.c.l.b16 %v9532
    %v9833 = vunpack.c.h.b16 %v9532
    %v9834 = vunpack.c.l.b16 %v9533
    %v9835 = vunpack.c.h.b16 %v9533
    %v9836 = vunpack.c.l.b16 %v9534
    %v9837 = vunpack.c.h.b16 %v9534
    %v9838 = vunpack.c.l.b16 %v9535
    %v9839 = vunpack.c.h.b16 %v9535
    %v9840 = vunpack.c.l.b16 %v9536
    %v9841 = vunpack.c.h.b16 %v9536
    %v9842 = vunpack.c.l.b16 %v9537
    %v9843 = vunpack.c.h.b16 %v9537
    %v9844 = vunpack.c.l.b16 %v9538
    %v9845 = vunpack.c.h.b16 %v9538
    %v9846 = vunpack.c.l.b16 %v9539
    %v9847 = vunpack.c.h.b16 %v9539
    %v9848 = vunpack.c.l.b16 %v9540
    %v9849 = vunpack.c.h.b16 %v9540
    %v9850 = vunpack.c.l.b16 %v9541
    %v9851 = vunpack.c.h.b16 %v9541
    %v9852 = vunpack.c.l.b16 %v9542
    %v9853 = vunpack.c.h.b16 %v9542
    %v9854 = vunpack.c.l.b16 %v9543
    %v9855 = vunpack.c.h.b16 %v9543
    %v9856 = vunpack.c.l.b16 %v9544
    %v9857 = vunpack.c.h.b16 %v9544
    %v9858 = vunpack.c.l.b16 %v9545
    %v9859 = vunpack.c.h.b16 %v9545
    %v9860 = vunpack.c.l.b16 %v9546
    %v9861 = vunpack.c.h.b16 %v9546
    %v9862 = vunpack.c.l.b16 %v9547
    %v9863 = vunpack.c.h.b16 %v9547
    %v9864 = vunpack.c.l.b16 %v9548
    %v9865 = vunpack.c.h.b16 %v9548
    %v9866 = vunpack.c.l.b16 %v9549
    %v9867 = vunpack.c.h.b16 %v9549
    %v9868 = vunpack.c.l.b16 %v9550
    %v9869 = vunpack.c.h.b16 %v9550
    %v9870 = vunpack.c.l.b16 %v9551
    %v9871 = vunpack.c.h.b16 %v9551
    %v9872 = vunpack.c.l.b16 %v9552
    %v9873 = vunpack.c.h.b16 %v9552
    %v9874 = vunpack.c.l.b16 %v9553
    %v9875 = vunpack.c.h.b16 %v9553
    %v9876 = vunpack.c.l.b16 %v9554
    %v9877 = vunpack.c.h.b16 %v9554
    %v9878 = vunpack.c.l.b16 %v9555
    %v9879 = vunpack.c.h.b16 %v9555
    %v9880 = vunpack.c.l.b16 %v9556
    %v9881 = vunpack.c.h.b16 %v9556
    %v9882 = vunpack.c.l.b16 %v9557
    %v9883 = vunpack.c.h.b16 %v9557
    %v9884 = vunpack.c.l.b16 %v9558
    %v9885 = vunpack.c.h.b16 %v9558
    %v9886 = vunpack.c.l.b16 %v9559
    %v9887 = vunpack.c.h.b16 %v9559
    %v9888 = vunpack.c.l.b16 %v9560
    %v9889 = vunpack.c.h.b16 %v9560
    %v9890 = vunpack.c.l.b16 %v9561
    %v9891 = vunpack.c.h.b16 %v9561
    %v9892 = vunpack.c.l.b16 %v9562
    %v9893 = vunpack.c.h.b16 %v9562
    %v9894 = vunpack.c.l.b16 %v9563
    %v9895 = vunpack.c.h.b16 %v9563
    %v9896 = vunpack.c.l.b16 %v9564
    %v9897 = vunpack.c.h.b16 %v9564
    %v9898 = vunpack.c.l.b16 %v9565
    %v9899 = vunpack.c.h.b16 %v9565
    %v9900 = vunpack.c.l.b16 %v9566
    %v9901 = vunpack.c.h.b16 %v9566
    %v9902 = vunpack.c.l.b16 %v9567
    %v9903 = vunpack.c.h.b16 %v9567
    %v9904 = vunpack.c.l.b16 %v9568
    %v9905 = vunpack.c.h.b16 %v9568
    %v9906 = vunpack.c.l.b16 %v9569
    %v9907 = vunpack.c.h.b16 %v9569
    %v9908 = vunpack.c.l.b16 %v9570
    %v9909 = vunpack.c.h.b16 %v9570
    %v9910 = vunpack.c.l.b16 %v9571
    %v9911 = vunpack.c.h.b16 %v9571
    %v9912 = vunpack.c.l.b16 %v9572
    %v9913 = vunpack.c.h.b16 %v9572
    %v9914 = vunpack.c.l.b16 %v9573
    %v9915 = vunpack.c.h.b16 %v9573
    %v9916 = vunpack.c.l.b16 %v9574
    %v9917 = vunpack.c.h.b16 %v9574
    %v9918 = vunpack.c.l.b16 %v9575
    %v9919 = vunpack.c.h.b16 %v9575
    %v9920 = vunpack.c.l.b16 %v9576
    %v9921 = vunpack.c.h.b16 %v9576
    %v9922 = vunpack.c.l.b16 %v9577
    %v9923 = vunpack.c.h.b16 %v9577
    %v9924 = vunpack.c.l.b16 %v9578
    %v9925 = vunpack.c.h.b16 %v9578
    %v9926 = vunpack.c.l.b16 %v9579
    %v9927 = vunpack.c.h.b16 %v9579
    %v9928 = vunpack.c.l.b16 %v9580
    %v9929 = vunpack.c.h.b16 %v9580
    %v9930 = vunpack.c.l.b16 %v9581
    %v9931 = vunpack.c.h.b16 %v9581
    %v9932 = vunpack.c.l.b16 %v9582
    %v9933 = vunpack.c.h.b16 %v9582
    %v9934 = vunpack.c.l.b16 %v9583
    %v9935 = vunpack.c.h.b16 %v9583
    %v9936 = vunpack.c.l.b16 %v9584
    %v9937 = vunpack.c.h.b16 %v9584
    %v9938 = vunpack.c.l.b16 %v9585
    %v9939 = vunpack.c.h.b16 %v9585
    %v9940 = vunpack.c.l.b16 %v9586
    %v9941 = vunpack.c.h.b16 %v9586
    %v9942 = vunpack.c.l.b16 %v9587
    %v9943 = vunpack.c.h.b16 %v9587
    %v9944 = vunpack.c.l.b16 %v9588
    %v9945 = vunpack.c.h.b16 %v9588
    %v9946 = vunpack.c.l.b16 %v9589
    %v9947 = vunpack.c.h.b16 %v9589
    %v9948 = vunpack.c.l.b16 %v9590
    %v9949 = vunpack.c.h.b16 %v9590
    %v9950 = vunpack.c.l.b16 %v9591
    %v9951 = vunpack.c.h.b16 %v9591
    %v9952 = vunpack.c.l.b16 %v9592
    %v9953 = vunpack.c.h.b16 %v9592
    %v9954 = vunpack.c.l.b16 %v9593
    %v9955 = vunpack.c.h.b16 %v9593
    %v9956 = vunpack.c.l.b16 %v9594
    %v9957 = vunpack.c.h.b16 %v9594
    %v9958 = vunpack.c.l.b16 %v9595
    %v9959 = vunpack.c.h.b16 %v9595
    %v9960 = vunpack.c.l.b16 %v9596
    %v9961 = vunpack.c.h.b16 %v9596
    %v9962 = vunpack.c.l.b16 %v9597
    %v9963 = vunpack.c.h.b16 %v9597
    %v9964 = vunpack.c.l.b16 %v9598
    %v9965 = vunpack.c.h.b16 %v9598
    %v9966 = vunpack.c.l.b16 %v9599
    %v9967 = vunpack.c.h.b16 %v9599
    %v9968 = vunpack.c.l.b16 %v9600
    %v9969 = vunpack.c.h.b16 %v9600
    %v9970 = vunpack.c.l.b16 %v9601
    %v9971 = vunpack.c.h.b16 %v9601
    %v9972 = vunpack.c.l.b16 %v9602
    %v9973 = vunpack.c.h.b16 %v9602
    %v9974 = vunpack.c.l.b16 %v9603
    %v9975 = vunpack.c.h.b16 %v9603
    %v9976 = vunpack.c.l.b16 %v9604
    %v9977 = vunpack.c.h.b16 %v9604
    %v9978 = vunpack.c.l.b16 %v9605
    %v9979 = vunpack.c.h.b16 %v9605
    %v9980 = vunpack.c.l.b16 %v9606
    %v9981 = vunpack.c.h.b16 %v9606
    %v9982 = vunpack.c.l.b16 %v9607
    %v9983 = vunpack.c.h.b16 %v9607
    %v9984 = vunpack.c.l.b16 %v9608
    %v9985 = vunpack.c.h.b16 %v9608
    %v9986 = vunpack.c.l.b16 %v9609
    %v9987 = vunpack.c.h.b16 %v9609
    %v9988 = vunpack.c.l.b16 %v9610
    %v9989 = vunpack.c.h.b16 %v9610
    %v9990 = vunpack.c.l.b16 %v9611
    %v9991 = vunpack.c.h.b16 %v9611
    %v9992 = vunpack.c.l.b16 %v9612
    %v9993 = vunpack.c.h.b16 %v9612
    %v9994 = vunpack.c.l.b16 %v9613
    %v9995 = vunpack.c.h.b16 %v9613
    %v9996 = vunpack.c.l.b16 %v9614
    %v9997 = vunpack.c.h.b16 %v9614
    %v9998 = vunpack.c.l.b16 %v9615
    %v9999 = vunpack.c.h.b16 %v9615
    %v10000 = vunpack.c.l.b16 %v9616
    %v10001 = vunpack.c.h.b16 %v9616
    %v10002 = vunpack.c.l.b16 %v9617
    %v10003 = vunpack.c.h.b16 %v9617
    %v10004 = vunpack.c.l.b16 %v9618
    %v10005 = vunpack.c.h.b16 %v9618
    %v10006 = vunpack.c.l.b16 %v9619
    %v10007 = vunpack.c.h.b16 %v9619
    %v10008 = vunpack.c.l.b16 %v9620
    %v10009 = vunpack.c.h.b16 %v9620
    %v10010 = vunpack.c.l.b16 %v9621
    %v10011 = vunpack.c.h.b16 %v9621
    %v10012 = vpack.c.b16 %v9758, %v9756
    %v10013 = vpack.c.b16 %v9759, %v9757
    %v10014 = vpack.c.b16 %v9762, %v9760
    %v10015 = vpack.c.b16 %v9763, %v9761
    %v10016 = vpack.c.b16 %v9766, %v9764
    %v10017 = vpack.c.b16 %v9767, %v9765
    %v10018 = vpack.c.b16 %v9770, %v9768
    %v10019 = vpack.c.b16 %v9771, %v9769
    %v10020 = vpack.c.b16 %v9774, %v9772
    %v10021 = vpack.c.b16 %v9775, %v9773
    %v10022 = vpack.c.b16 %v9778, %v9776
    %v10023 = vpack.c.b16 %v9779, %v9777
    %v10024 = vpack.c.b16 %v9782, %v9780
    %v10025 = vpack.c.b16 %v9783, %v9781
    %v10026 = vpack.c.b16 %v9786, %v9784
    %v10027 = vpack.c.b16 %v9787, %v9785
    %v10028 = vpack.c.b16 %v9790, %v9788
    %v10029 = vpack.c.b16 %v9791, %v9789
    %v10030 = vpack.c.b16 %v9794, %v9792
    %v10031 = vpack.c.b16 %v9795, %v9793
    %v10032 = vpack.c.b16 %v9798, %v9796
    %v10033 = vpack.c.b16 %v9799, %v9797
    %v10034 = vpack.c.b16 %v9802, %v9800
    %v10035 = vpack.c.b16 %v9803, %v9801
    %v10036 = vpack.c.b16 %v9806, %v9804
    %v10037 = vpack.c.b16 %v9807, %v9805
    %v10038 = vpack.c.b16 %v9810, %v9808
    %v10039 = vpack.c.b16 %v9811, %v9809
    %v10040 = vpack.c.b16 %v9814, %v9812
    %v10041 = vpack.c.b16 %v9815, %v9813
    %v10042 = vpack.c.b16 %v9818, %v9816
    %v10043 = vpack.c.b16 %v9819, %v9817
    %v10044 = vpack.c.b16 %v9822, %v9820
    %v10045 = vpack.c.b16 %v9823, %v9821
    %v10046 = vpack.c.b16 %v9826, %v9824
    %v10047 = vpack.c.b16 %v9827, %v9825
    %v10048 = vpack.c.b16 %v9830, %v9828
    %v10049 = vpack.c.b16 %v9831, %v9829
    %v10050 = vpack.c.b16 %v9834, %v9832
    %v10051 = vpack.c.b16 %v9835, %v9833
    %v10052 = vpack.c.b16 %v9838, %v9836
    %v10053 = vpack.c.b16 %v9839, %v9837
    %v10054 = vpack.c.b16 %v9842, %v9840
    %v10055 = vpack.c.b16 %v9843, %v9841
    %v10056 = vpack.c.b16 %v9846, %v9844
    %v10057 = vpack.c.b16 %v9847, %v9845
    %v10058 = vpack.c.b16 %v9850, %v9848
    %v10059 = vpack.c.b16 %v9851, %v9849
    %v10060 = vpack.c.b16 %v9854, %v9852
    %v10061 = vpack.c.b16 %v9855, %v9853
    %v10062 = vpack.c.b16 %v9858, %v9856
    %v10063 = vpack.c.b16 %v9859, %v9857
    %v10064 = vpack.c.b16 %v9862, %v9860
    %v10065 = vpack.c.b16 %v9863, %v9861
    %v10066 = vpack.c.b16 %v9866, %v9864
    %v10067 = vpack.c.b16 %v9867, %v9865
    %v10068 = vpack.c.b16 %v9870, %v9868
    %v10069 = vpack.c.b16 %v9871, %v9869
    %v10070 = vpack.c.b16 %v9874, %v9872
    %v10071 = vpack.c.b16 %v9875, %v9873
    %v10072 = vpack.c.b16 %v9878, %v9876
    %v10073 = vpack.c.b16 %v9879, %v9877
    %v10074 = vpack.c.b16 %v9882, %v9880
    %v10075 = vpack.c.b16 %v9883, %v9881
    %v10076 = vpack.c.b16 %v9886, %v9884
    %v10077 = vpack.c.b16 %v9887, %v9885
    %v10078 = vpack.c.b16 %v9890, %v9888
    %v10079 = vpack.c.b16 %v9891, %v9889
    %v10080 = vpack.c.b16 %v9894, %v9892
    %v10081 = vpack.c.b16 %v9895, %v9893
    %v10082 = vpack.c.b16 %v9898, %v9896
    %v10083 = vpack.c.b16 %v9899, %v9897
    %v10084 = vpack.c.b16 %v9902, %v9900
    %v10085 = vpack.c.b16 %v9903, %v9901
    %v10086 = vpack.c.b16 %v9906, %v9904
    %v10087 = vpack.c.b16 %v9907, %v9905
    %v10088 = vpack.c.b16 %v9910, %v9908
    %v10089 = vpack.c.b16 %v9911, %v9909
    %v10090 = vpack.c.b16 %v9914, %v9912
    %v10091 = vpack.c.b16 %v9915, %v9913
    %v10092 = vpack.c.b16 %v9918, %v9916
    %v10093 = vpack.c.b16 %v9919, %v9917
    %v10094 = vpack.c.b16 %v9922, %v9920
    %v10095 = vpack.c.b16 %v9923, %v9921
    %v10096 = vpack.c.b16 %v9926, %v9924
    %v10097 = vpack.c.b16 %v9927, %v9925
    %v10098 = vpack.c.b16 %v9930, %v9928
    %v10099 = vpack.c.b16 %v9931, %v9929
    %v10100 = vpack.c.b16 %v9934, %v9932
    %v10101 = vpack.c.b16 %v9935, %v9933
    %v10102 = vpack.c.b16 %v9938, %v9936
    %v10103 = vpack.c.b16 %v9939, %v9937
    %v10104 = vpack.c.b16 %v9942, %v9940
    %v10105 = vpack.c.b16 %v9943, %v9941
    %v10106 = vpack.c.b16 %v9946, %v9944
    %v10107 = vpack.c.b16 %v9947, %v9945
    %v10108 = vpack.c.b16 %v9950, %v9948
    %v10109 = vpack.c.b16 %v9951, %v9949
    %v10110 = vpack.c.b16 %v9954, %v9952
    %v10111 = vpack.c.b16 %v9955, %v9953
    %v10112 = vpack.c.b16 %v9958, %v9956
    %v10113 = vpack.c.b16 %v9959, %v9957
    %v10114 = vpack.c.b16 %v9962, %v9960
    %v10115 = vpack.c.b16 %v9963, %v9961
    %v10116 = vpack.c.b16 %v9966, %v9964
    %v10117 = vpack.c.b16 %v9967, %v9965
    %v10118 = vpack.c.b16 %v9970, %v9968
    %v10119 = vpack.c.b16 %v9971, %v9969
    %v10120 = vpack.c.b16 %v9974, %v9972
    %v10121 = vpack.c.b16 %v9975, %v9973
    %v10122 = vpack.c.b16 %v9978, %v9976
    %v10123 = vpack.c.b16 %v9979, %v9977
    %v10124 = vpack.c.b16 %v9982, %v9980
    %v10125 = vpack.c.b16 %v9983, %v9981
    %v10126 = vpack.c.b16 %v9986, %v9984
    %v10127 = vpack.c.b16 %v9987, %v9985
    %v10128 = vpack.c.b16 %v9990, %v9988
    %v10129 = vpack.c.b16 %v9991, %v9989
    %v10130 = vpack.c.b16 %v9994, %v9992
    %v10131 = vpack.c.b16 %v9995, %v9993
    %v10132 = vpack.c.b16 %v9998, %v9996
    %v10133 = vpack.c.b16 %v9999, %v9997
    %v10134 = vpack.c.b16 %v10002, %v10000
    %v10135 = vpack.c.b16 %v10003, %v10001
    %v10136 = vpack.c.b16 %v10006, %v10004
    %v10137 = vpack.c.b16 %v10007, %v10005
    %v10138 = vpack.c.b16 %v10010, %v10008
    %v10139 = vpack.c.b16 %v10011, %v10009
    %10268 = vmatpush.bf16.msra.mxu0 %v10026
    %10269 = vmatpush.bf16.msra.mxu0 %v10024
    %10270 = vmatpush.bf16.msra.mxu0 %v10022
    %10271 = vmatpush.bf16.msra.mxu0 %v10020
    %10272 = vmatpush.bf16.msra.mxu0 %v10018
    %10273 = vmatpush.bf16.msra.mxu0 %v10016
    %10274 = vmatpush.bf16.msra.mxu0 %v10014
    %10275 = vmatpush.bf16.msra.mxu0 %v10012
    %10276 = vmatmul.bf16.gmra.mxu0 %v9430
    %v10277 = vpop.f32.mrf.mxu0
    %v10278 = vadd.f32 %v9624, %v10277
    %v10279 = vpop.f32.mrf.mxu0
    %v10280 = vadd.f32 %v9624, %v10279
    %10281 = vmatmul.bf16.gmra.mxu0 %v9438
    %v10282 = vpop.f32.mrf.mxu0
    %v10283 = vadd.f32 %v9624, %v10282
    %v10284 = vpop.f32.mrf.mxu0
    %v10285 = vadd.f32 %v9624, %v10284
    %10286 = vmatmul.bf16.gmra.mxu0 %v9446
    %v10287 = vpop.f32.mrf.mxu0
    %v10288 = vadd.f32 %v9624, %v10287
    %v10289 = vpop.f32.mrf.mxu0
    %v10290 = vadd.f32 %v9624, %v10289
    %10291 = vmatmul.bf16.gmra.mxu0 %v9454
    %v10292 = vpop.f32.mrf.mxu0
    %v10293 = vadd.f32 %v9624, %v10292
    %v10294 = vpop.f32.mrf.mxu0
    %v10295 = vadd.f32 %v9624, %v10294
    %10296 = vmatmul.bf16.gmra.mxu0 %v9462
    %v10297 = vpop.f32.mrf.mxu0
    %v10298 = vadd.f32 %v9624, %v10297
    %v10299 = vpop.f32.mrf.mxu0
    %v10300 = vadd.f32 %v9624, %v10299
    %10301 = vmatmul.bf16.gmra.mxu0 %v9470
    %v10302 = vpop.f32.mrf.mxu0
    %v10303 = vadd.f32 %v9624, %v10302
    %v10304 = vpop.f32.mrf.mxu0
    %v10305 = vadd.f32 %v9624, %v10304
    %10306 = vmatmul.bf16.gmra.mxu0 %v9478
    %v10307 = vpop.f32.mrf.mxu0
    %v10308 = vadd.f32 %v9624, %v10307
    %v10309 = vpop.f32.mrf.mxu0
    %v10310 = vadd.f32 %v9624, %v10309
    %10311 = vmatmul.bf16.gmra.mxu0 %v9486
    %v10312 = vpop.f32.mrf.mxu0
    %v10313 = vadd.f32 %v9624, %v10312
    %v10314 = vpop.f32.mrf.mxu0
    %v10315 = vadd.f32 %v9624, %v10314
    %10316 = vdwg.mxu0
    %10317 = vmatpush.bf16.msra.mxu0 %v10042
    %10318 = vmatpush.bf16.msra.mxu0 %v10040
    %10319 = vmatpush.bf16.msra.mxu0 %v10038
    %10320 = vmatpush.bf16.msra.mxu0 %v10036
    %10321 = vmatpush.bf16.msra.mxu0 %v10034
    %10322 = vmatpush.bf16.msra.mxu0 %v10032
    %10323 = vmatpush.bf16.msra.mxu0 %v10030
    %10324 = vmatpush.bf16.msra.mxu0 %v10028
    %10325 = vmatmul.bf16.gmra.mxu0 %v9431
    %v10326 = vpop.f32.mrf.mxu0
    %v10327 = vadd.f32 %v10278, %v10326
    %v10328 = vpop.f32.mrf.mxu0
    %v10329 = vadd.f32 %v10280, %v10328
    %10330 = vmatmul.bf16.gmra.mxu0 %v9439
    %v10331 = vpop.f32.mrf.mxu0
    %v10332 = vadd.f32 %v10283, %v10331
    %v10333 = vpop.f32.mrf.mxu0
    %v10334 = vadd.f32 %v10285, %v10333
    %10335 = vmatmul.bf16.gmra.mxu0 %v9447
    %v10336 = vpop.f32.mrf.mxu0
    %v10337 = vadd.f32 %v10288, %v10336
    %v10338 = vpop.f32.mrf.mxu0
    %v10339 = vadd.f32 %v10290, %v10338
    %10340 = vmatmul.bf16.gmra.mxu0 %v9455
    %v10341 = vpop.f32.mrf.mxu0
    %v10342 = vadd.f32 %v10293, %v10341
    %v10343 = vpop.f32.mrf.mxu0
    %v10344 = vadd.f32 %v10295, %v10343
    %10345 = vmatmul.bf16.gmra.mxu0 %v9463
    %v10346 = vpop.f32.mrf.mxu0
    %v10347 = vadd.f32 %v10298, %v10346
    %v10348 = vpop.f32.mrf.mxu0
    %v10349 = vadd.f32 %v10300, %v10348
    %10350 = vmatmul.bf16.gmra.mxu0 %v9471
    %v10351 = vpop.f32.mrf.mxu0
    %v10352 = vadd.f32 %v10303, %v10351
    %v10353 = vpop.f32.mrf.mxu0
    %v10354 = vadd.f32 %v10305, %v10353
    %10355 = vmatmul.bf16.gmra.mxu0 %v9479
    %v10356 = vpop.f32.mrf.mxu0
    %v10357 = vadd.f32 %v10308, %v10356
    %v10358 = vpop.f32.mrf.mxu0
    %v10359 = vadd.f32 %v10310, %v10358
    %10360 = vmatmul.bf16.gmra.mxu0 %v9487
    %v10361 = vpop.f32.mrf.mxu0
    %v10362 = vadd.f32 %v10313, %v10361
    %v10363 = vpop.f32.mrf.mxu0
    %v10364 = vadd.f32 %v10315, %v10363
    %10365 = vdwg.mxu0
    %10366 = vmatpush.bf16.msra.mxu0 %v10058
    %10367 = vmatpush.bf16.msra.mxu0 %v10056
    %10368 = vmatpush.bf16.msra.mxu0 %v10054
    %10369 = vmatpush.bf16.msra.mxu0 %v10052
    %10370 = vmatpush.bf16.msra.mxu0 %v10050
    %10371 = vmatpush.bf16.msra.mxu0 %v10048
    %10372 = vmatpush.bf16.msra.mxu0 %v10046
    %10373 = vmatpush.bf16.msra.mxu0 %v10044
    %10374 = vmatmul.bf16.gmra.mxu0 %v9432
    %v10375 = vpop.f32.mrf.mxu0
    %v10376 = vadd.f32 %v10327, %v10375
    %v10377 = vpop.f32.mrf.mxu0
    %v10378 = vadd.f32 %v10329, %v10377
    %10379 = vmatmul.bf16.gmra.mxu0 %v9440
    %v10380 = vpop.f32.mrf.mxu0
    %v10381 = vadd.f32 %v10332, %v10380
    %v10382 = vpop.f32.mrf.mxu0
    %v10383 = vadd.f32 %v10334, %v10382
    %10384 = vmatmul.bf16.gmra.mxu0 %v9448
    %v10385 = vpop.f32.mrf.mxu0
    %v10386 = vadd.f32 %v10337, %v10385
    %v10387 = vpop.f32.mrf.mxu0
    %v10388 = vadd.f32 %v10339, %v10387
    %10389 = vmatmul.bf16.gmra.mxu0 %v9456
    %v10390 = vpop.f32.mrf.mxu0
    %v10391 = vadd.f32 %v10342, %v10390
    %v10392 = vpop.f32.mrf.mxu0
    %v10393 = vadd.f32 %v10344, %v10392
    %10394 = vmatmul.bf16.gmra.mxu0 %v9464
    %v10395 = vpop.f32.mrf.mxu0
    %v10396 = vadd.f32 %v10347, %v10395
    %v10397 = vpop.f32.mrf.mxu0
    %v10398 = vadd.f32 %v10349, %v10397
    %10399 = vmatmul.bf16.gmra.mxu0 %v9472
    %v10400 = vpop.f32.mrf.mxu0
    %v10401 = vadd.f32 %v10352, %v10400
    %v10402 = vpop.f32.mrf.mxu0
    %v10403 = vadd.f32 %v10354, %v10402
    %10404 = vmatmul.bf16.gmra.mxu0 %v9480
    %v10405 = vpop.f32.mrf.mxu0
    %v10406 = vadd.f32 %v10357, %v10405
    %v10407 = vpop.f32.mrf.mxu0
    %v10408 = vadd.f32 %v10359, %v10407
    %10409 = vmatmul.bf16.gmra.mxu0 %v9488
    %v10410 = vpop.f32.mrf.mxu0
    %v10411 = vadd.f32 %v10362, %v10410
    %v10412 = vpop.f32.mrf.mxu0
    %v10413 = vadd.f32 %v10364, %v10412
    %10414 = vdwg.mxu0
    %10415 = vmatpush.bf16.msra.mxu0 %v10074
    %10416 = vmatpush.bf16.msra.mxu0 %v10072
    %10417 = vmatpush.bf16.msra.mxu0 %v10070
    %10418 = vmatpush.bf16.msra.mxu0 %v10068
    %10419 = vmatpush.bf16.msra.mxu0 %v10066
    %10420 = vmatpush.bf16.msra.mxu0 %v10064
    %10421 = vmatpush.bf16.msra.mxu0 %v10062
    %10422 = vmatpush.bf16.msra.mxu0 %v10060
    %10423 = vmatmul.bf16.gmra.mxu0 %v9433
    %v10424 = vpop.f32.mrf.mxu0
    %v10425 = vadd.f32 %v10376, %v10424
    %v10426 = vpop.f32.mrf.mxu0
    %v10427 = vadd.f32 %v10378, %v10426
    %10428 = vmatmul.bf16.gmra.mxu0 %v9441
    %v10429 = vpop.f32.mrf.mxu0
    %v10430 = vadd.f32 %v10381, %v10429
    %v10431 = vpop.f32.mrf.mxu0
    %v10432 = vadd.f32 %v10383, %v10431
    %10433 = vmatmul.bf16.gmra.mxu0 %v9449
    %v10434 = vpop.f32.mrf.mxu0
    %v10435 = vadd.f32 %v10386, %v10434
    %v10436 = vpop.f32.mrf.mxu0
    %v10437 = vadd.f32 %v10388, %v10436
    %10438 = vmatmul.bf16.gmra.mxu0 %v9457
    %v10439 = vpop.f32.mrf.mxu0
    %v10440 = vadd.f32 %v10391, %v10439
    %v10441 = vpop.f32.mrf.mxu0
    %v10442 = vadd.f32 %v10393, %v10441
    %10443 = vmatmul.bf16.gmra.mxu0 %v9465
    %v10444 = vpop.f32.mrf.mxu0
    %v10445 = vadd.f32 %v10396, %v10444
    %v10446 = vpop.f32.mrf.mxu0
    %v10447 = vadd.f32 %v10398, %v10446
    %10448 = vmatmul.bf16.gmra.mxu0 %v9473
    %v10449 = vpop.f32.mrf.mxu0
    %v10450 = vadd.f32 %v10401, %v10449
    %v10451 = vpop.f32.mrf.mxu0
    %v10452 = vadd.f32 %v10403, %v10451
    %10453 = vmatmul.bf16.gmra.mxu0 %v9481
    %v10454 = vpop.f32.mrf.mxu0
    %v10455 = vadd.f32 %v10406, %v10454
    %v10456 = vpop.f32.mrf.mxu0
    %v10457 = vadd.f32 %v10408, %v10456
    %10458 = vmatmul.bf16.gmra.mxu0 %v9489
    %v10459 = vpop.f32.mrf.mxu0
    %v10460 = vadd.f32 %v10411, %v10459
    %v10461 = vpop.f32.mrf.mxu0
    %v10462 = vadd.f32 %v10413, %v10461
    %10463 = vdwg.mxu0
    %10464 = vmatpush.bf16.msra.mxu0 %v10090
    %10465 = vmatpush.bf16.msra.mxu0 %v10088
    %10466 = vmatpush.bf16.msra.mxu0 %v10086
    %10467 = vmatpush.bf16.msra.mxu0 %v10084
    %10468 = vmatpush.bf16.msra.mxu0 %v10082
    %10469 = vmatpush.bf16.msra.mxu0 %v10080
    %10470 = vmatpush.bf16.msra.mxu0 %v10078
    %10471 = vmatpush.bf16.msra.mxu0 %v10076
    %10472 = vmatmul.bf16.gmra.mxu0 %v9434
    %v10473 = vpop.f32.mrf.mxu0
    %v10474 = vadd.f32 %v10425, %v10473
    %v10475 = vpop.f32.mrf.mxu0
    %v10476 = vadd.f32 %v10427, %v10475
    %10477 = vmatmul.bf16.gmra.mxu0 %v9442
    %v10478 = vpop.f32.mrf.mxu0
    %v10479 = vadd.f32 %v10430, %v10478
    %v10480 = vpop.f32.mrf.mxu0
    %v10481 = vadd.f32 %v10432, %v10480
    %10482 = vmatmul.bf16.gmra.mxu0 %v9450
    %v10483 = vpop.f32.mrf.mxu0
    %v10484 = vadd.f32 %v10435, %v10483
    %v10485 = vpop.f32.mrf.mxu0
    %v10486 = vadd.f32 %v10437, %v10485
    %10487 = vmatmul.bf16.gmra.mxu0 %v9458
    %v10488 = vpop.f32.mrf.mxu0
    %v10489 = vadd.f32 %v10440, %v10488
    %v10490 = vpop.f32.mrf.mxu0
    %v10491 = vadd.f32 %v10442, %v10490
    %10492 = vmatmul.bf16.gmra.mxu0 %v9466
    %v10493 = vpop.f32.mrf.mxu0
    %v10494 = vadd.f32 %v10445, %v10493
    %v10495 = vpop.f32.mrf.mxu0
    %v10496 = vadd.f32 %v10447, %v10495
    %10497 = vmatmul.bf16.gmra.mxu0 %v9474
    %v10498 = vpop.f32.mrf.mxu0
    %v10499 = vadd.f32 %v10450, %v10498
    %v10500 = vpop.f32.mrf.mxu0
    %v10501 = vadd.f32 %v10452, %v10500
    %10502 = vmatmul.bf16.gmra.mxu0 %v9482
    %v10503 = vpop.f32.mrf.mxu0
    %v10504 = vadd.f32 %v10455, %v10503
    %v10505 = vpop.f32.mrf.mxu0
    %v10506 = vadd.f32 %v10457, %v10505
    %10507 = vmatmul.bf16.gmra.mxu0 %v9490
    %v10508 = vpop.f32.mrf.mxu0
    %v10509 = vadd.f32 %v10460, %v10508
    %v10510 = vpop.f32.mrf.mxu0
    %v10511 = vadd.f32 %v10462, %v10510
    %10512 = vdwg.mxu0
    %10513 = vmatpush.bf16.msra.mxu0 %v10106
    %10514 = vmatpush.bf16.msra.mxu0 %v10104
    %10515 = vmatpush.bf16.msra.mxu0 %v10102
    %10516 = vmatpush.bf16.msra.mxu0 %v10100
    %10517 = vmatpush.bf16.msra.mxu0 %v10098
    %10518 = vmatpush.bf16.msra.mxu0 %v10096
    %10519 = vmatpush.bf16.msra.mxu0 %v10094
    %10520 = vmatpush.bf16.msra.mxu0 %v10092
    %10521 = vmatmul.bf16.gmra.mxu0 %v9435
    %v10522 = vpop.f32.mrf.mxu0
    %v10523 = vadd.f32 %v10474, %v10522
    %v10524 = vpop.f32.mrf.mxu0
    %v10525 = vadd.f32 %v10476, %v10524
    %10526 = vmatmul.bf16.gmra.mxu0 %v9443
    %v10527 = vpop.f32.mrf.mxu0
    %v10528 = vadd.f32 %v10479, %v10527
    %v10529 = vpop.f32.mrf.mxu0
    %v10530 = vadd.f32 %v10481, %v10529
    %10531 = vmatmul.bf16.gmra.mxu0 %v9451
    %v10532 = vpop.f32.mrf.mxu0
    %v10533 = vadd.f32 %v10484, %v10532
    %v10534 = vpop.f32.mrf.mxu0
    %v10535 = vadd.f32 %v10486, %v10534
    %10536 = vmatmul.bf16.gmra.mxu0 %v9459
    %v10537 = vpop.f32.mrf.mxu0
    %v10538 = vadd.f32 %v10489, %v10537
    %v10539 = vpop.f32.mrf.mxu0
    %v10540 = vadd.f32 %v10491, %v10539
    %10541 = vmatmul.bf16.gmra.mxu0 %v9467
    %v10542 = vpop.f32.mrf.mxu0
    %v10543 = vadd.f32 %v10494, %v10542
    %v10544 = vpop.f32.mrf.mxu0
    %v10545 = vadd.f32 %v10496, %v10544
    %10546 = vmatmul.bf16.gmra.mxu0 %v9475
    %v10547 = vpop.f32.mrf.mxu0
    %v10548 = vadd.f32 %v10499, %v10547
    %v10549 = vpop.f32.mrf.mxu0
    %v10550 = vadd.f32 %v10501, %v10549
    %10551 = vmatmul.bf16.gmra.mxu0 %v9483
    %v10552 = vpop.f32.mrf.mxu0
    %v10553 = vadd.f32 %v10504, %v10552
    %v10554 = vpop.f32.mrf.mxu0
    %v10555 = vadd.f32 %v10506, %v10554
    %10556 = vmatmul.bf16.gmra.mxu0 %v9491
    %v10557 = vpop.f32.mrf.mxu0
    %v10558 = vadd.f32 %v10509, %v10557
    %v10559 = vpop.f32.mrf.mxu0
    %v10560 = vadd.f32 %v10511, %v10559
    %10561 = vdwg.mxu0
    %10562 = vmatpush.bf16.msra.mxu0 %v10122
    %10563 = vmatpush.bf16.msra.mxu0 %v10120
    %10564 = vmatpush.bf16.msra.mxu0 %v10118
    %10565 = vmatpush.bf16.msra.mxu0 %v10116
    %10566 = vmatpush.bf16.msra.mxu0 %v10114
    %10567 = vmatpush.bf16.msra.mxu0 %v10112
    %10568 = vmatpush.bf16.msra.mxu0 %v10110
    %10569 = vmatpush.bf16.msra.mxu0 %v10108
    %10570 = vmatmul.bf16.gmra.mxu0 %v9436
    %v10571 = vpop.f32.mrf.mxu0
    %v10572 = vadd.f32 %v10523, %v10571
    %v10573 = vpop.f32.mrf.mxu0
    %v10574 = vadd.f32 %v10525, %v10573
    %10575 = vmatmul.bf16.gmra.mxu0 %v9444
    %v10576 = vpop.f32.mrf.mxu0
    %v10577 = vadd.f32 %v10528, %v10576
    %v10578 = vpop.f32.mrf.mxu0
    %v10579 = vadd.f32 %v10530, %v10578
    %10580 = vmatmul.bf16.gmra.mxu0 %v9452
    %v10581 = vpop.f32.mrf.mxu0
    %v10582 = vadd.f32 %v10533, %v10581
    %v10583 = vpop.f32.mrf.mxu0
    %v10584 = vadd.f32 %v10535, %v10583
    %10585 = vmatmul.bf16.gmra.mxu0 %v9460
    %v10586 = vpop.f32.mrf.mxu0
    %v10587 = vadd.f32 %v10538, %v10586
    %v10588 = vpop.f32.mrf.mxu0
    %v10589 = vadd.f32 %v10540, %v10588
    %10590 = vmatmul.bf16.gmra.mxu0 %v9468
    %v10591 = vpop.f32.mrf.mxu0
    %v10592 = vadd.f32 %v10543, %v10591
    %v10593 = vpop.f32.mrf.mxu0
    %v10594 = vadd.f32 %v10545, %v10593
    %10595 = vmatmul.bf16.gmra.mxu0 %v9476
    %v10596 = vpop.f32.mrf.mxu0
    %v10597 = vadd.f32 %v10548, %v10596
    %v10598 = vpop.f32.mrf.mxu0
    %v10599 = vadd.f32 %v10550, %v10598
    %10600 = vmatmul.bf16.gmra.mxu0 %v9484
    %v10601 = vpop.f32.mrf.mxu0
    %v10602 = vadd.f32 %v10553, %v10601
    %v10603 = vpop.f32.mrf.mxu0
    %v10604 = vadd.f32 %v10555, %v10603
    %10605 = vmatmul.bf16.gmra.mxu0 %v9492
    %v10606 = vpop.f32.mrf.mxu0
    %v10607 = vadd.f32 %v10558, %v10606
    %v10608 = vpop.f32.mrf.mxu0
    %v10609 = vadd.f32 %v10560, %v10608
    %10610 = vdwg.mxu0
    %10611 = vmatpush.bf16.msra.mxu0 %v10138
    %10612 = vmatpush.bf16.msra.mxu0 %v10136
    %10613 = vmatpush.bf16.msra.mxu0 %v10134
    %10614 = vmatpush.bf16.msra.mxu0 %v10132
    %10615 = vmatpush.bf16.msra.mxu0 %v10130
    %10616 = vmatpush.bf16.msra.mxu0 %v10128
    %10617 = vmatpush.bf16.msra.mxu0 %v10126
    %10618 = vmatpush.bf16.msra.mxu0 %v10124
    %10619 = vmatmul.bf16.gmra.mxu0 %v9437
    %v10620 = vpop.f32.mrf.mxu0
    %v10621 = vadd.f32 %v10572, %v10620
    %v10622 = vpop.f32.mrf.mxu0
    %v10623 = vadd.f32 %v10574, %v10622
    %10624 = vmatmul.bf16.gmra.mxu0 %v9445
    %v10625 = vpop.f32.mrf.mxu0
    %v10626 = vadd.f32 %v10577, %v10625
    %v10627 = vpop.f32.mrf.mxu0
    %v10628 = vadd.f32 %v10579, %v10627
    %10629 = vmatmul.bf16.gmra.mxu0 %v9453
    %v10630 = vpop.f32.mrf.mxu0
    %v10631 = vadd.f32 %v10582, %v10630
    %v10632 = vpop.f32.mrf.mxu0
    %v10633 = vadd.f32 %v10584, %v10632
    %10634 = vmatmul.bf16.gmra.mxu0 %v9461
    %v10635 = vpop.f32.mrf.mxu0
    %v10636 = vadd.f32 %v10587, %v10635
    %v10637 = vpop.f32.mrf.mxu0
    %v10638 = vadd.f32 %v10589, %v10637
    %10639 = vmatmul.bf16.gmra.mxu0 %v9469
    %v10640 = vpop.f32.mrf.mxu0
    %v10641 = vadd.f32 %v10592, %v10640
    %v10642 = vpop.f32.mrf.mxu0
    %v10643 = vadd.f32 %v10594, %v10642
    %10644 = vmatmul.bf16.gmra.mxu0 %v9477
    %v10645 = vpop.f32.mrf.mxu0
    %v10646 = vadd.f32 %v10597, %v10645
    %v10647 = vpop.f32.mrf.mxu0
    %v10648 = vadd.f32 %v10599, %v10647
    %10649 = vmatmul.bf16.gmra.mxu0 %v9485
    %v10650 = vpop.f32.mrf.mxu0
    %v10651 = vadd.f32 %v10602, %v10650
    %v10652 = vpop.f32.mrf.mxu0
    %v10653 = vadd.f32 %v10604, %v10652
    %10654 = vmatmul.bf16.gmra.mxu0 %v9493
    %v10655 = vpop.f32.mrf.mxu0
    %v10656 = vadd.f32 %v10607, %v10655
    %v10657 = vpop.f32.mrf.mxu0
    %v10658 = vadd.f32 %v10609, %v10657
    %10659 = vdwg.mxu0
    %10660 = vmatpush.bf16.msra.mxu0 %v10027
    %10661 = vmatpush.bf16.msra.mxu0 %v10025
    %10662 = vmatpush.bf16.msra.mxu0 %v10023
    %10663 = vmatpush.bf16.msra.mxu0 %v10021
    %10664 = vmatpush.bf16.msra.mxu0 %v10019
    %10665 = vmatpush.bf16.msra.mxu0 %v10017
    %10666 = vmatpush.bf16.msra.mxu0 %v10015
    %10667 = vmatpush.bf16.msra.mxu0 %v10013
    %10668 = vmatmul.bf16.gmra.mxu0 %v9430
    %v10669 = vpop.f32.mrf.mxu0
    %v10670 = vadd.f32 %v9625, %v10669
    %v10671 = vpop.f32.mrf.mxu0
    %v10672 = vadd.f32 %v9625, %v10671
    %10673 = vmatmul.bf16.gmra.mxu0 %v9438
    %v10674 = vpop.f32.mrf.mxu0
    %v10675 = vadd.f32 %v9625, %v10674
    %v10676 = vpop.f32.mrf.mxu0
    %v10677 = vadd.f32 %v9625, %v10676
    %10678 = vmatmul.bf16.gmra.mxu0 %v9446
    %v10679 = vpop.f32.mrf.mxu0
    %v10680 = vadd.f32 %v9625, %v10679
    %v10681 = vpop.f32.mrf.mxu0
    %v10682 = vadd.f32 %v9625, %v10681
    %10683 = vmatmul.bf16.gmra.mxu0 %v9454
    %v10684 = vpop.f32.mrf.mxu0
    %v10685 = vadd.f32 %v9625, %v10684
    %v10686 = vpop.f32.mrf.mxu0
    %v10687 = vadd.f32 %v9625, %v10686
    %10688 = vmatmul.bf16.gmra.mxu0 %v9462
    %v10689 = vpop.f32.mrf.mxu0
    %v10690 = vadd.f32 %v9625, %v10689
    %v10691 = vpop.f32.mrf.mxu0
    %v10692 = vadd.f32 %v9625, %v10691
    %10693 = vmatmul.bf16.gmra.mxu0 %v9470
    %v10694 = vpop.f32.mrf.mxu0
    %v10695 = vadd.f32 %v9625, %v10694
    %v10696 = vpop.f32.mrf.mxu0
    %v10697 = vadd.f32 %v9625, %v10696
    %10698 = vmatmul.bf16.gmra.mxu0 %v9478
    %v10699 = vpop.f32.mrf.mxu0
    %v10700 = vadd.f32 %v9625, %v10699
    %v10701 = vpop.f32.mrf.mxu0
    %v10702 = vadd.f32 %v9625, %v10701
    %10703 = vmatmul.bf16.gmra.mxu0 %v9486
    %v10704 = vpop.f32.mrf.mxu0
    %v10705 = vadd.f32 %v9625, %v10704
    %v10706 = vpop.f32.mrf.mxu0
    %v10707 = vadd.f32 %v9625, %v10706
    %10708 = vdwg.mxu0
    %10709 = vmatpush.bf16.msra.mxu0 %v10043
    %10710 = vmatpush.bf16.msra.mxu0 %v10041
    %10711 = vmatpush.bf16.msra.mxu0 %v10039
    %10712 = vmatpush.bf16.msra.mxu0 %v10037
    %10713 = vmatpush.bf16.msra.mxu0 %v10035
    %10714 = vmatpush.bf16.msra.mxu0 %v10033
    %10715 = vmatpush.bf16.msra.mxu0 %v10031
    %10716 = vmatpush.bf16.msra.mxu0 %v10029
    %10717 = vmatmul.bf16.gmra.mxu0 %v9431
    %v10718 = vpop.f32.mrf.mxu0
    %v10719 = vadd.f32 %v10670, %v10718
    %v10720 = vpop.f32.mrf.mxu0
    %v10721 = vadd.f32 %v10672, %v10720
    %10722 = vmatmul.bf16.gmra.mxu0 %v9439
    %v10723 = vpop.f32.mrf.mxu0
    %v10724 = vadd.f32 %v10675, %v10723
    %v10725 = vpop.f32.mrf.mxu0
    %v10726 = vadd.f32 %v10677, %v10725
    %10727 = vmatmul.bf16.gmra.mxu0 %v9447
    %v10728 = vpop.f32.mrf.mxu0
    %v10729 = vadd.f32 %v10680, %v10728
    %v10730 = vpop.f32.mrf.mxu0
    %v10731 = vadd.f32 %v10682, %v10730
    %10732 = vmatmul.bf16.gmra.mxu0 %v9455
    %v10733 = vpop.f32.mrf.mxu0
    %v10734 = vadd.f32 %v10685, %v10733
    %v10735 = vpop.f32.mrf.mxu0
    %v10736 = vadd.f32 %v10687, %v10735
    %10737 = vmatmul.bf16.gmra.mxu0 %v9463
    %v10738 = vpop.f32.mrf.mxu0
    %v10739 = vadd.f32 %v10690, %v10738
    %v10740 = vpop.f32.mrf.mxu0
    %v10741 = vadd.f32 %v10692, %v10740
    %10742 = vmatmul.bf16.gmra.mxu0 %v9471
    %v10743 = vpop.f32.mrf.mxu0
    %v10744 = vadd.f32 %v10695, %v10743
    %v10745 = vpop.f32.mrf.mxu0
    %v10746 = vadd.f32 %v10697, %v10745
    %10747 = vmatmul.bf16.gmra.mxu0 %v9479
    %v10748 = vpop.f32.mrf.mxu0
    %v10749 = vadd.f32 %v10700, %v10748
    %v10750 = vpop.f32.mrf.mxu0
    %v10751 = vadd.f32 %v10702, %v10750
    %10752 = vmatmul.bf16.gmra.mxu0 %v9487
    %v10753 = vpop.f32.mrf.mxu0
    %v10754 = vadd.f32 %v10705, %v10753
    %v10755 = vpop.f32.mrf.mxu0
    %v10756 = vadd.f32 %v10707, %v10755
    %10757 = vdwg.mxu0
    %10758 = vmatpush.bf16.msra.mxu0 %v10059
    %10759 = vmatpush.bf16.msra.mxu0 %v10057
    %10760 = vmatpush.bf16.msra.mxu0 %v10055
    %10761 = vmatpush.bf16.msra.mxu0 %v10053
    %10762 = vmatpush.bf16.msra.mxu0 %v10051
    %10763 = vmatpush.bf16.msra.mxu0 %v10049
    %10764 = vmatpush.bf16.msra.mxu0 %v10047
    %10765 = vmatpush.bf16.msra.mxu0 %v10045
    %10766 = vmatmul.bf16.gmra.mxu0 %v9432
    %v10767 = vpop.f32.mrf.mxu0
    %v10768 = vadd.f32 %v10719, %v10767
    %v10769 = vpop.f32.mrf.mxu0
    %v10770 = vadd.f32 %v10721, %v10769
    %10771 = vmatmul.bf16.gmra.mxu0 %v9440
    %v10772 = vpop.f32.mrf.mxu0
    %v10773 = vadd.f32 %v10724, %v10772
    %v10774 = vpop.f32.mrf.mxu0
    %v10775 = vadd.f32 %v10726, %v10774
    %10776 = vmatmul.bf16.gmra.mxu0 %v9448
    %v10777 = vpop.f32.mrf.mxu0
    %v10778 = vadd.f32 %v10729, %v10777
    %v10779 = vpop.f32.mrf.mxu0
    %v10780 = vadd.f32 %v10731, %v10779
    %10781 = vmatmul.bf16.gmra.mxu0 %v9456
    %v10782 = vpop.f32.mrf.mxu0
    %v10783 = vadd.f32 %v10734, %v10782
    %v10784 = vpop.f32.mrf.mxu0
    %v10785 = vadd.f32 %v10736, %v10784
    %10786 = vmatmul.bf16.gmra.mxu0 %v9464
    %v10787 = vpop.f32.mrf.mxu0
    %v10788 = vadd.f32 %v10739, %v10787
    %v10789 = vpop.f32.mrf.mxu0
    %v10790 = vadd.f32 %v10741, %v10789
    %10791 = vmatmul.bf16.gmra.mxu0 %v9472
    %v10792 = vpop.f32.mrf.mxu0
    %v10793 = vadd.f32 %v10744, %v10792
    %v10794 = vpop.f32.mrf.mxu0
    %v10795 = vadd.f32 %v10746, %v10794
    %10796 = vmatmul.bf16.gmra.mxu0 %v9480
    %v10797 = vpop.f32.mrf.mxu0
    %v10798 = vadd.f32 %v10749, %v10797
    %v10799 = vpop.f32.mrf.mxu0
    %v10800 = vadd.f32 %v10751, %v10799
    %10801 = vmatmul.bf16.gmra.mxu0 %v9488
    %v10802 = vpop.f32.mrf.mxu0
    %v10803 = vadd.f32 %v10754, %v10802
    %v10804 = vpop.f32.mrf.mxu0
    %v10805 = vadd.f32 %v10756, %v10804
    %10806 = vdwg.mxu0
    %10807 = vmatpush.bf16.msra.mxu0 %v10075
    %10808 = vmatpush.bf16.msra.mxu0 %v10073
    %10809 = vmatpush.bf16.msra.mxu0 %v10071
    %10810 = vmatpush.bf16.msra.mxu0 %v10069
    %10811 = vmatpush.bf16.msra.mxu0 %v10067
    %10812 = vmatpush.bf16.msra.mxu0 %v10065
    %10813 = vmatpush.bf16.msra.mxu0 %v10063
    %10814 = vmatpush.bf16.msra.mxu0 %v10061
    %10815 = vmatmul.bf16.gmra.mxu0 %v9433
    %v10816 = vpop.f32.mrf.mxu0
    %v10817 = vadd.f32 %v10768, %v10816
    %v10818 = vpop.f32.mrf.mxu0
    %v10819 = vadd.f32 %v10770, %v10818
    %10820 = vmatmul.bf16.gmra.mxu0 %v9441
    %v10821 = vpop.f32.mrf.mxu0
    %v10822 = vadd.f32 %v10773, %v10821
    %v10823 = vpop.f32.mrf.mxu0
    %v10824 = vadd.f32 %v10775, %v10823
    %10825 = vmatmul.bf16.gmra.mxu0 %v9449
    %v10826 = vpop.f32.mrf.mxu0
    %v10827 = vadd.f32 %v10778, %v10826
    %v10828 = vpop.f32.mrf.mxu0
    %v10829 = vadd.f32 %v10780, %v10828
    %10830 = vmatmul.bf16.gmra.mxu0 %v9457
    %v10831 = vpop.f32.mrf.mxu0
    %v10832 = vadd.f32 %v10783, %v10831
    %v10833 = vpop.f32.mrf.mxu0
    %v10834 = vadd.f32 %v10785, %v10833
    %10835 = vmatmul.bf16.gmra.mxu0 %v9465
    %v10836 = vpop.f32.mrf.mxu0
    %v10837 = vadd.f32 %v10788, %v10836
    %v10838 = vpop.f32.mrf.mxu0
    %v10839 = vadd.f32 %v10790, %v10838
    %10840 = vmatmul.bf16.gmra.mxu0 %v9473
    %v10841 = vpop.f32.mrf.mxu0
    %v10842 = vadd.f32 %v10793, %v10841
    %v10843 = vpop.f32.mrf.mxu0
    %v10844 = vadd.f32 %v10795, %v10843
    %10845 = vmatmul.bf16.gmra.mxu0 %v9481
    %v10846 = vpop.f32.mrf.mxu0
    %v10847 = vadd.f32 %v10798, %v10846
    %v10848 = vpop.f32.mrf.mxu0
    %v10849 = vadd.f32 %v10800, %v10848
    %10850 = vmatmul.bf16.gmra.mxu0 %v9489
    %v10851 = vpop.f32.mrf.mxu0
    %v10852 = vadd.f32 %v10803, %v10851
    %v10853 = vpop.f32.mrf.mxu0
    %v10854 = vadd.f32 %v10805, %v10853
    %10855 = vdwg.mxu0
    %10856 = vmatpush.bf16.msra.mxu0 %v10091
    %10857 = vmatpush.bf16.msra.mxu0 %v10089
    %10858 = vmatpush.bf16.msra.mxu0 %v10087
    %10859 = vmatpush.bf16.msra.mxu0 %v10085
    %10860 = vmatpush.bf16.msra.mxu0 %v10083
    %10861 = vmatpush.bf16.msra.mxu0 %v10081
    %10862 = vmatpush.bf16.msra.mxu0 %v10079
    %10863 = vmatpush.bf16.msra.mxu0 %v10077
    %10864 = vmatmul.bf16.gmra.mxu0 %v9434
    %v10865 = vpop.f32.mrf.mxu0
    %v10866 = vadd.f32 %v10817, %v10865
    %v10867 = vpop.f32.mrf.mxu0
    %v10868 = vadd.f32 %v10819, %v10867
    %10869 = vmatmul.bf16.gmra.mxu0 %v9442
    %v10870 = vpop.f32.mrf.mxu0
    %v10871 = vadd.f32 %v10822, %v10870
    %v10872 = vpop.f32.mrf.mxu0
    %v10873 = vadd.f32 %v10824, %v10872
    %10874 = vmatmul.bf16.gmra.mxu0 %v9450
    %v10875 = vpop.f32.mrf.mxu0
    %v10876 = vadd.f32 %v10827, %v10875
    %v10877 = vpop.f32.mrf.mxu0
    %v10878 = vadd.f32 %v10829, %v10877
    %10879 = vmatmul.bf16.gmra.mxu0 %v9458
    %v10880 = vpop.f32.mrf.mxu0
    %v10881 = vadd.f32 %v10832, %v10880
    %v10882 = vpop.f32.mrf.mxu0
    %v10883 = vadd.f32 %v10834, %v10882
    %10884 = vmatmul.bf16.gmra.mxu0 %v9466
    %v10885 = vpop.f32.mrf.mxu0
    %v10886 = vadd.f32 %v10837, %v10885
    %v10887 = vpop.f32.mrf.mxu0
    %v10888 = vadd.f32 %v10839, %v10887
    %10889 = vmatmul.bf16.gmra.mxu0 %v9474
    %v10890 = vpop.f32.mrf.mxu0
    %v10891 = vadd.f32 %v10842, %v10890
    %v10892 = vpop.f32.mrf.mxu0
    %v10893 = vadd.f32 %v10844, %v10892
    %10894 = vmatmul.bf16.gmra.mxu0 %v9482
    %v10895 = vpop.f32.mrf.mxu0
    %v10896 = vadd.f32 %v10847, %v10895
    %v10897 = vpop.f32.mrf.mxu0
    %v10898 = vadd.f32 %v10849, %v10897
    %10899 = vmatmul.bf16.gmra.mxu0 %v9490
    %v10900 = vpop.f32.mrf.mxu0
    %v10901 = vadd.f32 %v10852, %v10900
    %v10902 = vpop.f32.mrf.mxu0
    %v10903 = vadd.f32 %v10854, %v10902
    %10904 = vdwg.mxu0
    %10905 = vmatpush.bf16.msra.mxu0 %v10107
    %10906 = vmatpush.bf16.msra.mxu0 %v10105
    %10907 = vmatpush.bf16.msra.mxu0 %v10103
    %10908 = vmatpush.bf16.msra.mxu0 %v10101
    %10909 = vmatpush.bf16.msra.mxu0 %v10099
    %10910 = vmatpush.bf16.msra.mxu0 %v10097
    %10911 = vmatpush.bf16.msra.mxu0 %v10095
    %10912 = vmatpush.bf16.msra.mxu0 %v10093
    %10913 = vmatmul.bf16.gmra.mxu0 %v9435
    %v10914 = vpop.f32.mrf.mxu0
    %v10915 = vadd.f32 %v10866, %v10914
    %v10916 = vpop.f32.mrf.mxu0
    %v10917 = vadd.f32 %v10868, %v10916
    %10918 = vmatmul.bf16.gmra.mxu0 %v9443
    %v10919 = vpop.f32.mrf.mxu0
    %v10920 = vadd.f32 %v10871, %v10919
    %v10921 = vpop.f32.mrf.mxu0
    %v10922 = vadd.f32 %v10873, %v10921
    %10923 = vmatmul.bf16.gmra.mxu0 %v9451
    %v10924 = vpop.f32.mrf.mxu0
    %v10925 = vadd.f32 %v10876, %v10924
    %v10926 = vpop.f32.mrf.mxu0
    %v10927 = vadd.f32 %v10878, %v10926
    %10928 = vmatmul.bf16.gmra.mxu0 %v9459
    %v10929 = vpop.f32.mrf.mxu0
    %v10930 = vadd.f32 %v10881, %v10929
    %v10931 = vpop.f32.mrf.mxu0
    %v10932 = vadd.f32 %v10883, %v10931
    %10933 = vmatmul.bf16.gmra.mxu0 %v9467
    %v10934 = vpop.f32.mrf.mxu0
    %v10935 = vadd.f32 %v10886, %v10934
    %v10936 = vpop.f32.mrf.mxu0
    %v10937 = vadd.f32 %v10888, %v10936
    %10938 = vmatmul.bf16.gmra.mxu0 %v9475
    %v10939 = vpop.f32.mrf.mxu0
    %v10940 = vadd.f32 %v10891, %v10939
    %v10941 = vpop.f32.mrf.mxu0
    %v10942 = vadd.f32 %v10893, %v10941
    %10943 = vmatmul.bf16.gmra.mxu0 %v9483
    %v10944 = vpop.f32.mrf.mxu0
    %v10945 = vadd.f32 %v10896, %v10944
    %v10946 = vpop.f32.mrf.mxu0
    %v10947 = vadd.f32 %v10898, %v10946
    %10948 = vmatmul.bf16.gmra.mxu0 %v9491
    %v10949 = vpop.f32.mrf.mxu0
    %v10950 = vadd.f32 %v10901, %v10949
    %v10951 = vpop.f32.mrf.mxu0
    %v10952 = vadd.f32 %v10903, %v10951
    %10953 = vdwg.mxu0
    %10954 = vmatpush.bf16.msra.mxu0 %v10123
    %10955 = vmatpush.bf16.msra.mxu0 %v10121
    %10956 = vmatpush.bf16.msra.mxu0 %v10119
    %10957 = vmatpush.bf16.msra.mxu0 %v10117
    %10958 = vmatpush.bf16.msra.mxu0 %v10115
    %10959 = vmatpush.bf16.msra.mxu0 %v10113
    %10960 = vmatpush.bf16.msra.mxu0 %v10111
    %10961 = vmatpush.bf16.msra.mxu0 %v10109
    %10962 = vmatmul.bf16.gmra.mxu0 %v9436
    %v10963 = vpop.f32.mrf.mxu0
    %v10964 = vadd.f32 %v10915, %v10963
    %v10965 = vpop.f32.mrf.mxu0
    %v10966 = vadd.f32 %v10917, %v10965
    %10967 = vmatmul.bf16.gmra.mxu0 %v9444
    %v10968 = vpop.f32.mrf.mxu0
    %v10969 = vadd.f32 %v10920, %v10968
    %v10970 = vpop.f32.mrf.mxu0
    %v10971 = vadd.f32 %v10922, %v10970
    %10972 = vmatmul.bf16.gmra.mxu0 %v9452
    %v10973 = vpop.f32.mrf.mxu0
    %v10974 = vadd.f32 %v10925, %v10973
    %v10975 = vpop.f32.mrf.mxu0
    %v10976 = vadd.f32 %v10927, %v10975
    %10977 = vmatmul.bf16.gmra.mxu0 %v9460
    %v10978 = vpop.f32.mrf.mxu0
    %v10979 = vadd.f32 %v10930, %v10978
    %v10980 = vpop.f32.mrf.mxu0
    %v10981 = vadd.f32 %v10932, %v10980
    %10982 = vmatmul.bf16.gmra.mxu0 %v9468
    %v10983 = vpop.f32.mrf.mxu0
    %v10984 = vadd.f32 %v10935, %v10983
    %v10985 = vpop.f32.mrf.mxu0
    %v10986 = vadd.f32 %v10937, %v10985
    %10987 = vmatmul.bf16.gmra.mxu0 %v9476
    %v10988 = vpop.f32.mrf.mxu0
    %v10989 = vadd.f32 %v10940, %v10988
    %v10990 = vpop.f32.mrf.mxu0
    %v10991 = vadd.f32 %v10942, %v10990
    %10992 = vmatmul.bf16.gmra.mxu0 %v9484
    %v10993 = vpop.f32.mrf.mxu0
    %v10994 = vadd.f32 %v10945, %v10993
    %v10995 = vpop.f32.mrf.mxu0
    %v10996 = vadd.f32 %v10947, %v10995
    %10997 = vmatmul.bf16.gmra.mxu0 %v9492
    %v10998 = vpop.f32.mrf.mxu0
    %v10999 = vadd.f32 %v10950, %v10998
    %v11000 = vpop.f32.mrf.mxu0
    %v11001 = vadd.f32 %v10952, %v11000
    %11002 = vdwg.mxu0
    %11003 = vmatpush.bf16.msra.mxu0 %v10139
    %11004 = vmatpush.bf16.msra.mxu0 %v10137
    %11005 = vmatpush.bf16.msra.mxu0 %v10135
    %11006 = vmatpush.bf16.msra.mxu0 %v10133
    %11007 = vmatpush.bf16.msra.mxu0 %v10131
    %11008 = vmatpush.bf16.msra.mxu0 %v10129
    %11009 = vmatpush.bf16.msra.mxu0 %v10127
    %11010 = vmatpush.bf16.msra.mxu0 %v10125
    %11011 = vmatmul.bf16.gmra.mxu0 %v9437
    %v11012 = vpop.f32.mrf.mxu0
    %v11013 = vadd.f32 %v10964, %v11012
    %v11014 = vpop.f32.mrf.mxu0
    %v11015 = vadd.f32 %v10966, %v11014
    %11016 = vmatmul.bf16.gmra.mxu0 %v9445
    %v11017 = vpop.f32.mrf.mxu0
    %v11018 = vadd.f32 %v10969, %v11017
    %v11019 = vpop.f32.mrf.mxu0
    %v11020 = vadd.f32 %v10971, %v11019
    %11021 = vmatmul.bf16.gmra.mxu0 %v9453
    %v11022 = vpop.f32.mrf.mxu0
    %v11023 = vadd.f32 %v10974, %v11022
    %v11024 = vpop.f32.mrf.mxu0
    %v11025 = vadd.f32 %v10976, %v11024
    %11026 = vmatmul.bf16.gmra.mxu0 %v9461
    %v11027 = vpop.f32.mrf.mxu0
    %v11028 = vadd.f32 %v10979, %v11027
    %v11029 = vpop.f32.mrf.mxu0
    %v11030 = vadd.f32 %v10981, %v11029
    %11031 = vmatmul.bf16.gmra.mxu0 %v9469
    %v11032 = vpop.f32.mrf.mxu0
    %v11033 = vadd.f32 %v10984, %v11032
    %v11034 = vpop.f32.mrf.mxu0
    %v11035 = vadd.f32 %v10986, %v11034
    %11036 = vmatmul.bf16.gmra.mxu0 %v9477
    %v11037 = vpop.f32.mrf.mxu0
    %v11038 = vadd.f32 %v10989, %v11037
    %v11039 = vpop.f32.mrf.mxu0
    %v11040 = vadd.f32 %v10991, %v11039
    %11041 = vmatmul.bf16.gmra.mxu0 %v9485
    %v11042 = vpop.f32.mrf.mxu0
    %v11043 = vadd.f32 %v10994, %v11042
    %v11044 = vpop.f32.mrf.mxu0
    %v11045 = vadd.f32 %v10996, %v11044
    %11046 = vmatmul.bf16.gmra.mxu0 %v9493
    %v11047 = vpop.f32.mrf.mxu0
    %v11048 = vadd.f32 %v10999, %v11047
    %v11049 = vpop.f32.mrf.mxu0
    %v11050 = vadd.f32 %v11001, %v11049
    %11051 = vdwg.mxu0
    %v11052 = vadd.f32 %v6260, %v10621
    %v11053 = vadd.f32 %v6261, %v11013
    %v11054 = vadd.f32 %v6262, %v10623
    %v11055 = vadd.f32 %v6263, %v11015
    %v11056 = vadd.f32 %v6264, %v10626
    %v11057 = vadd.f32 %v6265, %v11018
    %v11058 = vadd.f32 %v6266, %v10628
    %v11059 = vadd.f32 %v6267, %v11020
    %v11060 = vadd.f32 %v6268, %v10631
    %v11061 = vadd.f32 %v6269, %v11023
    %v11062 = vadd.f32 %v6270, %v10633
    %v11063 = vadd.f32 %v6271, %v11025
    %v11064 = vadd.f32 %v6272, %v10636
    %v11065 = vadd.f32 %v6273, %v11028
    %v11066 = vadd.f32 %v6274, %v10638
    %v11067 = vadd.f32 %v6275, %v11030
    %v11068 = vadd.f32 %v6276, %v10641
    %v11069 = vadd.f32 %v6277, %v11033
    %v11070 = vadd.f32 %v6278, %v10643
    %v11071 = vadd.f32 %v6279, %v11035
    %v11072 = vadd.f32 %v6280, %v10646
    %v11073 = vadd.f32 %v6281, %v11038
    %v11074 = vadd.f32 %v6282, %v10648
    %v11075 = vadd.f32 %v6283, %v11040
    %v11076 = vadd.f32 %v6284, %v10651
    %v11077 = vadd.f32 %v6285, %v11043
    %v11078 = vadd.f32 %v6286, %v10653
    %v11079 = vadd.f32 %v6287, %v11045
    %v11080 = vadd.f32 %v6288, %v10656
    %v11081 = vadd.f32 %v6289, %v11048
    %v11082 = vadd.f32 %v6290, %v10658
    %v11083 = vadd.f32 %v6291, %v11050
    %11084 = vst [vmem:[#allocation14] sm:$0xff] %v11052
    %11085 = vst [vmem:[#allocation14 + $0x8] sm:$0xff] %v11053
    %11086 = vst [vmem:[#allocation14 + $0x10] sm:$0xff] %v11054
    %11087 = vst [vmem:[#allocation14 + $0x18] sm:$0xff] %v11055
    %11088 = vst [vmem:[#allocation14 + $0x20] sm:$0xff] %v11056
    %11089 = vst [vmem:[#allocation14 + $0x28] sm:$0xff] %v11057
    %11090 = vst [vmem:[#allocation14 + $0x30] sm:$0xff] %v11058
    %11091 = vst [vmem:[#allocation14 + $0x38] sm:$0xff] %v11059
    %11092 = vst [vmem:[#allocation14 + $0x40] sm:$0xff] %v11060
    %11093 = vst [vmem:[#allocation14 + $0x48] sm:$0xff] %v11061
    %11094 = vst [vmem:[#allocation14 + $0x50] sm:$0xff] %v11062
    %11095 = vst [vmem:[#allocation14 + $0x58] sm:$0xff] %v11063
    %11096 = vst [vmem:[#allocation14 + $0x60] sm:$0xff] %v11064
    %11097 = vst [vmem:[#allocation14 + $0x68] sm:$0xff] %v11065
    %11098 = vst [vmem:[#allocation14 + $0x70] sm:$0xff] %v11066
    %11099 = vst [vmem:[#allocation14 + $0x78] sm:$0xff] %v11067
    %11100 = vst [vmem:[#allocation14 + $0x80] sm:$0xff] %v11068
    %11101 = vst [vmem:[#allocation14 + $0x88] sm:$0xff] %v11069
    %11102 = vst [vmem:[#allocation14 + $0x90] sm:$0xff] %v11070
    %11103 = vst [vmem:[#allocation14 + $0x98] sm:$0xff] %v11071
    %11104 = vst [vmem:[#allocation14 + $0xa0] sm:$0xff] %v11072
    %11105 = vst [vmem:[#allocation14 + $0xa8] sm:$0xff] %v11073
    %11106 = vst [vmem:[#allocation14 + $0xb0] sm:$0xff] %v11074
    %11107 = vst [vmem:[#allocation14 + $0xb8] sm:$0xff] %v11075
    %11108 = vst [vmem:[#allocation14 + $0xc0] sm:$0xff] %v11076
    %11109 = vst [vmem:[#allocation14 + $0xc8] sm:$0xff] %v11077
    %11110 = vst [vmem:[#allocation14 + $0xd0] sm:$0xff] %v11078
    %11111 = vst [vmem:[#allocation14 + $0xd8] sm:$0xff] %v11079
    %11112 = vst [vmem:[#allocation14 + $0xe0] sm:$0xff] %v11080
    %11113 = vst [vmem:[#allocation14 + $0xe8] sm:$0xff] %v11081
    %11114 = vst [vmem:[#allocation14 + $0xf0] sm:$0xff] %v11082
    %11115 = vst [vmem:[#allocation14 + $0xf8] sm:$0xff] %v11083
    // Predicated region
    $region66: #{tpu_custom_call.1} parent=1 // pred_check
      _
    $region67: #{tpu_custom_call.1} parent=1 // pred_check_branch
      %11117 = sbr.rel (0) target = $region69
    $region68: #{tpu_custom_call.1} parent=1 // pred_region
      %11119 = vsyncadd [#allocation4], 0
      %s11120 = sshll.u32 [#allocation14], 4
      %s11121 = int_to_ptr.vmem [resolvable:$true] %s11120
      %s11122 = sshll.u32 %s9, 4
      %s11123 = int_to_ptr.hbm [resolvable:$true] %s11122
      %11128 = dma.vmem_to_hbm [thread:$0]  %s11121, 4096, %s11123, [#allocation4], 256, 256, 16
    $region69: #{tpu_custom_call.1} parent=1 // pred_fallthru
      _
    // Predicated region
    $region70: #{tpu_custom_call.1} parent=1 // pred_check
      _
    $region71: #{tpu_custom_call.1} parent=1 // pred_check_branch
      %11130 = sbr.rel (0) target = $region73
    $region72: #{tpu_custom_call.1} parent=1 // pred_region
      %11132 = dma.done [#allocation4], 4096
    $region73: #{tpu_custom_call.1} parent=1 // pred_fallthru
      _
    %11133 = vsyncpa [#allocation3], 1
    %11134 = vsyncpa [#allocation6], 1
    %11135 = vsyncpa [#allocation9], 1
    %11136 = vsyncpa [#allocation12], 1
    %11137 = vsyncpa [#allocation4], 1

</llo_original>
